<compile_context>
chip_gen: v7x
topology: tpu7x:2x2x1
jax: 0.10.0
libtpu: 0.0.40
codegen_flags: <defaults>
</compile_context>

<pallas_src>
import jax
import jax.numpy as jnp
from jax.experimental import pallas as pl
from jax.experimental.pallas import tpu as pltpu


# Geometry fixed by the module (fdfc1 expects 128*30 inputs => L_in = 250).
C_IN, L_IN = 64, 250
L1, P1 = 248, 124          # conv1 output length / after MaxPool1d(2)
L2, P2 = 124, 62           # conv2 (padding=1) output length / after pool
L3, P3 = 60, 30            # conv3 output length / after pool


def _freq_domain_kernel(x_ref, w1_ref, b1_ref, w2_ref, b2_ref, w3_ref, b3_ref,
                        w12_ref, b12_ref, o_ref,
                        s1, p1pad, s2, p2buf, s3, p3buf):
    f32 = jnp.float32

    # ---- conv1d1 (k=3, no pad) + bias: (250,64) -> (248,32) -----------------
    acc = jnp.zeros((L1, 32), f32)
    for k in range(3):                         # static taps, each an MXU matmul
        acc = acc + jnp.dot(x_ref[0, pl.ds(k, L1), :], w1_ref[k],
                            preferred_element_type=f32)
    s1[...] = acc + b1_ref[...]
    # MaxPool1d(2) then ReLU (== ReLU then pool; max is monotone).
    pool1 = jnp.maximum(
        jnp.maximum(s1[pl.ds(0, P1, 2), :], s1[pl.ds(1, P1, 2), :]), 0.0)
    # Stage pooled activation into a zero-padded buffer: conv1d2 has padding=1.
    p1pad[pl.ds(0, 1), :] = jnp.zeros((1, 32), f32)
    p1pad[pl.ds(P1 + 1, 1), :] = jnp.zeros((1, 32), f32)
    p1pad[pl.ds(1, P1), :] = pool1

    # ---- conv1d2 (k=3, pad=1) + bias: (126,32) -> (124,64) ------------------
    acc = jnp.zeros((L2, 64), f32)
    for k in range(3):
        acc = acc + jnp.dot(p1pad[pl.ds(k, L2), :], w2_ref[k],
                            preferred_element_type=f32)
    s2[...] = acc + b2_ref[...]
    p2buf[...] = jnp.maximum(
        jnp.maximum(s2[pl.ds(0, P2, 2), :], s2[pl.ds(1, P2, 2), :]), 0.0)

    # ---- conv1d3 (k=3, no pad) + bias: (62,64) -> (60,128) ------------------
    acc = jnp.zeros((L3, 128), f32)
    for k in range(3):
        acc = acc + jnp.dot(p2buf[pl.ds(k, L3), :], w3_ref[k],
                            preferred_element_type=f32)
    s3[...] = acc + b3_ref[...]
    p3buf[...] = jnp.maximum(
        jnp.maximum(s3[pl.ds(0, P3, 2), :], s3[pl.ds(1, P3, 2), :]), 0.0)

    # ---- flatten + fdfc1 + fdfc2 (collapsed at init; flatten permutation is
    # folded into w12's rows).  Contract row-by-row to avoid an in-kernel
    # (30,128)->(1,3840) relayout; FC is <6% of total FLOPs.
    out = b12_ref[...]                                   # (1, 64) f32
    for l in range(P3):
        out = out + jnp.dot(p3buf[pl.ds(l, 1), :], w12_ref[l],
                            preferred_element_type=f32)
    # TODO(synk): nn.Dropout(0.4) is identity in eval mode; train-mode RNG
    # masking is not implemented here.
    o_ref[0] = out.astype(o_ref.dtype)


@jax.jit
def frequency_domain_forward(x_ncl, params):
    """x_ncl: (B, 64, 250) float32 (PyTorch NCL layout) -> (1, B, 64)."""
    B = x_ncl.shape[0]
    x_nlc = jnp.transpose(x_ncl, (0, 2, 1)).astype(jnp.float32)   # (B, 250, 64)

    out = pl.pallas_call(
        _freq_domain_kernel,
        out_shape=jax.ShapeDtypeStruct((B, 1, 64), jnp.float32),
        grid_spec=pltpu.PrefetchScalarGridSpec(
            num_scalar_prefetch=0,
            grid=(B,),
            in_specs=[
                pl.BlockSpec((1, L_IN, C_IN), lambda b: (b, 0, 0)),   # x
                pl.BlockSpec((3, 64, 32), lambda b: (0, 0, 0)),       # w1
                pl.BlockSpec((1, 32), lambda b: (0, 0)),              # b1
                pl.BlockSpec((3, 32, 64), lambda b: (0, 0, 0)),       # w2
                pl.BlockSpec((1, 64), lambda b: (0, 0)),              # b2
                pl.BlockSpec((3, 64, 128), lambda b: (0, 0, 0)),      # w3
                pl.BlockSpec((1, 128), lambda b: (0, 0)),             # b3
                pl.BlockSpec((P3, 128, 64), lambda b: (0, 0, 0)),     # w12
                pl.BlockSpec((1, 64), lambda b: (0, 0)),              # b12
            ],
            out_specs=pl.BlockSpec((1, 1, 64), lambda b: (b, 0, 0)),
            scratch_shapes=[
                pltpu.VMEM((L1, 32), jnp.float32),        # conv1 pre-pool
                pltpu.VMEM((P1 + 2, 32), jnp.float32),    # pooled1, zero-padded
                pltpu.VMEM((L2, 64), jnp.float32),        # conv2 pre-pool
                pltpu.VMEM((P2, 64), jnp.float32),        # pooled2
                pltpu.VMEM((L3, 128), jnp.float32),       # conv3 pre-pool
                pltpu.VMEM((P3, 128), jnp.float32),       # pooled3 (flatten src)
            ],
        ),
        compiler_params=pltpu.CompilerParams(
            dimension_semantics=("parallel",)),
    )(x_nlc, params["w1"], params["b1"], params["w2"], params["b2"],
      params["w3"], params["b3"], params["w12"], params["b12"])

    return jnp.squeeze(out, axis=1)[None, ...]             # (1, B, 64)


# --------------------------------------------------------------------------
# Parameters: PyTorch-convention random init, then packed for the kernel.
# --------------------------------------------------------------------------
def _uniform(key, shape, fan_in):
    bound = 1.0 / jnp.sqrt(jnp.float32(fan_in))
    return jax.random.uniform(key, shape, jnp.float32, -bound, bound)


def init_torch_params(key):
    """Random parameters in PyTorch-native shapes / init convention."""
    ks = jax.random.split(key, 10)
    return dict(
        w1=_uniform(ks[0], (32, 64, 3), 64 * 3), b1=_uniform(ks[1], (32,), 64 * 3),
        w2=_uniform(ks[2], (64, 32, 3), 32 * 3), b2=_uniform(ks[3], (64,), 32 * 3),
        w3=_uniform(ks[4], (128, 64, 3), 64 * 3), b3=_uniform(ks[5], (128,), 64 * 3),
        fw1=_uniform(ks[6], (16, 128 * 30), 128 * 30),
        fb1=_uniform(ks[7], (16,), 128 * 30),
        fw2=_uniform(ks[8], (64, 16), 16), fb2=_uniform(ks[9], (64,), 16),
    )


def pack_params(t):
    """Fold layout transforms and the fdfc1/fdfc2 collapse into the weights."""
    # Conv weights (Cout, Cin, K) -> (K, Cin, Cout): each tap is a (Cin, Cout) matmul.
    w1 = jnp.transpose(t["w1"], (2, 1, 0))
    w2 = jnp.transpose(t["w2"], (2, 1, 0))
    w3 = jnp.transpose(t["w3"], (2, 1, 0))
    # fdfc2(fdfc1(x)) = x @ (W1^T W2^T) + (b1 @ W2^T + b2)  (no nonlinearity).
    w12 = t["fw1"].T @ t["fw2"].T                        # (3840, 64)
    b12 = t["fb1"] @ t["fw2"].T + t["fb2"]               # (64,)
    # torch.flatten of (B,128,30) is channel-major (row c*30+l); the kernel's
    # pooled conv3 output is (l, c), so permute w12's rows to (l, c) order.
    w12 = w12.reshape(128, 30, 64).transpose(1, 0, 2)    # (30, 128, 64)
    return dict(
        w1=w1, b1=t["b1"][None, :], w2=w2, b2=t["b2"][None, :],
        w3=w3, b3=t["b3"][None, :], w12=w12, b12=b12[None, :],
    )


# --------------------------------------------------------------------------
# Pure-JAX reference (mirrors FrequencyDomain.forward, eval mode).
# --------------------------------------------------------------------------
def reference_forward(x_ncl, t):
    def conv1d(x, w, b, pad):
        y = jax.lax.conv_general_dilated(
            x, w, window_strides=(1,), padding=[(pad, pad)],
            dimension_numbers=("NCH", "OIH", "NCH"))
        return y + b[None, :, None]

    def pool(x):
        B, C, L = x.shape
        return jnp.max(x.reshape(B, C, L // 2, 2), axis=-1)

    x = pool(jax.nn.relu(conv1d(x_ncl, t["w1"], t["b1"], 0)))
    x = pool(jax.nn.relu(conv1d(x, t["w2"], t["b2"], 1)))
    x = pool(jax.nn.relu(conv1d(x, t["w3"], t["b3"], 0)))
    x = x.reshape(x.shape[0], -1)
    x = x @ t["fw1"].T + t["fb1"]
    x = x @ t["fw2"].T + t["fb2"]
    return x[None, ...]


if __name__ == "__main__":
    key = jax.random.PRNGKey(0)
    k_param, k_x = jax.random.split(key)
    torch_params = init_torch_params(k_param)
    params = pack_params(torch_params)

    # The module's fc layer (128*30 inputs) fixes C=64, L=250; small batch=2.
    x = jax.random.normal(k_x, (2, 64, 250), dtype=jnp.float32)

    y = frequency_domain_forward(x, params)
    y = jax.block_until_ready(y)
    assert y.shape == (1, 2, 64), y.shape

    # Correctness check vs. pure-JAX reference (tolerance covers MXU f32-pass
    # vs. XLA accumulation-order differences and the algebraic FC collapse).
    y_ref = reference_forward(x, torch_params)
    max_err = float(jnp.max(jnp.abs(y - y_ref)))
    assert jnp.allclose(y, y_ref, rtol=1e-2, atol=1e-2), max_err

    print("KERNEL_OK")
</pallas_src>

<mosaic_0001>
module attributes {stable_mosaic.version = 11 : i64} {
  func.func @_freq_domain_kernel(%arg0: i32, %arg1: memref<1x250x64xf32, #tpu.memory_space<vmem>>, %arg2: memref<3x64x32xf32, #tpu.memory_space<vmem>>, %arg3: memref<1x32xf32, #tpu.memory_space<vmem>>, %arg4: memref<3x32x64xf32, #tpu.memory_space<vmem>>, %arg5: memref<1x64xf32, #tpu.memory_space<vmem>>, %arg6: memref<3x64x128xf32, #tpu.memory_space<vmem>>, %arg7: memref<1x128xf32, #tpu.memory_space<vmem>>, %arg8: memref<30x128x64xf32, #tpu.memory_space<vmem>>, %arg9: memref<1x64xf32, #tpu.memory_space<vmem>>, %arg10: memref<1x1x64xf32, #tpu.memory_space<vmem>>, %arg11: memref<248x32xf32, #tpu.memory_space<vmem>>, %arg12: memref<126x32xf32, #tpu.memory_space<vmem>>, %arg13: memref<124x64xf32, #tpu.memory_space<vmem>>, %arg14: memref<62x64xf32, #tpu.memory_space<vmem>>, %arg15: memref<60x128xf32, #tpu.memory_space<vmem>>, %arg16: memref<30x128xf32, #tpu.memory_space<vmem>>) attributes {dimension_semantics = [#tpu.dimension_semantics<parallel>], iteration_bounds = array<i64: 2>, scalar_prefetch = 0 : i64, scratch_operands = 6 : i64, tpu.core_type = #tpu.core_type<tc>, window_params = [{transform_indices = @transform_0, window_bounds = array<i64: 1, 250, 64>}, {pipeline_mode = #tpu.pipeline_mode<synchronous>, transform_indices = @transform_1, window_bounds = array<i64: 3, 64, 32>}, {pipeline_mode = #tpu.pipeline_mode<synchronous>, transform_indices = @transform_2, window_bounds = array<i64: 1, 32>}, {pipeline_mode = #tpu.pipeline_mode<synchronous>, transform_indices = @transform_3, window_bounds = array<i64: 3, 32, 64>}, {pipeline_mode = #tpu.pipeline_mode<synchronous>, transform_indices = @transform_4, window_bounds = array<i64: 1, 64>}, {pipeline_mode = #tpu.pipeline_mode<synchronous>, transform_indices = @transform_5, window_bounds = array<i64: 3, 64, 128>}, {pipeline_mode = #tpu.pipeline_mode<synchronous>, transform_indices = @transform_6, window_bounds = array<i64: 1, 128>}, {pipeline_mode = #tpu.pipeline_mode<synchronous>, transform_indices = @transform_7, window_bounds = array<i64: 30, 128, 64>}, {pipeline_mode = #tpu.pipeline_mode<synchronous>, transform_indices = @transform_8, window_bounds = array<i64: 1, 64>}, {transform_indices = @transform_9, window_bounds = array<i64: 1, 1, 64>}]} {
    %cst = arith.constant 0.000000e+00 : f32
    %0 = vector.broadcast %cst : f32 to vector<248x32xf32>
    %c0 = arith.constant 0 : index
    %c0_0 = arith.constant 0 : index
    %c0_1 = arith.constant 0 : index
    %1 = vector.load %arg1[%c0, %c0_0, %c0_1] : memref<1x250x64xf32, #tpu.memory_space<vmem>>, vector<1x248x64xf32>
    %2 = vector.shape_cast %1 : vector<1x248x64xf32> to vector<248x64xf32>
    %c0_2 = arith.constant 0 : index
    %c0_3 = arith.constant 0 : index
    %c0_4 = arith.constant 0 : index
    %3 = vector.load %arg2[%c0_2, %c0_3, %c0_4] : memref<3x64x32xf32, #tpu.memory_space<vmem>>, vector<1x64x32xf32>
    %4 = vector.shape_cast %3 : vector<1x64x32xf32> to vector<64x32xf32>
    %cst_5 = arith.constant dense<0.000000e+00> : vector<248x32xf32>
    %5 = tpu.matmul %2, %4, %cst_5 {dimension_numbers = #tpu.dot_dimension_numbers<[1], [0], [0], [1], [0, 0, 1, 1], [], []>} : vector<248x64xf32>, vector<64x32xf32>, vector<248x32xf32> -> vector<248x32xf32>
    %6 = arith.addf %0, %5 : vector<248x32xf32>
    %c0_6 = arith.constant 0 : index
    %c1 = arith.constant 1 : index
    %c0_7 = arith.constant 0 : index
    %7 = vector.load %arg1[%c0_6, %c1, %c0_7] : memref<1x250x64xf32, #tpu.memory_space<vmem>>, vector<1x248x64xf32>
    %8 = vector.shape_cast %7 : vector<1x248x64xf32> to vector<248x64xf32>
    %c1_8 = arith.constant 1 : index
    %c0_9 = arith.constant 0 : index
    %c0_10 = arith.constant 0 : index
    %9 = vector.load %arg2[%c1_8, %c0_9, %c0_10] : memref<3x64x32xf32, #tpu.memory_space<vmem>>, vector<1x64x32xf32>
    %10 = vector.shape_cast %9 : vector<1x64x32xf32> to vector<64x32xf32>
    %cst_11 = arith.constant dense<0.000000e+00> : vector<248x32xf32>
    %11 = tpu.matmul %8, %10, %cst_11 {dimension_numbers = #tpu.dot_dimension_numbers<[1], [0], [0], [1], [0, 0, 1, 1], [], []>} : vector<248x64xf32>, vector<64x32xf32>, vector<248x32xf32> -> vector<248x32xf32>
    %12 = arith.addf %6, %11 : vector<248x32xf32>
    %c0_12 = arith.constant 0 : index
    %c2 = arith.constant 2 : index
    %c0_13 = arith.constant 0 : index
    %13 = vector.load %arg1[%c0_12, %c2, %c0_13] : memref<1x250x64xf32, #tpu.memory_space<vmem>>, vector<1x248x64xf32>
    %14 = vector.shape_cast %13 : vector<1x248x64xf32> to vector<248x64xf32>
    %c2_14 = arith.constant 2 : index
    %c0_15 = arith.constant 0 : index
    %c0_16 = arith.constant 0 : index
    %15 = vector.load %arg2[%c2_14, %c0_15, %c0_16] : memref<3x64x32xf32, #tpu.memory_space<vmem>>, vector<1x64x32xf32>
    %16 = vector.shape_cast %15 : vector<1x64x32xf32> to vector<64x32xf32>
    %cst_17 = arith.constant dense<0.000000e+00> : vector<248x32xf32>
    %17 = tpu.matmul %14, %16, %cst_17 {dimension_numbers = #tpu.dot_dimension_numbers<[1], [0], [0], [1], [0, 0, 1, 1], [], []>} : vector<248x64xf32>, vector<64x32xf32>, vector<248x32xf32> -> vector<248x32xf32>
    %18 = arith.addf %12, %17 : vector<248x32xf32>
    %c0_18 = arith.constant 0 : index
    %c0_19 = arith.constant 0 : index
    %19 = vector.load %arg3[%c0_18, %c0_19] : memref<1x32xf32, #tpu.memory_space<vmem>>, vector<1x32xf32>
    %20 = vector.broadcast %19 : vector<1x32xf32> to vector<248x32xf32>
    %21 = arith.addf %18, %20 : vector<248x32xf32>
    %c0_20 = arith.constant 0 : index
    %c0_21 = arith.constant 0 : index
    %22 = vector.load %arg11[%c0_20, %c0_21] : memref<248x32xf32, #tpu.memory_space<vmem>>, vector<248x32xf32>
    tpu.vector_store %arg11[%c0_20, %c0_21], %21 {strides = array<i32>} : memref<248x32xf32, #tpu.memory_space<vmem>>, vector<248x32xf32>,
    %c0_22 = arith.constant 0 : index
    %c0_23 = arith.constant 0 : index
    %23 = tpu.strided_load %arg11[%c0_22, %c0_23] {strides = array<i32: 2, 1>} : memref<248x32xf32, #tpu.memory_space<vmem>>, vector<124x32xf32>
    %c1_24 = arith.constant 1 : index
    %c0_25 = arith.constant 0 : index
    %24 = tpu.strided_load %arg11[%c1_24, %c0_25] {strides = array<i32: 2, 1>} : memref<248x32xf32, #tpu.memory_space<vmem>>, vector<124x32xf32>
    %25 = arith.maximumf %23, %24 : vector<124x32xf32>
    %cst_26 = arith.constant 0.000000e+00 : f32
    %26 = vector.broadcast %cst_26 : f32 to vector<124x32xf32>
    %27 = arith.maximumf %25, %26 : vector<124x32xf32>
    %cst_27 = arith.constant 0.000000e+00 : f32
    %28 = vector.broadcast %cst_27 : f32 to vector<1x32xf32>
    %c0_28 = arith.constant 0 : index
    %c0_29 = arith.constant 0 : index
    %29 = vector.load %arg12[%c0_28, %c0_29] : memref<126x32xf32, #tpu.memory_space<vmem>>, vector<1x32xf32>
    tpu.vector_store %arg12[%c0_28, %c0_29], %28 {strides = array<i32>} : memref<126x32xf32, #tpu.memory_space<vmem>>, vector<1x32xf32>,
    %cst_30 = arith.constant 0.000000e+00 : f32
    %30 = vector.broadcast %cst_30 : f32 to vector<1x32xf32>
    %c125 = arith.constant 125 : index
    %c0_31 = arith.constant 0 : index
    %31 = vector.load %arg12[%c125, %c0_31] : memref<126x32xf32, #tpu.memory_space<vmem>>, vector<1x32xf32>
    tpu.vector_store %arg12[%c125, %c0_31], %30 {strides = array<i32>} : memref<126x32xf32, #tpu.memory_space<vmem>>, vector<1x32xf32>,
    %c1_32 = arith.constant 1 : index
    %c0_33 = arith.constant 0 : index
    %32 = vector.load %arg12[%c1_32, %c0_33] : memref<126x32xf32, #tpu.memory_space<vmem>>, vector<124x32xf32>
    tpu.vector_store %arg12[%c1_32, %c0_33], %27 {strides = array<i32>} : memref<126x32xf32, #tpu.memory_space<vmem>>, vector<124x32xf32>,
    %cst_34 = arith.constant 0.000000e+00 : f32
    %33 = vector.broadcast %cst_34 : f32 to vector<124x64xf32>
    %c0_35 = arith.constant 0 : index
    %c0_36 = arith.constant 0 : index
    %34 = vector.load %arg12[%c0_35, %c0_36] : memref<126x32xf32, #tpu.memory_space<vmem>>, vector<124x32xf32>
    %c0_37 = arith.constant 0 : index
    %c0_38 = arith.constant 0 : index
    %c0_39 = arith.constant 0 : index
    %35 = vector.load %arg4[%c0_37, %c0_38, %c0_39] : memref<3x32x64xf32, #tpu.memory_space<vmem>>, vector<1x32x64xf32>
    %36 = vector.shape_cast %35 : vector<1x32x64xf32> to vector<32x64xf32>
    %cst_40 = arith.constant dense<0.000000e+00> : vector<124x64xf32>
    %37 = tpu.matmul %34, %36, %cst_40 {dimension_numbers = #tpu.dot_dimension_numbers<[1], [0], [0], [1], [0, 0, 1, 1], [], []>} : vector<124x32xf32>, vector<32x64xf32>, vector<124x64xf32> -> vector<124x64xf32>
    %38 = arith.addf %33, %37 : vector<124x64xf32>
    %c1_41 = arith.constant 1 : index
    %c0_42 = arith.constant 0 : index
    %39 = vector.load %arg12[%c1_41, %c0_42] : memref<126x32xf32, #tpu.memory_space<vmem>>, vector<124x32xf32>
    %c1_43 = arith.constant 1 : index
    %c0_44 = arith.constant 0 : index
    %c0_45 = arith.constant 0 : index
    %40 = vector.load %arg4[%c1_43, %c0_44, %c0_45] : memref<3x32x64xf32, #tpu.memory_space<vmem>>, vector<1x32x64xf32>
    %41 = vector.shape_cast %40 : vector<1x32x64xf32> to vector<32x64xf32>
    %cst_46 = arith.constant dense<0.000000e+00> : vector<124x64xf32>
    %42 = tpu.matmul %39, %41, %cst_46 {dimension_numbers = #tpu.dot_dimension_numbers<[1], [0], [0], [1], [0, 0, 1, 1], [], []>} : vector<124x32xf32>, vector<32x64xf32>, vector<124x64xf32> -> vector<124x64xf32>
    %43 = arith.addf %38, %42 : vector<124x64xf32>
    %c2_47 = arith.constant 2 : index
    %c0_48 = arith.constant 0 : index
    %44 = vector.load %arg12[%c2_47, %c0_48] : memref<126x32xf32, #tpu.memory_space<vmem>>, vector<124x32xf32>
    %c2_49 = arith.constant 2 : index
    %c0_50 = arith.constant 0 : index
    %c0_51 = arith.constant 0 : index
    %45 = vector.load %arg4[%c2_49, %c0_50, %c0_51] : memref<3x32x64xf32, #tpu.memory_space<vmem>>, vector<1x32x64xf32>
    %46 = vector.shape_cast %45 : vector<1x32x64xf32> to vector<32x64xf32>
    %cst_52 = arith.constant dense<0.000000e+00> : vector<124x64xf32>
    %47 = tpu.matmul %44, %46, %cst_52 {dimension_numbers = #tpu.dot_dimension_numbers<[1], [0], [0], [1], [0, 0, 1, 1], [], []>} : vector<124x32xf32>, vector<32x64xf32>, vector<124x64xf32> -> vector<124x64xf32>
    %48 = arith.addf %43, %47 : vector<124x64xf32>
    %c0_53 = arith.constant 0 : index
    %c0_54 = arith.constant 0 : index
    %49 = vector.load %arg5[%c0_53, %c0_54] : memref<1x64xf32, #tpu.memory_space<vmem>>, vector<1x64xf32>
    %50 = vector.broadcast %49 : vector<1x64xf32> to vector<124x64xf32>
    %51 = arith.addf %48, %50 : vector<124x64xf32>
    %c0_55 = arith.constant 0 : index
    %c0_56 = arith.constant 0 : index
    %52 = vector.load %arg13[%c0_55, %c0_56] : memref<124x64xf32, #tpu.memory_space<vmem>>, vector<124x64xf32>
    tpu.vector_store %arg13[%c0_55, %c0_56], %51 {strides = array<i32>} : memref<124x64xf32, #tpu.memory_space<vmem>>, vector<124x64xf32>,
    %c0_57 = arith.constant 0 : index
    %c0_58 = arith.constant 0 : index
    %53 = tpu.strided_load %arg13[%c0_57, %c0_58] {strides = array<i32: 2, 1>} : memref<124x64xf32, #tpu.memory_space<vmem>>, vector<62x64xf32>
    %c1_59 = arith.constant 1 : index
    %c0_60 = arith.constant 0 : index
    %54 = tpu.strided_load %arg13[%c1_59, %c0_60] {strides = array<i32: 2, 1>} : memref<124x64xf32, #tpu.memory_space<vmem>>, vector<62x64xf32>
    %55 = arith.maximumf %53, %54 : vector<62x64xf32>
    %cst_61 = arith.constant 0.000000e+00 : f32
    %56 = vector.broadcast %cst_61 : f32 to vector<62x64xf32>
    %57 = arith.maximumf %55, %56 : vector<62x64xf32>
    %c0_62 = arith.constant 0 : index
    %c0_63 = arith.constant 0 : index
    %58 = vector.load %arg14[%c0_62, %c0_63] : memref<62x64xf32, #tpu.memory_space<vmem>>, vector<62x64xf32>
    tpu.vector_store %arg14[%c0_62, %c0_63], %57 {strides = array<i32>} : memref<62x64xf32, #tpu.memory_space<vmem>>, vector<62x64xf32>,
    %cst_64 = arith.constant 0.000000e+00 : f32
    %59 = vector.broadcast %cst_64 : f32 to vector<60x128xf32>
    %c0_65 = arith.constant 0 : index
    %c0_66 = arith.constant 0 : index
    %60 = vector.load %arg14[%c0_65, %c0_66] : memref<62x64xf32, #tpu.memory_space<vmem>>, vector<60x64xf32>
    %c0_67 = arith.constant 0 : index
    %c0_68 = arith.constant 0 : index
    %c0_69 = arith.constant 0 : index
    %61 = vector.load %arg6[%c0_67, %c0_68, %c0_69] : memref<3x64x128xf32, #tpu.memory_space<vmem>>, vector<1x64x128xf32>
    %62 = vector.shape_cast %61 : vector<1x64x128xf32> to vector<64x128xf32>
    %cst_70 = arith.constant dense<0.000000e+00> : vector<60x128xf32>
    %63 = tpu.matmul %60, %62, %cst_70 {dimension_numbers = #tpu.dot_dimension_numbers<[1], [0], [0], [1], [0, 0, 1, 1], [], []>} : vector<60x64xf32>, vector<64x128xf32>, vector<60x128xf32> -> vector<60x128xf32>
    %64 = arith.addf %59, %63 : vector<60x128xf32>
    %c1_71 = arith.constant 1 : index
    %c0_72 = arith.constant 0 : index
    %65 = vector.load %arg14[%c1_71, %c0_72] : memref<62x64xf32, #tpu.memory_space<vmem>>, vector<60x64xf32>
    %c1_73 = arith.constant 1 : index
    %c0_74 = arith.constant 0 : index
    %c0_75 = arith.constant 0 : index
    %66 = vector.load %arg6[%c1_73, %c0_74, %c0_75] : memref<3x64x128xf32, #tpu.memory_space<vmem>>, vector<1x64x128xf32>
    %67 = vector.shape_cast %66 : vector<1x64x128xf32> to vector<64x128xf32>
    %cst_76 = arith.constant dense<0.000000e+00> : vector<60x128xf32>
    %68 = tpu.matmul %65, %67, %cst_76 {dimension_numbers = #tpu.dot_dimension_numbers<[1], [0], [0], [1], [0, 0, 1, 1], [], []>} : vector<60x64xf32>, vector<64x128xf32>, vector<60x128xf32> -> vector<60x128xf32>
    %69 = arith.addf %64, %68 : vector<60x128xf32>
    %c2_77 = arith.constant 2 : index
    %c0_78 = arith.constant 0 : index
    %70 = vector.load %arg14[%c2_77, %c0_78] : memref<62x64xf32, #tpu.memory_space<vmem>>, vector<60x64xf32>
    %c2_79 = arith.constant 2 : index
    %c0_80 = arith.constant 0 : index
    %c0_81 = arith.constant 0 : index
    %71 = vector.load %arg6[%c2_79, %c0_80, %c0_81] : memref<3x64x128xf32, #tpu.memory_space<vmem>>, vector<1x64x128xf32>
    %72 = vector.shape_cast %71 : vector<1x64x128xf32> to vector<64x128xf32>
    %cst_82 = arith.constant dense<0.000000e+00> : vector<60x128xf32>
    %73 = tpu.matmul %70, %72, %cst_82 {dimension_numbers = #tpu.dot_dimension_numbers<[1], [0], [0], [1], [0, 0, 1, 1], [], []>} : vector<60x64xf32>, vector<64x128xf32>, vector<60x128xf32> -> vector<60x128xf32>
    %74 = arith.addf %69, %73 : vector<60x128xf32>
    %c0_83 = arith.constant 0 : index
    %c0_84 = arith.constant 0 : index
    %75 = vector.load %arg7[%c0_83, %c0_84] : memref<1x128xf32, #tpu.memory_space<vmem>>, vector<1x128xf32>
    %76 = vector.broadcast %75 : vector<1x128xf32> to vector<60x128xf32>
    %77 = arith.addf %74, %76 : vector<60x128xf32>
    %c0_85 = arith.constant 0 : index
    %c0_86 = arith.constant 0 : index
    %78 = vector.load %arg15[%c0_85, %c0_86] : memref<60x128xf32, #tpu.memory_space<vmem>>, vector<60x128xf32>
    tpu.vector_store %arg15[%c0_85, %c0_86], %77 {strides = array<i32>} : memref<60x128xf32, #tpu.memory_space<vmem>>, vector<60x128xf32>,
    %c0_87 = arith.constant 0 : index
    %c0_88 = arith.constant 0 : index
    %79 = tpu.strided_load %arg15[%c0_87, %c0_88] {strides = array<i32: 2, 1>} : memref<60x128xf32, #tpu.memory_space<vmem>>, vector<30x128xf32>
    %c1_89 = arith.constant 1 : index
    %c0_90 = arith.constant 0 : index
    %80 = tpu.strided_load %arg15[%c1_89, %c0_90] {strides = array<i32: 2, 1>} : memref<60x128xf32, #tpu.memory_space<vmem>>, vector<30x128xf32>
    %81 = arith.maximumf %79, %80 : vector<30x128xf32>
    %cst_91 = arith.constant 0.000000e+00 : f32
    %82 = vector.broadcast %cst_91 : f32 to vector<30x128xf32>
    %83 = arith.maximumf %81, %82 : vector<30x128xf32>
    %c0_92 = arith.constant 0 : index
    %c0_93 = arith.constant 0 : index
    %84 = vector.load %arg16[%c0_92, %c0_93] : memref<30x128xf32, #tpu.memory_space<vmem>>, vector<30x128xf32>
    tpu.vector_store %arg16[%c0_92, %c0_93], %83 {strides = array<i32>} : memref<30x128xf32, #tpu.memory_space<vmem>>, vector<30x128xf32>,
    %c0_94 = arith.constant 0 : index
    %c0_95 = arith.constant 0 : index
    %85 = vector.load %arg9[%c0_94, %c0_95] : memref<1x64xf32, #tpu.memory_space<vmem>>, vector<1x64xf32>
    %c0_96 = arith.constant 0 : index
    %c0_97 = arith.constant 0 : index
    %86 = vector.load %arg16[%c0_96, %c0_97] : memref<30x128xf32, #tpu.memory_space<vmem>>, vector<1x128xf32>
    %c0_98 = arith.constant 0 : index
    %c0_99 = arith.constant 0 : index
    %c0_100 = arith.constant 0 : index
    %87 = vector.load %arg8[%c0_98, %c0_99, %c0_100] : memref<30x128x64xf32, #tpu.memory_space<vmem>>, vector<1x128x64xf32>
    %88 = vector.shape_cast %87 : vector<1x128x64xf32> to vector<128x64xf32>
    %cst_101 = arith.constant dense<0.000000e+00> : vector<1x64xf32>
    %89 = tpu.matmul %86, %88, %cst_101 {dimension_numbers = #tpu.dot_dimension_numbers<[1], [0], [0], [1], [0, 0, 1, 1], [], []>} : vector<1x128xf32>, vector<128x64xf32>, vector<1x64xf32> -> vector<1x64xf32>
    %90 = arith.addf %85, %89 : vector<1x64xf32>
    %c1_102 = arith.constant 1 : index
    %c0_103 = arith.constant 0 : index
    %91 = vector.load %arg16[%c1_102, %c0_103] : memref<30x128xf32, #tpu.memory_space<vmem>>, vector<1x128xf32>
    %c1_104 = arith.constant 1 : index
    %c0_105 = arith.constant 0 : index
    %c0_106 = arith.constant 0 : index
    %92 = vector.load %arg8[%c1_104, %c0_105, %c0_106] : memref<30x128x64xf32, #tpu.memory_space<vmem>>, vector<1x128x64xf32>
    %93 = vector.shape_cast %92 : vector<1x128x64xf32> to vector<128x64xf32>
    %cst_107 = arith.constant dense<0.000000e+00> : vector<1x64xf32>
    %94 = tpu.matmul %91, %93, %cst_107 {dimension_numbers = #tpu.dot_dimension_numbers<[1], [0], [0], [1], [0, 0, 1, 1], [], []>} : vector<1x128xf32>, vector<128x64xf32>, vector<1x64xf32> -> vector<1x64xf32>
    %95 = arith.addf %90, %94 : vector<1x64xf32>
    %c2_108 = arith.constant 2 : index
    %c0_109 = arith.constant 0 : index
    %96 = vector.load %arg16[%c2_108, %c0_109] : memref<30x128xf32, #tpu.memory_space<vmem>>, vector<1x128xf32>
    %c2_110 = arith.constant 2 : index
    %c0_111 = arith.constant 0 : index
    %c0_112 = arith.constant 0 : index
    %97 = vector.load %arg8[%c2_110, %c0_111, %c0_112] : memref<30x128x64xf32, #tpu.memory_space<vmem>>, vector<1x128x64xf32>
    %98 = vector.shape_cast %97 : vector<1x128x64xf32> to vector<128x64xf32>
    %cst_113 = arith.constant dense<0.000000e+00> : vector<1x64xf32>
    %99 = tpu.matmul %96, %98, %cst_113 {dimension_numbers = #tpu.dot_dimension_numbers<[1], [0], [0], [1], [0, 0, 1, 1], [], []>} : vector<1x128xf32>, vector<128x64xf32>, vector<1x64xf32> -> vector<1x64xf32>
    %100 = arith.addf %95, %99 : vector<1x64xf32>
    %c3 = arith.constant 3 : index
    %c0_114 = arith.constant 0 : index
    %101 = vector.load %arg16[%c3, %c0_114] : memref<30x128xf32, #tpu.memory_space<vmem>>, vector<1x128xf32>
    %c3_115 = arith.constant 3 : index
    %c0_116 = arith.constant 0 : index
    %c0_117 = arith.constant 0 : index
    %102 = vector.load %arg8[%c3_115, %c0_116, %c0_117] : memref<30x128x64xf32, #tpu.memory_space<vmem>>, vector<1x128x64xf32>
    %103 = vector.shape_cast %102 : vector<1x128x64xf32> to vector<128x64xf32>
    %cst_118 = arith.constant dense<0.000000e+00> : vector<1x64xf32>
    %104 = tpu.matmul %101, %103, %cst_118 {dimension_numbers = #tpu.dot_dimension_numbers<[1], [0], [0], [1], [0, 0, 1, 1], [], []>} : vector<1x128xf32>, vector<128x64xf32>, vector<1x64xf32> -> vector<1x64xf32>
    %105 = arith.addf %100, %104 : vector<1x64xf32>
    %c4 = arith.constant 4 : index
    %c0_119 = arith.constant 0 : index
    %106 = vector.load %arg16[%c4, %c0_119] : memref<30x128xf32, #tpu.memory_space<vmem>>, vector<1x128xf32>
    %c4_120 = arith.constant 4 : index
    %c0_121 = arith.constant 0 : index
    %c0_122 = arith.constant 0 : index
    %107 = vector.load %arg8[%c4_120, %c0_121, %c0_122] : memref<30x128x64xf32, #tpu.memory_space<vmem>>, vector<1x128x64xf32>
    %108 = vector.shape_cast %107 : vector<1x128x64xf32> to vector<128x64xf32>
    %cst_123 = arith.constant dense<0.000000e+00> : vector<1x64xf32>
    %109 = tpu.matmul %106, %108, %cst_123 {dimension_numbers = #tpu.dot_dimension_numbers<[1], [0], [0], [1], [0, 0, 1, 1], [], []>} : vector<1x128xf32>, vector<128x64xf32>, vector<1x64xf32> -> vector<1x64xf32>
    %110 = arith.addf %105, %109 : vector<1x64xf32>
    %c5 = arith.constant 5 : index
    %c0_124 = arith.constant 0 : index
    %111 = vector.load %arg16[%c5, %c0_124] : memref<30x128xf32, #tpu.memory_space<vmem>>, vector<1x128xf32>
    %c5_125 = arith.constant 5 : index
    %c0_126 = arith.constant 0 : index
    %c0_127 = arith.constant 0 : index
    %112 = vector.load %arg8[%c5_125, %c0_126, %c0_127] : memref<30x128x64xf32, #tpu.memory_space<vmem>>, vector<1x128x64xf32>
    %113 = vector.shape_cast %112 : vector<1x128x64xf32> to vector<128x64xf32>
    %cst_128 = arith.constant dense<0.000000e+00> : vector<1x64xf32>
    %114 = tpu.matmul %111, %113, %cst_128 {dimension_numbers = #tpu.dot_dimension_numbers<[1], [0], [0], [1], [0, 0, 1, 1], [], []>} : vector<1x128xf32>, vector<128x64xf32>, vector<1x64xf32> -> vector<1x64xf32>
    %115 = arith.addf %110, %114 : vector<1x64xf32>
    %c6 = arith.constant 6 : index
    %c0_129 = arith.constant 0 : index
    %116 = vector.load %arg16[%c6, %c0_129] : memref<30x128xf32, #tpu.memory_space<vmem>>, vector<1x128xf32>
    %c6_130 = arith.constant 6 : index
    %c0_131 = arith.constant 0 : index
    %c0_132 = arith.constant 0 : index
    %117 = vector.load %arg8[%c6_130, %c0_131, %c0_132] : memref<30x128x64xf32, #tpu.memory_space<vmem>>, vector<1x128x64xf32>
    %118 = vector.shape_cast %117 : vector<1x128x64xf32> to vector<128x64xf32>
    %cst_133 = arith.constant dense<0.000000e+00> : vector<1x64xf32>
    %119 = tpu.matmul %116, %118, %cst_133 {dimension_numbers = #tpu.dot_dimension_numbers<[1], [0], [0], [1], [0, 0, 1, 1], [], []>} : vector<1x128xf32>, vector<128x64xf32>, vector<1x64xf32> -> vector<1x64xf32>
    %120 = arith.addf %115, %119 : vector<1x64xf32>
    %c7 = arith.constant 7 : index
    %c0_134 = arith.constant 0 : index
    %121 = vector.load %arg16[%c7, %c0_134] : memref<30x128xf32, #tpu.memory_space<vmem>>, vector<1x128xf32>
    %c7_135 = arith.constant 7 : index
    %c0_136 = arith.constant 0 : index
    %c0_137 = arith.constant 0 : index
    %122 = vector.load %arg8[%c7_135, %c0_136, %c0_137] : memref<30x128x64xf32, #tpu.memory_space<vmem>>, vector<1x128x64xf32>
    %123 = vector.shape_cast %122 : vector<1x128x64xf32> to vector<128x64xf32>
    %cst_138 = arith.constant dense<0.000000e+00> : vector<1x64xf32>
    %124 = tpu.matmul %121, %123, %cst_138 {dimension_numbers = #tpu.dot_dimension_numbers<[1], [0], [0], [1], [0, 0, 1, 1], [], []>} : vector<1x128xf32>, vector<128x64xf32>, vector<1x64xf32> -> vector<1x64xf32>
    %125 = arith.addf %120, %124 : vector<1x64xf32>
    %c8 = arith.constant 8 : index
    %c0_139 = arith.constant 0 : index
    %126 = vector.load %arg16[%c8, %c0_139] : memref<30x128xf32, #tpu.memory_space<vmem>>, vector<1x128xf32>
    %c8_140 = arith.constant 8 : index
    %c0_141 = arith.constant 0 : index
    %c0_142 = arith.constant 0 : index
    %127 = vector.load %arg8[%c8_140, %c0_141, %c0_142] : memref<30x128x64xf32, #tpu.memory_space<vmem>>, vector<1x128x64xf32>
    %128 = vector.shape_cast %127 : vector<1x128x64xf32> to vector<128x64xf32>
    %cst_143 = arith.constant dense<0.000000e+00> : vector<1x64xf32>
    %129 = tpu.matmul %126, %128, %cst_143 {dimension_numbers = #tpu.dot_dimension_numbers<[1], [0], [0], [1], [0, 0, 1, 1], [], []>} : vector<1x128xf32>, vector<128x64xf32>, vector<1x64xf32> -> vector<1x64xf32>
    %130 = arith.addf %125, %129 : vector<1x64xf32>
    %c9 = arith.constant 9 : index
    %c0_144 = arith.constant 0 : index
    %131 = vector.load %arg16[%c9, %c0_144] : memref<30x128xf32, #tpu.memory_space<vmem>>, vector<1x128xf32>
    %c9_145 = arith.constant 9 : index
    %c0_146 = arith.constant 0 : index
    %c0_147 = arith.constant 0 : index
    %132 = vector.load %arg8[%c9_145, %c0_146, %c0_147] : memref<30x128x64xf32, #tpu.memory_space<vmem>>, vector<1x128x64xf32>
    %133 = vector.shape_cast %132 : vector<1x128x64xf32> to vector<128x64xf32>
    %cst_148 = arith.constant dense<0.000000e+00> : vector<1x64xf32>
    %134 = tpu.matmul %131, %133, %cst_148 {dimension_numbers = #tpu.dot_dimension_numbers<[1], [0], [0], [1], [0, 0, 1, 1], [], []>} : vector<1x128xf32>, vector<128x64xf32>, vector<1x64xf32> -> vector<1x64xf32>
    %135 = arith.addf %130, %134 : vector<1x64xf32>
    %c10 = arith.constant 10 : index
    %c0_149 = arith.constant 0 : index
    %136 = vector.load %arg16[%c10, %c0_149] : memref<30x128xf32, #tpu.memory_space<vmem>>, vector<1x128xf32>
    %c10_150 = arith.constant 10 : index
    %c0_151 = arith.constant 0 : index
    %c0_152 = arith.constant 0 : index
    %137 = vector.load %arg8[%c10_150, %c0_151, %c0_152] : memref<30x128x64xf32, #tpu.memory_space<vmem>>, vector<1x128x64xf32>
    %138 = vector.shape_cast %137 : vector<1x128x64xf32> to vector<128x64xf32>
    %cst_153 = arith.constant dense<0.000000e+00> : vector<1x64xf32>
    %139 = tpu.matmul %136, %138, %cst_153 {dimension_numbers = #tpu.dot_dimension_numbers<[1], [0], [0], [1], [0, 0, 1, 1], [], []>} : vector<1x128xf32>, vector<128x64xf32>, vector<1x64xf32> -> vector<1x64xf32>
    %140 = arith.addf %135, %139 : vector<1x64xf32>
    %c11 = arith.constant 11 : index
    %c0_154 = arith.constant 0 : index
    %141 = vector.load %arg16[%c11, %c0_154] : memref<30x128xf32, #tpu.memory_space<vmem>>, vector<1x128xf32>
    %c11_155 = arith.constant 11 : index
    %c0_156 = arith.constant 0 : index
    %c0_157 = arith.constant 0 : index
    %142 = vector.load %arg8[%c11_155, %c0_156, %c0_157] : memref<30x128x64xf32, #tpu.memory_space<vmem>>, vector<1x128x64xf32>
    %143 = vector.shape_cast %142 : vector<1x128x64xf32> to vector<128x64xf32>
    %cst_158 = arith.constant dense<0.000000e+00> : vector<1x64xf32>
    %144 = tpu.matmul %141, %143, %cst_158 {dimension_numbers = #tpu.dot_dimension_numbers<[1], [0], [0], [1], [0, 0, 1, 1], [], []>} : vector<1x128xf32>, vector<128x64xf32>, vector<1x64xf32> -> vector<1x64xf32>
    %145 = arith.addf %140, %144 : vector<1x64xf32>
    %c12 = arith.constant 12 : index
    %c0_159 = arith.constant 0 : index
    %146 = vector.load %arg16[%c12, %c0_159] : memref<30x128xf32, #tpu.memory_space<vmem>>, vector<1x128xf32>
    %c12_160 = arith.constant 12 : index
    %c0_161 = arith.constant 0 : index
    %c0_162 = arith.constant 0 : index
    %147 = vector.load %arg8[%c12_160, %c0_161, %c0_162] : memref<30x128x64xf32, #tpu.memory_space<vmem>>, vector<1x128x64xf32>
    %148 = vector.shape_cast %147 : vector<1x128x64xf32> to vector<128x64xf32>
    %cst_163 = arith.constant dense<0.000000e+00> : vector<1x64xf32>
    %149 = tpu.matmul %146, %148, %cst_163 {dimension_numbers = #tpu.dot_dimension_numbers<[1], [0], [0], [1], [0, 0, 1, 1], [], []>} : vector<1x128xf32>, vector<128x64xf32>, vector<1x64xf32> -> vector<1x64xf32>
    %150 = arith.addf %145, %149 : vector<1x64xf32>
    %c13 = arith.constant 13 : index
    %c0_164 = arith.constant 0 : index
    %151 = vector.load %arg16[%c13, %c0_164] : memref<30x128xf32, #tpu.memory_space<vmem>>, vector<1x128xf32>
    %c13_165 = arith.constant 13 : index
    %c0_166 = arith.constant 0 : index
    %c0_167 = arith.constant 0 : index
    %152 = vector.load %arg8[%c13_165, %c0_166, %c0_167] : memref<30x128x64xf32, #tpu.memory_space<vmem>>, vector<1x128x64xf32>
    %153 = vector.shape_cast %152 : vector<1x128x64xf32> to vector<128x64xf32>
    %cst_168 = arith.constant dense<0.000000e+00> : vector<1x64xf32>
    %154 = tpu.matmul %151, %153, %cst_168 {dimension_numbers = #tpu.dot_dimension_numbers<[1], [0], [0], [1], [0, 0, 1, 1], [], []>} : vector<1x128xf32>, vector<128x64xf32>, vector<1x64xf32> -> vector<1x64xf32>
    %155 = arith.addf %150, %154 : vector<1x64xf32>
    %c14 = arith.constant 14 : index
    %c0_169 = arith.constant 0 : index
    %156 = vector.load %arg16[%c14, %c0_169] : memref<30x128xf32, #tpu.memory_space<vmem>>, vector<1x128xf32>
    %c14_170 = arith.constant 14 : index
    %c0_171 = arith.constant 0 : index
    %c0_172 = arith.constant 0 : index
    %157 = vector.load %arg8[%c14_170, %c0_171, %c0_172] : memref<30x128x64xf32, #tpu.memory_space<vmem>>, vector<1x128x64xf32>
    %158 = vector.shape_cast %157 : vector<1x128x64xf32> to vector<128x64xf32>
    %cst_173 = arith.constant dense<0.000000e+00> : vector<1x64xf32>
    %159 = tpu.matmul %156, %158, %cst_173 {dimension_numbers = #tpu.dot_dimension_numbers<[1], [0], [0], [1], [0, 0, 1, 1], [], []>} : vector<1x128xf32>, vector<128x64xf32>, vector<1x64xf32> -> vector<1x64xf32>
    %160 = arith.addf %155, %159 : vector<1x64xf32>
    %c15 = arith.constant 15 : index
    %c0_174 = arith.constant 0 : index
    %161 = vector.load %arg16[%c15, %c0_174] : memref<30x128xf32, #tpu.memory_space<vmem>>, vector<1x128xf32>
    %c15_175 = arith.constant 15 : index
    %c0_176 = arith.constant 0 : index
    %c0_177 = arith.constant 0 : index
    %162 = vector.load %arg8[%c15_175, %c0_176, %c0_177] : memref<30x128x64xf32, #tpu.memory_space<vmem>>, vector<1x128x64xf32>
    %163 = vector.shape_cast %162 : vector<1x128x64xf32> to vector<128x64xf32>
    %cst_178 = arith.constant dense<0.000000e+00> : vector<1x64xf32>
    %164 = tpu.matmul %161, %163, %cst_178 {dimension_numbers = #tpu.dot_dimension_numbers<[1], [0], [0], [1], [0, 0, 1, 1], [], []>} : vector<1x128xf32>, vector<128x64xf32>, vector<1x64xf32> -> vector<1x64xf32>
    %165 = arith.addf %160, %164 : vector<1x64xf32>
    %c16 = arith.constant 16 : index
    %c0_179 = arith.constant 0 : index
    %166 = vector.load %arg16[%c16, %c0_179] : memref<30x128xf32, #tpu.memory_space<vmem>>, vector<1x128xf32>
    %c16_180 = arith.constant 16 : index
    %c0_181 = arith.constant 0 : index
    %c0_182 = arith.constant 0 : index
    %167 = vector.load %arg8[%c16_180, %c0_181, %c0_182] : memref<30x128x64xf32, #tpu.memory_space<vmem>>, vector<1x128x64xf32>
    %168 = vector.shape_cast %167 : vector<1x128x64xf32> to vector<128x64xf32>
    %cst_183 = arith.constant dense<0.000000e+00> : vector<1x64xf32>
    %169 = tpu.matmul %166, %168, %cst_183 {dimension_numbers = #tpu.dot_dimension_numbers<[1], [0], [0], [1], [0, 0, 1, 1], [], []>} : vector<1x128xf32>, vector<128x64xf32>, vector<1x64xf32> -> vector<1x64xf32>
    %170 = arith.addf %165, %169 : vector<1x64xf32>
    %c17 = arith.constant 17 : index
    %c0_184 = arith.constant 0 : index
    %171 = vector.load %arg16[%c17, %c0_184] : memref<30x128xf32, #tpu.memory_space<vmem>>, vector<1x128xf32>
    %c17_185 = arith.constant 17 : index
    %c0_186 = arith.constant 0 : index
    %c0_187 = arith.constant 0 : index
    %172 = vector.load %arg8[%c17_185, %c0_186, %c0_187] : memref<30x128x64xf32, #tpu.memory_space<vmem>>, vector<1x128x64xf32>
    %173 = vector.shape_cast %172 : vector<1x128x64xf32> to vector<128x64xf32>
    %cst_188 = arith.constant dense<0.000000e+00> : vector<1x64xf32>
    %174 = tpu.matmul %171, %173, %cst_188 {dimension_numbers = #tpu.dot_dimension_numbers<[1], [0], [0], [1], [0, 0, 1, 1], [], []>} : vector<1x128xf32>, vector<128x64xf32>, vector<1x64xf32> -> vector<1x64xf32>
    %175 = arith.addf %170, %174 : vector<1x64xf32>
    %c18 = arith.constant 18 : index
    %c0_189 = arith.constant 0 : index
    %176 = vector.load %arg16[%c18, %c0_189] : memref<30x128xf32, #tpu.memory_space<vmem>>, vector<1x128xf32>
    %c18_190 = arith.constant 18 : index
    %c0_191 = arith.constant 0 : index
    %c0_192 = arith.constant 0 : index
    %177 = vector.load %arg8[%c18_190, %c0_191, %c0_192] : memref<30x128x64xf32, #tpu.memory_space<vmem>>, vector<1x128x64xf32>
    %178 = vector.shape_cast %177 : vector<1x128x64xf32> to vector<128x64xf32>
    %cst_193 = arith.constant dense<0.000000e+00> : vector<1x64xf32>
    %179 = tpu.matmul %176, %178, %cst_193 {dimension_numbers = #tpu.dot_dimension_numbers<[1], [0], [0], [1], [0, 0, 1, 1], [], []>} : vector<1x128xf32>, vector<128x64xf32>, vector<1x64xf32> -> vector<1x64xf32>
    %180 = arith.addf %175, %179 : vector<1x64xf32>
    %c19 = arith.constant 19 : index
    %c0_194 = arith.constant 0 : index
    %181 = vector.load %arg16[%c19, %c0_194] : memref<30x128xf32, #tpu.memory_space<vmem>>, vector<1x128xf32>
    %c19_195 = arith.constant 19 : index
    %c0_196 = arith.constant 0 : index
    %c0_197 = arith.constant 0 : index
    %182 = vector.load %arg8[%c19_195, %c0_196, %c0_197] : memref<30x128x64xf32, #tpu.memory_space<vmem>>, vector<1x128x64xf32>
    %183 = vector.shape_cast %182 : vector<1x128x64xf32> to vector<128x64xf32>
    %cst_198 = arith.constant dense<0.000000e+00> : vector<1x64xf32>
    %184 = tpu.matmul %181, %183, %cst_198 {dimension_numbers = #tpu.dot_dimension_numbers<[1], [0], [0], [1], [0, 0, 1, 1], [], []>} : vector<1x128xf32>, vector<128x64xf32>, vector<1x64xf32> -> vector<1x64xf32>
    %185 = arith.addf %180, %184 : vector<1x64xf32>
    %c20 = arith.constant 20 : index
    %c0_199 = arith.constant 0 : index
    %186 = vector.load %arg16[%c20, %c0_199] : memref<30x128xf32, #tpu.memory_space<vmem>>, vector<1x128xf32>
    %c20_200 = arith.constant 20 : index
    %c0_201 = arith.constant 0 : index
    %c0_202 = arith.constant 0 : index
    %187 = vector.load %arg8[%c20_200, %c0_201, %c0_202] : memref<30x128x64xf32, #tpu.memory_space<vmem>>, vector<1x128x64xf32>
    %188 = vector.shape_cast %187 : vector<1x128x64xf32> to vector<128x64xf32>
    %cst_203 = arith.constant dense<0.000000e+00> : vector<1x64xf32>
    %189 = tpu.matmul %186, %188, %cst_203 {dimension_numbers = #tpu.dot_dimension_numbers<[1], [0], [0], [1], [0, 0, 1, 1], [], []>} : vector<1x128xf32>, vector<128x64xf32>, vector<1x64xf32> -> vector<1x64xf32>
    %190 = arith.addf %185, %189 : vector<1x64xf32>
    %c21 = arith.constant 21 : index
    %c0_204 = arith.constant 0 : index
    %191 = vector.load %arg16[%c21, %c0_204] : memref<30x128xf32, #tpu.memory_space<vmem>>, vector<1x128xf32>
    %c21_205 = arith.constant 21 : index
    %c0_206 = arith.constant 0 : index
    %c0_207 = arith.constant 0 : index
    %192 = vector.load %arg8[%c21_205, %c0_206, %c0_207] : memref<30x128x64xf32, #tpu.memory_space<vmem>>, vector<1x128x64xf32>
    %193 = vector.shape_cast %192 : vector<1x128x64xf32> to vector<128x64xf32>
    %cst_208 = arith.constant dense<0.000000e+00> : vector<1x64xf32>
    %194 = tpu.matmul %191, %193, %cst_208 {dimension_numbers = #tpu.dot_dimension_numbers<[1], [0], [0], [1], [0, 0, 1, 1], [], []>} : vector<1x128xf32>, vector<128x64xf32>, vector<1x64xf32> -> vector<1x64xf32>
    %195 = arith.addf %190, %194 : vector<1x64xf32>
    %c22 = arith.constant 22 : index
    %c0_209 = arith.constant 0 : index
    %196 = vector.load %arg16[%c22, %c0_209] : memref<30x128xf32, #tpu.memory_space<vmem>>, vector<1x128xf32>
    %c22_210 = arith.constant 22 : index
    %c0_211 = arith.constant 0 : index
    %c0_212 = arith.constant 0 : index
    %197 = vector.load %arg8[%c22_210, %c0_211, %c0_212] : memref<30x128x64xf32, #tpu.memory_space<vmem>>, vector<1x128x64xf32>
    %198 = vector.shape_cast %197 : vector<1x128x64xf32> to vector<128x64xf32>
    %cst_213 = arith.constant dense<0.000000e+00> : vector<1x64xf32>
    %199 = tpu.matmul %196, %198, %cst_213 {dimension_numbers = #tpu.dot_dimension_numbers<[1], [0], [0], [1], [0, 0, 1, 1], [], []>} : vector<1x128xf32>, vector<128x64xf32>, vector<1x64xf32> -> vector<1x64xf32>
    %200 = arith.addf %195, %199 : vector<1x64xf32>
    %c23 = arith.constant 23 : index
    %c0_214 = arith.constant 0 : index
    %201 = vector.load %arg16[%c23, %c0_214] : memref<30x128xf32, #tpu.memory_space<vmem>>, vector<1x128xf32>
    %c23_215 = arith.constant 23 : index
    %c0_216 = arith.constant 0 : index
    %c0_217 = arith.constant 0 : index
    %202 = vector.load %arg8[%c23_215, %c0_216, %c0_217] : memref<30x128x64xf32, #tpu.memory_space<vmem>>, vector<1x128x64xf32>
    %203 = vector.shape_cast %202 : vector<1x128x64xf32> to vector<128x64xf32>
    %cst_218 = arith.constant dense<0.000000e+00> : vector<1x64xf32>
    %204 = tpu.matmul %201, %203, %cst_218 {dimension_numbers = #tpu.dot_dimension_numbers<[1], [0], [0], [1], [0, 0, 1, 1], [], []>} : vector<1x128xf32>, vector<128x64xf32>, vector<1x64xf32> -> vector<1x64xf32>
    %205 = arith.addf %200, %204 : vector<1x64xf32>
    %c24 = arith.constant 24 : index
    %c0_219 = arith.constant 0 : index
    %206 = vector.load %arg16[%c24, %c0_219] : memref<30x128xf32, #tpu.memory_space<vmem>>, vector<1x128xf32>
    %c24_220 = arith.constant 24 : index
    %c0_221 = arith.constant 0 : index
    %c0_222 = arith.constant 0 : index
    %207 = vector.load %arg8[%c24_220, %c0_221, %c0_222] : memref<30x128x64xf32, #tpu.memory_space<vmem>>, vector<1x128x64xf32>
    %208 = vector.shape_cast %207 : vector<1x128x64xf32> to vector<128x64xf32>
    %cst_223 = arith.constant dense<0.000000e+00> : vector<1x64xf32>
    %209 = tpu.matmul %206, %208, %cst_223 {dimension_numbers = #tpu.dot_dimension_numbers<[1], [0], [0], [1], [0, 0, 1, 1], [], []>} : vector<1x128xf32>, vector<128x64xf32>, vector<1x64xf32> -> vector<1x64xf32>
    %210 = arith.addf %205, %209 : vector<1x64xf32>
    %c25 = arith.constant 25 : index
    %c0_224 = arith.constant 0 : index
    %211 = vector.load %arg16[%c25, %c0_224] : memref<30x128xf32, #tpu.memory_space<vmem>>, vector<1x128xf32>
    %c25_225 = arith.constant 25 : index
    %c0_226 = arith.constant 0 : index
    %c0_227 = arith.constant 0 : index
    %212 = vector.load %arg8[%c25_225, %c0_226, %c0_227] : memref<30x128x64xf32, #tpu.memory_space<vmem>>, vector<1x128x64xf32>
    %213 = vector.shape_cast %212 : vector<1x128x64xf32> to vector<128x64xf32>
    %cst_228 = arith.constant dense<0.000000e+00> : vector<1x64xf32>
    %214 = tpu.matmul %211, %213, %cst_228 {dimension_numbers = #tpu.dot_dimension_numbers<[1], [0], [0], [1], [0, 0, 1, 1], [], []>} : vector<1x128xf32>, vector<128x64xf32>, vector<1x64xf32> -> vector<1x64xf32>
    %215 = arith.addf %210, %214 : vector<1x64xf32>
    %c26 = arith.constant 26 : index
    %c0_229 = arith.constant 0 : index
    %216 = vector.load %arg16[%c26, %c0_229] : memref<30x128xf32, #tpu.memory_space<vmem>>, vector<1x128xf32>
    %c26_230 = arith.constant 26 : index
    %c0_231 = arith.constant 0 : index
    %c0_232 = arith.constant 0 : index
    %217 = vector.load %arg8[%c26_230, %c0_231, %c0_232] : memref<30x128x64xf32, #tpu.memory_space<vmem>>, vector<1x128x64xf32>
    %218 = vector.shape_cast %217 : vector<1x128x64xf32> to vector<128x64xf32>
    %cst_233 = arith.constant dense<0.000000e+00> : vector<1x64xf32>
    %219 = tpu.matmul %216, %218, %cst_233 {dimension_numbers = #tpu.dot_dimension_numbers<[1], [0], [0], [1], [0, 0, 1, 1], [], []>} : vector<1x128xf32>, vector<128x64xf32>, vector<1x64xf32> -> vector<1x64xf32>
    %220 = arith.addf %215, %219 : vector<1x64xf32>
    %c27 = arith.constant 27 : index
    %c0_234 = arith.constant 0 : index
    %221 = vector.load %arg16[%c27, %c0_234] : memref<30x128xf32, #tpu.memory_space<vmem>>, vector<1x128xf32>
    %c27_235 = arith.constant 27 : index
    %c0_236 = arith.constant 0 : index
    %c0_237 = arith.constant 0 : index
    %222 = vector.load %arg8[%c27_235, %c0_236, %c0_237] : memref<30x128x64xf32, #tpu.memory_space<vmem>>, vector<1x128x64xf32>
    %223 = vector.shape_cast %222 : vector<1x128x64xf32> to vector<128x64xf32>
    %cst_238 = arith.constant dense<0.000000e+00> : vector<1x64xf32>
    %224 = tpu.matmul %221, %223, %cst_238 {dimension_numbers = #tpu.dot_dimension_numbers<[1], [0], [0], [1], [0, 0, 1, 1], [], []>} : vector<1x128xf32>, vector<128x64xf32>, vector<1x64xf32> -> vector<1x64xf32>
    %225 = arith.addf %220, %224 : vector<1x64xf32>
    %c28 = arith.constant 28 : index
    %c0_239 = arith.constant 0 : index
    %226 = vector.load %arg16[%c28, %c0_239] : memref<30x128xf32, #tpu.memory_space<vmem>>, vector<1x128xf32>
    %c28_240 = arith.constant 28 : index
    %c0_241 = arith.constant 0 : index
    %c0_242 = arith.constant 0 : index
    %227 = vector.load %arg8[%c28_240, %c0_241, %c0_242] : memref<30x128x64xf32, #tpu.memory_space<vmem>>, vector<1x128x64xf32>
    %228 = vector.shape_cast %227 : vector<1x128x64xf32> to vector<128x64xf32>
    %cst_243 = arith.constant dense<0.000000e+00> : vector<1x64xf32>
    %229 = tpu.matmul %226, %228, %cst_243 {dimension_numbers = #tpu.dot_dimension_numbers<[1], [0], [0], [1], [0, 0, 1, 1], [], []>} : vector<1x128xf32>, vector<128x64xf32>, vector<1x64xf32> -> vector<1x64xf32>
    %230 = arith.addf %225, %229 : vector<1x64xf32>
    %c29 = arith.constant 29 : index
    %c0_244 = arith.constant 0 : index
    %231 = vector.load %arg16[%c29, %c0_244] : memref<30x128xf32, #tpu.memory_space<vmem>>, vector<1x128xf32>
    %c29_245 = arith.constant 29 : index
    %c0_246 = arith.constant 0 : index
    %c0_247 = arith.constant 0 : index
    %232 = vector.load %arg8[%c29_245, %c0_246, %c0_247] : memref<30x128x64xf32, #tpu.memory_space<vmem>>, vector<1x128x64xf32>
    %233 = vector.shape_cast %232 : vector<1x128x64xf32> to vector<128x64xf32>
    %cst_248 = arith.constant dense<0.000000e+00> : vector<1x64xf32>
    %234 = tpu.matmul %231, %233, %cst_248 {dimension_numbers = #tpu.dot_dimension_numbers<[1], [0], [0], [1], [0, 0, 1, 1], [], []>} : vector<1x128xf32>, vector<128x64xf32>, vector<1x64xf32> -> vector<1x64xf32>
    %235 = arith.addf %230, %234 : vector<1x64xf32>
    %c0_249 = arith.constant 0 : index
    %c0_250 = arith.constant 0 : index
    %c0_251 = arith.constant 0 : index
    %236 = vector.load %arg10[%c0_249, %c0_250, %c0_251] : memref<1x1x64xf32, #tpu.memory_space<vmem>>, vector<1x1x64xf32>
    %237 = vector.shape_cast %236 : vector<1x1x64xf32> to vector<1x64xf32>
    %238 = vector.shape_cast %235 : vector<1x64xf32> to vector<1x1x64xf32>
    tpu.vector_store %arg10[%c0_249, %c0_250, %c0_251], %238 {strides = array<i32>} : memref<1x1x64xf32, #tpu.memory_space<vmem>>, vector<1x1x64xf32>,
    return
  }
  func.func @transform_0(%arg0: i32) -> (i32, i32, i32) {
    %c0_i32 = arith.constant 0 : i32
    %c0_i32_0 = arith.constant 0 : i32
    %c0_i32_1 = arith.constant 0 : i32
    return %arg0, %c0_i32, %c0_i32_0 : i32, i32, i32
  }
  func.func @transform_1(%arg0: i32) -> (i32, i32, i32) {
    %c0_i32 = arith.constant 0 : i32
    %c0_i32_0 = arith.constant 0 : i32
    %c0_i32_1 = arith.constant 0 : i32
    %c0_i32_2 = arith.constant 0 : i32
    return %c0_i32, %c0_i32_0, %c0_i32_1 : i32, i32, i32
  }
  func.func @transform_2(%arg0: i32) -> (i32, i32) {
    %c0_i32 = arith.constant 0 : i32
    %c0_i32_0 = arith.constant 0 : i32
    %c0_i32_1 = arith.constant 0 : i32
    return %c0_i32, %c0_i32_0 : i32, i32
  }
  func.func @transform_3(%arg0: i32) -> (i32, i32, i32) {
    %c0_i32 = arith.constant 0 : i32
    %c0_i32_0 = arith.constant 0 : i32
    %c0_i32_1 = arith.constant 0 : i32
    %c0_i32_2 = arith.constant 0 : i32
    return %c0_i32, %c0_i32_0, %c0_i32_1 : i32, i32, i32
  }
  func.func @transform_4(%arg0: i32) -> (i32, i32) {
    %c0_i32 = arith.constant 0 : i32
    %c0_i32_0 = arith.constant 0 : i32
    %c0_i32_1 = arith.constant 0 : i32
    return %c0_i32, %c0_i32_0 : i32, i32
  }
  func.func @transform_5(%arg0: i32) -> (i32, i32, i32) {
    %c0_i32 = arith.constant 0 : i32
    %c0_i32_0 = arith.constant 0 : i32
    %c0_i32_1 = arith.constant 0 : i32
    %c0_i32_2 = arith.constant 0 : i32
    return %c0_i32, %c0_i32_0, %c0_i32_1 : i32, i32, i32
  }
  func.func @transform_6(%arg0: i32) -> (i32, i32) {
    %c0_i32 = arith.constant 0 : i32
    %c0_i32_0 = arith.constant 0 : i32
    %c0_i32_1 = arith.constant 0 : i32
    return %c0_i32, %c0_i32_0 : i32, i32
  }
  func.func @transform_7(%arg0: i32) -> (i32, i32, i32) {
    %c0_i32 = arith.constant 0 : i32
    %c0_i32_0 = arith.constant 0 : i32
    %c0_i32_1 = arith.constant 0 : i32
    %c0_i32_2 = arith.constant 0 : i32
    return %c0_i32, %c0_i32_0, %c0_i32_1 : i32, i32, i32
  }
  func.func @transform_8(%arg0: i32) -> (i32, i32) {
    %c0_i32 = arith.constant 0 : i32
    %c0_i32_0 = arith.constant 0 : i32
    %c0_i32_1 = arith.constant 0 : i32
    return %c0_i32, %c0_i32_0 : i32, i32
  }
  func.func @transform_9(%arg0: i32) -> (i32, i32, i32) {
    %c0_i32 = arith.constant 0 : i32
    %c0_i32_0 = arith.constant 0 : i32
    %c0_i32_1 = arith.constant 0 : i32
    return %arg0, %c0_i32, %c0_i32_0 : i32, i32, i32
  }
}

</mosaic_0001>

<llo_original>
// kernel: frequency_domain_forward.1
$region0: #{frequency_domain_forward.1}
  #allocation0 [shape = 'u32[]', space=smem, size = 0x4, offset = 0x4, fixed_abs, tag = 'smem constant byte address 0x4 - core index']
  #allocation1 [shape = 'u32[144,128]{1,0:T(1,128)}', space=vmem, size = 0x12000, scoped, tag = 'internal scratch']
  #allocation2 [shape = 'f32[248,32]{1,0:T(8,128)}', space=vmem, size = 0x1f000, scoped, tag = 'scratch operand']
  #allocation3 [shape = 'f32[126,32]{1,0:T(8,128)}', space=vmem, size = 0x10000, scoped, tag = 'scratch operand']
  #allocation4 [shape = 'f32[124,64]{1,0:T(8,128)}', space=vmem, size = 0x10000, scoped, tag = 'scratch operand']
  #allocation5 [shape = 'f32[62,64]{1,0:T(8,128)}', space=vmem, size = 0x8000, scoped, tag = 'scratch operand']
  #allocation6 [shape = 'f32[60,128]{1,0:T(8,128)}', space=vmem, size = 0x8000, scoped, tag = 'scratch operand']
  #allocation7 [shape = 'f32[30,128]{1,0:T(8,128)}', space=vmem, size = 0x4000, scoped, tag = 'scratch operand']
  %s0 = inlined_call_operand.vmem [shape: f32[2,250,64], index: 0, kind: input, shape index: {}]
  %s1 = inlined_call_operand.vmem [shape: f32[3,64,32], index: 1, kind: input, shape index: {}]
  %s2 = inlined_call_operand.vmem [shape: f32[1,32], index: 2, kind: input, shape index: {}]
  %s3 = inlined_call_operand.vmem [shape: f32[3,32,64], index: 3, kind: input, shape index: {}]
  %s4 = inlined_call_operand.vmem [shape: f32[1,64], index: 4, kind: input, shape index: {}]
  %s5 = inlined_call_operand.vmem [shape: f32[3,64,128], index: 5, kind: input, shape index: {}]
  %s6 = inlined_call_operand.vmem [shape: f32[1,128], index: 6, kind: input, shape index: {}]
  %s7 = inlined_call_operand.vmem [shape: f32[30,128,64], index: 7, kind: input, shape index: {}]
  %s8 = inlined_call_operand.vmem [shape: f32[1,64], index: 8, kind: input, shape index: {}]
  %s9 = inlined_call_operand.hbm [shape: f32[2,1,64], index: 9, kind: output, shape index: {}]
  %s10 = sld [smem:[#allocation0]]
  $region69: #{frequency_domain_forward.1} parent=0
    _
  %s12 = ssub.s32 1, %s10
  %s13 = scalar_select 0, %s12, %s10
  $region1: #{frequency_domain_forward.1} parent=0
    #allocation8 [shape = 'u8[1024]{0}', space=vmem, size = 0x400, scoped, tag = 'output window, operand 0']
    #allocation9 [shape = 's32[2]{0}', space=sflag, size = 0x8, scoped, tag = 'scoped memory for frequency_domain_forward.1']
    %14 = vsyncpa [#allocation9], 0
    %s15 = scalar_lea.sflag [#allocation9], 1
    %16 = vsyncpa %s15, 0
    loop: start=0, step=1, limit=4
    $region2: #{frequency_domain_forward.1} parent=1 // loop_pre_header
      _
    $region3: #{frequency_domain_forward.1} parent=1 // loop_header
      %s18 = sphi 0, %s22
      %p19 = scmp.ge.s32.totalorder %s18, 4
      %s28 = sphi 0, %s30
      %s31 = sphi 0, %s28
      %s32 = sphi 0, %s31
      %s48 = sphi 0, %s32
      %s52 = sphi 0, %s52
      %s54 = sphi 0, %s52
      %s55 = sphi 0, %s54
      %s69 = sphi 0, %s55
      %s73 = sphi 0, %s73
      %s75 = sphi 0, %s73
      %s76 = sphi 0, %s75
      %s90 = sphi 0, %s76
      %s94 = sphi 0, %s94
      %s96 = sphi 0, %s94
      %s97 = sphi 0, %s96
      %s111 = sphi 0, %s97
      %s115 = sphi 0, %s115
      %s117 = sphi 0, %s115
      %s118 = sphi 0, %s117
      %s132 = sphi 0, %s118
      %s136 = sphi 0, %s136
      %s138 = sphi 0, %s136
      %s139 = sphi 0, %s138
      %s153 = sphi 0, %s139
      %s157 = sphi 0, %s157
      %s159 = sphi 0, %s157
      %s160 = sphi 0, %s159
      %s174 = sphi 0, %s160
      %s178 = sphi 0, %s178
      %s180 = sphi 0, %s178
      %s181 = sphi 0, %s180
      %s195 = sphi 0, %s181
      %s199 = sphi 0, %s199
      %s201 = sphi 0, %s199
      %s202 = sphi 0, %s201
      %s216 = sphi 0, %s202
      %s222 = sphi 0, %s224
      %s225 = sphi 0, %s222
      %s226 = sphi 0, %s225
      %s242 = sphi 0, %s226
    $region4: #{frequency_domain_forward.1} parent=1 // loop_header_branch
      %21 = sbr.rel (%p19) target = $region8
    $region5: #{frequency_domain_forward.1} parent=1 // loop_body
      %s23 = ssub.s32 %s18, 1
      %s24 = ssub.s32 %s18, 2
      %s25 = sadd.s32 %s18, 1
      %s26 = ssub.s32 %s18, %s25
      %p27 = scmp.eq.s32.totalorder %s26, 0
      %s29 = sadd.s32 %s28, 1
      %s30 = scalar_select %p27, %s28, %s29
      %p33 = pneg %p27
      %p34 = scmp.eq.s32.totalorder %s18, 1
      %p35 = por %p33, %p34
      %p36 = scmp.ne.s32.totalorder %s28, %s31
      %p37 = scmp.eq.s32.totalorder %s18, 0
      %p38 = por %p36, %p37
      %p39 = scmp.ne.s32.totalorder %s28, %s31
      %p40 = scmp.eq.s32.totalorder %s23, 1
      %p41 = por %p39, %p40
      %p42 = scmp.ne.s32.totalorder %s31, %s32
      %p43 = scmp.eq.s32.totalorder %s23, 0
      %p44 = por %p42, %p43
      %p45 = scmp.ne.s32.totalorder %s31, %s32
      %p46 = scmp.eq.s32.totalorder %s24, 1
      %p47 = por %p45, %p46
      %p49 = scmp.ne.s32.totalorder %s32, %s48
      %p50 = scmp.eq.s32.totalorder %s24, 0
      %p51 = por %p49, %p50
      %s53 = sadd.s32 %s52, 1
      %p56 = scmp.eq.s32.totalorder %s18, 1
      %p57 = scmp.ne.s32.totalorder %s52, %s54
      %p58 = scmp.eq.s32.totalorder %s18, 0
      %p59 = por %p57, %p58
      %p60 = scmp.ne.s32.totalorder %s52, %s54
      %p61 = scmp.eq.s32.totalorder %s23, 1
      %p62 = por %p60, %p61
      %p63 = scmp.ne.s32.totalorder %s54, %s55
      %p64 = scmp.eq.s32.totalorder %s23, 0
      %p65 = por %p63, %p64
      %p66 = scmp.ne.s32.totalorder %s54, %s55
      %p67 = scmp.eq.s32.totalorder %s24, 1
      %p68 = por %p66, %p67
      %p70 = scmp.ne.s32.totalorder %s55, %s69
      %p71 = scmp.eq.s32.totalorder %s24, 0
      %p72 = por %p70, %p71
      %s74 = sadd.s32 %s73, 1
      %p77 = scmp.eq.s32.totalorder %s18, 1
      %p78 = scmp.ne.s32.totalorder %s73, %s75
      %p79 = scmp.eq.s32.totalorder %s18, 0
      %p80 = por %p78, %p79
      %p81 = scmp.ne.s32.totalorder %s73, %s75
      %p82 = scmp.eq.s32.totalorder %s23, 1
      %p83 = por %p81, %p82
      %p84 = scmp.ne.s32.totalorder %s75, %s76
      %p85 = scmp.eq.s32.totalorder %s23, 0
      %p86 = por %p84, %p85
      %p87 = scmp.ne.s32.totalorder %s75, %s76
      %p88 = scmp.eq.s32.totalorder %s24, 1
      %p89 = por %p87, %p88
      %p91 = scmp.ne.s32.totalorder %s76, %s90
      %p92 = scmp.eq.s32.totalorder %s24, 0
      %p93 = por %p91, %p92
      %s95 = sadd.s32 %s94, 1
      %p98 = scmp.eq.s32.totalorder %s18, 1
      %p99 = scmp.ne.s32.totalorder %s94, %s96
      %p100 = scmp.eq.s32.totalorder %s18, 0
      %p101 = por %p99, %p100
      %p102 = scmp.ne.s32.totalorder %s94, %s96
      %p103 = scmp.eq.s32.totalorder %s23, 1
      %p104 = por %p102, %p103
      %p105 = scmp.ne.s32.totalorder %s96, %s97
      %p106 = scmp.eq.s32.totalorder %s23, 0
      %p107 = por %p105, %p106
      %p108 = scmp.ne.s32.totalorder %s96, %s97
      %p109 = scmp.eq.s32.totalorder %s24, 1
      %p110 = por %p108, %p109
      %p112 = scmp.ne.s32.totalorder %s97, %s111
      %p113 = scmp.eq.s32.totalorder %s24, 0
      %p114 = por %p112, %p113
      %s116 = sadd.s32 %s115, 1
      %p119 = scmp.eq.s32.totalorder %s18, 1
      %p120 = scmp.ne.s32.totalorder %s115, %s117
      %p121 = scmp.eq.s32.totalorder %s18, 0
      %p122 = por %p120, %p121
      %p123 = scmp.ne.s32.totalorder %s115, %s117
      %p124 = scmp.eq.s32.totalorder %s23, 1
      %p125 = por %p123, %p124
      %p126 = scmp.ne.s32.totalorder %s117, %s118
      %p127 = scmp.eq.s32.totalorder %s23, 0
      %p128 = por %p126, %p127
      %p129 = scmp.ne.s32.totalorder %s117, %s118
      %p130 = scmp.eq.s32.totalorder %s24, 1
      %p131 = por %p129, %p130
      %p133 = scmp.ne.s32.totalorder %s118, %s132
      %p134 = scmp.eq.s32.totalorder %s24, 0
      %p135 = por %p133, %p134
      %s137 = sadd.s32 %s136, 1
      %p140 = scmp.eq.s32.totalorder %s18, 1
      %p141 = scmp.ne.s32.totalorder %s136, %s138
      %p142 = scmp.eq.s32.totalorder %s18, 0
      %p143 = por %p141, %p142
      %p144 = scmp.ne.s32.totalorder %s136, %s138
      %p145 = scmp.eq.s32.totalorder %s23, 1
      %p146 = por %p144, %p145
      %p147 = scmp.ne.s32.totalorder %s138, %s139
      %p148 = scmp.eq.s32.totalorder %s23, 0
      %p149 = por %p147, %p148
      %p150 = scmp.ne.s32.totalorder %s138, %s139
      %p151 = scmp.eq.s32.totalorder %s24, 1
      %p152 = por %p150, %p151
      %p154 = scmp.ne.s32.totalorder %s139, %s153
      %p155 = scmp.eq.s32.totalorder %s24, 0
      %p156 = por %p154, %p155
      %s158 = sadd.s32 %s157, 1
      %p161 = scmp.eq.s32.totalorder %s18, 1
      %p162 = scmp.ne.s32.totalorder %s157, %s159
      %p163 = scmp.eq.s32.totalorder %s18, 0
      %p164 = por %p162, %p163
      %p165 = scmp.ne.s32.totalorder %s157, %s159
      %p166 = scmp.eq.s32.totalorder %s23, 1
      %p167 = por %p165, %p166
      %p168 = scmp.ne.s32.totalorder %s159, %s160
      %p169 = scmp.eq.s32.totalorder %s23, 0
      %p170 = por %p168, %p169
      %p171 = scmp.ne.s32.totalorder %s159, %s160
      %p172 = scmp.eq.s32.totalorder %s24, 1
      %p173 = por %p171, %p172
      %p175 = scmp.ne.s32.totalorder %s160, %s174
      %p176 = scmp.eq.s32.totalorder %s24, 0
      %p177 = por %p175, %p176
      %s179 = sadd.s32 %s178, 1
      %p182 = scmp.eq.s32.totalorder %s18, 1
      %p183 = scmp.ne.s32.totalorder %s178, %s180
      %p184 = scmp.eq.s32.totalorder %s18, 0
      %p185 = por %p183, %p184
      %p186 = scmp.ne.s32.totalorder %s178, %s180
      %p187 = scmp.eq.s32.totalorder %s23, 1
      %p188 = por %p186, %p187
      %p189 = scmp.ne.s32.totalorder %s180, %s181
      %p190 = scmp.eq.s32.totalorder %s23, 0
      %p191 = por %p189, %p190
      %p192 = scmp.ne.s32.totalorder %s180, %s181
      %p193 = scmp.eq.s32.totalorder %s24, 1
      %p194 = por %p192, %p193
      %p196 = scmp.ne.s32.totalorder %s181, %s195
      %p197 = scmp.eq.s32.totalorder %s24, 0
      %p198 = por %p196, %p197
      %s200 = sadd.s32 %s199, 1
      %p203 = scmp.eq.s32.totalorder %s18, 1
      %p204 = scmp.ne.s32.totalorder %s199, %s201
      %p205 = scmp.eq.s32.totalorder %s18, 0
      %p206 = por %p204, %p205
      %p207 = scmp.ne.s32.totalorder %s199, %s201
      %p208 = scmp.eq.s32.totalorder %s23, 1
      %p209 = por %p207, %p208
      %p210 = scmp.ne.s32.totalorder %s201, %s202
      %p211 = scmp.eq.s32.totalorder %s23, 0
      %p212 = por %p210, %p211
      %p213 = scmp.ne.s32.totalorder %s201, %s202
      %p214 = scmp.eq.s32.totalorder %s24, 1
      %p215 = por %p213, %p214
      %p217 = scmp.ne.s32.totalorder %s202, %s216
      %p218 = scmp.eq.s32.totalorder %s24, 0
      %p219 = por %p217, %p218
      %s220 = ssub.s32 %s18, %s25
      %p221 = scmp.eq.s32.totalorder %s220, 0
      %s223 = sadd.s32 %s222, 1
      %s224 = scalar_select %p221, %s222, %s223
      %p227 = pneg %p221
      %p228 = scmp.eq.s32.totalorder %s18, 1
      %p229 = por %p227, %p228
      %p230 = scmp.ne.s32.totalorder %s222, %s225
      %p231 = scmp.eq.s32.totalorder %s18, 0
      %p232 = por %p230, %p231
      %p233 = scmp.ne.s32.totalorder %s222, %s225
      %p234 = scmp.eq.s32.totalorder %s23, 1
      %p235 = por %p233, %p234
      %p236 = scmp.ne.s32.totalorder %s225, %s226
      %p237 = scmp.eq.s32.totalorder %s23, 0
      %p238 = por %p236, %p237
      %p239 = scmp.ne.s32.totalorder %s225, %s226
      %p240 = scmp.eq.s32.totalorder %s24, 1
      %p241 = por %p239, %p240
      %p243 = scmp.ne.s32.totalorder %s226, %s242
      %p244 = scmp.eq.s32.totalorder %s24, 0
      %p245 = por %p243, %p244
      %p246 = scmp.le.s32.totalorder 1, %s18
      %p247 = scmp.lt.s32.totalorder %s18, 3
      %p248 = pnand %p246, %p247
      %p249 = pneg %p248
      // Predicated region
      $region9: #{frequency_domain_forward.1} parent=5 // pred_check
        _
      $region10: #{frequency_domain_forward.1} parent=5 // pred_check_branch
        %251 = sbr.rel (%p248) target = $region12
      $region11: #{frequency_domain_forward.1} parent=5 // pred_region
        %s252 = ssub.s32 %s18, 1
        // Predicated region
        $region13: #{frequency_domain_forward.1} parent=11 // pred_check
          %p253 = pneg %p65
        $region14: #{frequency_domain_forward.1} parent=11 // pred_check_branch
          %255 = sbr.rel (%p253) target = $region16
        $region15: #{frequency_domain_forward.1} parent=11 // pred_region
          _
        $region16: #{frequency_domain_forward.1} parent=11 // pred_fallthru
          _
        // Predicated region
        $region17: #{frequency_domain_forward.1} parent=11 // pred_check
          %p256 = pneg %p86
        $region18: #{frequency_domain_forward.1} parent=11 // pred_check_branch
          %258 = sbr.rel (%p256) target = $region20
        $region19: #{frequency_domain_forward.1} parent=11 // pred_region
          _
        $region20: #{frequency_domain_forward.1} parent=11 // pred_fallthru
          _
        // Predicated region
        $region21: #{frequency_domain_forward.1} parent=11 // pred_check
          %p259 = pneg %p107
        $region22: #{frequency_domain_forward.1} parent=11 // pred_check_branch
          %261 = sbr.rel (%p259) target = $region24
        $region23: #{frequency_domain_forward.1} parent=11 // pred_region
          _
        $region24: #{frequency_domain_forward.1} parent=11 // pred_fallthru
          _
        // Predicated region
        $region25: #{frequency_domain_forward.1} parent=11 // pred_check
          %p262 = pneg %p128
        $region26: #{frequency_domain_forward.1} parent=11 // pred_check_branch
          %264 = sbr.rel (%p262) target = $region28
        $region27: #{frequency_domain_forward.1} parent=11 // pred_region
          _
        $region28: #{frequency_domain_forward.1} parent=11 // pred_fallthru
          _
        // Predicated region
        $region29: #{frequency_domain_forward.1} parent=11 // pred_check
          %p265 = pneg %p149
        $region30: #{frequency_domain_forward.1} parent=11 // pred_check_branch
          %267 = sbr.rel (%p265) target = $region32
        $region31: #{frequency_domain_forward.1} parent=11 // pred_region
          _
        $region32: #{frequency_domain_forward.1} parent=11 // pred_fallthru
          _
        // Predicated region
        $region33: #{frequency_domain_forward.1} parent=11 // pred_check
          %p268 = pneg %p170
        $region34: #{frequency_domain_forward.1} parent=11 // pred_check_branch
          %270 = sbr.rel (%p268) target = $region36
        $region35: #{frequency_domain_forward.1} parent=11 // pred_region
          _
        $region36: #{frequency_domain_forward.1} parent=11 // pred_fallthru
          _
        // Predicated region
        $region37: #{frequency_domain_forward.1} parent=11 // pred_check
          %p271 = pneg %p191
        $region38: #{frequency_domain_forward.1} parent=11 // pred_check_branch
          %273 = sbr.rel (%p271) target = $region40
        $region39: #{frequency_domain_forward.1} parent=11 // pred_region
          _
        $region40: #{frequency_domain_forward.1} parent=11 // pred_fallthru
          _
        // Predicated region
        $region41: #{frequency_domain_forward.1} parent=11 // pred_check
          %p274 = pneg %p212
        $region42: #{frequency_domain_forward.1} parent=11 // pred_check_branch
          %276 = sbr.rel (%p274) target = $region44
        $region43: #{frequency_domain_forward.1} parent=11 // pred_region
          _
        $region44: #{frequency_domain_forward.1} parent=11 // pred_fallthru
          _
      $region12: #{frequency_domain_forward.1} parent=5 // pred_fallthru
        _
      %p277 = scmp.lt.s32.totalorder %s18, 2
      // Predicated region
      $region45: #{frequency_domain_forward.1} parent=5 // pred_check
        %p278 = pneg %p277
      $region46: #{frequency_domain_forward.1} parent=5 // pred_check_branch
        %280 = sbr.rel (%p278) target = $region48
      $region47: #{frequency_domain_forward.1} parent=5 // pred_region
        // Predicated region
        $region49: #{frequency_domain_forward.1} parent=47 // pred_check
          %p281 = pneg %p38
        $region50: #{frequency_domain_forward.1} parent=47 // pred_check_branch
          %283 = sbr.rel (%p281) target = $region52
        $region51: #{frequency_domain_forward.1} parent=47 // pred_region
          %p284 = scmp.lt.s32.totalorder %s18, 1
          %s285 = scalar_select %p284, %s18, 1
          %s286 = smul.addr %s285, 32
          %s287 = smul.addr %s286, 8
          %s288 = scalar_lea.vmem %s0, %s287
        $region52: #{frequency_domain_forward.1} parent=47 // pred_fallthru
          _
      $region48: #{frequency_domain_forward.1} parent=5 // pred_fallthru
        _
      %p289 = scmp.le.s32.totalorder 1, %s18
      %p290 = scmp.lt.s32.totalorder %s18, 3
      %p291 = pnand %p289, %p290
      %p292 = pneg %p291
      // Predicated region
      $region53: #{frequency_domain_forward.1} parent=5 // pred_check
        _
      $region54: #{frequency_domain_forward.1} parent=5 // pred_check_branch
        %294 = sbr.rel (%p291) target = $region56
      $region55: #{frequency_domain_forward.1} parent=5 // pred_region
        %s295 = ssub.s32 %s18, 1
        %p296 = scmp.lt.s32.totalorder %s23, 1
        %s297 = scalar_select %p296, %s23, 1
        %s298 = smul.addr %s297, 32
        %s299 = smul.addr %s298, 8
        %s300 = scalar_lea.vmem %s0, %s299
        %p301 = pneg %p44
        %p302 = pneg %p41
        %p303 = pneg %p65
        %p304 = pneg %p62
        %p305 = pneg %p86
        %p306 = pneg %p83
        %p307 = pneg %p107
        %p308 = pneg %p104
        %p309 = pneg %p128
        %p310 = pneg %p125
        %p311 = pneg %p149
        %p312 = pneg %p146
        %p313 = pneg %p170
        %p314 = pneg %p167
        %p315 = pneg %p191
        %p316 = pneg %p188
        %p317 = pneg %p212
        %p318 = pneg %p209
        %p319 = pneg %p238
        %p320 = pneg %p235
        %s321 = sand.u32 %s225, 1
        %s322 = scalar_lea.sflag [#allocation9], %s321
        %s323 = sand.u32 %s225, 1
        %s324 = scalar_lea.vmem [#allocation8], %s323
        %p325 = scmp.lt.s32.totalorder %s23, 1
        %s326 = scalar_select %p325, %s23, 1
        %s327 = smul.addr %s326, 32
        %s328 = smul.addr %s327, 8
        %s329 = scalar_lea.vmem %s0, %s328
        %v330 = vld [vmem:[%s329] sm:$0xff]
        %v331 = vld [vmem:[%s329 + $0x8] sm:$0xff]
        %v332 = vld [vmem:[%s329 + $0x10] sm:$0xff]
        %v333 = vld [vmem:[%s329 + $0x18] sm:$0xff]
        %v334 = vld [vmem:[%s329 + $0x20] sm:$0xff]
        %v335 = vld [vmem:[%s329 + $0x28] sm:$0xff]
        %v336 = vld [vmem:[%s329 + $0x30] sm:$0xff]
        %v337 = vld [vmem:[%s329 + $0x38] sm:$0xff]
        %v338 = vld [vmem:[%s329 + $0x40] sm:$0xff]
        %v339 = vld [vmem:[%s329 + $0x48] sm:$0xff]
        %v340 = vld [vmem:[%s329 + $0x50] sm:$0xff]
        %v341 = vld [vmem:[%s329 + $0x58] sm:$0xff]
        %v342 = vld [vmem:[%s329 + $0x60] sm:$0xff]
        %v343 = vld [vmem:[%s329 + $0x68] sm:$0xff]
        %v344 = vld [vmem:[%s329 + $0x70] sm:$0xff]
        %v345 = vld [vmem:[%s329 + $0x78] sm:$0xff]
        %v346 = vld [vmem:[%s329 + $0x80] sm:$0xff]
        %v347 = vld [vmem:[%s329 + $0x88] sm:$0xff]
        %v348 = vld [vmem:[%s329 + $0x90] sm:$0xff]
        %v349 = vld [vmem:[%s329 + $0x98] sm:$0xff]
        %v350 = vld [vmem:[%s329 + $0xa0] sm:$0xff]
        %v351 = vld [vmem:[%s329 + $0xa8] sm:$0xff]
        %v352 = vld [vmem:[%s329 + $0xb0] sm:$0xff]
        %v353 = vld [vmem:[%s329 + $0xb8] sm:$0xff]
        %v354 = vld [vmem:[%s329 + $0xc0] sm:$0xff]
        %v355 = vld [vmem:[%s329 + $0xc8] sm:$0xff]
        %v356 = vld [vmem:[%s329 + $0xd0] sm:$0xff]
        %v357 = vld [vmem:[%s329 + $0xd8] sm:$0xff]
        %v358 = vld [vmem:[%s329 + $0xe0] sm:$0xff]
        %v359 = vld [vmem:[%s329 + $0xe8] sm:$0xff]
        %v360 = vld [vmem:[%s329 + $0xf0] sm:$0xff]
        %v361 = vld [vmem:[%s1] sm:$0xff]
        %v362 = vld [vmem:[%s1 + $0x8] sm:$0xff]
        %v363 = vld [vmem:[%s1 + $0x10] sm:$0xff]
        %v364 = vld [vmem:[%s1 + $0x18] sm:$0xff]
        %v365 = vld [vmem:[%s1 + $0x20] sm:$0xff]
        %v366 = vld [vmem:[%s1 + $0x28] sm:$0xff]
        %v367 = vld [vmem:[%s1 + $0x30] sm:$0xff]
        %v368 = vld [vmem:[%s1 + $0x38] sm:$0xff]
        %v369 = vld [vmem:[%s329 + $0x1] sm:$0xff]
        %v370 = vld [vmem:[%s329 + $0x9] sm:$0xff]
        %v371 = vld [vmem:[%s329 + $0x11] sm:$0xff]
        %v372 = vld [vmem:[%s329 + $0x19] sm:$0xff]
        %v373 = vld [vmem:[%s329 + $0x21] sm:$0xff]
        %v374 = vld [vmem:[%s329 + $0x29] sm:$0xff]
        %v375 = vld [vmem:[%s329 + $0x31] sm:$0xff]
        %v376 = vld [vmem:[%s329 + $0x39] sm:$0xff]
        %v377 = vld [vmem:[%s329 + $0x41] sm:$0xff]
        %v378 = vld [vmem:[%s329 + $0x49] sm:$0xff]
        %v379 = vld [vmem:[%s329 + $0x51] sm:$0xff]
        %v380 = vld [vmem:[%s329 + $0x59] sm:$0xff]
        %v381 = vld [vmem:[%s329 + $0x61] sm:$0xff]
        %v382 = vld [vmem:[%s329 + $0x69] sm:$0xff]
        %v383 = vld [vmem:[%s329 + $0x71] sm:$0xff]
        %v384 = vld [vmem:[%s329 + $0x79] sm:$0xff]
        %v385 = vld [vmem:[%s329 + $0x81] sm:$0xff]
        %v386 = vld [vmem:[%s329 + $0x89] sm:$0xff]
        %v387 = vld [vmem:[%s329 + $0x91] sm:$0xff]
        %v388 = vld [vmem:[%s329 + $0x99] sm:$0xff]
        %v389 = vld [vmem:[%s329 + $0xa1] sm:$0xff]
        %v390 = vld [vmem:[%s329 + $0xa9] sm:$0xff]
        %v391 = vld [vmem:[%s329 + $0xb1] sm:$0xff]
        %v392 = vld [vmem:[%s329 + $0xb9] sm:$0xff]
        %v393 = vld [vmem:[%s329 + $0xc1] sm:$0xff]
        %v394 = vld [vmem:[%s329 + $0xc9] sm:$0xff]
        %v395 = vld [vmem:[%s329 + $0xd1] sm:$0xff]
        %v396 = vld [vmem:[%s329 + $0xd9] sm:$0xff]
        %v397 = vld [vmem:[%s329 + $0xe1] sm:$0xff]
        %v398 = vld [vmem:[%s329 + $0xe9] sm:$0xff]
        %v399 = vld [vmem:[%s329 + $0xf1] sm:$0xff]
        %s400 = scalar_lea.vmem %s1, 64
        %v401 = vld [vmem:[%s400] sm:$0xff]
        %v402 = vld [vmem:[%s400 + $0x8] sm:$0xff]
        %v403 = vld [vmem:[%s400 + $0x10] sm:$0xff]
        %v404 = vld [vmem:[%s400 + $0x18] sm:$0xff]
        %v405 = vld [vmem:[%s400 + $0x20] sm:$0xff]
        %v406 = vld [vmem:[%s400 + $0x28] sm:$0xff]
        %v407 = vld [vmem:[%s400 + $0x30] sm:$0xff]
        %v408 = vld [vmem:[%s400 + $0x38] sm:$0xff]
        %vm409 = vcmask 523264
        %v411 = vsel %vm409, %v369, 0
        %v414 = vsel %vm409, %v370, 0
        %v417 = vsel %vm409, %v371, 0
        %v420 = vsel %vm409, %v372, 0
        %v423 = vsel %vm409, %v373, 0
        %v426 = vsel %vm409, %v374, 0
        %v429 = vsel %vm409, %v375, 0
        %v432 = vsel %vm409, %v376, 0
        %v435 = vsel %vm409, %v377, 0
        %v438 = vsel %vm409, %v378, 0
        %v441 = vsel %vm409, %v379, 0
        %v444 = vsel %vm409, %v380, 0
        %v447 = vsel %vm409, %v381, 0
        %v450 = vsel %vm409, %v382, 0
        %v453 = vsel %vm409, %v383, 0
        %v456 = vsel %vm409, %v384, 0
        %v459 = vsel %vm409, %v385, 0
        %v462 = vsel %vm409, %v386, 0
        %v465 = vsel %vm409, %v387, 0
        %v468 = vsel %vm409, %v388, 0
        %v471 = vsel %vm409, %v389, 0
        %v474 = vsel %vm409, %v390, 0
        %v477 = vsel %vm409, %v391, 0
        %v480 = vsel %vm409, %v392, 0
        %v483 = vsel %vm409, %v393, 0
        %v486 = vsel %vm409, %v394, 0
        %v489 = vsel %vm409, %v395, 0
        %v492 = vsel %vm409, %v396, 0
        %v495 = vsel %vm409, %v397, 0
        %v498 = vsel %vm409, %v398, 0
        %v501 = vsel %vm409, %v399, 0
        %503 = vmatprep.subr.mxu0 0.0
        %504 = vmatpush1.msra.mxu0 %v401
        %505 = vmatprep.subr.mxu0 0.0
        %506 = vmatpush1.msra.mxu0 %v402
        %507 = vmatprep.subr.mxu0 0.0
        %508 = vmatpush1.msra.mxu0 %v403
        %509 = vmatprep.subr.mxu0 0.0
        %510 = vmatpush1.msra.mxu0 %v404
        %511 = vmatprep.subr.mxu0 0.0
        %512 = vmatpush1.msra.mxu0 %v405
        %513 = vmatprep.subr.mxu0 0.0
        %514 = vmatpush1.msra.mxu0 %v406
        %515 = vmatprep.subr.mxu0 0.0
        %516 = vmatpush1.msra.mxu0 %v407
        %517 = vmatprep.subr.mxu0 0.0
        %518 = vmatpush1.msra.mxu0 %v408
        %519 = vmatprep.subr.mxu0 0.0
        %520 = vmatpush1.msra.mxu0 0.0
        %521 = vmatprep.subr.mxu0 0.0
        %522 = vmatpush1.msra.mxu0 0.0
        %523 = vmatprep.subr.mxu0 0.0
        %524 = vmatpush1.msra.mxu0 0.0
        %525 = vmatprep.subr.mxu0 0.0
        %526 = vmatpush1.msra.mxu0 0.0
        %527 = vmatprep.subr.mxu0 0.0
        %528 = vmatpush1.msra.mxu0 0.0
        %529 = vmatprep.subr.mxu0 0.0
        %530 = vmatpush1.msra.mxu0 0.0
        %531 = vmatprep.subr.mxu0 0.0
        %532 = vmatpush1.msra.mxu0 0.0
        %533 = vmatprep.subr.mxu0 0.0
        %534 = vmatpush1.msra.mxu0 0.0
        %535 = vmatprep.subr.mxu0 0.0
        %536 = vmatpush1.msra.mxu0 0.0
        %537 = vmatprep.subr.mxu0 0.0
        %538 = vmatpush1.msra.mxu0 0.0
        %539 = vmatprep.subr.mxu0 0.0
        %540 = vmatpush1.msra.mxu0 0.0
        %541 = vmatprep.subr.mxu0 0.0
        %542 = vmatpush1.msra.mxu0 0.0
        %543 = vmatprep.subr.mxu0 0.0
        %544 = vmatpush1.msra.mxu0 0.0
        %545 = vmatprep.subr.mxu0 0.0
        %546 = vmatpush1.msra.mxu0 0.0
        %547 = vmatprep.subr.mxu0 0.0
        %548 = vmatpush1.msra.mxu0 0.0
        %549 = vmatprep.subr.mxu0 0.0
        %550 = vmatpush1.msra.mxu0 0.0
        %551 = vmatprep.subr.mxu0 0.0
        %552 = vmatpush1.msra.mxu0 0.0
        %553 = vmatprep.subr.mxu0 0.0
        %554 = vmatpush1.msra.mxu0 0.0
        %555 = vmatprep.subr.mxu0 0.0
        %556 = vmatpush1.msra.mxu0 0.0
        %557 = vmatprep.subr.mxu0 0.0
        %558 = vmatpush1.msra.mxu0 0.0
        %559 = vmatprep.subr.mxu0 0.0
        %560 = vmatpush1.msra.mxu0 0.0
        %561 = vmatprep.subr.mxu0 0.0
        %562 = vmatpush1.msra.mxu0 0.0
        %563 = vmatprep.subr.mxu0 0.0
        %564 = vmatpush1.msra.mxu0 0.0
        %565 = vmatprep.subr.mxu0 0.0
        %566 = vmatpush1.msra.mxu0 0.0
        %567 = vmatprep.mubr.f32.mxu0 0.0
        %568 = vmatmul.mubr.f32.gmra.mrb[0].mxu0 %v411
        %v569 = vpop.f32.mrb[0].mxu0
        %v570 = vadd.f32 0.0, %v569
        %v571 = vpop.f32.mrb[0].mxu0
        %572 = vmatprep.mubr.f32.mxu0 0.0
        %573 = vmatmul.mubr.f32.gmra.mrb[0].mxu0 %v414
        %v574 = vpop.f32.mrb[0].mxu0
        %v575 = vadd.f32 0.0, %v574
        %v576 = vpop.f32.mrb[0].mxu0
        %577 = vmatprep.mubr.f32.mxu0 0.0
        %578 = vmatmul.mubr.f32.gmra.mrb[0].mxu0 %v417
        %v579 = vpop.f32.mrb[0].mxu0
        %v580 = vadd.f32 0.0, %v579
        %v581 = vpop.f32.mrb[0].mxu0
        %582 = vmatprep.mubr.f32.mxu0 0.0
        %583 = vmatmul.mubr.f32.gmra.mrb[0].mxu0 %v420
        %v584 = vpop.f32.mrb[0].mxu0
        %v585 = vadd.f32 0.0, %v584
        %v586 = vpop.f32.mrb[0].mxu0
        %587 = vmatprep.mubr.f32.mxu0 0.0
        %588 = vmatmul.mubr.f32.gmra.mrb[0].mxu0 %v423
        %v589 = vpop.f32.mrb[0].mxu0
        %v590 = vadd.f32 0.0, %v589
        %v591 = vpop.f32.mrb[0].mxu0
        %592 = vmatprep.mubr.f32.mxu0 0.0
        %593 = vmatmul.mubr.f32.gmra.mrb[0].mxu0 %v426
        %v594 = vpop.f32.mrb[0].mxu0
        %v595 = vadd.f32 0.0, %v594
        %v596 = vpop.f32.mrb[0].mxu0
        %597 = vmatprep.mubr.f32.mxu0 0.0
        %598 = vmatmul.mubr.f32.gmra.mrb[0].mxu0 %v429
        %v599 = vpop.f32.mrb[0].mxu0
        %v600 = vadd.f32 0.0, %v599
        %v601 = vpop.f32.mrb[0].mxu0
        %602 = vmatprep.mubr.f32.mxu0 0.0
        %603 = vmatmul.mubr.f32.gmra.mrb[0].mxu0 %v432
        %v604 = vpop.f32.mrb[0].mxu0
        %v605 = vadd.f32 0.0, %v604
        %v606 = vpop.f32.mrb[0].mxu0
        %607 = vmatprep.mubr.f32.mxu0 0.0
        %608 = vmatmul.mubr.f32.gmra.mrb[0].mxu0 %v435
        %v609 = vpop.f32.mrb[0].mxu0
        %v610 = vadd.f32 0.0, %v609
        %v611 = vpop.f32.mrb[0].mxu0
        %612 = vmatprep.mubr.f32.mxu0 0.0
        %613 = vmatmul.mubr.f32.gmra.mrb[0].mxu0 %v438
        %v614 = vpop.f32.mrb[0].mxu0
        %v615 = vadd.f32 0.0, %v614
        %v616 = vpop.f32.mrb[0].mxu0
        %617 = vmatprep.mubr.f32.mxu0 0.0
        %618 = vmatmul.mubr.f32.gmra.mrb[0].mxu0 %v441
        %v619 = vpop.f32.mrb[0].mxu0
        %v620 = vadd.f32 0.0, %v619
        %v621 = vpop.f32.mrb[0].mxu0
        %622 = vmatprep.mubr.f32.mxu0 0.0
        %623 = vmatmul.mubr.f32.gmra.mrb[0].mxu0 %v444
        %v624 = vpop.f32.mrb[0].mxu0
        %v625 = vadd.f32 0.0, %v624
        %v626 = vpop.f32.mrb[0].mxu0
        %627 = vmatprep.mubr.f32.mxu0 0.0
        %628 = vmatmul.mubr.f32.gmra.mrb[0].mxu0 %v447
        %v629 = vpop.f32.mrb[0].mxu0
        %v630 = vadd.f32 0.0, %v629
        %v631 = vpop.f32.mrb[0].mxu0
        %632 = vmatprep.mubr.f32.mxu0 0.0
        %633 = vmatmul.mubr.f32.gmra.mrb[0].mxu0 %v450
        %v634 = vpop.f32.mrb[0].mxu0
        %v635 = vadd.f32 0.0, %v634
        %v636 = vpop.f32.mrb[0].mxu0
        %637 = vmatprep.mubr.f32.mxu0 0.0
        %638 = vmatmul.mubr.f32.gmra.mrb[0].mxu0 %v453
        %v639 = vpop.f32.mrb[0].mxu0
        %v640 = vadd.f32 0.0, %v639
        %v641 = vpop.f32.mrb[0].mxu0
        %642 = vmatprep.mubr.f32.mxu0 0.0
        %643 = vmatmul.mubr.f32.gmra.mrb[0].mxu0 %v456
        %v644 = vpop.f32.mrb[0].mxu0
        %v645 = vadd.f32 0.0, %v644
        %v646 = vpop.f32.mrb[0].mxu0
        %647 = vmatprep.mubr.f32.mxu0 0.0
        %648 = vmatmul.mubr.f32.gmra.mrb[0].mxu0 %v459
        %v649 = vpop.f32.mrb[0].mxu0
        %v650 = vadd.f32 0.0, %v649
        %v651 = vpop.f32.mrb[0].mxu0
        %652 = vmatprep.mubr.f32.mxu0 0.0
        %653 = vmatmul.mubr.f32.gmra.mrb[0].mxu0 %v462
        %v654 = vpop.f32.mrb[0].mxu0
        %v655 = vadd.f32 0.0, %v654
        %v656 = vpop.f32.mrb[0].mxu0
        %657 = vmatprep.mubr.f32.mxu0 0.0
        %658 = vmatmul.mubr.f32.gmra.mrb[0].mxu0 %v465
        %v659 = vpop.f32.mrb[0].mxu0
        %v660 = vadd.f32 0.0, %v659
        %v661 = vpop.f32.mrb[0].mxu0
        %662 = vmatprep.mubr.f32.mxu0 0.0
        %663 = vmatmul.mubr.f32.gmra.mrb[0].mxu0 %v468
        %v664 = vpop.f32.mrb[0].mxu0
        %v665 = vadd.f32 0.0, %v664
        %v666 = vpop.f32.mrb[0].mxu0
        %667 = vmatprep.mubr.f32.mxu0 0.0
        %668 = vmatmul.mubr.f32.gmra.mrb[0].mxu0 %v471
        %v669 = vpop.f32.mrb[0].mxu0
        %v670 = vadd.f32 0.0, %v669
        %v671 = vpop.f32.mrb[0].mxu0
        %672 = vmatprep.mubr.f32.mxu0 0.0
        %673 = vmatmul.mubr.f32.gmra.mrb[0].mxu0 %v474
        %v674 = vpop.f32.mrb[0].mxu0
        %v675 = vadd.f32 0.0, %v674
        %v676 = vpop.f32.mrb[0].mxu0
        %677 = vmatprep.mubr.f32.mxu0 0.0
        %678 = vmatmul.mubr.f32.gmra.mrb[0].mxu0 %v477
        %v679 = vpop.f32.mrb[0].mxu0
        %v680 = vadd.f32 0.0, %v679
        %v681 = vpop.f32.mrb[0].mxu0
        %682 = vmatprep.mubr.f32.mxu0 0.0
        %683 = vmatmul.mubr.f32.gmra.mrb[0].mxu0 %v480
        %v684 = vpop.f32.mrb[0].mxu0
        %v685 = vadd.f32 0.0, %v684
        %v686 = vpop.f32.mrb[0].mxu0
        %687 = vmatprep.mubr.f32.mxu0 0.0
        %688 = vmatmul.mubr.f32.gmra.mrb[0].mxu0 %v483
        %v689 = vpop.f32.mrb[0].mxu0
        %v690 = vadd.f32 0.0, %v689
        %v691 = vpop.f32.mrb[0].mxu0
        %692 = vmatprep.mubr.f32.mxu0 0.0
        %693 = vmatmul.mubr.f32.gmra.mrb[0].mxu0 %v486
        %v694 = vpop.f32.mrb[0].mxu0
        %v695 = vadd.f32 0.0, %v694
        %v696 = vpop.f32.mrb[0].mxu0
        %697 = vmatprep.mubr.f32.mxu0 0.0
        %698 = vmatmul.mubr.f32.gmra.mrb[0].mxu0 %v489
        %v699 = vpop.f32.mrb[0].mxu0
        %v700 = vadd.f32 0.0, %v699
        %v701 = vpop.f32.mrb[0].mxu0
        %702 = vmatprep.mubr.f32.mxu0 0.0
        %703 = vmatmul.mubr.f32.gmra.mrb[0].mxu0 %v492
        %v704 = vpop.f32.mrb[0].mxu0
        %v705 = vadd.f32 0.0, %v704
        %v706 = vpop.f32.mrb[0].mxu0
        %707 = vmatprep.mubr.f32.mxu0 0.0
        %708 = vmatmul.mubr.f32.gmra.mrb[0].mxu0 %v495
        %v709 = vpop.f32.mrb[0].mxu0
        %v710 = vadd.f32 0.0, %v709
        %v711 = vpop.f32.mrb[0].mxu0
        %712 = vmatprep.mubr.f32.mxu0 0.0
        %713 = vmatmul.mubr.f32.gmra.mrb[0].mxu0 %v498
        %v714 = vpop.f32.mrb[0].mxu0
        %v715 = vadd.f32 0.0, %v714
        %v716 = vpop.f32.mrb[0].mxu0
        %717 = vmatprep.mubr.f32.mxu0 0.0
        %718 = vmatmul.mubr.f32.gmra.mrb[0].mxu0 %v501
        %v719 = vpop.f32.mrb[0].mxu0
        %v720 = vadd.f32 0.0, %v719
        %v721 = vpop.f32.mrb[0].mxu0
        %722 = vdwg.mxu0
        %v724 = vsel %vm409, %v330, 0
        %v727 = vsel %vm409, %v331, 0
        %v730 = vsel %vm409, %v332, 0
        %v733 = vsel %vm409, %v333, 0
        %v736 = vsel %vm409, %v334, 0
        %v739 = vsel %vm409, %v335, 0
        %v742 = vsel %vm409, %v336, 0
        %v745 = vsel %vm409, %v337, 0
        %v748 = vsel %vm409, %v338, 0
        %v751 = vsel %vm409, %v339, 0
        %v754 = vsel %vm409, %v340, 0
        %v757 = vsel %vm409, %v341, 0
        %v760 = vsel %vm409, %v342, 0
        %v763 = vsel %vm409, %v343, 0
        %v766 = vsel %vm409, %v344, 0
        %v769 = vsel %vm409, %v345, 0
        %v772 = vsel %vm409, %v346, 0
        %v775 = vsel %vm409, %v347, 0
        %v778 = vsel %vm409, %v348, 0
        %v781 = vsel %vm409, %v349, 0
        %v784 = vsel %vm409, %v350, 0
        %v787 = vsel %vm409, %v351, 0
        %v790 = vsel %vm409, %v352, 0
        %v793 = vsel %vm409, %v353, 0
        %v796 = vsel %vm409, %v354, 0
        %v799 = vsel %vm409, %v355, 0
        %v802 = vsel %vm409, %v356, 0
        %v805 = vsel %vm409, %v357, 0
        %v808 = vsel %vm409, %v358, 0
        %v811 = vsel %vm409, %v359, 0
        %v814 = vsel %vm409, %v360, 0
        %816 = vmatprep.subr.mxu0 0.0
        %817 = vmatpush1.msra.mxu0 %v361
        %818 = vmatprep.subr.mxu0 0.0
        %819 = vmatpush1.msra.mxu0 %v362
        %820 = vmatprep.subr.mxu0 0.0
        %821 = vmatpush1.msra.mxu0 %v363
        %822 = vmatprep.subr.mxu0 0.0
        %823 = vmatpush1.msra.mxu0 %v364
        %824 = vmatprep.subr.mxu0 0.0
        %825 = vmatpush1.msra.mxu0 %v365
        %826 = vmatprep.subr.mxu0 0.0
        %827 = vmatpush1.msra.mxu0 %v366
        %828 = vmatprep.subr.mxu0 0.0
        %829 = vmatpush1.msra.mxu0 %v367
        %830 = vmatprep.subr.mxu0 0.0
        %831 = vmatpush1.msra.mxu0 %v368
        %832 = vmatprep.subr.mxu0 0.0
        %833 = vmatpush1.msra.mxu0 0.0
        %834 = vmatprep.subr.mxu0 0.0
        %835 = vmatpush1.msra.mxu0 0.0
        %836 = vmatprep.subr.mxu0 0.0
        %837 = vmatpush1.msra.mxu0 0.0
        %838 = vmatprep.subr.mxu0 0.0
        %839 = vmatpush1.msra.mxu0 0.0
        %840 = vmatprep.subr.mxu0 0.0
        %841 = vmatpush1.msra.mxu0 0.0
        %842 = vmatprep.subr.mxu0 0.0
        %843 = vmatpush1.msra.mxu0 0.0
        %844 = vmatprep.subr.mxu0 0.0
        %845 = vmatpush1.msra.mxu0 0.0
        %846 = vmatprep.subr.mxu0 0.0
        %847 = vmatpush1.msra.mxu0 0.0
        %848 = vmatprep.subr.mxu0 0.0
        %849 = vmatpush1.msra.mxu0 0.0
        %850 = vmatprep.subr.mxu0 0.0
        %851 = vmatpush1.msra.mxu0 0.0
        %852 = vmatprep.subr.mxu0 0.0
        %853 = vmatpush1.msra.mxu0 0.0
        %854 = vmatprep.subr.mxu0 0.0
        %855 = vmatpush1.msra.mxu0 0.0
        %856 = vmatprep.subr.mxu0 0.0
        %857 = vmatpush1.msra.mxu0 0.0
        %858 = vmatprep.subr.mxu0 0.0
        %859 = vmatpush1.msra.mxu0 0.0
        %860 = vmatprep.subr.mxu0 0.0
        %861 = vmatpush1.msra.mxu0 0.0
        %862 = vmatprep.subr.mxu0 0.0
        %863 = vmatpush1.msra.mxu0 0.0
        %864 = vmatprep.subr.mxu0 0.0
        %865 = vmatpush1.msra.mxu0 0.0
        %866 = vmatprep.subr.mxu0 0.0
        %867 = vmatpush1.msra.mxu0 0.0
        %868 = vmatprep.subr.mxu0 0.0
        %869 = vmatpush1.msra.mxu0 0.0
        %870 = vmatprep.subr.mxu0 0.0
        %871 = vmatpush1.msra.mxu0 0.0
        %872 = vmatprep.subr.mxu0 0.0
        %873 = vmatpush1.msra.mxu0 0.0
        %874 = vmatprep.subr.mxu0 0.0
        %875 = vmatpush1.msra.mxu0 0.0
        %876 = vmatprep.subr.mxu0 0.0
        %877 = vmatpush1.msra.mxu0 0.0
        %878 = vmatprep.subr.mxu0 0.0
        %879 = vmatpush1.msra.mxu0 0.0
        %880 = vmatprep.mubr.f32.mxu0 0.0
        %881 = vmatmul.mubr.f32.gmra.mrb[0].mxu0 %v724
        %v882 = vpop.f32.mrb[0].mxu0
        %v883 = vadd.f32 %v570, %v882
        %v884 = vpop.f32.mrb[0].mxu0
        %885 = vmatprep.mubr.f32.mxu0 0.0
        %886 = vmatmul.mubr.f32.gmra.mrb[0].mxu0 %v727
        %v887 = vpop.f32.mrb[0].mxu0
        %v888 = vadd.f32 %v575, %v887
        %v889 = vpop.f32.mrb[0].mxu0
        %890 = vmatprep.mubr.f32.mxu0 0.0
        %891 = vmatmul.mubr.f32.gmra.mrb[0].mxu0 %v730
        %v892 = vpop.f32.mrb[0].mxu0
        %v893 = vadd.f32 %v580, %v892
        %v894 = vpop.f32.mrb[0].mxu0
        %895 = vmatprep.mubr.f32.mxu0 0.0
        %896 = vmatmul.mubr.f32.gmra.mrb[0].mxu0 %v733
        %v897 = vpop.f32.mrb[0].mxu0
        %v898 = vadd.f32 %v585, %v897
        %v899 = vpop.f32.mrb[0].mxu0
        %900 = vmatprep.mubr.f32.mxu0 0.0
        %901 = vmatmul.mubr.f32.gmra.mrb[0].mxu0 %v736
        %v902 = vpop.f32.mrb[0].mxu0
        %v903 = vadd.f32 %v590, %v902
        %v904 = vpop.f32.mrb[0].mxu0
        %905 = vmatprep.mubr.f32.mxu0 0.0
        %906 = vmatmul.mubr.f32.gmra.mrb[0].mxu0 %v739
        %v907 = vpop.f32.mrb[0].mxu0
        %v908 = vadd.f32 %v595, %v907
        %v909 = vpop.f32.mrb[0].mxu0
        %910 = vmatprep.mubr.f32.mxu0 0.0
        %911 = vmatmul.mubr.f32.gmra.mrb[0].mxu0 %v742
        %v912 = vpop.f32.mrb[0].mxu0
        %v913 = vadd.f32 %v600, %v912
        %v914 = vpop.f32.mrb[0].mxu0
        %915 = vmatprep.mubr.f32.mxu0 0.0
        %916 = vmatmul.mubr.f32.gmra.mrb[0].mxu0 %v745
        %v917 = vpop.f32.mrb[0].mxu0
        %v918 = vadd.f32 %v605, %v917
        %v919 = vpop.f32.mrb[0].mxu0
        %920 = vmatprep.mubr.f32.mxu0 0.0
        %921 = vmatmul.mubr.f32.gmra.mrb[0].mxu0 %v748
        %v922 = vpop.f32.mrb[0].mxu0
        %v923 = vadd.f32 %v610, %v922
        %v924 = vpop.f32.mrb[0].mxu0
        %925 = vmatprep.mubr.f32.mxu0 0.0
        %926 = vmatmul.mubr.f32.gmra.mrb[0].mxu0 %v751
        %v927 = vpop.f32.mrb[0].mxu0
        %v928 = vadd.f32 %v615, %v927
        %v929 = vpop.f32.mrb[0].mxu0
        %930 = vmatprep.mubr.f32.mxu0 0.0
        %931 = vmatmul.mubr.f32.gmra.mrb[0].mxu0 %v754
        %v932 = vpop.f32.mrb[0].mxu0
        %v933 = vadd.f32 %v620, %v932
        %v934 = vpop.f32.mrb[0].mxu0
        %935 = vmatprep.mubr.f32.mxu0 0.0
        %936 = vmatmul.mubr.f32.gmra.mrb[0].mxu0 %v757
        %v937 = vpop.f32.mrb[0].mxu0
        %v938 = vadd.f32 %v625, %v937
        %v939 = vpop.f32.mrb[0].mxu0
        %940 = vmatprep.mubr.f32.mxu0 0.0
        %941 = vmatmul.mubr.f32.gmra.mrb[0].mxu0 %v760
        %v942 = vpop.f32.mrb[0].mxu0
        %v943 = vadd.f32 %v630, %v942
        %v944 = vpop.f32.mrb[0].mxu0
        %945 = vmatprep.mubr.f32.mxu0 0.0
        %946 = vmatmul.mubr.f32.gmra.mrb[0].mxu0 %v763
        %v947 = vpop.f32.mrb[0].mxu0
        %v948 = vadd.f32 %v635, %v947
        %v949 = vpop.f32.mrb[0].mxu0
        %950 = vmatprep.mubr.f32.mxu0 0.0
        %951 = vmatmul.mubr.f32.gmra.mrb[0].mxu0 %v766
        %v952 = vpop.f32.mrb[0].mxu0
        %v953 = vadd.f32 %v640, %v952
        %v954 = vpop.f32.mrb[0].mxu0
        %955 = vmatprep.mubr.f32.mxu0 0.0
        %956 = vmatmul.mubr.f32.gmra.mrb[0].mxu0 %v769
        %v957 = vpop.f32.mrb[0].mxu0
        %v958 = vadd.f32 %v645, %v957
        %v959 = vpop.f32.mrb[0].mxu0
        %960 = vmatprep.mubr.f32.mxu0 0.0
        %961 = vmatmul.mubr.f32.gmra.mrb[0].mxu0 %v772
        %v962 = vpop.f32.mrb[0].mxu0
        %v963 = vadd.f32 %v650, %v962
        %v964 = vpop.f32.mrb[0].mxu0
        %965 = vmatprep.mubr.f32.mxu0 0.0
        %966 = vmatmul.mubr.f32.gmra.mrb[0].mxu0 %v775
        %v967 = vpop.f32.mrb[0].mxu0
        %v968 = vadd.f32 %v655, %v967
        %v969 = vpop.f32.mrb[0].mxu0
        %970 = vmatprep.mubr.f32.mxu0 0.0
        %971 = vmatmul.mubr.f32.gmra.mrb[0].mxu0 %v778
        %v972 = vpop.f32.mrb[0].mxu0
        %v973 = vadd.f32 %v660, %v972
        %v974 = vpop.f32.mrb[0].mxu0
        %975 = vmatprep.mubr.f32.mxu0 0.0
        %976 = vmatmul.mubr.f32.gmra.mrb[0].mxu0 %v781
        %v977 = vpop.f32.mrb[0].mxu0
        %v978 = vadd.f32 %v665, %v977
        %v979 = vpop.f32.mrb[0].mxu0
        %980 = vmatprep.mubr.f32.mxu0 0.0
        %981 = vmatmul.mubr.f32.gmra.mrb[0].mxu0 %v784
        %v982 = vpop.f32.mrb[0].mxu0
        %v983 = vadd.f32 %v670, %v982
        %v984 = vpop.f32.mrb[0].mxu0
        %985 = vmatprep.mubr.f32.mxu0 0.0
        %986 = vmatmul.mubr.f32.gmra.mrb[0].mxu0 %v787
        %v987 = vpop.f32.mrb[0].mxu0
        %v988 = vadd.f32 %v675, %v987
        %v989 = vpop.f32.mrb[0].mxu0
        %990 = vmatprep.mubr.f32.mxu0 0.0
        %991 = vmatmul.mubr.f32.gmra.mrb[0].mxu0 %v790
        %v992 = vpop.f32.mrb[0].mxu0
        %v993 = vadd.f32 %v680, %v992
        %v994 = vpop.f32.mrb[0].mxu0
        %995 = vmatprep.mubr.f32.mxu0 0.0
        %996 = vmatmul.mubr.f32.gmra.mrb[0].mxu0 %v793
        %v997 = vpop.f32.mrb[0].mxu0
        %v998 = vadd.f32 %v685, %v997
        %v999 = vpop.f32.mrb[0].mxu0
        %1000 = vmatprep.mubr.f32.mxu0 0.0
        %1001 = vmatmul.mubr.f32.gmra.mrb[0].mxu0 %v796
        %v1002 = vpop.f32.mrb[0].mxu0
        %v1003 = vadd.f32 %v690, %v1002
        %v1004 = vpop.f32.mrb[0].mxu0
        %1005 = vmatprep.mubr.f32.mxu0 0.0
        %1006 = vmatmul.mubr.f32.gmra.mrb[0].mxu0 %v799
        %v1007 = vpop.f32.mrb[0].mxu0
        %v1008 = vadd.f32 %v695, %v1007
        %v1009 = vpop.f32.mrb[0].mxu0
        %1010 = vmatprep.mubr.f32.mxu0 0.0
        %1011 = vmatmul.mubr.f32.gmra.mrb[0].mxu0 %v802
        %v1012 = vpop.f32.mrb[0].mxu0
        %v1013 = vadd.f32 %v700, %v1012
        %v1014 = vpop.f32.mrb[0].mxu0
        %1015 = vmatprep.mubr.f32.mxu0 0.0
        %1016 = vmatmul.mubr.f32.gmra.mrb[0].mxu0 %v805
        %v1017 = vpop.f32.mrb[0].mxu0
        %v1018 = vadd.f32 %v705, %v1017
        %v1019 = vpop.f32.mrb[0].mxu0
        %1020 = vmatprep.mubr.f32.mxu0 0.0
        %1021 = vmatmul.mubr.f32.gmra.mrb[0].mxu0 %v808
        %v1022 = vpop.f32.mrb[0].mxu0
        %v1023 = vadd.f32 %v710, %v1022
        %v1024 = vpop.f32.mrb[0].mxu0
        %1025 = vmatprep.mubr.f32.mxu0 0.0
        %1026 = vmatmul.mubr.f32.gmra.mrb[0].mxu0 %v811
        %v1027 = vpop.f32.mrb[0].mxu0
        %v1028 = vadd.f32 %v715, %v1027
        %v1029 = vpop.f32.mrb[0].mxu0
        %1030 = vmatprep.mubr.f32.mxu0 0.0
        %1031 = vmatmul.mubr.f32.gmra.mrb[0].mxu0 %v814
        %v1032 = vpop.f32.mrb[0].mxu0
        %v1033 = vadd.f32 %v720, %v1032
        %v1034 = vpop.f32.mrb[0].mxu0
        %1035 = vdwg.mxu0
        %v1036 = vld [vmem:[%s329 + $0x2] sm:$0xff]
        %v1037 = vld [vmem:[%s329 + $0xa] sm:$0xff]
        %v1038 = vld [vmem:[%s329 + $0x12] sm:$0xff]
        %v1039 = vld [vmem:[%s329 + $0x1a] sm:$0xff]
        %v1040 = vld [vmem:[%s329 + $0x22] sm:$0xff]
        %v1041 = vld [vmem:[%s329 + $0x2a] sm:$0xff]
        %v1042 = vld [vmem:[%s329 + $0x32] sm:$0xff]
        %v1043 = vld [vmem:[%s329 + $0x3a] sm:$0xff]
        %v1044 = vld [vmem:[%s329 + $0x42] sm:$0xff]
        %v1045 = vld [vmem:[%s329 + $0x4a] sm:$0xff]
        %v1046 = vld [vmem:[%s329 + $0x52] sm:$0xff]
        %v1047 = vld [vmem:[%s329 + $0x5a] sm:$0xff]
        %v1048 = vld [vmem:[%s329 + $0x62] sm:$0xff]
        %v1049 = vld [vmem:[%s329 + $0x6a] sm:$0xff]
        %v1050 = vld [vmem:[%s329 + $0x72] sm:$0xff]
        %v1051 = vld [vmem:[%s329 + $0x7a] sm:$0xff]
        %v1052 = vld [vmem:[%s329 + $0x82] sm:$0xff]
        %v1053 = vld [vmem:[%s329 + $0x8a] sm:$0xff]
        %v1054 = vld [vmem:[%s329 + $0x92] sm:$0xff]
        %v1055 = vld [vmem:[%s329 + $0x9a] sm:$0xff]
        %v1056 = vld [vmem:[%s329 + $0xa2] sm:$0xff]
        %v1057 = vld [vmem:[%s329 + $0xaa] sm:$0xff]
        %v1058 = vld [vmem:[%s329 + $0xb2] sm:$0xff]
        %v1059 = vld [vmem:[%s329 + $0xba] sm:$0xff]
        %v1060 = vld [vmem:[%s329 + $0xc2] sm:$0xff]
        %v1061 = vld [vmem:[%s329 + $0xca] sm:$0xff]
        %v1062 = vld [vmem:[%s329 + $0xd2] sm:$0xff]
        %v1063 = vld [vmem:[%s329 + $0xda] sm:$0xff]
        %v1064 = vld [vmem:[%s329 + $0xe2] sm:$0xff]
        %v1065 = vld [vmem:[%s329 + $0xea] sm:$0xff]
        %v1066 = vld [vmem:[%s329 + $0xf2] sm:$0xff]
        %s1067 = scalar_lea.vmem %s1, 128
        %v1068 = vld [vmem:[%s1067] sm:$0xff]
        %v1069 = vld [vmem:[%s1067 + $0x8] sm:$0xff]
        %v1070 = vld [vmem:[%s1067 + $0x10] sm:$0xff]
        %v1071 = vld [vmem:[%s1067 + $0x18] sm:$0xff]
        %v1072 = vld [vmem:[%s1067 + $0x20] sm:$0xff]
        %v1073 = vld [vmem:[%s1067 + $0x28] sm:$0xff]
        %v1074 = vld [vmem:[%s1067 + $0x30] sm:$0xff]
        %v1075 = vld [vmem:[%s1067 + $0x38] sm:$0xff]
        %v1077 = vsel %vm409, %v1036, 0
        %v1080 = vsel %vm409, %v1037, 0
        %v1083 = vsel %vm409, %v1038, 0
        %v1086 = vsel %vm409, %v1039, 0
        %v1089 = vsel %vm409, %v1040, 0
        %v1092 = vsel %vm409, %v1041, 0
        %v1095 = vsel %vm409, %v1042, 0
        %v1098 = vsel %vm409, %v1043, 0
        %v1101 = vsel %vm409, %v1044, 0
        %v1104 = vsel %vm409, %v1045, 0
        %v1107 = vsel %vm409, %v1046, 0
        %v1110 = vsel %vm409, %v1047, 0
        %v1113 = vsel %vm409, %v1048, 0
        %v1116 = vsel %vm409, %v1049, 0
        %v1119 = vsel %vm409, %v1050, 0
        %v1122 = vsel %vm409, %v1051, 0
        %v1125 = vsel %vm409, %v1052, 0
        %v1128 = vsel %vm409, %v1053, 0
        %v1131 = vsel %vm409, %v1054, 0
        %v1134 = vsel %vm409, %v1055, 0
        %v1137 = vsel %vm409, %v1056, 0
        %v1140 = vsel %vm409, %v1057, 0
        %v1143 = vsel %vm409, %v1058, 0
        %v1146 = vsel %vm409, %v1059, 0
        %v1149 = vsel %vm409, %v1060, 0
        %v1152 = vsel %vm409, %v1061, 0
        %v1155 = vsel %vm409, %v1062, 0
        %v1158 = vsel %vm409, %v1063, 0
        %v1161 = vsel %vm409, %v1064, 0
        %v1164 = vsel %vm409, %v1065, 0
        %v1167 = vsel %vm409, %v1066, 0
        %1169 = vmatprep.subr.mxu0 0.0
        %1170 = vmatpush1.msra.mxu0 %v1068
        %1171 = vmatprep.subr.mxu0 0.0
        %1172 = vmatpush1.msra.mxu0 %v1069
        %1173 = vmatprep.subr.mxu0 0.0
        %1174 = vmatpush1.msra.mxu0 %v1070
        %1175 = vmatprep.subr.mxu0 0.0
        %1176 = vmatpush1.msra.mxu0 %v1071
        %1177 = vmatprep.subr.mxu0 0.0
        %1178 = vmatpush1.msra.mxu0 %v1072
        %1179 = vmatprep.subr.mxu0 0.0
        %1180 = vmatpush1.msra.mxu0 %v1073
        %1181 = vmatprep.subr.mxu0 0.0
        %1182 = vmatpush1.msra.mxu0 %v1074
        %1183 = vmatprep.subr.mxu0 0.0
        %1184 = vmatpush1.msra.mxu0 %v1075
        %1185 = vmatprep.subr.mxu0 0.0
        %1186 = vmatpush1.msra.mxu0 0.0
        %1187 = vmatprep.subr.mxu0 0.0
        %1188 = vmatpush1.msra.mxu0 0.0
        %1189 = vmatprep.subr.mxu0 0.0
        %1190 = vmatpush1.msra.mxu0 0.0
        %1191 = vmatprep.subr.mxu0 0.0
        %1192 = vmatpush1.msra.mxu0 0.0
        %1193 = vmatprep.subr.mxu0 0.0
        %1194 = vmatpush1.msra.mxu0 0.0
        %1195 = vmatprep.subr.mxu0 0.0
        %1196 = vmatpush1.msra.mxu0 0.0
        %1197 = vmatprep.subr.mxu0 0.0
        %1198 = vmatpush1.msra.mxu0 0.0
        %1199 = vmatprep.subr.mxu0 0.0
        %1200 = vmatpush1.msra.mxu0 0.0
        %1201 = vmatprep.subr.mxu0 0.0
        %1202 = vmatpush1.msra.mxu0 0.0
        %1203 = vmatprep.subr.mxu0 0.0
        %1204 = vmatpush1.msra.mxu0 0.0
        %1205 = vmatprep.subr.mxu0 0.0
        %1206 = vmatpush1.msra.mxu0 0.0
        %1207 = vmatprep.subr.mxu0 0.0
        %1208 = vmatpush1.msra.mxu0 0.0
        %1209 = vmatprep.subr.mxu0 0.0
        %1210 = vmatpush1.msra.mxu0 0.0
        %1211 = vmatprep.subr.mxu0 0.0
        %1212 = vmatpush1.msra.mxu0 0.0
        %1213 = vmatprep.subr.mxu0 0.0
        %1214 = vmatpush1.msra.mxu0 0.0
        %1215 = vmatprep.subr.mxu0 0.0
        %1216 = vmatpush1.msra.mxu0 0.0
        %1217 = vmatprep.subr.mxu0 0.0
        %1218 = vmatpush1.msra.mxu0 0.0
        %1219 = vmatprep.subr.mxu0 0.0
        %1220 = vmatpush1.msra.mxu0 0.0
        %1221 = vmatprep.subr.mxu0 0.0
        %1222 = vmatpush1.msra.mxu0 0.0
        %1223 = vmatprep.subr.mxu0 0.0
        %1224 = vmatpush1.msra.mxu0 0.0
        %1225 = vmatprep.subr.mxu0 0.0
        %1226 = vmatpush1.msra.mxu0 0.0
        %1227 = vmatprep.subr.mxu0 0.0
        %1228 = vmatpush1.msra.mxu0 0.0
        %1229 = vmatprep.subr.mxu0 0.0
        %1230 = vmatpush1.msra.mxu0 0.0
        %1231 = vmatprep.subr.mxu0 0.0
        %1232 = vmatpush1.msra.mxu0 0.0
        %1233 = vmatprep.mubr.f32.mxu0 0.0
        %1234 = vmatmul.mubr.f32.gmra.mrb[0].mxu0 %v1077
        %v1235 = vpop.f32.mrb[0].mxu0
        %v1236 = vadd.f32 0.0, %v1235
        %v1237 = vpop.f32.mrb[0].mxu0
        %1238 = vmatprep.mubr.f32.mxu0 0.0
        %1239 = vmatmul.mubr.f32.gmra.mrb[0].mxu0 %v1080
        %v1240 = vpop.f32.mrb[0].mxu0
        %v1241 = vadd.f32 0.0, %v1240
        %v1242 = vpop.f32.mrb[0].mxu0
        %1243 = vmatprep.mubr.f32.mxu0 0.0
        %1244 = vmatmul.mubr.f32.gmra.mrb[0].mxu0 %v1083
        %v1245 = vpop.f32.mrb[0].mxu0
        %v1246 = vadd.f32 0.0, %v1245
        %v1247 = vpop.f32.mrb[0].mxu0
        %1248 = vmatprep.mubr.f32.mxu0 0.0
        %1249 = vmatmul.mubr.f32.gmra.mrb[0].mxu0 %v1086
        %v1250 = vpop.f32.mrb[0].mxu0
        %v1251 = vadd.f32 0.0, %v1250
        %v1252 = vpop.f32.mrb[0].mxu0
        %1253 = vmatprep.mubr.f32.mxu0 0.0
        %1254 = vmatmul.mubr.f32.gmra.mrb[0].mxu0 %v1089
        %v1255 = vpop.f32.mrb[0].mxu0
        %v1256 = vadd.f32 0.0, %v1255
        %v1257 = vpop.f32.mrb[0].mxu0
        %1258 = vmatprep.mubr.f32.mxu0 0.0
        %1259 = vmatmul.mubr.f32.gmra.mrb[0].mxu0 %v1092
        %v1260 = vpop.f32.mrb[0].mxu0
        %v1261 = vadd.f32 0.0, %v1260
        %v1262 = vpop.f32.mrb[0].mxu0
        %1263 = vmatprep.mubr.f32.mxu0 0.0
        %1264 = vmatmul.mubr.f32.gmra.mrb[0].mxu0 %v1095
        %v1265 = vpop.f32.mrb[0].mxu0
        %v1266 = vadd.f32 0.0, %v1265
        %v1267 = vpop.f32.mrb[0].mxu0
        %1268 = vmatprep.mubr.f32.mxu0 0.0
        %1269 = vmatmul.mubr.f32.gmra.mrb[0].mxu0 %v1098
        %v1270 = vpop.f32.mrb[0].mxu0
        %v1271 = vadd.f32 0.0, %v1270
        %v1272 = vpop.f32.mrb[0].mxu0
        %1273 = vmatprep.mubr.f32.mxu0 0.0
        %1274 = vmatmul.mubr.f32.gmra.mrb[0].mxu0 %v1101
        %v1275 = vpop.f32.mrb[0].mxu0
        %v1276 = vadd.f32 0.0, %v1275
        %v1277 = vpop.f32.mrb[0].mxu0
        %1278 = vmatprep.mubr.f32.mxu0 0.0
        %1279 = vmatmul.mubr.f32.gmra.mrb[0].mxu0 %v1104
        %v1280 = vpop.f32.mrb[0].mxu0
        %v1281 = vadd.f32 0.0, %v1280
        %v1282 = vpop.f32.mrb[0].mxu0
        %1283 = vmatprep.mubr.f32.mxu0 0.0
        %1284 = vmatmul.mubr.f32.gmra.mrb[0].mxu0 %v1107
        %v1285 = vpop.f32.mrb[0].mxu0
        %v1286 = vadd.f32 0.0, %v1285
        %v1287 = vpop.f32.mrb[0].mxu0
        %1288 = vmatprep.mubr.f32.mxu0 0.0
        %1289 = vmatmul.mubr.f32.gmra.mrb[0].mxu0 %v1110
        %v1290 = vpop.f32.mrb[0].mxu0
        %v1291 = vadd.f32 0.0, %v1290
        %v1292 = vpop.f32.mrb[0].mxu0
        %1293 = vmatprep.mubr.f32.mxu0 0.0
        %1294 = vmatmul.mubr.f32.gmra.mrb[0].mxu0 %v1113
        %v1295 = vpop.f32.mrb[0].mxu0
        %v1296 = vadd.f32 0.0, %v1295
        %v1297 = vpop.f32.mrb[0].mxu0
        %1298 = vmatprep.mubr.f32.mxu0 0.0
        %1299 = vmatmul.mubr.f32.gmra.mrb[0].mxu0 %v1116
        %v1300 = vpop.f32.mrb[0].mxu0
        %v1301 = vadd.f32 0.0, %v1300
        %v1302 = vpop.f32.mrb[0].mxu0
        %1303 = vmatprep.mubr.f32.mxu0 0.0
        %1304 = vmatmul.mubr.f32.gmra.mrb[0].mxu0 %v1119
        %v1305 = vpop.f32.mrb[0].mxu0
        %v1306 = vadd.f32 0.0, %v1305
        %v1307 = vpop.f32.mrb[0].mxu0
        %1308 = vmatprep.mubr.f32.mxu0 0.0
        %1309 = vmatmul.mubr.f32.gmra.mrb[0].mxu0 %v1122
        %v1310 = vpop.f32.mrb[0].mxu0
        %v1311 = vadd.f32 0.0, %v1310
        %v1312 = vpop.f32.mrb[0].mxu0
        %1313 = vmatprep.mubr.f32.mxu0 0.0
        %1314 = vmatmul.mubr.f32.gmra.mrb[0].mxu0 %v1125
        %v1315 = vpop.f32.mrb[0].mxu0
        %v1316 = vadd.f32 0.0, %v1315
        %v1317 = vpop.f32.mrb[0].mxu0
        %1318 = vmatprep.mubr.f32.mxu0 0.0
        %1319 = vmatmul.mubr.f32.gmra.mrb[0].mxu0 %v1128
        %v1320 = vpop.f32.mrb[0].mxu0
        %v1321 = vadd.f32 0.0, %v1320
        %v1322 = vpop.f32.mrb[0].mxu0
        %1323 = vmatprep.mubr.f32.mxu0 0.0
        %1324 = vmatmul.mubr.f32.gmra.mrb[0].mxu0 %v1131
        %v1325 = vpop.f32.mrb[0].mxu0
        %v1326 = vadd.f32 0.0, %v1325
        %v1327 = vpop.f32.mrb[0].mxu0
        %1328 = vmatprep.mubr.f32.mxu0 0.0
        %1329 = vmatmul.mubr.f32.gmra.mrb[0].mxu0 %v1134
        %v1330 = vpop.f32.mrb[0].mxu0
        %v1331 = vadd.f32 0.0, %v1330
        %v1332 = vpop.f32.mrb[0].mxu0
        %1333 = vmatprep.mubr.f32.mxu0 0.0
        %1334 = vmatmul.mubr.f32.gmra.mrb[0].mxu0 %v1137
        %v1335 = vpop.f32.mrb[0].mxu0
        %v1336 = vadd.f32 0.0, %v1335
        %v1337 = vpop.f32.mrb[0].mxu0
        %1338 = vmatprep.mubr.f32.mxu0 0.0
        %1339 = vmatmul.mubr.f32.gmra.mrb[0].mxu0 %v1140
        %v1340 = vpop.f32.mrb[0].mxu0
        %v1341 = vadd.f32 0.0, %v1340
        %v1342 = vpop.f32.mrb[0].mxu0
        %1343 = vmatprep.mubr.f32.mxu0 0.0
        %1344 = vmatmul.mubr.f32.gmra.mrb[0].mxu0 %v1143
        %v1345 = vpop.f32.mrb[0].mxu0
        %v1346 = vadd.f32 0.0, %v1345
        %v1347 = vpop.f32.mrb[0].mxu0
        %1348 = vmatprep.mubr.f32.mxu0 0.0
        %1349 = vmatmul.mubr.f32.gmra.mrb[0].mxu0 %v1146
        %v1350 = vpop.f32.mrb[0].mxu0
        %v1351 = vadd.f32 0.0, %v1350
        %v1352 = vpop.f32.mrb[0].mxu0
        %1353 = vmatprep.mubr.f32.mxu0 0.0
        %1354 = vmatmul.mubr.f32.gmra.mrb[0].mxu0 %v1149
        %v1355 = vpop.f32.mrb[0].mxu0
        %v1356 = vadd.f32 0.0, %v1355
        %v1357 = vpop.f32.mrb[0].mxu0
        %1358 = vmatprep.mubr.f32.mxu0 0.0
        %1359 = vmatmul.mubr.f32.gmra.mrb[0].mxu0 %v1152
        %v1360 = vpop.f32.mrb[0].mxu0
        %v1361 = vadd.f32 0.0, %v1360
        %v1362 = vpop.f32.mrb[0].mxu0
        %1363 = vmatprep.mubr.f32.mxu0 0.0
        %1364 = vmatmul.mubr.f32.gmra.mrb[0].mxu0 %v1155
        %v1365 = vpop.f32.mrb[0].mxu0
        %v1366 = vadd.f32 0.0, %v1365
        %v1367 = vpop.f32.mrb[0].mxu0
        %1368 = vmatprep.mubr.f32.mxu0 0.0
        %1369 = vmatmul.mubr.f32.gmra.mrb[0].mxu0 %v1158
        %v1370 = vpop.f32.mrb[0].mxu0
        %v1371 = vadd.f32 0.0, %v1370
        %v1372 = vpop.f32.mrb[0].mxu0
        %1373 = vmatprep.mubr.f32.mxu0 0.0
        %1374 = vmatmul.mubr.f32.gmra.mrb[0].mxu0 %v1161
        %v1375 = vpop.f32.mrb[0].mxu0
        %v1376 = vadd.f32 0.0, %v1375
        %v1377 = vpop.f32.mrb[0].mxu0
        %1378 = vmatprep.mubr.f32.mxu0 0.0
        %1379 = vmatmul.mubr.f32.gmra.mrb[0].mxu0 %v1164
        %v1380 = vpop.f32.mrb[0].mxu0
        %v1381 = vadd.f32 0.0, %v1380
        %v1382 = vpop.f32.mrb[0].mxu0
        %1383 = vmatprep.mubr.f32.mxu0 0.0
        %1384 = vmatmul.mubr.f32.gmra.mrb[0].mxu0 %v1167
        %v1385 = vpop.f32.mrb[0].mxu0
        %v1386 = vadd.f32 0.0, %v1385
        %v1387 = vpop.f32.mrb[0].mxu0
        %1388 = vdwg.mxu0
        %v1389 = vadd.f32 %v883, %v1236
        %v1390 = vadd.f32 %v888, %v1241
        %v1391 = vadd.f32 %v893, %v1246
        %v1392 = vadd.f32 %v898, %v1251
        %v1393 = vadd.f32 %v903, %v1256
        %v1394 = vadd.f32 %v908, %v1261
        %v1395 = vadd.f32 %v913, %v1266
        %v1396 = vadd.f32 %v918, %v1271
        %v1397 = vadd.f32 %v923, %v1276
        %v1398 = vadd.f32 %v928, %v1281
        %v1399 = vadd.f32 %v933, %v1286
        %v1400 = vadd.f32 %v938, %v1291
        %v1401 = vadd.f32 %v943, %v1296
        %v1402 = vadd.f32 %v948, %v1301
        %v1403 = vadd.f32 %v953, %v1306
        %v1404 = vadd.f32 %v958, %v1311
        %v1405 = vadd.f32 %v963, %v1316
        %v1406 = vadd.f32 %v968, %v1321
        %v1407 = vadd.f32 %v973, %v1326
        %v1408 = vadd.f32 %v978, %v1331
        %v1409 = vadd.f32 %v983, %v1336
        %v1410 = vadd.f32 %v988, %v1341
        %v1411 = vadd.f32 %v993, %v1346
        %v1412 = vadd.f32 %v998, %v1351
        %v1413 = vadd.f32 %v1003, %v1356
        %v1414 = vadd.f32 %v1008, %v1361
        %v1415 = vadd.f32 %v1013, %v1366
        %v1416 = vadd.f32 %v1018, %v1371
        %v1417 = vadd.f32 %v1023, %v1376
        %v1418 = vadd.f32 %v1028, %v1381
        %v1419 = vadd.f32 %v1033, %v1386
        %v1420 = vld [vmem:[%s2] sm:$0x1]
        %v1422 = vlaneseq
        %v1423 = vshrl.u32 %v1422, 7
        %v1424 = vsub.s32 0, %v1423
        %v1425 = vrot.slane %v1420, %v1424
        %v1427 = vadd.f32 %v1389, %v1425
        %v1428 = vadd.f32 %v1390, %v1425
        %v1429 = vadd.f32 %v1391, %v1425
        %v1430 = vadd.f32 %v1392, %v1425
        %v1431 = vadd.f32 %v1393, %v1425
        %v1432 = vadd.f32 %v1394, %v1425
        %v1433 = vadd.f32 %v1395, %v1425
        %v1434 = vadd.f32 %v1396, %v1425
        %v1435 = vadd.f32 %v1397, %v1425
        %v1436 = vadd.f32 %v1398, %v1425
        %v1437 = vadd.f32 %v1399, %v1425
        %v1438 = vadd.f32 %v1400, %v1425
        %v1439 = vadd.f32 %v1401, %v1425
        %v1440 = vadd.f32 %v1402, %v1425
        %v1441 = vadd.f32 %v1403, %v1425
        %v1442 = vadd.f32 %v1404, %v1425
        %v1443 = vadd.f32 %v1405, %v1425
        %v1444 = vadd.f32 %v1406, %v1425
        %v1445 = vadd.f32 %v1407, %v1425
        %v1446 = vadd.f32 %v1408, %v1425
        %v1447 = vadd.f32 %v1409, %v1425
        %v1448 = vadd.f32 %v1410, %v1425
        %v1449 = vadd.f32 %v1411, %v1425
        %v1450 = vadd.f32 %v1412, %v1425
        %v1451 = vadd.f32 %v1413, %v1425
        %v1452 = vadd.f32 %v1414, %v1425
        %v1453 = vadd.f32 %v1415, %v1425
        %v1454 = vadd.f32 %v1416, %v1425
        %v1455 = vadd.f32 %v1417, %v1425
        %v1456 = vadd.f32 %v1418, %v1425
        %v1457 = vadd.f32 %v1419, %v1425
        %vm1458 = vcmask 261120
        %1459 = vst.msk [vmem:[#allocation2] sm:$0xff] %vm1458, %v1427
        %1460 = vst.msk [vmem:[#allocation2 + $0x8] sm:$0xff] %vm1458, %v1428
        %1461 = vst.msk [vmem:[#allocation2 + $0x10] sm:$0xff] %vm1458, %v1429
        %1462 = vst.msk [vmem:[#allocation2 + $0x18] sm:$0xff] %vm1458, %v1430
        %1463 = vst.msk [vmem:[#allocation2 + $0x20] sm:$0xff] %vm1458, %v1431
        %1464 = vst.msk [vmem:[#allocation2 + $0x28] sm:$0xff] %vm1458, %v1432
        %1465 = vst.msk [vmem:[#allocation2 + $0x30] sm:$0xff] %vm1458, %v1433
        %1466 = vst.msk [vmem:[#allocation2 + $0x38] sm:$0xff] %vm1458, %v1434
        %1467 = vst.msk [vmem:[#allocation2 + $0x40] sm:$0xff] %vm1458, %v1435
        %1468 = vst.msk [vmem:[#allocation2 + $0x48] sm:$0xff] %vm1458, %v1436
        %1469 = vst.msk [vmem:[#allocation2 + $0x50] sm:$0xff] %vm1458, %v1437
        %1470 = vst.msk [vmem:[#allocation2 + $0x58] sm:$0xff] %vm1458, %v1438
        %1471 = vst.msk [vmem:[#allocation2 + $0x60] sm:$0xff] %vm1458, %v1439
        %1472 = vst.msk [vmem:[#allocation2 + $0x68] sm:$0xff] %vm1458, %v1440
        %1473 = vst.msk [vmem:[#allocation2 + $0x70] sm:$0xff] %vm1458, %v1441
        %1474 = vst.msk [vmem:[#allocation2 + $0x78] sm:$0xff] %vm1458, %v1442
        %1475 = vst.msk [vmem:[#allocation2 + $0x80] sm:$0xff] %vm1458, %v1443
        %1476 = vst.msk [vmem:[#allocation2 + $0x88] sm:$0xff] %vm1458, %v1444
        %1477 = vst.msk [vmem:[#allocation2 + $0x90] sm:$0xff] %vm1458, %v1445
        %1478 = vst.msk [vmem:[#allocation2 + $0x98] sm:$0xff] %vm1458, %v1446
        %1479 = vst.msk [vmem:[#allocation2 + $0xa0] sm:$0xff] %vm1458, %v1447
        %1480 = vst.msk [vmem:[#allocation2 + $0xa8] sm:$0xff] %vm1458, %v1448
        %1481 = vst.msk [vmem:[#allocation2 + $0xb0] sm:$0xff] %vm1458, %v1449
        %1482 = vst.msk [vmem:[#allocation2 + $0xb8] sm:$0xff] %vm1458, %v1450
        %1483 = vst.msk [vmem:[#allocation2 + $0xc0] sm:$0xff] %vm1458, %v1451
        %1484 = vst.msk [vmem:[#allocation2 + $0xc8] sm:$0xff] %vm1458, %v1452
        %1485 = vst.msk [vmem:[#allocation2 + $0xd0] sm:$0xff] %vm1458, %v1453
        %1486 = vst.msk [vmem:[#allocation2 + $0xd8] sm:$0xff] %vm1458, %v1454
        %1487 = vst.msk [vmem:[#allocation2 + $0xe0] sm:$0xff] %vm1458, %v1455
        %1488 = vst.msk [vmem:[#allocation2 + $0xe8] sm:$0xff] %vm1458, %v1456
        %1489 = vst.msk [vmem:[#allocation2 + $0xf0] sm:$0xff] %vm1458, %v1457
        %v1490 = vld [vmem:[#allocation2] ss:$2 sm:$0xff]
        %s1491 = scalar_lea.vmem [#allocation2], 16
        %v1492 = vld [vmem:[%s1491] ss:$2 sm:$0xff]
        %s1493 = scalar_lea.vmem [#allocation2], 32
        %v1494 = vld [vmem:[%s1493] ss:$2 sm:$0xff]
        %s1495 = scalar_lea.vmem [#allocation2], 48
        %v1496 = vld [vmem:[%s1495] ss:$2 sm:$0xff]
        %s1497 = scalar_lea.vmem [#allocation2], 64
        %v1498 = vld [vmem:[%s1497] ss:$2 sm:$0xff]
        %s1499 = scalar_lea.vmem [#allocation2], 80
        %v1500 = vld [vmem:[%s1499] ss:$2 sm:$0xff]
        %s1501 = scalar_lea.vmem [#allocation2], 96
        %v1502 = vld [vmem:[%s1501] ss:$2 sm:$0xff]
        %s1503 = scalar_lea.vmem [#allocation2], 112
        %v1504 = vld [vmem:[%s1503] ss:$2 sm:$0xff]
        %s1505 = scalar_lea.vmem [#allocation2], 128
        %v1506 = vld [vmem:[%s1505] ss:$2 sm:$0xff]
        %s1507 = scalar_lea.vmem [#allocation2], 144
        %v1508 = vld [vmem:[%s1507] ss:$2 sm:$0xff]
        %s1509 = scalar_lea.vmem [#allocation2], 160
        %v1510 = vld [vmem:[%s1509] ss:$2 sm:$0xff]
        %s1511 = scalar_lea.vmem [#allocation2], 176
        %v1512 = vld [vmem:[%s1511] ss:$2 sm:$0xff]
        %s1513 = scalar_lea.vmem [#allocation2], 192
        %v1514 = vld [vmem:[%s1513] ss:$2 sm:$0xff]
        %s1515 = scalar_lea.vmem [#allocation2], 208
        %v1516 = vld [vmem:[%s1515] ss:$2 sm:$0xff]
        %s1517 = scalar_lea.vmem [#allocation2], 224
        %v1518 = vld [vmem:[%s1517] ss:$2 sm:$0xff]
        %s1519 = scalar_lea.vmem [#allocation2], 240
        %v1520 = vld [vmem:[%s1519] ss:$2 sm:$0xf]
        %s1521 = scalar_lea.vmem [#allocation2], 1
        %v1522 = vld [vmem:[%s1521] ss:$2 sm:$0xff]
        %s1523 = scalar_lea.vmem [#allocation2], 17
        %v1524 = vld [vmem:[%s1523] ss:$2 sm:$0xff]
        %s1525 = scalar_lea.vmem [#allocation2], 33
        %v1526 = vld [vmem:[%s1525] ss:$2 sm:$0xff]
        %s1527 = scalar_lea.vmem [#allocation2], 49
        %v1528 = vld [vmem:[%s1527] ss:$2 sm:$0xff]
        %s1529 = scalar_lea.vmem [#allocation2], 65
        %v1530 = vld [vmem:[%s1529] ss:$2 sm:$0xff]
        %s1531 = scalar_lea.vmem [#allocation2], 81
        %v1532 = vld [vmem:[%s1531] ss:$2 sm:$0xff]
        %s1533 = scalar_lea.vmem [#allocation2], 97
        %v1534 = vld [vmem:[%s1533] ss:$2 sm:$0xff]
        %s1535 = scalar_lea.vmem [#allocation2], 113
        %v1536 = vld [vmem:[%s1535] ss:$2 sm:$0xff]
        %s1537 = scalar_lea.vmem [#allocation2], 129
        %v1538 = vld [vmem:[%s1537] ss:$2 sm:$0xff]
        %s1539 = scalar_lea.vmem [#allocation2], 145
        %v1540 = vld [vmem:[%s1539] ss:$2 sm:$0xff]
        %s1541 = scalar_lea.vmem [#allocation2], 161
        %v1542 = vld [vmem:[%s1541] ss:$2 sm:$0xff]
        %s1543 = scalar_lea.vmem [#allocation2], 177
        %v1544 = vld [vmem:[%s1543] ss:$2 sm:$0xff]
        %s1545 = scalar_lea.vmem [#allocation2], 193
        %v1546 = vld [vmem:[%s1545] ss:$2 sm:$0xff]
        %s1547 = scalar_lea.vmem [#allocation2], 209
        %v1548 = vld [vmem:[%s1547] ss:$2 sm:$0xff]
        %s1549 = scalar_lea.vmem [#allocation2], 225
        %v1550 = vld [vmem:[%s1549] ss:$2 sm:$0xff]
        %s1551 = scalar_lea.vmem [#allocation2], 241
        %v1552 = vld [vmem:[%s1551] ss:$2 sm:$0xf]
        %v1553 = vmax.f32 %v1490, %v1522
        %v1554 = vmax.f32 %v1492, %v1524
        %v1555 = vmax.f32 %v1494, %v1526
        %v1556 = vmax.f32 %v1496, %v1528
        %v1557 = vmax.f32 %v1498, %v1530
        %v1558 = vmax.f32 %v1500, %v1532
        %v1559 = vmax.f32 %v1502, %v1534
        %v1560 = vmax.f32 %v1504, %v1536
        %v1561 = vmax.f32 %v1506, %v1538
        %v1562 = vmax.f32 %v1508, %v1540
        %v1563 = vmax.f32 %v1510, %v1542
        %v1564 = vmax.f32 %v1512, %v1544
        %v1565 = vmax.f32 %v1514, %v1546
        %v1566 = vmax.f32 %v1516, %v1548
        %v1567 = vmax.f32 %v1518, %v1550
        %v1568 = vmax.f32 %v1520, %v1552
        %v1569 = vmax.f32 %v1553, 0.0
        %v1570 = vmax.f32 %v1554, 0.0
        %v1571 = vmax.f32 %v1555, 0.0
        %v1572 = vmax.f32 %v1556, 0.0
        %v1573 = vmax.f32 %v1557, 0.0
        %v1574 = vmax.f32 %v1558, 0.0
        %v1575 = vmax.f32 %v1559, 0.0
        %v1576 = vmax.f32 %v1560, 0.0
        %v1577 = vmax.f32 %v1561, 0.0
        %v1578 = vmax.f32 %v1562, 0.0
        %v1579 = vmax.f32 %v1563, 0.0
        %v1580 = vmax.f32 %v1564, 0.0
        %v1581 = vmax.f32 %v1565, 0.0
        %v1582 = vmax.f32 %v1566, 0.0
        %v1583 = vmax.f32 %v1567, 0.0
        %v1584 = vmax.f32 %v1568, 0.0
        %vm1585 = vcmask 253952
        %1586 = vst.msk [vmem:[#allocation3] sm:$0x1] %vm1585, 0.0
        %1587 = vst.msk [vmem:[#allocation3 + $0x7d] sm:$0x1] %vm1585, 0.0
        %1588 = vst.msk [vmem:[#allocation3 + $0x1] sm:$0xff] %vm1458, %v1569
        %1589 = vst.msk [vmem:[#allocation3 + $0x9] sm:$0xff] %vm1458, %v1570
        %1590 = vst.msk [vmem:[#allocation3 + $0x11] sm:$0xff] %vm1458, %v1571
        %1591 = vst.msk [vmem:[#allocation3 + $0x19] sm:$0xff] %vm1458, %v1572
        %1592 = vst.msk [vmem:[#allocation3 + $0x21] sm:$0xff] %vm1458, %v1573
        %1593 = vst.msk [vmem:[#allocation3 + $0x29] sm:$0xff] %vm1458, %v1574
        %1594 = vst.msk [vmem:[#allocation3 + $0x31] sm:$0xff] %vm1458, %v1575
        %1595 = vst.msk [vmem:[#allocation3 + $0x39] sm:$0xff] %vm1458, %v1576
        %1596 = vst.msk [vmem:[#allocation3 + $0x41] sm:$0xff] %vm1458, %v1577
        %1597 = vst.msk [vmem:[#allocation3 + $0x49] sm:$0xff] %vm1458, %v1578
        %1598 = vst.msk [vmem:[#allocation3 + $0x51] sm:$0xff] %vm1458, %v1579
        %1599 = vst.msk [vmem:[#allocation3 + $0x59] sm:$0xff] %vm1458, %v1580
        %1600 = vst.msk [vmem:[#allocation3 + $0x61] sm:$0xff] %vm1458, %v1581
        %1601 = vst.msk [vmem:[#allocation3 + $0x69] sm:$0xff] %vm1458, %v1582
        %1602 = vst.msk [vmem:[#allocation3 + $0x71] sm:$0xff] %vm1458, %v1583
        %vm1603 = vcmask 257024
        %1604 = vst.msk [vmem:[#allocation3 + $0x79] sm:$0xf] %vm1603, %v1584
        %v1605 = vld [vmem:[#allocation3] sm:$0xff]
        %v1606 = vld [vmem:[#allocation3 + $0x8] sm:$0xff]
        %v1607 = vld [vmem:[#allocation3 + $0x10] sm:$0xff]
        %v1608 = vld [vmem:[#allocation3 + $0x18] sm:$0xff]
        %v1609 = vld [vmem:[#allocation3 + $0x20] sm:$0xff]
        %v1610 = vld [vmem:[#allocation3 + $0x28] sm:$0xff]
        %v1611 = vld [vmem:[#allocation3 + $0x30] sm:$0xff]
        %v1612 = vld [vmem:[#allocation3 + $0x38] sm:$0xff]
        %v1613 = vld [vmem:[#allocation3 + $0x40] sm:$0xff]
        %v1614 = vld [vmem:[#allocation3 + $0x48] sm:$0xff]
        %v1615 = vld [vmem:[#allocation3 + $0x50] sm:$0xff]
        %v1616 = vld [vmem:[#allocation3 + $0x58] sm:$0xff]
        %v1617 = vld [vmem:[#allocation3 + $0x60] sm:$0xff]
        %v1618 = vld [vmem:[#allocation3 + $0x68] sm:$0xff]
        %v1619 = vld [vmem:[#allocation3 + $0x70] sm:$0xff]
        %v1620 = vld [vmem:[#allocation3 + $0x78] sm:$0xf]
        %v1621 = vld [vmem:[%s3] sm:$0xff]
        %v1622 = vld [vmem:[%s3 + $0x8] sm:$0xff]
        %v1623 = vld [vmem:[%s3 + $0x10] sm:$0xff]
        %v1624 = vld [vmem:[%s3 + $0x18] sm:$0xff]
        %v1625 = vld [vmem:[#allocation3 + $0x1] sm:$0xff]
        %v1626 = vld [vmem:[#allocation3 + $0x9] sm:$0xff]
        %v1627 = vld [vmem:[#allocation3 + $0x11] sm:$0xff]
        %v1628 = vld [vmem:[#allocation3 + $0x19] sm:$0xff]
        %v1629 = vld [vmem:[#allocation3 + $0x21] sm:$0xff]
        %v1630 = vld [vmem:[#allocation3 + $0x29] sm:$0xff]
        %v1631 = vld [vmem:[#allocation3 + $0x31] sm:$0xff]
        %v1632 = vld [vmem:[#allocation3 + $0x39] sm:$0xff]
        %v1633 = vld [vmem:[#allocation3 + $0x41] sm:$0xff]
        %v1634 = vld [vmem:[#allocation3 + $0x49] sm:$0xff]
        %v1635 = vld [vmem:[#allocation3 + $0x51] sm:$0xff]
        %v1636 = vld [vmem:[#allocation3 + $0x59] sm:$0xff]
        %v1637 = vld [vmem:[#allocation3 + $0x61] sm:$0xff]
        %v1638 = vld [vmem:[#allocation3 + $0x69] sm:$0xff]
        %v1639 = vld [vmem:[#allocation3 + $0x71] sm:$0xff]
        %v1640 = vld [vmem:[#allocation3 + $0x79] sm:$0xf]
        %s1641 = scalar_lea.vmem %s3, 32
        %v1642 = vld [vmem:[%s1641] sm:$0xff]
        %v1643 = vld [vmem:[%s1641 + $0x8] sm:$0xff]
        %v1644 = vld [vmem:[%s1641 + $0x10] sm:$0xff]
        %v1645 = vld [vmem:[%s1641 + $0x18] sm:$0xff]
        %v1647 = vsel %vm1458, %v1625, 0
        %v1650 = vsel %vm1458, %v1626, 0
        %v1653 = vsel %vm1458, %v1627, 0
        %v1656 = vsel %vm1458, %v1628, 0
        %v1659 = vsel %vm1458, %v1629, 0
        %v1662 = vsel %vm1458, %v1630, 0
        %v1665 = vsel %vm1458, %v1631, 0
        %v1668 = vsel %vm1458, %v1632, 0
        %v1671 = vsel %vm1458, %v1633, 0
        %v1674 = vsel %vm1458, %v1634, 0
        %v1677 = vsel %vm1458, %v1635, 0
        %v1680 = vsel %vm1458, %v1636, 0
        %v1683 = vsel %vm1458, %v1637, 0
        %v1686 = vsel %vm1458, %v1638, 0
        %v1689 = vsel %vm1458, %v1639, 0
        %v1692 = vsel %vm1458, %v1640, 0
        %1694 = vmatprep.subr.mxu0 0.0
        %1695 = vmatpush1.msra.mxu0 %v1642
        %1696 = vmatprep.subr.mxu0 0.0
        %1697 = vmatpush1.msra.mxu0 %v1643
        %1698 = vmatprep.subr.mxu0 0.0
        %1699 = vmatpush1.msra.mxu0 %v1644
        %1700 = vmatprep.subr.mxu0 0.0
        %1701 = vmatpush1.msra.mxu0 %v1645
        %1702 = vmatprep.subr.mxu0 0.0
        %1703 = vmatpush1.msra.mxu0 0.0
        %1704 = vmatprep.subr.mxu0 0.0
        %1705 = vmatpush1.msra.mxu0 0.0
        %1706 = vmatprep.subr.mxu0 0.0
        %1707 = vmatpush1.msra.mxu0 0.0
        %1708 = vmatprep.subr.mxu0 0.0
        %1709 = vmatpush1.msra.mxu0 0.0
        %1710 = vmatprep.subr.mxu0 0.0
        %1711 = vmatpush1.msra.mxu0 0.0
        %1712 = vmatprep.subr.mxu0 0.0
        %1713 = vmatpush1.msra.mxu0 0.0
        %1714 = vmatprep.subr.mxu0 0.0
        %1715 = vmatpush1.msra.mxu0 0.0
        %1716 = vmatprep.subr.mxu0 0.0
        %1717 = vmatpush1.msra.mxu0 0.0
        %1718 = vmatprep.subr.mxu0 0.0
        %1719 = vmatpush1.msra.mxu0 0.0
        %1720 = vmatprep.subr.mxu0 0.0
        %1721 = vmatpush1.msra.mxu0 0.0
        %1722 = vmatprep.subr.mxu0 0.0
        %1723 = vmatpush1.msra.mxu0 0.0
        %1724 = vmatprep.subr.mxu0 0.0
        %1725 = vmatpush1.msra.mxu0 0.0
        %1726 = vmatprep.subr.mxu0 0.0
        %1727 = vmatpush1.msra.mxu0 0.0
        %1728 = vmatprep.subr.mxu0 0.0
        %1729 = vmatpush1.msra.mxu0 0.0
        %1730 = vmatprep.subr.mxu0 0.0
        %1731 = vmatpush1.msra.mxu0 0.0
        %1732 = vmatprep.subr.mxu0 0.0
        %1733 = vmatpush1.msra.mxu0 0.0
        %1734 = vmatprep.subr.mxu0 0.0
        %1735 = vmatpush1.msra.mxu0 0.0
        %1736 = vmatprep.subr.mxu0 0.0
        %1737 = vmatpush1.msra.mxu0 0.0
        %1738 = vmatprep.subr.mxu0 0.0
        %1739 = vmatpush1.msra.mxu0 0.0
        %1740 = vmatprep.subr.mxu0 0.0
        %1741 = vmatpush1.msra.mxu0 0.0
        %1742 = vmatprep.subr.mxu0 0.0
        %1743 = vmatpush1.msra.mxu0 0.0
        %1744 = vmatprep.subr.mxu0 0.0
        %1745 = vmatpush1.msra.mxu0 0.0
        %1746 = vmatprep.subr.mxu0 0.0
        %1747 = vmatpush1.msra.mxu0 0.0
        %1748 = vmatprep.subr.mxu0 0.0
        %1749 = vmatpush1.msra.mxu0 0.0
        %1750 = vmatprep.subr.mxu0 0.0
        %1751 = vmatpush1.msra.mxu0 0.0
        %1752 = vmatprep.subr.mxu0 0.0
        %1753 = vmatpush1.msra.mxu0 0.0
        %1754 = vmatprep.subr.mxu0 0.0
        %1755 = vmatpush1.msra.mxu0 0.0
        %1756 = vmatprep.subr.mxu0 0.0
        %1757 = vmatpush1.msra.mxu0 0.0
        %1758 = vmatprep.mubr.f32.mxu0 0.0
        %1759 = vmatmul.mubr.f32.gmra.mrb[0].mxu0 %v1647
        %v1760 = vpop.f32.mrb[0].mxu0
        %v1761 = vadd.f32 0.0, %v1760
        %v1762 = vpop.f32.mrb[0].mxu0
        %1763 = vmatprep.mubr.f32.mxu0 0.0
        %1764 = vmatmul.mubr.f32.gmra.mrb[0].mxu0 %v1650
        %v1765 = vpop.f32.mrb[0].mxu0
        %v1766 = vadd.f32 0.0, %v1765
        %v1767 = vpop.f32.mrb[0].mxu0
        %1768 = vmatprep.mubr.f32.mxu0 0.0
        %1769 = vmatmul.mubr.f32.gmra.mrb[0].mxu0 %v1653
        %v1770 = vpop.f32.mrb[0].mxu0
        %v1771 = vadd.f32 0.0, %v1770
        %v1772 = vpop.f32.mrb[0].mxu0
        %1773 = vmatprep.mubr.f32.mxu0 0.0
        %1774 = vmatmul.mubr.f32.gmra.mrb[0].mxu0 %v1656
        %v1775 = vpop.f32.mrb[0].mxu0
        %v1776 = vadd.f32 0.0, %v1775
        %v1777 = vpop.f32.mrb[0].mxu0
        %1778 = vmatprep.mubr.f32.mxu0 0.0
        %1779 = vmatmul.mubr.f32.gmra.mrb[0].mxu0 %v1659
        %v1780 = vpop.f32.mrb[0].mxu0
        %v1781 = vadd.f32 0.0, %v1780
        %v1782 = vpop.f32.mrb[0].mxu0
        %1783 = vmatprep.mubr.f32.mxu0 0.0
        %1784 = vmatmul.mubr.f32.gmra.mrb[0].mxu0 %v1662
        %v1785 = vpop.f32.mrb[0].mxu0
        %v1786 = vadd.f32 0.0, %v1785
        %v1787 = vpop.f32.mrb[0].mxu0
        %1788 = vmatprep.mubr.f32.mxu0 0.0
        %1789 = vmatmul.mubr.f32.gmra.mrb[0].mxu0 %v1665
        %v1790 = vpop.f32.mrb[0].mxu0
        %v1791 = vadd.f32 0.0, %v1790
        %v1792 = vpop.f32.mrb[0].mxu0
        %1793 = vmatprep.mubr.f32.mxu0 0.0
        %1794 = vmatmul.mubr.f32.gmra.mrb[0].mxu0 %v1668
        %v1795 = vpop.f32.mrb[0].mxu0
        %v1796 = vadd.f32 0.0, %v1795
        %v1797 = vpop.f32.mrb[0].mxu0
        %1798 = vmatprep.mubr.f32.mxu0 0.0
        %1799 = vmatmul.mubr.f32.gmra.mrb[0].mxu0 %v1671
        %v1800 = vpop.f32.mrb[0].mxu0
        %v1801 = vadd.f32 0.0, %v1800
        %v1802 = vpop.f32.mrb[0].mxu0
        %1803 = vmatprep.mubr.f32.mxu0 0.0
        %1804 = vmatmul.mubr.f32.gmra.mrb[0].mxu0 %v1674
        %v1805 = vpop.f32.mrb[0].mxu0
        %v1806 = vadd.f32 0.0, %v1805
        %v1807 = vpop.f32.mrb[0].mxu0
        %1808 = vmatprep.mubr.f32.mxu0 0.0
        %1809 = vmatmul.mubr.f32.gmra.mrb[0].mxu0 %v1677
        %v1810 = vpop.f32.mrb[0].mxu0
        %v1811 = vadd.f32 0.0, %v1810
        %v1812 = vpop.f32.mrb[0].mxu0
        %1813 = vmatprep.mubr.f32.mxu0 0.0
        %1814 = vmatmul.mubr.f32.gmra.mrb[0].mxu0 %v1680
        %v1815 = vpop.f32.mrb[0].mxu0
        %v1816 = vadd.f32 0.0, %v1815
        %v1817 = vpop.f32.mrb[0].mxu0
        %1818 = vmatprep.mubr.f32.mxu0 0.0
        %1819 = vmatmul.mubr.f32.gmra.mrb[0].mxu0 %v1683
        %v1820 = vpop.f32.mrb[0].mxu0
        %v1821 = vadd.f32 0.0, %v1820
        %v1822 = vpop.f32.mrb[0].mxu0
        %1823 = vmatprep.mubr.f32.mxu0 0.0
        %1824 = vmatmul.mubr.f32.gmra.mrb[0].mxu0 %v1686
        %v1825 = vpop.f32.mrb[0].mxu0
        %v1826 = vadd.f32 0.0, %v1825
        %v1827 = vpop.f32.mrb[0].mxu0
        %1828 = vmatprep.mubr.f32.mxu0 0.0
        %1829 = vmatmul.mubr.f32.gmra.mrb[0].mxu0 %v1689
        %v1830 = vpop.f32.mrb[0].mxu0
        %v1831 = vadd.f32 0.0, %v1830
        %v1832 = vpop.f32.mrb[0].mxu0
        %1833 = vmatprep.mubr.f32.mxu0 0.0
        %1834 = vmatmul.mubr.f32.gmra.mrb[0].mxu0 %v1692
        %v1835 = vpop.f32.mrb[0].mxu0
        %v1836 = vadd.f32 0.0, %v1835
        %v1837 = vpop.f32.mrb[0].mxu0
        %1838 = vdwg.mxu0
        %v1840 = vsel %vm1458, %v1605, 0
        %v1843 = vsel %vm1458, %v1606, 0
        %v1846 = vsel %vm1458, %v1607, 0
        %v1849 = vsel %vm1458, %v1608, 0
        %v1852 = vsel %vm1458, %v1609, 0
        %v1855 = vsel %vm1458, %v1610, 0
        %v1858 = vsel %vm1458, %v1611, 0
        %v1861 = vsel %vm1458, %v1612, 0
        %v1864 = vsel %vm1458, %v1613, 0
        %v1867 = vsel %vm1458, %v1614, 0
        %v1870 = vsel %vm1458, %v1615, 0
        %v1873 = vsel %vm1458, %v1616, 0
        %v1876 = vsel %vm1458, %v1617, 0
        %v1879 = vsel %vm1458, %v1618, 0
        %v1882 = vsel %vm1458, %v1619, 0
        %v1885 = vsel %vm1458, %v1620, 0
        %1887 = vmatprep.subr.mxu0 0.0
        %1888 = vmatpush1.msra.mxu0 %v1621
        %1889 = vmatprep.subr.mxu0 0.0
        %1890 = vmatpush1.msra.mxu0 %v1622
        %1891 = vmatprep.subr.mxu0 0.0
        %1892 = vmatpush1.msra.mxu0 %v1623
        %1893 = vmatprep.subr.mxu0 0.0
        %1894 = vmatpush1.msra.mxu0 %v1624
        %1895 = vmatprep.subr.mxu0 0.0
        %1896 = vmatpush1.msra.mxu0 0.0
        %1897 = vmatprep.subr.mxu0 0.0
        %1898 = vmatpush1.msra.mxu0 0.0
        %1899 = vmatprep.subr.mxu0 0.0
        %1900 = vmatpush1.msra.mxu0 0.0
        %1901 = vmatprep.subr.mxu0 0.0
        %1902 = vmatpush1.msra.mxu0 0.0
        %1903 = vmatprep.subr.mxu0 0.0
        %1904 = vmatpush1.msra.mxu0 0.0
        %1905 = vmatprep.subr.mxu0 0.0
        %1906 = vmatpush1.msra.mxu0 0.0
        %1907 = vmatprep.subr.mxu0 0.0
        %1908 = vmatpush1.msra.mxu0 0.0
        %1909 = vmatprep.subr.mxu0 0.0
        %1910 = vmatpush1.msra.mxu0 0.0
        %1911 = vmatprep.subr.mxu0 0.0
        %1912 = vmatpush1.msra.mxu0 0.0
        %1913 = vmatprep.subr.mxu0 0.0
        %1914 = vmatpush1.msra.mxu0 0.0
        %1915 = vmatprep.subr.mxu0 0.0
        %1916 = vmatpush1.msra.mxu0 0.0
        %1917 = vmatprep.subr.mxu0 0.0
        %1918 = vmatpush1.msra.mxu0 0.0
        %1919 = vmatprep.subr.mxu0 0.0
        %1920 = vmatpush1.msra.mxu0 0.0
        %1921 = vmatprep.subr.mxu0 0.0
        %1922 = vmatpush1.msra.mxu0 0.0
        %1923 = vmatprep.subr.mxu0 0.0
        %1924 = vmatpush1.msra.mxu0 0.0
        %1925 = vmatprep.subr.mxu0 0.0
        %1926 = vmatpush1.msra.mxu0 0.0
        %1927 = vmatprep.subr.mxu0 0.0
        %1928 = vmatpush1.msra.mxu0 0.0
        %1929 = vmatprep.subr.mxu0 0.0
        %1930 = vmatpush1.msra.mxu0 0.0
        %1931 = vmatprep.subr.mxu0 0.0
        %1932 = vmatpush1.msra.mxu0 0.0
        %1933 = vmatprep.subr.mxu0 0.0
        %1934 = vmatpush1.msra.mxu0 0.0
        %1935 = vmatprep.subr.mxu0 0.0
        %1936 = vmatpush1.msra.mxu0 0.0
        %1937 = vmatprep.subr.mxu0 0.0
        %1938 = vmatpush1.msra.mxu0 0.0
        %1939 = vmatprep.subr.mxu0 0.0
        %1940 = vmatpush1.msra.mxu0 0.0
        %1941 = vmatprep.subr.mxu0 0.0
        %1942 = vmatpush1.msra.mxu0 0.0
        %1943 = vmatprep.subr.mxu0 0.0
        %1944 = vmatpush1.msra.mxu0 0.0
        %1945 = vmatprep.subr.mxu0 0.0
        %1946 = vmatpush1.msra.mxu0 0.0
        %1947 = vmatprep.subr.mxu0 0.0
        %1948 = vmatpush1.msra.mxu0 0.0
        %1949 = vmatprep.subr.mxu0 0.0
        %1950 = vmatpush1.msra.mxu0 0.0
        %1951 = vmatprep.mubr.f32.mxu0 0.0
        %1952 = vmatmul.mubr.f32.gmra.mrb[0].mxu0 %v1840
        %v1953 = vpop.f32.mrb[0].mxu0
        %v1954 = vadd.f32 %v1761, %v1953
        %v1955 = vpop.f32.mrb[0].mxu0
        %1956 = vmatprep.mubr.f32.mxu0 0.0
        %1957 = vmatmul.mubr.f32.gmra.mrb[0].mxu0 %v1843
        %v1958 = vpop.f32.mrb[0].mxu0
        %v1959 = vadd.f32 %v1766, %v1958
        %v1960 = vpop.f32.mrb[0].mxu0
        %1961 = vmatprep.mubr.f32.mxu0 0.0
        %1962 = vmatmul.mubr.f32.gmra.mrb[0].mxu0 %v1846
        %v1963 = vpop.f32.mrb[0].mxu0
        %v1964 = vadd.f32 %v1771, %v1963
        %v1965 = vpop.f32.mrb[0].mxu0
        %1966 = vmatprep.mubr.f32.mxu0 0.0
        %1967 = vmatmul.mubr.f32.gmra.mrb[0].mxu0 %v1849
        %v1968 = vpop.f32.mrb[0].mxu0
        %v1969 = vadd.f32 %v1776, %v1968
        %v1970 = vpop.f32.mrb[0].mxu0
        %1971 = vmatprep.mubr.f32.mxu0 0.0
        %1972 = vmatmul.mubr.f32.gmra.mrb[0].mxu0 %v1852
        %v1973 = vpop.f32.mrb[0].mxu0
        %v1974 = vadd.f32 %v1781, %v1973
        %v1975 = vpop.f32.mrb[0].mxu0
        %1976 = vmatprep.mubr.f32.mxu0 0.0
        %1977 = vmatmul.mubr.f32.gmra.mrb[0].mxu0 %v1855
        %v1978 = vpop.f32.mrb[0].mxu0
        %v1979 = vadd.f32 %v1786, %v1978
        %v1980 = vpop.f32.mrb[0].mxu0
        %1981 = vmatprep.mubr.f32.mxu0 0.0
        %1982 = vmatmul.mubr.f32.gmra.mrb[0].mxu0 %v1858
        %v1983 = vpop.f32.mrb[0].mxu0
        %v1984 = vadd.f32 %v1791, %v1983
        %v1985 = vpop.f32.mrb[0].mxu0
        %1986 = vmatprep.mubr.f32.mxu0 0.0
        %1987 = vmatmul.mubr.f32.gmra.mrb[0].mxu0 %v1861
        %v1988 = vpop.f32.mrb[0].mxu0
        %v1989 = vadd.f32 %v1796, %v1988
        %v1990 = vpop.f32.mrb[0].mxu0
        %1991 = vmatprep.mubr.f32.mxu0 0.0
        %1992 = vmatmul.mubr.f32.gmra.mrb[0].mxu0 %v1864
        %v1993 = vpop.f32.mrb[0].mxu0
        %v1994 = vadd.f32 %v1801, %v1993
        %v1995 = vpop.f32.mrb[0].mxu0
        %1996 = vmatprep.mubr.f32.mxu0 0.0
        %1997 = vmatmul.mubr.f32.gmra.mrb[0].mxu0 %v1867
        %v1998 = vpop.f32.mrb[0].mxu0
        %v1999 = vadd.f32 %v1806, %v1998
        %v2000 = vpop.f32.mrb[0].mxu0
        %2001 = vmatprep.mubr.f32.mxu0 0.0
        %2002 = vmatmul.mubr.f32.gmra.mrb[0].mxu0 %v1870
        %v2003 = vpop.f32.mrb[0].mxu0
        %v2004 = vadd.f32 %v1811, %v2003
        %v2005 = vpop.f32.mrb[0].mxu0
        %2006 = vmatprep.mubr.f32.mxu0 0.0
        %2007 = vmatmul.mubr.f32.gmra.mrb[0].mxu0 %v1873
        %v2008 = vpop.f32.mrb[0].mxu0
        %v2009 = vadd.f32 %v1816, %v2008
        %v2010 = vpop.f32.mrb[0].mxu0
        %2011 = vmatprep.mubr.f32.mxu0 0.0
        %2012 = vmatmul.mubr.f32.gmra.mrb[0].mxu0 %v1876
        %v2013 = vpop.f32.mrb[0].mxu0
        %v2014 = vadd.f32 %v1821, %v2013
        %v2015 = vpop.f32.mrb[0].mxu0
        %2016 = vmatprep.mubr.f32.mxu0 0.0
        %2017 = vmatmul.mubr.f32.gmra.mrb[0].mxu0 %v1879
        %v2018 = vpop.f32.mrb[0].mxu0
        %v2019 = vadd.f32 %v1826, %v2018
        %v2020 = vpop.f32.mrb[0].mxu0
        %2021 = vmatprep.mubr.f32.mxu0 0.0
        %2022 = vmatmul.mubr.f32.gmra.mrb[0].mxu0 %v1882
        %v2023 = vpop.f32.mrb[0].mxu0
        %v2024 = vadd.f32 %v1831, %v2023
        %v2025 = vpop.f32.mrb[0].mxu0
        %2026 = vmatprep.mubr.f32.mxu0 0.0
        %2027 = vmatmul.mubr.f32.gmra.mrb[0].mxu0 %v1885
        %v2028 = vpop.f32.mrb[0].mxu0
        %v2029 = vadd.f32 %v1836, %v2028
        %v2030 = vpop.f32.mrb[0].mxu0
        %2031 = vdwg.mxu0
        %v2032 = vld [vmem:[#allocation3 + $0x2] sm:$0xff]
        %v2033 = vld [vmem:[#allocation3 + $0xa] sm:$0xff]
        %v2034 = vld [vmem:[#allocation3 + $0x12] sm:$0xff]
        %v2035 = vld [vmem:[#allocation3 + $0x1a] sm:$0xff]
        %v2036 = vld [vmem:[#allocation3 + $0x22] sm:$0xff]
        %v2037 = vld [vmem:[#allocation3 + $0x2a] sm:$0xff]
        %v2038 = vld [vmem:[#allocation3 + $0x32] sm:$0xff]
        %v2039 = vld [vmem:[#allocation3 + $0x3a] sm:$0xff]
        %v2040 = vld [vmem:[#allocation3 + $0x42] sm:$0xff]
        %v2041 = vld [vmem:[#allocation3 + $0x4a] sm:$0xff]
        %v2042 = vld [vmem:[#allocation3 + $0x52] sm:$0xff]
        %v2043 = vld [vmem:[#allocation3 + $0x5a] sm:$0xff]
        %v2044 = vld [vmem:[#allocation3 + $0x62] sm:$0xff]
        %v2045 = vld [vmem:[#allocation3 + $0x6a] sm:$0xff]
        %v2046 = vld [vmem:[#allocation3 + $0x72] sm:$0xff]
        %v2047 = vld [vmem:[#allocation3 + $0x7a] sm:$0xf]
        %s2048 = scalar_lea.vmem %s3, 64
        %v2049 = vld [vmem:[%s2048] sm:$0xff]
        %v2050 = vld [vmem:[%s2048 + $0x8] sm:$0xff]
        %v2051 = vld [vmem:[%s2048 + $0x10] sm:$0xff]
        %v2052 = vld [vmem:[%s2048 + $0x18] sm:$0xff]
        %v2054 = vsel %vm1458, %v2032, 0
        %v2057 = vsel %vm1458, %v2033, 0
        %v2060 = vsel %vm1458, %v2034, 0
        %v2063 = vsel %vm1458, %v2035, 0
        %v2066 = vsel %vm1458, %v2036, 0
        %v2069 = vsel %vm1458, %v2037, 0
        %v2072 = vsel %vm1458, %v2038, 0
        %v2075 = vsel %vm1458, %v2039, 0
        %v2078 = vsel %vm1458, %v2040, 0
        %v2081 = vsel %vm1458, %v2041, 0
        %v2084 = vsel %vm1458, %v2042, 0
        %v2087 = vsel %vm1458, %v2043, 0
        %v2090 = vsel %vm1458, %v2044, 0
        %v2093 = vsel %vm1458, %v2045, 0
        %v2096 = vsel %vm1458, %v2046, 0
        %v2099 = vsel %vm1458, %v2047, 0
        %2101 = vmatprep.subr.mxu0 0.0
        %2102 = vmatpush1.msra.mxu0 %v2049
        %2103 = vmatprep.subr.mxu0 0.0
        %2104 = vmatpush1.msra.mxu0 %v2050
        %2105 = vmatprep.subr.mxu0 0.0
        %2106 = vmatpush1.msra.mxu0 %v2051
        %2107 = vmatprep.subr.mxu0 0.0
        %2108 = vmatpush1.msra.mxu0 %v2052
        %2109 = vmatprep.subr.mxu0 0.0
        %2110 = vmatpush1.msra.mxu0 0.0
        %2111 = vmatprep.subr.mxu0 0.0
        %2112 = vmatpush1.msra.mxu0 0.0
        %2113 = vmatprep.subr.mxu0 0.0
        %2114 = vmatpush1.msra.mxu0 0.0
        %2115 = vmatprep.subr.mxu0 0.0
        %2116 = vmatpush1.msra.mxu0 0.0
        %2117 = vmatprep.subr.mxu0 0.0
        %2118 = vmatpush1.msra.mxu0 0.0
        %2119 = vmatprep.subr.mxu0 0.0
        %2120 = vmatpush1.msra.mxu0 0.0
        %2121 = vmatprep.subr.mxu0 0.0
        %2122 = vmatpush1.msra.mxu0 0.0
        %2123 = vmatprep.subr.mxu0 0.0
        %2124 = vmatpush1.msra.mxu0 0.0
        %2125 = vmatprep.subr.mxu0 0.0
        %2126 = vmatpush1.msra.mxu0 0.0
        %2127 = vmatprep.subr.mxu0 0.0
        %2128 = vmatpush1.msra.mxu0 0.0
        %2129 = vmatprep.subr.mxu0 0.0
        %2130 = vmatpush1.msra.mxu0 0.0
        %2131 = vmatprep.subr.mxu0 0.0
        %2132 = vmatpush1.msra.mxu0 0.0
        %2133 = vmatprep.subr.mxu0 0.0
        %2134 = vmatpush1.msra.mxu0 0.0
        %2135 = vmatprep.subr.mxu0 0.0
        %2136 = vmatpush1.msra.mxu0 0.0
        %2137 = vmatprep.subr.mxu0 0.0
        %2138 = vmatpush1.msra.mxu0 0.0
        %2139 = vmatprep.subr.mxu0 0.0
        %2140 = vmatpush1.msra.mxu0 0.0
        %2141 = vmatprep.subr.mxu0 0.0
        %2142 = vmatpush1.msra.mxu0 0.0
        %2143 = vmatprep.subr.mxu0 0.0
        %2144 = vmatpush1.msra.mxu0 0.0
        %2145 = vmatprep.subr.mxu0 0.0
        %2146 = vmatpush1.msra.mxu0 0.0
        %2147 = vmatprep.subr.mxu0 0.0
        %2148 = vmatpush1.msra.mxu0 0.0
        %2149 = vmatprep.subr.mxu0 0.0
        %2150 = vmatpush1.msra.mxu0 0.0
        %2151 = vmatprep.subr.mxu0 0.0
        %2152 = vmatpush1.msra.mxu0 0.0
        %2153 = vmatprep.subr.mxu0 0.0
        %2154 = vmatpush1.msra.mxu0 0.0
        %2155 = vmatprep.subr.mxu0 0.0
        %2156 = vmatpush1.msra.mxu0 0.0
        %2157 = vmatprep.subr.mxu0 0.0
        %2158 = vmatpush1.msra.mxu0 0.0
        %2159 = vmatprep.subr.mxu0 0.0
        %2160 = vmatpush1.msra.mxu0 0.0
        %2161 = vmatprep.subr.mxu0 0.0
        %2162 = vmatpush1.msra.mxu0 0.0
        %2163 = vmatprep.subr.mxu0 0.0
        %2164 = vmatpush1.msra.mxu0 0.0
        %2165 = vmatprep.mubr.f32.mxu0 0.0
        %2166 = vmatmul.mubr.f32.gmra.mrb[0].mxu0 %v2054
        %v2167 = vpop.f32.mrb[0].mxu0
        %v2168 = vadd.f32 0.0, %v2167
        %v2169 = vpop.f32.mrb[0].mxu0
        %2170 = vmatprep.mubr.f32.mxu0 0.0
        %2171 = vmatmul.mubr.f32.gmra.mrb[0].mxu0 %v2057
        %v2172 = vpop.f32.mrb[0].mxu0
        %v2173 = vadd.f32 0.0, %v2172
        %v2174 = vpop.f32.mrb[0].mxu0
        %2175 = vmatprep.mubr.f32.mxu0 0.0
        %2176 = vmatmul.mubr.f32.gmra.mrb[0].mxu0 %v2060
        %v2177 = vpop.f32.mrb[0].mxu0
        %v2178 = vadd.f32 0.0, %v2177
        %v2179 = vpop.f32.mrb[0].mxu0
        %2180 = vmatprep.mubr.f32.mxu0 0.0
        %2181 = vmatmul.mubr.f32.gmra.mrb[0].mxu0 %v2063
        %v2182 = vpop.f32.mrb[0].mxu0
        %v2183 = vadd.f32 0.0, %v2182
        %v2184 = vpop.f32.mrb[0].mxu0
        %2185 = vmatprep.mubr.f32.mxu0 0.0
        %2186 = vmatmul.mubr.f32.gmra.mrb[0].mxu0 %v2066
        %v2187 = vpop.f32.mrb[0].mxu0
        %v2188 = vadd.f32 0.0, %v2187
        %v2189 = vpop.f32.mrb[0].mxu0
        %2190 = vmatprep.mubr.f32.mxu0 0.0
        %2191 = vmatmul.mubr.f32.gmra.mrb[0].mxu0 %v2069
        %v2192 = vpop.f32.mrb[0].mxu0
        %v2193 = vadd.f32 0.0, %v2192
        %v2194 = vpop.f32.mrb[0].mxu0
        %2195 = vmatprep.mubr.f32.mxu0 0.0
        %2196 = vmatmul.mubr.f32.gmra.mrb[0].mxu0 %v2072
        %v2197 = vpop.f32.mrb[0].mxu0
        %v2198 = vadd.f32 0.0, %v2197
        %v2199 = vpop.f32.mrb[0].mxu0
        %2200 = vmatprep.mubr.f32.mxu0 0.0
        %2201 = vmatmul.mubr.f32.gmra.mrb[0].mxu0 %v2075
        %v2202 = vpop.f32.mrb[0].mxu0
        %v2203 = vadd.f32 0.0, %v2202
        %v2204 = vpop.f32.mrb[0].mxu0
        %2205 = vmatprep.mubr.f32.mxu0 0.0
        %2206 = vmatmul.mubr.f32.gmra.mrb[0].mxu0 %v2078
        %v2207 = vpop.f32.mrb[0].mxu0
        %v2208 = vadd.f32 0.0, %v2207
        %v2209 = vpop.f32.mrb[0].mxu0
        %2210 = vmatprep.mubr.f32.mxu0 0.0
        %2211 = vmatmul.mubr.f32.gmra.mrb[0].mxu0 %v2081
        %v2212 = vpop.f32.mrb[0].mxu0
        %v2213 = vadd.f32 0.0, %v2212
        %v2214 = vpop.f32.mrb[0].mxu0
        %2215 = vmatprep.mubr.f32.mxu0 0.0
        %2216 = vmatmul.mubr.f32.gmra.mrb[0].mxu0 %v2084
        %v2217 = vpop.f32.mrb[0].mxu0
        %v2218 = vadd.f32 0.0, %v2217
        %v2219 = vpop.f32.mrb[0].mxu0
        %2220 = vmatprep.mubr.f32.mxu0 0.0
        %2221 = vmatmul.mubr.f32.gmra.mrb[0].mxu0 %v2087
        %v2222 = vpop.f32.mrb[0].mxu0
        %v2223 = vadd.f32 0.0, %v2222
        %v2224 = vpop.f32.mrb[0].mxu0
        %2225 = vmatprep.mubr.f32.mxu0 0.0
        %2226 = vmatmul.mubr.f32.gmra.mrb[0].mxu0 %v2090
        %v2227 = vpop.f32.mrb[0].mxu0
        %v2228 = vadd.f32 0.0, %v2227
        %v2229 = vpop.f32.mrb[0].mxu0
        %2230 = vmatprep.mubr.f32.mxu0 0.0
        %2231 = vmatmul.mubr.f32.gmra.mrb[0].mxu0 %v2093
        %v2232 = vpop.f32.mrb[0].mxu0
        %v2233 = vadd.f32 0.0, %v2232
        %v2234 = vpop.f32.mrb[0].mxu0
        %2235 = vmatprep.mubr.f32.mxu0 0.0
        %2236 = vmatmul.mubr.f32.gmra.mrb[0].mxu0 %v2096
        %v2237 = vpop.f32.mrb[0].mxu0
        %v2238 = vadd.f32 0.0, %v2237
        %v2239 = vpop.f32.mrb[0].mxu0
        %2240 = vmatprep.mubr.f32.mxu0 0.0
        %2241 = vmatmul.mubr.f32.gmra.mrb[0].mxu0 %v2099
        %v2242 = vpop.f32.mrb[0].mxu0
        %v2243 = vadd.f32 0.0, %v2242
        %v2244 = vpop.f32.mrb[0].mxu0
        %2245 = vdwg.mxu0
        %v2246 = vadd.f32 %v1954, %v2168
        %v2247 = vadd.f32 %v1959, %v2173
        %v2248 = vadd.f32 %v1964, %v2178
        %v2249 = vadd.f32 %v1969, %v2183
        %v2250 = vadd.f32 %v1974, %v2188
        %v2251 = vadd.f32 %v1979, %v2193
        %v2252 = vadd.f32 %v1984, %v2198
        %v2253 = vadd.f32 %v1989, %v2203
        %v2254 = vadd.f32 %v1994, %v2208
        %v2255 = vadd.f32 %v1999, %v2213
        %v2256 = vadd.f32 %v2004, %v2218
        %v2257 = vadd.f32 %v2009, %v2223
        %v2258 = vadd.f32 %v2014, %v2228
        %v2259 = vadd.f32 %v2019, %v2233
        %v2260 = vadd.f32 %v2024, %v2238
        %v2261 = vadd.f32 %v2029, %v2243
        %v2262 = vld [vmem:[%s4] sm:$0x1]
        %v2264 = vlaneseq
        %v2265 = vshrl.u32 %v2264, 7
        %v2266 = vsub.s32 0, %v2265
        %v2267 = vrot.slane %v2262, %v2266
        %v2269 = vadd.f32 %v2246, %v2267
        %v2270 = vadd.f32 %v2247, %v2267
        %v2271 = vadd.f32 %v2248, %v2267
        %v2272 = vadd.f32 %v2249, %v2267
        %v2273 = vadd.f32 %v2250, %v2267
        %v2274 = vadd.f32 %v2251, %v2267
        %v2275 = vadd.f32 %v2252, %v2267
        %v2276 = vadd.f32 %v2253, %v2267
        %v2277 = vadd.f32 %v2254, %v2267
        %v2278 = vadd.f32 %v2255, %v2267
        %v2279 = vadd.f32 %v2256, %v2267
        %v2280 = vadd.f32 %v2257, %v2267
        %v2281 = vadd.f32 %v2258, %v2267
        %v2282 = vadd.f32 %v2259, %v2267
        %v2283 = vadd.f32 %v2260, %v2267
        %v2284 = vadd.f32 %v2261, %v2267
        %2285 = vst.msk [vmem:[#allocation4] sm:$0xff] %vm409, %v2269
        %2286 = vst.msk [vmem:[#allocation4 + $0x8] sm:$0xff] %vm409, %v2270
        %2287 = vst.msk [vmem:[#allocation4 + $0x10] sm:$0xff] %vm409, %v2271
        %2288 = vst.msk [vmem:[#allocation4 + $0x18] sm:$0xff] %vm409, %v2272
        %2289 = vst.msk [vmem:[#allocation4 + $0x20] sm:$0xff] %vm409, %v2273
        %2290 = vst.msk [vmem:[#allocation4 + $0x28] sm:$0xff] %vm409, %v2274
        %2291 = vst.msk [vmem:[#allocation4 + $0x30] sm:$0xff] %vm409, %v2275
        %2292 = vst.msk [vmem:[#allocation4 + $0x38] sm:$0xff] %vm409, %v2276
        %2293 = vst.msk [vmem:[#allocation4 + $0x40] sm:$0xff] %vm409, %v2277
        %2294 = vst.msk [vmem:[#allocation4 + $0x48] sm:$0xff] %vm409, %v2278
        %2295 = vst.msk [vmem:[#allocation4 + $0x50] sm:$0xff] %vm409, %v2279
        %2296 = vst.msk [vmem:[#allocation4 + $0x58] sm:$0xff] %vm409, %v2280
        %2297 = vst.msk [vmem:[#allocation4 + $0x60] sm:$0xff] %vm409, %v2281
        %2298 = vst.msk [vmem:[#allocation4 + $0x68] sm:$0xff] %vm409, %v2282
        %2299 = vst.msk [vmem:[#allocation4 + $0x70] sm:$0xff] %vm409, %v2283
        %vm2300 = vcmask 519168
        %2301 = vst.msk [vmem:[#allocation4 + $0x78] sm:$0xf] %vm2300, %v2284
        %v2302 = vld [vmem:[#allocation4] ss:$2 sm:$0xff]
        %s2303 = scalar_lea.vmem [#allocation4], 16
        %v2304 = vld [vmem:[%s2303] ss:$2 sm:$0xff]
        %s2305 = scalar_lea.vmem [#allocation4], 32
        %v2306 = vld [vmem:[%s2305] ss:$2 sm:$0xff]
        %s2307 = scalar_lea.vmem [#allocation4], 48
        %v2308 = vld [vmem:[%s2307] ss:$2 sm:$0xff]
        %s2309 = scalar_lea.vmem [#allocation4], 64
        %v2310 = vld [vmem:[%s2309] ss:$2 sm:$0xff]
        %s2311 = scalar_lea.vmem [#allocation4], 80
        %v2312 = vld [vmem:[%s2311] ss:$2 sm:$0xff]
        %s2313 = scalar_lea.vmem [#allocation4], 96
        %v2314 = vld [vmem:[%s2313] ss:$2 sm:$0xff]
        %s2315 = scalar_lea.vmem [#allocation4], 112
        %v2316 = vld [vmem:[%s2315] ss:$2 sm:$0x3f]
        %s2317 = scalar_lea.vmem [#allocation4], 1
        %v2318 = vld [vmem:[%s2317] ss:$2 sm:$0xff]
        %s2319 = scalar_lea.vmem [#allocation4], 17
        %v2320 = vld [vmem:[%s2319] ss:$2 sm:$0xff]
        %s2321 = scalar_lea.vmem [#allocation4], 33
        %v2322 = vld [vmem:[%s2321] ss:$2 sm:$0xff]
        %s2323 = scalar_lea.vmem [#allocation4], 49
        %v2324 = vld [vmem:[%s2323] ss:$2 sm:$0xff]
        %s2325 = scalar_lea.vmem [#allocation4], 65
        %v2326 = vld [vmem:[%s2325] ss:$2 sm:$0xff]
        %s2327 = scalar_lea.vmem [#allocation4], 81
        %v2328 = vld [vmem:[%s2327] ss:$2 sm:$0xff]
        %s2329 = scalar_lea.vmem [#allocation4], 97
        %v2330 = vld [vmem:[%s2329] ss:$2 sm:$0xff]
        %s2331 = scalar_lea.vmem [#allocation4], 113
        %v2332 = vld [vmem:[%s2331] ss:$2 sm:$0x3f]
        %v2333 = vmax.f32 %v2302, %v2318
        %v2334 = vmax.f32 %v2304, %v2320
        %v2335 = vmax.f32 %v2306, %v2322
        %v2336 = vmax.f32 %v2308, %v2324
        %v2337 = vmax.f32 %v2310, %v2326
        %v2338 = vmax.f32 %v2312, %v2328
        %v2339 = vmax.f32 %v2314, %v2330
        %v2340 = vmax.f32 %v2316, %v2332
        %v2341 = vmax.f32 %v2333, 0.0
        %v2342 = vmax.f32 %v2334, 0.0
        %v2343 = vmax.f32 %v2335, 0.0
        %v2344 = vmax.f32 %v2336, 0.0
        %v2345 = vmax.f32 %v2337, 0.0
        %v2346 = vmax.f32 %v2338, 0.0
        %v2347 = vmax.f32 %v2339, 0.0
        %v2348 = vmax.f32 %v2340, 0.0
        %2349 = vst.msk [vmem:[#allocation5] sm:$0xff] %vm409, %v2341
        %2350 = vst.msk [vmem:[#allocation5 + $0x8] sm:$0xff] %vm409, %v2342
        %2351 = vst.msk [vmem:[#allocation5 + $0x10] sm:$0xff] %vm409, %v2343
        %2352 = vst.msk [vmem:[#allocation5 + $0x18] sm:$0xff] %vm409, %v2344
        %2353 = vst.msk [vmem:[#allocation5 + $0x20] sm:$0xff] %vm409, %v2345
        %2354 = vst.msk [vmem:[#allocation5 + $0x28] sm:$0xff] %vm409, %v2346
        %2355 = vst.msk [vmem:[#allocation5 + $0x30] sm:$0xff] %vm409, %v2347
        %vm2356 = vcmask 521216
        %2357 = vst.msk [vmem:[#allocation5 + $0x38] sm:$0x3f] %vm2356, %v2348
        %v2358 = vld [vmem:[#allocation5] sm:$0xff]
        %v2359 = vld [vmem:[#allocation5 + $0x8] sm:$0xff]
        %v2360 = vld [vmem:[#allocation5 + $0x10] sm:$0xff]
        %v2361 = vld [vmem:[#allocation5 + $0x18] sm:$0xff]
        %v2362 = vld [vmem:[#allocation5 + $0x20] sm:$0xff]
        %v2363 = vld [vmem:[#allocation5 + $0x28] sm:$0xff]
        %v2364 = vld [vmem:[#allocation5 + $0x30] sm:$0xff]
        %v2365 = vld [vmem:[#allocation5 + $0x38] sm:$0xf]
        %v2366 = vld [vmem:[%s5] sm:$0xff]
        %v2367 = vld [vmem:[%s5 + $0x8] sm:$0xff]
        %v2368 = vld [vmem:[%s5 + $0x10] sm:$0xff]
        %v2369 = vld [vmem:[%s5 + $0x18] sm:$0xff]
        %v2370 = vld [vmem:[%s5 + $0x20] sm:$0xff]
        %v2371 = vld [vmem:[%s5 + $0x28] sm:$0xff]
        %v2372 = vld [vmem:[%s5 + $0x30] sm:$0xff]
        %v2373 = vld [vmem:[%s5 + $0x38] sm:$0xff]
        %v2374 = vld [vmem:[#allocation5 + $0x1] sm:$0xff]
        %v2375 = vld [vmem:[#allocation5 + $0x9] sm:$0xff]
        %v2376 = vld [vmem:[#allocation5 + $0x11] sm:$0xff]
        %v2377 = vld [vmem:[#allocation5 + $0x19] sm:$0xff]
        %v2378 = vld [vmem:[#allocation5 + $0x21] sm:$0xff]
        %v2379 = vld [vmem:[#allocation5 + $0x29] sm:$0xff]
        %v2380 = vld [vmem:[#allocation5 + $0x31] sm:$0xff]
        %v2381 = vld [vmem:[#allocation5 + $0x39] sm:$0xf]
        %s2382 = scalar_lea.vmem %s5, 64
        %v2383 = vld [vmem:[%s2382] sm:$0xff]
        %v2384 = vld [vmem:[%s2382 + $0x8] sm:$0xff]
        %v2385 = vld [vmem:[%s2382 + $0x10] sm:$0xff]
        %v2386 = vld [vmem:[%s2382 + $0x18] sm:$0xff]
        %v2387 = vld [vmem:[%s2382 + $0x20] sm:$0xff]
        %v2388 = vld [vmem:[%s2382 + $0x28] sm:$0xff]
        %v2389 = vld [vmem:[%s2382 + $0x30] sm:$0xff]
        %v2390 = vld [vmem:[%s2382 + $0x38] sm:$0xff]
        %v2392 = vsel %vm409, %v2374, 0
        %v2395 = vsel %vm409, %v2375, 0
        %v2398 = vsel %vm409, %v2376, 0
        %v2401 = vsel %vm409, %v2377, 0
        %v2404 = vsel %vm409, %v2378, 0
        %v2407 = vsel %vm409, %v2379, 0
        %v2410 = vsel %vm409, %v2380, 0
        %v2413 = vsel %vm409, %v2381, 0
        %2415 = vmatprep.subr.mxu0 0.0
        %2416 = vmatpush1.msra.mxu0 %v2383
        %2417 = vmatprep.subr.mxu0 0.0
        %2418 = vmatpush1.msra.mxu0 %v2384
        %2419 = vmatprep.subr.mxu0 0.0
        %2420 = vmatpush1.msra.mxu0 %v2385
        %2421 = vmatprep.subr.mxu0 0.0
        %2422 = vmatpush1.msra.mxu0 %v2386
        %2423 = vmatprep.subr.mxu0 0.0
        %2424 = vmatpush1.msra.mxu0 %v2387
        %2425 = vmatprep.subr.mxu0 0.0
        %2426 = vmatpush1.msra.mxu0 %v2388
        %2427 = vmatprep.subr.mxu0 0.0
        %2428 = vmatpush1.msra.mxu0 %v2389
        %2429 = vmatprep.subr.mxu0 0.0
        %2430 = vmatpush1.msra.mxu0 %v2390
        %2431 = vmatprep.subr.mxu0 0.0
        %2432 = vmatpush1.msra.mxu0 0.0
        %2433 = vmatprep.subr.mxu0 0.0
        %2434 = vmatpush1.msra.mxu0 0.0
        %2435 = vmatprep.subr.mxu0 0.0
        %2436 = vmatpush1.msra.mxu0 0.0
        %2437 = vmatprep.subr.mxu0 0.0
        %2438 = vmatpush1.msra.mxu0 0.0
        %2439 = vmatprep.subr.mxu0 0.0
        %2440 = vmatpush1.msra.mxu0 0.0
        %2441 = vmatprep.subr.mxu0 0.0
        %2442 = vmatpush1.msra.mxu0 0.0
        %2443 = vmatprep.subr.mxu0 0.0
        %2444 = vmatpush1.msra.mxu0 0.0
        %2445 = vmatprep.subr.mxu0 0.0
        %2446 = vmatpush1.msra.mxu0 0.0
        %2447 = vmatprep.subr.mxu0 0.0
        %2448 = vmatpush1.msra.mxu0 0.0
        %2449 = vmatprep.subr.mxu0 0.0
        %2450 = vmatpush1.msra.mxu0 0.0
        %2451 = vmatprep.subr.mxu0 0.0
        %2452 = vmatpush1.msra.mxu0 0.0
        %2453 = vmatprep.subr.mxu0 0.0
        %2454 = vmatpush1.msra.mxu0 0.0
        %2455 = vmatprep.subr.mxu0 0.0
        %2456 = vmatpush1.msra.mxu0 0.0
        %2457 = vmatprep.subr.mxu0 0.0
        %2458 = vmatpush1.msra.mxu0 0.0
        %2459 = vmatprep.subr.mxu0 0.0
        %2460 = vmatpush1.msra.mxu0 0.0
        %2461 = vmatprep.subr.mxu0 0.0
        %2462 = vmatpush1.msra.mxu0 0.0
        %2463 = vmatprep.subr.mxu0 0.0
        %2464 = vmatpush1.msra.mxu0 0.0
        %2465 = vmatprep.subr.mxu0 0.0
        %2466 = vmatpush1.msra.mxu0 0.0
        %2467 = vmatprep.subr.mxu0 0.0
        %2468 = vmatpush1.msra.mxu0 0.0
        %2469 = vmatprep.subr.mxu0 0.0
        %2470 = vmatpush1.msra.mxu0 0.0
        %2471 = vmatprep.subr.mxu0 0.0
        %2472 = vmatpush1.msra.mxu0 0.0
        %2473 = vmatprep.subr.mxu0 0.0
        %2474 = vmatpush1.msra.mxu0 0.0
        %2475 = vmatprep.subr.mxu0 0.0
        %2476 = vmatpush1.msra.mxu0 0.0
        %2477 = vmatprep.subr.mxu0 0.0
        %2478 = vmatpush1.msra.mxu0 0.0
        %2479 = vmatprep.mubr.f32.mxu0 0.0
        %2480 = vmatmul.mubr.f32.gmra.mrb[0].mxu0 %v2392
        %v2481 = vpop.f32.mrb[0].mxu0
        %v2482 = vadd.f32 0.0, %v2481
        %v2483 = vpop.f32.mrb[0].mxu0
        %2484 = vmatprep.mubr.f32.mxu0 0.0
        %2485 = vmatmul.mubr.f32.gmra.mrb[0].mxu0 %v2395
        %v2486 = vpop.f32.mrb[0].mxu0
        %v2487 = vadd.f32 0.0, %v2486
        %v2488 = vpop.f32.mrb[0].mxu0
        %2489 = vmatprep.mubr.f32.mxu0 0.0
        %2490 = vmatmul.mubr.f32.gmra.mrb[0].mxu0 %v2398
        %v2491 = vpop.f32.mrb[0].mxu0
        %v2492 = vadd.f32 0.0, %v2491
        %v2493 = vpop.f32.mrb[0].mxu0
        %2494 = vmatprep.mubr.f32.mxu0 0.0
        %2495 = vmatmul.mubr.f32.gmra.mrb[0].mxu0 %v2401
        %v2496 = vpop.f32.mrb[0].mxu0
        %v2497 = vadd.f32 0.0, %v2496
        %v2498 = vpop.f32.mrb[0].mxu0
        %2499 = vmatprep.mubr.f32.mxu0 0.0
        %2500 = vmatmul.mubr.f32.gmra.mrb[0].mxu0 %v2404
        %v2501 = vpop.f32.mrb[0].mxu0
        %v2502 = vadd.f32 0.0, %v2501
        %v2503 = vpop.f32.mrb[0].mxu0
        %2504 = vmatprep.mubr.f32.mxu0 0.0
        %2505 = vmatmul.mubr.f32.gmra.mrb[0].mxu0 %v2407
        %v2506 = vpop.f32.mrb[0].mxu0
        %v2507 = vadd.f32 0.0, %v2506
        %v2508 = vpop.f32.mrb[0].mxu0
        %2509 = vmatprep.mubr.f32.mxu0 0.0
        %2510 = vmatmul.mubr.f32.gmra.mrb[0].mxu0 %v2410
        %v2511 = vpop.f32.mrb[0].mxu0
        %v2512 = vadd.f32 0.0, %v2511
        %v2513 = vpop.f32.mrb[0].mxu0
        %2514 = vmatprep.mubr.f32.mxu0 0.0
        %2515 = vmatmul.mubr.f32.gmra.mrb[0].mxu0 %v2413
        %v2516 = vpop.f32.mrb[0].mxu0
        %v2517 = vadd.f32 0.0, %v2516
        %v2518 = vpop.f32.mrb[0].mxu0
        %2519 = vdwg.mxu0
        %v2521 = vsel %vm409, %v2358, 0
        %v2524 = vsel %vm409, %v2359, 0
        %v2527 = vsel %vm409, %v2360, 0
        %v2530 = vsel %vm409, %v2361, 0
        %v2533 = vsel %vm409, %v2362, 0
        %v2536 = vsel %vm409, %v2363, 0
        %v2539 = vsel %vm409, %v2364, 0
        %v2542 = vsel %vm409, %v2365, 0
        %2544 = vmatprep.subr.mxu0 0.0
        %2545 = vmatpush1.msra.mxu0 %v2366
        %2546 = vmatprep.subr.mxu0 0.0
        %2547 = vmatpush1.msra.mxu0 %v2367
        %2548 = vmatprep.subr.mxu0 0.0
        %2549 = vmatpush1.msra.mxu0 %v2368
        %2550 = vmatprep.subr.mxu0 0.0
        %2551 = vmatpush1.msra.mxu0 %v2369
        %2552 = vmatprep.subr.mxu0 0.0
        %2553 = vmatpush1.msra.mxu0 %v2370
        %2554 = vmatprep.subr.mxu0 0.0
        %2555 = vmatpush1.msra.mxu0 %v2371
        %2556 = vmatprep.subr.mxu0 0.0
        %2557 = vmatpush1.msra.mxu0 %v2372
        %2558 = vmatprep.subr.mxu0 0.0
        %2559 = vmatpush1.msra.mxu0 %v2373
        %2560 = vmatprep.subr.mxu0 0.0
        %2561 = vmatpush1.msra.mxu0 0.0
        %2562 = vmatprep.subr.mxu0 0.0
        %2563 = vmatpush1.msra.mxu0 0.0
        %2564 = vmatprep.subr.mxu0 0.0
        %2565 = vmatpush1.msra.mxu0 0.0
        %2566 = vmatprep.subr.mxu0 0.0
        %2567 = vmatpush1.msra.mxu0 0.0
        %2568 = vmatprep.subr.mxu0 0.0
        %2569 = vmatpush1.msra.mxu0 0.0
        %2570 = vmatprep.subr.mxu0 0.0
        %2571 = vmatpush1.msra.mxu0 0.0
        %2572 = vmatprep.subr.mxu0 0.0
        %2573 = vmatpush1.msra.mxu0 0.0
        %2574 = vmatprep.subr.mxu0 0.0
        %2575 = vmatpush1.msra.mxu0 0.0
        %2576 = vmatprep.subr.mxu0 0.0
        %2577 = vmatpush1.msra.mxu0 0.0
        %2578 = vmatprep.subr.mxu0 0.0
        %2579 = vmatpush1.msra.mxu0 0.0
        %2580 = vmatprep.subr.mxu0 0.0
        %2581 = vmatpush1.msra.mxu0 0.0
        %2582 = vmatprep.subr.mxu0 0.0
        %2583 = vmatpush1.msra.mxu0 0.0
        %2584 = vmatprep.subr.mxu0 0.0
        %2585 = vmatpush1.msra.mxu0 0.0
        %2586 = vmatprep.subr.mxu0 0.0
        %2587 = vmatpush1.msra.mxu0 0.0
        %2588 = vmatprep.subr.mxu0 0.0
        %2589 = vmatpush1.msra.mxu0 0.0
        %2590 = vmatprep.subr.mxu0 0.0
        %2591 = vmatpush1.msra.mxu0 0.0
        %2592 = vmatprep.subr.mxu0 0.0
        %2593 = vmatpush1.msra.mxu0 0.0
        %2594 = vmatprep.subr.mxu0 0.0
        %2595 = vmatpush1.msra.mxu0 0.0
        %2596 = vmatprep.subr.mxu0 0.0
        %2597 = vmatpush1.msra.mxu0 0.0
        %2598 = vmatprep.subr.mxu0 0.0
        %2599 = vmatpush1.msra.mxu0 0.0
        %2600 = vmatprep.subr.mxu0 0.0
        %2601 = vmatpush1.msra.mxu0 0.0
        %2602 = vmatprep.subr.mxu0 0.0
        %2603 = vmatpush1.msra.mxu0 0.0
        %2604 = vmatprep.subr.mxu0 0.0
        %2605 = vmatpush1.msra.mxu0 0.0
        %2606 = vmatprep.subr.mxu0 0.0
        %2607 = vmatpush1.msra.mxu0 0.0
        %2608 = vmatprep.mubr.f32.mxu0 0.0
        %2609 = vmatmul.mubr.f32.gmra.mrb[0].mxu0 %v2521
        %v2610 = vpop.f32.mrb[0].mxu0
        %v2611 = vadd.f32 %v2482, %v2610
        %v2612 = vpop.f32.mrb[0].mxu0
        %2613 = vmatprep.mubr.f32.mxu0 0.0
        %2614 = vmatmul.mubr.f32.gmra.mrb[0].mxu0 %v2524
        %v2615 = vpop.f32.mrb[0].mxu0
        %v2616 = vadd.f32 %v2487, %v2615
        %v2617 = vpop.f32.mrb[0].mxu0
        %2618 = vmatprep.mubr.f32.mxu0 0.0
        %2619 = vmatmul.mubr.f32.gmra.mrb[0].mxu0 %v2527
        %v2620 = vpop.f32.mrb[0].mxu0
        %v2621 = vadd.f32 %v2492, %v2620
        %v2622 = vpop.f32.mrb[0].mxu0
        %2623 = vmatprep.mubr.f32.mxu0 0.0
        %2624 = vmatmul.mubr.f32.gmra.mrb[0].mxu0 %v2530
        %v2625 = vpop.f32.mrb[0].mxu0
        %v2626 = vadd.f32 %v2497, %v2625
        %v2627 = vpop.f32.mrb[0].mxu0
        %2628 = vmatprep.mubr.f32.mxu0 0.0
        %2629 = vmatmul.mubr.f32.gmra.mrb[0].mxu0 %v2533
        %v2630 = vpop.f32.mrb[0].mxu0
        %v2631 = vadd.f32 %v2502, %v2630
        %v2632 = vpop.f32.mrb[0].mxu0
        %2633 = vmatprep.mubr.f32.mxu0 0.0
        %2634 = vmatmul.mubr.f32.gmra.mrb[0].mxu0 %v2536
        %v2635 = vpop.f32.mrb[0].mxu0
        %v2636 = vadd.f32 %v2507, %v2635
        %v2637 = vpop.f32.mrb[0].mxu0
        %2638 = vmatprep.mubr.f32.mxu0 0.0
        %2639 = vmatmul.mubr.f32.gmra.mrb[0].mxu0 %v2539
        %v2640 = vpop.f32.mrb[0].mxu0
        %v2641 = vadd.f32 %v2512, %v2640
        %v2642 = vpop.f32.mrb[0].mxu0
        %2643 = vmatprep.mubr.f32.mxu0 0.0
        %2644 = vmatmul.mubr.f32.gmra.mrb[0].mxu0 %v2542
        %v2645 = vpop.f32.mrb[0].mxu0
        %v2646 = vadd.f32 %v2517, %v2645
        %v2647 = vpop.f32.mrb[0].mxu0
        %2648 = vdwg.mxu0
        %v2649 = vld [vmem:[#allocation5 + $0x2] sm:$0xff]
        %v2650 = vld [vmem:[#allocation5 + $0xa] sm:$0xff]
        %v2651 = vld [vmem:[#allocation5 + $0x12] sm:$0xff]
        %v2652 = vld [vmem:[#allocation5 + $0x1a] sm:$0xff]
        %v2653 = vld [vmem:[#allocation5 + $0x22] sm:$0xff]
        %v2654 = vld [vmem:[#allocation5 + $0x2a] sm:$0xff]
        %v2655 = vld [vmem:[#allocation5 + $0x32] sm:$0xff]
        %v2656 = vld [vmem:[#allocation5 + $0x3a] sm:$0xf]
        %s2657 = scalar_lea.vmem %s5, 128
        %v2658 = vld [vmem:[%s2657] sm:$0xff]
        %v2659 = vld [vmem:[%s2657 + $0x8] sm:$0xff]
        %v2660 = vld [vmem:[%s2657 + $0x10] sm:$0xff]
        %v2661 = vld [vmem:[%s2657 + $0x18] sm:$0xff]
        %v2662 = vld [vmem:[%s2657 + $0x20] sm:$0xff]
        %v2663 = vld [vmem:[%s2657 + $0x28] sm:$0xff]
        %v2664 = vld [vmem:[%s2657 + $0x30] sm:$0xff]
        %v2665 = vld [vmem:[%s2657 + $0x38] sm:$0xff]
        %v2667 = vsel %vm409, %v2649, 0
        %v2670 = vsel %vm409, %v2650, 0
        %v2673 = vsel %vm409, %v2651, 0
        %v2676 = vsel %vm409, %v2652, 0
        %v2679 = vsel %vm409, %v2653, 0
        %v2682 = vsel %vm409, %v2654, 0
        %v2685 = vsel %vm409, %v2655, 0
        %v2688 = vsel %vm409, %v2656, 0
        %2690 = vmatprep.subr.mxu0 0.0
        %2691 = vmatpush1.msra.mxu0 %v2658
        %2692 = vmatprep.subr.mxu0 0.0
        %2693 = vmatpush1.msra.mxu0 %v2659
        %2694 = vmatprep.subr.mxu0 0.0
        %2695 = vmatpush1.msra.mxu0 %v2660
        %2696 = vmatprep.subr.mxu0 0.0
        %2697 = vmatpush1.msra.mxu0 %v2661
        %2698 = vmatprep.subr.mxu0 0.0
        %2699 = vmatpush1.msra.mxu0 %v2662
        %2700 = vmatprep.subr.mxu0 0.0
        %2701 = vmatpush1.msra.mxu0 %v2663
        %2702 = vmatprep.subr.mxu0 0.0
        %2703 = vmatpush1.msra.mxu0 %v2664
        %2704 = vmatprep.subr.mxu0 0.0
        %2705 = vmatpush1.msra.mxu0 %v2665
        %2706 = vmatprep.subr.mxu0 0.0
        %2707 = vmatpush1.msra.mxu0 0.0
        %2708 = vmatprep.subr.mxu0 0.0
        %2709 = vmatpush1.msra.mxu0 0.0
        %2710 = vmatprep.subr.mxu0 0.0
        %2711 = vmatpush1.msra.mxu0 0.0
        %2712 = vmatprep.subr.mxu0 0.0
        %2713 = vmatpush1.msra.mxu0 0.0
        %2714 = vmatprep.subr.mxu0 0.0
        %2715 = vmatpush1.msra.mxu0 0.0
        %2716 = vmatprep.subr.mxu0 0.0
        %2717 = vmatpush1.msra.mxu0 0.0
        %2718 = vmatprep.subr.mxu0 0.0
        %2719 = vmatpush1.msra.mxu0 0.0
        %2720 = vmatprep.subr.mxu0 0.0
        %2721 = vmatpush1.msra.mxu0 0.0
        %2722 = vmatprep.subr.mxu0 0.0
        %2723 = vmatpush1.msra.mxu0 0.0
        %2724 = vmatprep.subr.mxu0 0.0
        %2725 = vmatpush1.msra.mxu0 0.0
        %2726 = vmatprep.subr.mxu0 0.0
        %2727 = vmatpush1.msra.mxu0 0.0
        %2728 = vmatprep.subr.mxu0 0.0
        %2729 = vmatpush1.msra.mxu0 0.0
        %2730 = vmatprep.subr.mxu0 0.0
        %2731 = vmatpush1.msra.mxu0 0.0
        %2732 = vmatprep.subr.mxu0 0.0
        %2733 = vmatpush1.msra.mxu0 0.0
        %2734 = vmatprep.subr.mxu0 0.0
        %2735 = vmatpush1.msra.mxu0 0.0
        %2736 = vmatprep.subr.mxu0 0.0
        %2737 = vmatpush1.msra.mxu0 0.0
        %2738 = vmatprep.subr.mxu0 0.0
        %2739 = vmatpush1.msra.mxu0 0.0
        %2740 = vmatprep.subr.mxu0 0.0
        %2741 = vmatpush1.msra.mxu0 0.0
        %2742 = vmatprep.subr.mxu0 0.0
        %2743 = vmatpush1.msra.mxu0 0.0
        %2744 = vmatprep.subr.mxu0 0.0
        %2745 = vmatpush1.msra.mxu0 0.0
        %2746 = vmatprep.subr.mxu0 0.0
        %2747 = vmatpush1.msra.mxu0 0.0
        %2748 = vmatprep.subr.mxu0 0.0
        %2749 = vmatpush1.msra.mxu0 0.0
        %2750 = vmatprep.subr.mxu0 0.0
        %2751 = vmatpush1.msra.mxu0 0.0
        %2752 = vmatprep.subr.mxu0 0.0
        %2753 = vmatpush1.msra.mxu0 0.0
        %2754 = vmatprep.mubr.f32.mxu0 0.0
        %2755 = vmatmul.mubr.f32.gmra.mrb[0].mxu0 %v2667
        %v2756 = vpop.f32.mrb[0].mxu0
        %v2757 = vadd.f32 0.0, %v2756
        %v2758 = vpop.f32.mrb[0].mxu0
        %2759 = vmatprep.mubr.f32.mxu0 0.0
        %2760 = vmatmul.mubr.f32.gmra.mrb[0].mxu0 %v2670
        %v2761 = vpop.f32.mrb[0].mxu0
        %v2762 = vadd.f32 0.0, %v2761
        %v2763 = vpop.f32.mrb[0].mxu0
        %2764 = vmatprep.mubr.f32.mxu0 0.0
        %2765 = vmatmul.mubr.f32.gmra.mrb[0].mxu0 %v2673
        %v2766 = vpop.f32.mrb[0].mxu0
        %v2767 = vadd.f32 0.0, %v2766
        %v2768 = vpop.f32.mrb[0].mxu0
        %2769 = vmatprep.mubr.f32.mxu0 0.0
        %2770 = vmatmul.mubr.f32.gmra.mrb[0].mxu0 %v2676
        %v2771 = vpop.f32.mrb[0].mxu0
        %v2772 = vadd.f32 0.0, %v2771
        %v2773 = vpop.f32.mrb[0].mxu0
        %2774 = vmatprep.mubr.f32.mxu0 0.0
        %2775 = vmatmul.mubr.f32.gmra.mrb[0].mxu0 %v2679
        %v2776 = vpop.f32.mrb[0].mxu0
        %v2777 = vadd.f32 0.0, %v2776
        %v2778 = vpop.f32.mrb[0].mxu0
        %2779 = vmatprep.mubr.f32.mxu0 0.0
        %2780 = vmatmul.mubr.f32.gmra.mrb[0].mxu0 %v2682
        %v2781 = vpop.f32.mrb[0].mxu0
        %v2782 = vadd.f32 0.0, %v2781
        %v2783 = vpop.f32.mrb[0].mxu0
        %2784 = vmatprep.mubr.f32.mxu0 0.0
        %2785 = vmatmul.mubr.f32.gmra.mrb[0].mxu0 %v2685
        %v2786 = vpop.f32.mrb[0].mxu0
        %v2787 = vadd.f32 0.0, %v2786
        %v2788 = vpop.f32.mrb[0].mxu0
        %2789 = vmatprep.mubr.f32.mxu0 0.0
        %2790 = vmatmul.mubr.f32.gmra.mrb[0].mxu0 %v2688
        %v2791 = vpop.f32.mrb[0].mxu0
        %v2792 = vadd.f32 0.0, %v2791
        %v2793 = vpop.f32.mrb[0].mxu0
        %2794 = vdwg.mxu0
        %v2795 = vadd.f32 %v2611, %v2757
        %v2796 = vadd.f32 %v2616, %v2762
        %v2797 = vadd.f32 %v2621, %v2767
        %v2798 = vadd.f32 %v2626, %v2772
        %v2799 = vadd.f32 %v2631, %v2777
        %v2800 = vadd.f32 %v2636, %v2782
        %v2801 = vadd.f32 %v2641, %v2787
        %v2802 = vadd.f32 %v2646, %v2792
        %v2803 = vld [vmem:[%s6] sm:$0x1]
        %v2805 = vlaneseq
        %v2806 = vshrl.u32 %v2805, 7
        %v2807 = vsub.s32 0, %v2806
        %v2808 = vrot.slane %v2803, %v2807
        %v2810 = vadd.f32 %v2795, %v2808
        %v2811 = vadd.f32 %v2796, %v2808
        %v2812 = vadd.f32 %v2797, %v2808
        %v2813 = vadd.f32 %v2798, %v2808
        %v2814 = vadd.f32 %v2799, %v2808
        %v2815 = vadd.f32 %v2800, %v2808
        %v2816 = vadd.f32 %v2801, %v2808
        %v2817 = vadd.f32 %v2802, %v2808
        %2818 = vst [vmem:[#allocation6] sm:$0xff] %v2810
        %2819 = vst [vmem:[#allocation6 + $0x8] sm:$0xff] %v2811
        %2820 = vst [vmem:[#allocation6 + $0x10] sm:$0xff] %v2812
        %2821 = vst [vmem:[#allocation6 + $0x18] sm:$0xff] %v2813
        %2822 = vst [vmem:[#allocation6 + $0x20] sm:$0xff] %v2814
        %2823 = vst [vmem:[#allocation6 + $0x28] sm:$0xff] %v2815
        %2824 = vst [vmem:[#allocation6 + $0x30] sm:$0xff] %v2816
        %2825 = vst [vmem:[#allocation6 + $0x38] sm:$0xf] %v2817
        %v2826 = vld [vmem:[#allocation6] ss:$2 sm:$0xff]
        %s2827 = scalar_lea.vmem [#allocation6], 16
        %v2828 = vld [vmem:[%s2827] ss:$2 sm:$0xff]
        %s2829 = scalar_lea.vmem [#allocation6], 32
        %v2830 = vld [vmem:[%s2829] ss:$2 sm:$0xff]
        %s2831 = scalar_lea.vmem [#allocation6], 48
        %v2832 = vld [vmem:[%s2831] ss:$2 sm:$0x3f]
        %s2833 = scalar_lea.vmem [#allocation6], 1
        %v2834 = vld [vmem:[%s2833] ss:$2 sm:$0xff]
        %s2835 = scalar_lea.vmem [#allocation6], 17
        %v2836 = vld [vmem:[%s2835] ss:$2 sm:$0xff]
        %s2837 = scalar_lea.vmem [#allocation6], 33
        %v2838 = vld [vmem:[%s2837] ss:$2 sm:$0xff]
        %s2839 = scalar_lea.vmem [#allocation6], 49
        %v2840 = vld [vmem:[%s2839] ss:$2 sm:$0x3f]
        %v2841 = vmax.f32 %v2826, %v2834
        %v2842 = vmax.f32 %v2828, %v2836
        %v2843 = vmax.f32 %v2830, %v2838
        %v2844 = vmax.f32 %v2832, %v2840
        %v2845 = vmax.f32 %v2841, 0.0
        %v2846 = vmax.f32 %v2842, 0.0
        %v2847 = vmax.f32 %v2843, 0.0
        %v2848 = vmax.f32 %v2844, 0.0
        %2849 = vst [vmem:[#allocation7] sm:$0xff] %v2845
        %2850 = vst [vmem:[#allocation7 + $0x8] sm:$0xff] %v2846
        %2851 = vst [vmem:[#allocation7 + $0x10] sm:$0xff] %v2847
        %2852 = vst [vmem:[#allocation7 + $0x18] sm:$0x3f] %v2848
        %v2853 = vld [vmem:[%s8] sm:$0x1]
        %v2854 = vld [vmem:[#allocation7] sm:$0x1]
        %v2855 = vld [vmem:[%s7] sm:$0xff]
        %v2856 = vld [vmem:[%s7 + $0x8] sm:$0xff]
        %v2857 = vld [vmem:[%s7 + $0x10] sm:$0xff]
        %v2858 = vld [vmem:[%s7 + $0x18] sm:$0xff]
        %v2859 = vld [vmem:[%s7 + $0x20] sm:$0xff]
        %v2860 = vld [vmem:[%s7 + $0x28] sm:$0xff]
        %v2861 = vld [vmem:[%s7 + $0x30] sm:$0xff]
        %v2862 = vld [vmem:[%s7 + $0x38] sm:$0xff]
        %v2863 = vld [vmem:[%s7 + $0x40] sm:$0xff]
        %v2864 = vld [vmem:[%s7 + $0x48] sm:$0xff]
        %v2865 = vld [vmem:[%s7 + $0x50] sm:$0xff]
        %v2866 = vld [vmem:[%s7 + $0x58] sm:$0xff]
        %v2867 = vld [vmem:[%s7 + $0x60] sm:$0xff]
        %v2868 = vld [vmem:[%s7 + $0x68] sm:$0xff]
        %v2869 = vld [vmem:[%s7 + $0x70] sm:$0xff]
        %v2870 = vld [vmem:[%s7 + $0x78] sm:$0xff]
        %2871 = vmatprep.subr.mxu0 0.0
        %2872 = vmatpush1.msra.mxu0 %v2855
        %2873 = vmatprep.subr.mxu0 0.0
        %2874 = vmatpush1.msra.mxu0 %v2856
        %2875 = vmatprep.subr.mxu0 0.0
        %2876 = vmatpush1.msra.mxu0 %v2857
        %2877 = vmatprep.subr.mxu0 0.0
        %2878 = vmatpush1.msra.mxu0 %v2858
        %2879 = vmatprep.subr.mxu0 0.0
        %2880 = vmatpush1.msra.mxu0 %v2859
        %2881 = vmatprep.subr.mxu0 0.0
        %2882 = vmatpush1.msra.mxu0 %v2860
        %2883 = vmatprep.subr.mxu0 0.0
        %2884 = vmatpush1.msra.mxu0 %v2861
        %2885 = vmatprep.subr.mxu0 0.0
        %2886 = vmatpush1.msra.mxu0 %v2862
        %2887 = vmatprep.subr.mxu0 0.0
        %2888 = vmatpush1.msra.mxu0 %v2863
        %2889 = vmatprep.subr.mxu0 0.0
        %2890 = vmatpush1.msra.mxu0 %v2864
        %2891 = vmatprep.subr.mxu0 0.0
        %2892 = vmatpush1.msra.mxu0 %v2865
        %2893 = vmatprep.subr.mxu0 0.0
        %2894 = vmatpush1.msra.mxu0 %v2866
        %2895 = vmatprep.subr.mxu0 0.0
        %2896 = vmatpush1.msra.mxu0 %v2867
        %2897 = vmatprep.subr.mxu0 0.0
        %2898 = vmatpush1.msra.mxu0 %v2868
        %2899 = vmatprep.subr.mxu0 0.0
        %2900 = vmatpush1.msra.mxu0 %v2869
        %2901 = vmatprep.subr.mxu0 0.0
        %2902 = vmatpush1.msra.mxu0 %v2870
        %2903 = vmatprep.subr.mxu0 0.0
        %2904 = vmatpush1.msra.mxu0 0.0
        %2905 = vmatprep.subr.mxu0 0.0
        %2906 = vmatpush1.msra.mxu0 0.0
        %2907 = vmatprep.subr.mxu0 0.0
        %2908 = vmatpush1.msra.mxu0 0.0
        %2909 = vmatprep.subr.mxu0 0.0
        %2910 = vmatpush1.msra.mxu0 0.0
        %2911 = vmatprep.subr.mxu0 0.0
        %2912 = vmatpush1.msra.mxu0 0.0
        %2913 = vmatprep.subr.mxu0 0.0
        %2914 = vmatpush1.msra.mxu0 0.0
        %2915 = vmatprep.subr.mxu0 0.0
        %2916 = vmatpush1.msra.mxu0 0.0
        %2917 = vmatprep.subr.mxu0 0.0
        %2918 = vmatpush1.msra.mxu0 0.0
        %2919 = vmatprep.subr.mxu0 0.0
        %2920 = vmatpush1.msra.mxu0 0.0
        %2921 = vmatprep.subr.mxu0 0.0
        %2922 = vmatpush1.msra.mxu0 0.0
        %2923 = vmatprep.subr.mxu0 0.0
        %2924 = vmatpush1.msra.mxu0 0.0
        %2925 = vmatprep.subr.mxu0 0.0
        %2926 = vmatpush1.msra.mxu0 0.0
        %2927 = vmatprep.subr.mxu0 0.0
        %2928 = vmatpush1.msra.mxu0 0.0
        %2929 = vmatprep.subr.mxu0 0.0
        %2930 = vmatpush1.msra.mxu0 0.0
        %2931 = vmatprep.subr.mxu0 0.0
        %2932 = vmatpush1.msra.mxu0 0.0
        %2933 = vmatprep.subr.mxu0 0.0
        %2934 = vmatpush1.msra.mxu0 0.0
        %2935 = vmatprep.mubr.f32.mxu0 0.0
        %2936 = vmatmul.mubr.f32.gmra.mrb[0].mxu0 %v2854
        %v2937 = vpop.f32.mrb[0].mxu0
        %v2938 = vadd.f32 0.0, %v2937
        %v2939 = vpop.f32.mrb[0].mxu0
        %2940 = vdwg.mxu0
        %v2941 = vadd.f32 %v2853, %v2938
        %v2942 = vld [vmem:[#allocation7 + $0x1] sm:$0x1]
        %s2943 = scalar_lea.vmem %s7, 128
        %v2944 = vld [vmem:[%s2943] sm:$0xff]
        %v2945 = vld [vmem:[%s2943 + $0x8] sm:$0xff]
        %v2946 = vld [vmem:[%s2943 + $0x10] sm:$0xff]
        %v2947 = vld [vmem:[%s2943 + $0x18] sm:$0xff]
        %v2948 = vld [vmem:[%s2943 + $0x20] sm:$0xff]
        %v2949 = vld [vmem:[%s2943 + $0x28] sm:$0xff]
        %v2950 = vld [vmem:[%s2943 + $0x30] sm:$0xff]
        %v2951 = vld [vmem:[%s2943 + $0x38] sm:$0xff]
        %v2952 = vld [vmem:[%s2943 + $0x40] sm:$0xff]
        %v2953 = vld [vmem:[%s2943 + $0x48] sm:$0xff]
        %v2954 = vld [vmem:[%s2943 + $0x50] sm:$0xff]
        %v2955 = vld [vmem:[%s2943 + $0x58] sm:$0xff]
        %v2956 = vld [vmem:[%s2943 + $0x60] sm:$0xff]
        %v2957 = vld [vmem:[%s2943 + $0x68] sm:$0xff]
        %v2958 = vld [vmem:[%s2943 + $0x70] sm:$0xff]
        %v2959 = vld [vmem:[%s2943 + $0x78] sm:$0xff]
        %2960 = vmatprep.subr.mxu0 0.0
        %2961 = vmatpush1.msra.mxu0 %v2944
        %2962 = vmatprep.subr.mxu0 0.0
        %2963 = vmatpush1.msra.mxu0 %v2945
        %2964 = vmatprep.subr.mxu0 0.0
        %2965 = vmatpush1.msra.mxu0 %v2946
        %2966 = vmatprep.subr.mxu0 0.0
        %2967 = vmatpush1.msra.mxu0 %v2947
        %2968 = vmatprep.subr.mxu0 0.0
        %2969 = vmatpush1.msra.mxu0 %v2948
        %2970 = vmatprep.subr.mxu0 0.0
        %2971 = vmatpush1.msra.mxu0 %v2949
        %2972 = vmatprep.subr.mxu0 0.0
        %2973 = vmatpush1.msra.mxu0 %v2950
        %2974 = vmatprep.subr.mxu0 0.0
        %2975 = vmatpush1.msra.mxu0 %v2951
        %2976 = vmatprep.subr.mxu0 0.0
        %2977 = vmatpush1.msra.mxu0 %v2952
        %2978 = vmatprep.subr.mxu0 0.0
        %2979 = vmatpush1.msra.mxu0 %v2953
        %2980 = vmatprep.subr.mxu0 0.0
        %2981 = vmatpush1.msra.mxu0 %v2954
        %2982 = vmatprep.subr.mxu0 0.0
        %2983 = vmatpush1.msra.mxu0 %v2955
        %2984 = vmatprep.subr.mxu0 0.0
        %2985 = vmatpush1.msra.mxu0 %v2956
        %2986 = vmatprep.subr.mxu0 0.0
        %2987 = vmatpush1.msra.mxu0 %v2957
        %2988 = vmatprep.subr.mxu0 0.0
        %2989 = vmatpush1.msra.mxu0 %v2958
        %2990 = vmatprep.subr.mxu0 0.0
        %2991 = vmatpush1.msra.mxu0 %v2959
        %2992 = vmatprep.subr.mxu0 0.0
        %2993 = vmatpush1.msra.mxu0 0.0
        %2994 = vmatprep.subr.mxu0 0.0
        %2995 = vmatpush1.msra.mxu0 0.0
        %2996 = vmatprep.subr.mxu0 0.0
        %2997 = vmatpush1.msra.mxu0 0.0
        %2998 = vmatprep.subr.mxu0 0.0
        %2999 = vmatpush1.msra.mxu0 0.0
        %3000 = vmatprep.subr.mxu0 0.0
        %3001 = vmatpush1.msra.mxu0 0.0
        %3002 = vmatprep.subr.mxu0 0.0
        %3003 = vmatpush1.msra.mxu0 0.0
        %3004 = vmatprep.subr.mxu0 0.0
        %3005 = vmatpush1.msra.mxu0 0.0
        %3006 = vmatprep.subr.mxu0 0.0
        %3007 = vmatpush1.msra.mxu0 0.0
        %3008 = vmatprep.subr.mxu0 0.0
        %3009 = vmatpush1.msra.mxu0 0.0
        %3010 = vmatprep.subr.mxu0 0.0
        %3011 = vmatpush1.msra.mxu0 0.0
        %3012 = vmatprep.subr.mxu0 0.0
        %3013 = vmatpush1.msra.mxu0 0.0
        %3014 = vmatprep.subr.mxu0 0.0
        %3015 = vmatpush1.msra.mxu0 0.0
        %3016 = vmatprep.subr.mxu0 0.0
        %3017 = vmatpush1.msra.mxu0 0.0
        %3018 = vmatprep.subr.mxu0 0.0
        %3019 = vmatpush1.msra.mxu0 0.0
        %3020 = vmatprep.subr.mxu0 0.0
        %3021 = vmatpush1.msra.mxu0 0.0
        %3022 = vmatprep.subr.mxu0 0.0
        %3023 = vmatpush1.msra.mxu0 0.0
        %3024 = vmatprep.mubr.f32.mxu0 0.0
        %3025 = vmatmul.mubr.f32.gmra.mrb[0].mxu0 %v2942
        %v3026 = vpop.f32.mrb[0].mxu0
        %v3027 = vadd.f32 0.0, %v3026
        %v3028 = vpop.f32.mrb[0].mxu0
        %3029 = vdwg.mxu0
        %v3030 = vadd.f32 %v2941, %v3027
        %v3031 = vld [vmem:[#allocation7 + $0x2] sm:$0x1]
        %s3032 = scalar_lea.vmem %s7, 256
        %v3033 = vld [vmem:[%s3032] sm:$0xff]
        %v3034 = vld [vmem:[%s3032 + $0x8] sm:$0xff]
        %v3035 = vld [vmem:[%s3032 + $0x10] sm:$0xff]
        %v3036 = vld [vmem:[%s3032 + $0x18] sm:$0xff]
        %v3037 = vld [vmem:[%s3032 + $0x20] sm:$0xff]
        %v3038 = vld [vmem:[%s3032 + $0x28] sm:$0xff]
        %v3039 = vld [vmem:[%s3032 + $0x30] sm:$0xff]
        %v3040 = vld [vmem:[%s3032 + $0x38] sm:$0xff]
        %v3041 = vld [vmem:[%s3032 + $0x40] sm:$0xff]
        %v3042 = vld [vmem:[%s3032 + $0x48] sm:$0xff]
        %v3043 = vld [vmem:[%s3032 + $0x50] sm:$0xff]
        %v3044 = vld [vmem:[%s3032 + $0x58] sm:$0xff]
        %v3045 = vld [vmem:[%s3032 + $0x60] sm:$0xff]
        %v3046 = vld [vmem:[%s3032 + $0x68] sm:$0xff]
        %v3047 = vld [vmem:[%s3032 + $0x70] sm:$0xff]
        %v3048 = vld [vmem:[%s3032 + $0x78] sm:$0xff]
        %3049 = vmatprep.subr.mxu0 0.0
        %3050 = vmatpush1.msra.mxu0 %v3033
        %3051 = vmatprep.subr.mxu0 0.0
        %3052 = vmatpush1.msra.mxu0 %v3034
        %3053 = vmatprep.subr.mxu0 0.0
        %3054 = vmatpush1.msra.mxu0 %v3035
        %3055 = vmatprep.subr.mxu0 0.0
        %3056 = vmatpush1.msra.mxu0 %v3036
        %3057 = vmatprep.subr.mxu0 0.0
        %3058 = vmatpush1.msra.mxu0 %v3037
        %3059 = vmatprep.subr.mxu0 0.0
        %3060 = vmatpush1.msra.mxu0 %v3038
        %3061 = vmatprep.subr.mxu0 0.0
        %3062 = vmatpush1.msra.mxu0 %v3039
        %3063 = vmatprep.subr.mxu0 0.0
        %3064 = vmatpush1.msra.mxu0 %v3040
        %3065 = vmatprep.subr.mxu0 0.0
        %3066 = vmatpush1.msra.mxu0 %v3041
        %3067 = vmatprep.subr.mxu0 0.0
        %3068 = vmatpush1.msra.mxu0 %v3042
        %3069 = vmatprep.subr.mxu0 0.0
        %3070 = vmatpush1.msra.mxu0 %v3043
        %3071 = vmatprep.subr.mxu0 0.0
        %3072 = vmatpush1.msra.mxu0 %v3044
        %3073 = vmatprep.subr.mxu0 0.0
        %3074 = vmatpush1.msra.mxu0 %v3045
        %3075 = vmatprep.subr.mxu0 0.0
        %3076 = vmatpush1.msra.mxu0 %v3046
        %3077 = vmatprep.subr.mxu0 0.0
        %3078 = vmatpush1.msra.mxu0 %v3047
        %3079 = vmatprep.subr.mxu0 0.0
        %3080 = vmatpush1.msra.mxu0 %v3048
        %3081 = vmatprep.subr.mxu0 0.0
        %3082 = vmatpush1.msra.mxu0 0.0
        %3083 = vmatprep.subr.mxu0 0.0
        %3084 = vmatpush1.msra.mxu0 0.0
        %3085 = vmatprep.subr.mxu0 0.0
        %3086 = vmatpush1.msra.mxu0 0.0
        %3087 = vmatprep.subr.mxu0 0.0
        %3088 = vmatpush1.msra.mxu0 0.0
        %3089 = vmatprep.subr.mxu0 0.0
        %3090 = vmatpush1.msra.mxu0 0.0
        %3091 = vmatprep.subr.mxu0 0.0
        %3092 = vmatpush1.msra.mxu0 0.0
        %3093 = vmatprep.subr.mxu0 0.0
        %3094 = vmatpush1.msra.mxu0 0.0
        %3095 = vmatprep.subr.mxu0 0.0
        %3096 = vmatpush1.msra.mxu0 0.0
        %3097 = vmatprep.subr.mxu0 0.0
        %3098 = vmatpush1.msra.mxu0 0.0
        %3099 = vmatprep.subr.mxu0 0.0
        %3100 = vmatpush1.msra.mxu0 0.0
        %3101 = vmatprep.subr.mxu0 0.0
        %3102 = vmatpush1.msra.mxu0 0.0
        %3103 = vmatprep.subr.mxu0 0.0
        %3104 = vmatpush1.msra.mxu0 0.0
        %3105 = vmatprep.subr.mxu0 0.0
        %3106 = vmatpush1.msra.mxu0 0.0
        %3107 = vmatprep.subr.mxu0 0.0
        %3108 = vmatpush1.msra.mxu0 0.0
        %3109 = vmatprep.subr.mxu0 0.0
        %3110 = vmatpush1.msra.mxu0 0.0
        %3111 = vmatprep.subr.mxu0 0.0
        %3112 = vmatpush1.msra.mxu0 0.0
        %3113 = vmatprep.mubr.f32.mxu0 0.0
        %3114 = vmatmul.mubr.f32.gmra.mrb[0].mxu0 %v3031
        %v3115 = vpop.f32.mrb[0].mxu0
        %v3116 = vadd.f32 0.0, %v3115
        %v3117 = vpop.f32.mrb[0].mxu0
        %3118 = vdwg.mxu0
        %v3119 = vadd.f32 %v3030, %v3116
        %v3120 = vld [vmem:[#allocation7 + $0x3] sm:$0x1]
        %s3121 = scalar_lea.vmem %s7, 384
        %v3122 = vld [vmem:[%s3121] sm:$0xff]
        %v3123 = vld [vmem:[%s3121 + $0x8] sm:$0xff]
        %v3124 = vld [vmem:[%s3121 + $0x10] sm:$0xff]
        %v3125 = vld [vmem:[%s3121 + $0x18] sm:$0xff]
        %v3126 = vld [vmem:[%s3121 + $0x20] sm:$0xff]
        %v3127 = vld [vmem:[%s3121 + $0x28] sm:$0xff]
        %v3128 = vld [vmem:[%s3121 + $0x30] sm:$0xff]
        %v3129 = vld [vmem:[%s3121 + $0x38] sm:$0xff]
        %v3130 = vld [vmem:[%s3121 + $0x40] sm:$0xff]
        %v3131 = vld [vmem:[%s3121 + $0x48] sm:$0xff]
        %v3132 = vld [vmem:[%s3121 + $0x50] sm:$0xff]
        %v3133 = vld [vmem:[%s3121 + $0x58] sm:$0xff]
        %v3134 = vld [vmem:[%s3121 + $0x60] sm:$0xff]
        %v3135 = vld [vmem:[%s3121 + $0x68] sm:$0xff]
        %v3136 = vld [vmem:[%s3121 + $0x70] sm:$0xff]
        %v3137 = vld [vmem:[%s3121 + $0x78] sm:$0xff]
        %3138 = vmatprep.subr.mxu0 0.0
        %3139 = vmatpush1.msra.mxu0 %v3122
        %3140 = vmatprep.subr.mxu0 0.0
        %3141 = vmatpush1.msra.mxu0 %v3123
        %3142 = vmatprep.subr.mxu0 0.0
        %3143 = vmatpush1.msra.mxu0 %v3124
        %3144 = vmatprep.subr.mxu0 0.0
        %3145 = vmatpush1.msra.mxu0 %v3125
        %3146 = vmatprep.subr.mxu0 0.0
        %3147 = vmatpush1.msra.mxu0 %v3126
        %3148 = vmatprep.subr.mxu0 0.0
        %3149 = vmatpush1.msra.mxu0 %v3127
        %3150 = vmatprep.subr.mxu0 0.0
        %3151 = vmatpush1.msra.mxu0 %v3128
        %3152 = vmatprep.subr.mxu0 0.0
        %3153 = vmatpush1.msra.mxu0 %v3129
        %3154 = vmatprep.subr.mxu0 0.0
        %3155 = vmatpush1.msra.mxu0 %v3130
        %3156 = vmatprep.subr.mxu0 0.0
        %3157 = vmatpush1.msra.mxu0 %v3131
        %3158 = vmatprep.subr.mxu0 0.0
        %3159 = vmatpush1.msra.mxu0 %v3132
        %3160 = vmatprep.subr.mxu0 0.0
        %3161 = vmatpush1.msra.mxu0 %v3133
        %3162 = vmatprep.subr.mxu0 0.0
        %3163 = vmatpush1.msra.mxu0 %v3134
        %3164 = vmatprep.subr.mxu0 0.0
        %3165 = vmatpush1.msra.mxu0 %v3135
        %3166 = vmatprep.subr.mxu0 0.0
        %3167 = vmatpush1.msra.mxu0 %v3136
        %3168 = vmatprep.subr.mxu0 0.0
        %3169 = vmatpush1.msra.mxu0 %v3137
        %3170 = vmatprep.subr.mxu0 0.0
        %3171 = vmatpush1.msra.mxu0 0.0
        %3172 = vmatprep.subr.mxu0 0.0
        %3173 = vmatpush1.msra.mxu0 0.0
        %3174 = vmatprep.subr.mxu0 0.0
        %3175 = vmatpush1.msra.mxu0 0.0
        %3176 = vmatprep.subr.mxu0 0.0
        %3177 = vmatpush1.msra.mxu0 0.0
        %3178 = vmatprep.subr.mxu0 0.0
        %3179 = vmatpush1.msra.mxu0 0.0
        %3180 = vmatprep.subr.mxu0 0.0
        %3181 = vmatpush1.msra.mxu0 0.0
        %3182 = vmatprep.subr.mxu0 0.0
        %3183 = vmatpush1.msra.mxu0 0.0
        %3184 = vmatprep.subr.mxu0 0.0
        %3185 = vmatpush1.msra.mxu0 0.0
        %3186 = vmatprep.subr.mxu0 0.0
        %3187 = vmatpush1.msra.mxu0 0.0
        %3188 = vmatprep.subr.mxu0 0.0
        %3189 = vmatpush1.msra.mxu0 0.0
        %3190 = vmatprep.subr.mxu0 0.0
        %3191 = vmatpush1.msra.mxu0 0.0
        %3192 = vmatprep.subr.mxu0 0.0
        %3193 = vmatpush1.msra.mxu0 0.0
        %3194 = vmatprep.subr.mxu0 0.0
        %3195 = vmatpush1.msra.mxu0 0.0
        %3196 = vmatprep.subr.mxu0 0.0
        %3197 = vmatpush1.msra.mxu0 0.0
        %3198 = vmatprep.subr.mxu0 0.0
        %3199 = vmatpush1.msra.mxu0 0.0
        %3200 = vmatprep.subr.mxu0 0.0
        %3201 = vmatpush1.msra.mxu0 0.0
        %3202 = vmatprep.mubr.f32.mxu0 0.0
        %3203 = vmatmul.mubr.f32.gmra.mrb[0].mxu0 %v3120
        %v3204 = vpop.f32.mrb[0].mxu0
        %v3205 = vadd.f32 0.0, %v3204
        %v3206 = vpop.f32.mrb[0].mxu0
        %3207 = vdwg.mxu0
        %v3208 = vadd.f32 %v3119, %v3205
        %v3209 = vld [vmem:[#allocation7 + $0x4] sm:$0x1]
        %s3210 = scalar_lea.vmem %s7, 512
        %v3211 = vld [vmem:[%s3210] sm:$0xff]
        %v3212 = vld [vmem:[%s3210 + $0x8] sm:$0xff]
        %v3213 = vld [vmem:[%s3210 + $0x10] sm:$0xff]
        %v3214 = vld [vmem:[%s3210 + $0x18] sm:$0xff]
        %v3215 = vld [vmem:[%s3210 + $0x20] sm:$0xff]
        %v3216 = vld [vmem:[%s3210 + $0x28] sm:$0xff]
        %v3217 = vld [vmem:[%s3210 + $0x30] sm:$0xff]
        %v3218 = vld [vmem:[%s3210 + $0x38] sm:$0xff]
        %v3219 = vld [vmem:[%s3210 + $0x40] sm:$0xff]
        %v3220 = vld [vmem:[%s3210 + $0x48] sm:$0xff]
        %v3221 = vld [vmem:[%s3210 + $0x50] sm:$0xff]
        %v3222 = vld [vmem:[%s3210 + $0x58] sm:$0xff]
        %v3223 = vld [vmem:[%s3210 + $0x60] sm:$0xff]
        %v3224 = vld [vmem:[%s3210 + $0x68] sm:$0xff]
        %v3225 = vld [vmem:[%s3210 + $0x70] sm:$0xff]
        %v3226 = vld [vmem:[%s3210 + $0x78] sm:$0xff]
        %3227 = vmatprep.subr.mxu0 0.0
        %3228 = vmatpush1.msra.mxu0 %v3211
        %3229 = vmatprep.subr.mxu0 0.0
        %3230 = vmatpush1.msra.mxu0 %v3212
        %3231 = vmatprep.subr.mxu0 0.0
        %3232 = vmatpush1.msra.mxu0 %v3213
        %3233 = vmatprep.subr.mxu0 0.0
        %3234 = vmatpush1.msra.mxu0 %v3214
        %3235 = vmatprep.subr.mxu0 0.0
        %3236 = vmatpush1.msra.mxu0 %v3215
        %3237 = vmatprep.subr.mxu0 0.0
        %3238 = vmatpush1.msra.mxu0 %v3216
        %3239 = vmatprep.subr.mxu0 0.0
        %3240 = vmatpush1.msra.mxu0 %v3217
        %3241 = vmatprep.subr.mxu0 0.0
        %3242 = vmatpush1.msra.mxu0 %v3218
        %3243 = vmatprep.subr.mxu0 0.0
        %3244 = vmatpush1.msra.mxu0 %v3219
        %3245 = vmatprep.subr.mxu0 0.0
        %3246 = vmatpush1.msra.mxu0 %v3220
        %3247 = vmatprep.subr.mxu0 0.0
        %3248 = vmatpush1.msra.mxu0 %v3221
        %3249 = vmatprep.subr.mxu0 0.0
        %3250 = vmatpush1.msra.mxu0 %v3222
        %3251 = vmatprep.subr.mxu0 0.0
        %3252 = vmatpush1.msra.mxu0 %v3223
        %3253 = vmatprep.subr.mxu0 0.0
        %3254 = vmatpush1.msra.mxu0 %v3224
        %3255 = vmatprep.subr.mxu0 0.0
        %3256 = vmatpush1.msra.mxu0 %v3225
        %3257 = vmatprep.subr.mxu0 0.0
        %3258 = vmatpush1.msra.mxu0 %v3226
        %3259 = vmatprep.subr.mxu0 0.0
        %3260 = vmatpush1.msra.mxu0 0.0
        %3261 = vmatprep.subr.mxu0 0.0
        %3262 = vmatpush1.msra.mxu0 0.0
        %3263 = vmatprep.subr.mxu0 0.0
        %3264 = vmatpush1.msra.mxu0 0.0
        %3265 = vmatprep.subr.mxu0 0.0
        %3266 = vmatpush1.msra.mxu0 0.0
        %3267 = vmatprep.subr.mxu0 0.0
        %3268 = vmatpush1.msra.mxu0 0.0
        %3269 = vmatprep.subr.mxu0 0.0
        %3270 = vmatpush1.msra.mxu0 0.0
        %3271 = vmatprep.subr.mxu0 0.0
        %3272 = vmatpush1.msra.mxu0 0.0
        %3273 = vmatprep.subr.mxu0 0.0
        %3274 = vmatpush1.msra.mxu0 0.0
        %3275 = vmatprep.subr.mxu0 0.0
        %3276 = vmatpush1.msra.mxu0 0.0
        %3277 = vmatprep.subr.mxu0 0.0
        %3278 = vmatpush1.msra.mxu0 0.0
        %3279 = vmatprep.subr.mxu0 0.0
        %3280 = vmatpush1.msra.mxu0 0.0
        %3281 = vmatprep.subr.mxu0 0.0
        %3282 = vmatpush1.msra.mxu0 0.0
        %3283 = vmatprep.subr.mxu0 0.0
        %3284 = vmatpush1.msra.mxu0 0.0
        %3285 = vmatprep.subr.mxu0 0.0
        %3286 = vmatpush1.msra.mxu0 0.0
        %3287 = vmatprep.subr.mxu0 0.0
        %3288 = vmatpush1.msra.mxu0 0.0
        %3289 = vmatprep.subr.mxu0 0.0
        %3290 = vmatpush1.msra.mxu0 0.0
        %3291 = vmatprep.mubr.f32.mxu0 0.0
        %3292 = vmatmul.mubr.f32.gmra.mrb[0].mxu0 %v3209
        %v3293 = vpop.f32.mrb[0].mxu0
        %v3294 = vadd.f32 0.0, %v3293
        %v3295 = vpop.f32.mrb[0].mxu0
        %3296 = vdwg.mxu0
        %v3297 = vadd.f32 %v3208, %v3294
        %v3298 = vld [vmem:[#allocation7 + $0x5] sm:$0x1]
        %s3299 = scalar_lea.vmem %s7, 640
        %v3300 = vld [vmem:[%s3299] sm:$0xff]
        %v3301 = vld [vmem:[%s3299 + $0x8] sm:$0xff]
        %v3302 = vld [vmem:[%s3299 + $0x10] sm:$0xff]
        %v3303 = vld [vmem:[%s3299 + $0x18] sm:$0xff]
        %v3304 = vld [vmem:[%s3299 + $0x20] sm:$0xff]
        %v3305 = vld [vmem:[%s3299 + $0x28] sm:$0xff]
        %v3306 = vld [vmem:[%s3299 + $0x30] sm:$0xff]
        %v3307 = vld [vmem:[%s3299 + $0x38] sm:$0xff]
        %v3308 = vld [vmem:[%s3299 + $0x40] sm:$0xff]
        %v3309 = vld [vmem:[%s3299 + $0x48] sm:$0xff]
        %v3310 = vld [vmem:[%s3299 + $0x50] sm:$0xff]
        %v3311 = vld [vmem:[%s3299 + $0x58] sm:$0xff]
        %v3312 = vld [vmem:[%s3299 + $0x60] sm:$0xff]
        %v3313 = vld [vmem:[%s3299 + $0x68] sm:$0xff]
        %v3314 = vld [vmem:[%s3299 + $0x70] sm:$0xff]
        %v3315 = vld [vmem:[%s3299 + $0x78] sm:$0xff]
        %3316 = vmatprep.subr.mxu0 0.0
        %3317 = vmatpush1.msra.mxu0 %v3300
        %3318 = vmatprep.subr.mxu0 0.0
        %3319 = vmatpush1.msra.mxu0 %v3301
        %3320 = vmatprep.subr.mxu0 0.0
        %3321 = vmatpush1.msra.mxu0 %v3302
        %3322 = vmatprep.subr.mxu0 0.0
        %3323 = vmatpush1.msra.mxu0 %v3303
        %3324 = vmatprep.subr.mxu0 0.0
        %3325 = vmatpush1.msra.mxu0 %v3304
        %3326 = vmatprep.subr.mxu0 0.0
        %3327 = vmatpush1.msra.mxu0 %v3305
        %3328 = vmatprep.subr.mxu0 0.0
        %3329 = vmatpush1.msra.mxu0 %v3306
        %3330 = vmatprep.subr.mxu0 0.0
        %3331 = vmatpush1.msra.mxu0 %v3307
        %3332 = vmatprep.subr.mxu0 0.0
        %3333 = vmatpush1.msra.mxu0 %v3308
        %3334 = vmatprep.subr.mxu0 0.0
        %3335 = vmatpush1.msra.mxu0 %v3309
        %3336 = vmatprep.subr.mxu0 0.0
        %3337 = vmatpush1.msra.mxu0 %v3310
        %3338 = vmatprep.subr.mxu0 0.0
        %3339 = vmatpush1.msra.mxu0 %v3311
        %3340 = vmatprep.subr.mxu0 0.0
        %3341 = vmatpush1.msra.mxu0 %v3312
        %3342 = vmatprep.subr.mxu0 0.0
        %3343 = vmatpush1.msra.mxu0 %v3313
        %3344 = vmatprep.subr.mxu0 0.0
        %3345 = vmatpush1.msra.mxu0 %v3314
        %3346 = vmatprep.subr.mxu0 0.0
        %3347 = vmatpush1.msra.mxu0 %v3315
        %3348 = vmatprep.subr.mxu0 0.0
        %3349 = vmatpush1.msra.mxu0 0.0
        %3350 = vmatprep.subr.mxu0 0.0
        %3351 = vmatpush1.msra.mxu0 0.0
        %3352 = vmatprep.subr.mxu0 0.0
        %3353 = vmatpush1.msra.mxu0 0.0
        %3354 = vmatprep.subr.mxu0 0.0
        %3355 = vmatpush1.msra.mxu0 0.0
        %3356 = vmatprep.subr.mxu0 0.0
        %3357 = vmatpush1.msra.mxu0 0.0
        %3358 = vmatprep.subr.mxu0 0.0
        %3359 = vmatpush1.msra.mxu0 0.0
        %3360 = vmatprep.subr.mxu0 0.0
        %3361 = vmatpush1.msra.mxu0 0.0
        %3362 = vmatprep.subr.mxu0 0.0
        %3363 = vmatpush1.msra.mxu0 0.0
        %3364 = vmatprep.subr.mxu0 0.0
        %3365 = vmatpush1.msra.mxu0 0.0
        %3366 = vmatprep.subr.mxu0 0.0
        %3367 = vmatpush1.msra.mxu0 0.0
        %3368 = vmatprep.subr.mxu0 0.0
        %3369 = vmatpush1.msra.mxu0 0.0
        %3370 = vmatprep.subr.mxu0 0.0
        %3371 = vmatpush1.msra.mxu0 0.0
        %3372 = vmatprep.subr.mxu0 0.0
        %3373 = vmatpush1.msra.mxu0 0.0
        %3374 = vmatprep.subr.mxu0 0.0
        %3375 = vmatpush1.msra.mxu0 0.0
        %3376 = vmatprep.subr.mxu0 0.0
        %3377 = vmatpush1.msra.mxu0 0.0
        %3378 = vmatprep.subr.mxu0 0.0
        %3379 = vmatpush1.msra.mxu0 0.0
        %3380 = vmatprep.mubr.f32.mxu0 0.0
        %3381 = vmatmul.mubr.f32.gmra.mrb[0].mxu0 %v3298
        %v3382 = vpop.f32.mrb[0].mxu0
        %v3383 = vadd.f32 0.0, %v3382
        %v3384 = vpop.f32.mrb[0].mxu0
        %3385 = vdwg.mxu0
        %v3386 = vadd.f32 %v3297, %v3383
        %v3387 = vld [vmem:[#allocation7 + $0x6] sm:$0x1]
        %s3388 = scalar_lea.vmem %s7, 768
        %v3389 = vld [vmem:[%s3388] sm:$0xff]
        %v3390 = vld [vmem:[%s3388 + $0x8] sm:$0xff]
        %v3391 = vld [vmem:[%s3388 + $0x10] sm:$0xff]
        %v3392 = vld [vmem:[%s3388 + $0x18] sm:$0xff]
        %v3393 = vld [vmem:[%s3388 + $0x20] sm:$0xff]
        %v3394 = vld [vmem:[%s3388 + $0x28] sm:$0xff]
        %v3395 = vld [vmem:[%s3388 + $0x30] sm:$0xff]
        %v3396 = vld [vmem:[%s3388 + $0x38] sm:$0xff]
        %v3397 = vld [vmem:[%s3388 + $0x40] sm:$0xff]
        %v3398 = vld [vmem:[%s3388 + $0x48] sm:$0xff]
        %v3399 = vld [vmem:[%s3388 + $0x50] sm:$0xff]
        %v3400 = vld [vmem:[%s3388 + $0x58] sm:$0xff]
        %v3401 = vld [vmem:[%s3388 + $0x60] sm:$0xff]
        %v3402 = vld [vmem:[%s3388 + $0x68] sm:$0xff]
        %v3403 = vld [vmem:[%s3388 + $0x70] sm:$0xff]
        %v3404 = vld [vmem:[%s3388 + $0x78] sm:$0xff]
        %3405 = vmatprep.subr.mxu0 0.0
        %3406 = vmatpush1.msra.mxu0 %v3389
        %3407 = vmatprep.subr.mxu0 0.0
        %3408 = vmatpush1.msra.mxu0 %v3390
        %3409 = vmatprep.subr.mxu0 0.0
        %3410 = vmatpush1.msra.mxu0 %v3391
        %3411 = vmatprep.subr.mxu0 0.0
        %3412 = vmatpush1.msra.mxu0 %v3392
        %3413 = vmatprep.subr.mxu0 0.0
        %3414 = vmatpush1.msra.mxu0 %v3393
        %3415 = vmatprep.subr.mxu0 0.0
        %3416 = vmatpush1.msra.mxu0 %v3394
        %3417 = vmatprep.subr.mxu0 0.0
        %3418 = vmatpush1.msra.mxu0 %v3395
        %3419 = vmatprep.subr.mxu0 0.0
        %3420 = vmatpush1.msra.mxu0 %v3396
        %3421 = vmatprep.subr.mxu0 0.0
        %3422 = vmatpush1.msra.mxu0 %v3397
        %3423 = vmatprep.subr.mxu0 0.0
        %3424 = vmatpush1.msra.mxu0 %v3398
        %3425 = vmatprep.subr.mxu0 0.0
        %3426 = vmatpush1.msra.mxu0 %v3399
        %3427 = vmatprep.subr.mxu0 0.0
        %3428 = vmatpush1.msra.mxu0 %v3400
        %3429 = vmatprep.subr.mxu0 0.0
        %3430 = vmatpush1.msra.mxu0 %v3401
        %3431 = vmatprep.subr.mxu0 0.0
        %3432 = vmatpush1.msra.mxu0 %v3402
        %3433 = vmatprep.subr.mxu0 0.0
        %3434 = vmatpush1.msra.mxu0 %v3403
        %3435 = vmatprep.subr.mxu0 0.0
        %3436 = vmatpush1.msra.mxu0 %v3404
        %3437 = vmatprep.subr.mxu0 0.0
        %3438 = vmatpush1.msra.mxu0 0.0
        %3439 = vmatprep.subr.mxu0 0.0
        %3440 = vmatpush1.msra.mxu0 0.0
        %3441 = vmatprep.subr.mxu0 0.0
        %3442 = vmatpush1.msra.mxu0 0.0
        %3443 = vmatprep.subr.mxu0 0.0
        %3444 = vmatpush1.msra.mxu0 0.0
        %3445 = vmatprep.subr.mxu0 0.0
        %3446 = vmatpush1.msra.mxu0 0.0
        %3447 = vmatprep.subr.mxu0 0.0
        %3448 = vmatpush1.msra.mxu0 0.0
        %3449 = vmatprep.subr.mxu0 0.0
        %3450 = vmatpush1.msra.mxu0 0.0
        %3451 = vmatprep.subr.mxu0 0.0
        %3452 = vmatpush1.msra.mxu0 0.0
        %3453 = vmatprep.subr.mxu0 0.0
        %3454 = vmatpush1.msra.mxu0 0.0
        %3455 = vmatprep.subr.mxu0 0.0
        %3456 = vmatpush1.msra.mxu0 0.0
        %3457 = vmatprep.subr.mxu0 0.0
        %3458 = vmatpush1.msra.mxu0 0.0
        %3459 = vmatprep.subr.mxu0 0.0
        %3460 = vmatpush1.msra.mxu0 0.0
        %3461 = vmatprep.subr.mxu0 0.0
        %3462 = vmatpush1.msra.mxu0 0.0
        %3463 = vmatprep.subr.mxu0 0.0
        %3464 = vmatpush1.msra.mxu0 0.0
        %3465 = vmatprep.subr.mxu0 0.0
        %3466 = vmatpush1.msra.mxu0 0.0
        %3467 = vmatprep.subr.mxu0 0.0
        %3468 = vmatpush1.msra.mxu0 0.0
        %3469 = vmatprep.mubr.f32.mxu0 0.0
        %3470 = vmatmul.mubr.f32.gmra.mrb[0].mxu0 %v3387
        %v3471 = vpop.f32.mrb[0].mxu0
        %v3472 = vadd.f32 0.0, %v3471
        %v3473 = vpop.f32.mrb[0].mxu0
        %3474 = vdwg.mxu0
        %v3475 = vadd.f32 %v3386, %v3472
        %v3476 = vld [vmem:[#allocation7 + $0x7] sm:$0x1]
        %s3477 = scalar_lea.vmem %s7, 896
        %v3478 = vld [vmem:[%s3477] sm:$0xff]
        %v3479 = vld [vmem:[%s3477 + $0x8] sm:$0xff]
        %v3480 = vld [vmem:[%s3477 + $0x10] sm:$0xff]
        %v3481 = vld [vmem:[%s3477 + $0x18] sm:$0xff]
        %v3482 = vld [vmem:[%s3477 + $0x20] sm:$0xff]
        %v3483 = vld [vmem:[%s3477 + $0x28] sm:$0xff]
        %v3484 = vld [vmem:[%s3477 + $0x30] sm:$0xff]
        %v3485 = vld [vmem:[%s3477 + $0x38] sm:$0xff]
        %v3486 = vld [vmem:[%s3477 + $0x40] sm:$0xff]
        %v3487 = vld [vmem:[%s3477 + $0x48] sm:$0xff]
        %v3488 = vld [vmem:[%s3477 + $0x50] sm:$0xff]
        %v3489 = vld [vmem:[%s3477 + $0x58] sm:$0xff]
        %v3490 = vld [vmem:[%s3477 + $0x60] sm:$0xff]
        %v3491 = vld [vmem:[%s3477 + $0x68] sm:$0xff]
        %v3492 = vld [vmem:[%s3477 + $0x70] sm:$0xff]
        %v3493 = vld [vmem:[%s3477 + $0x78] sm:$0xff]
        %3494 = vmatprep.subr.mxu0 0.0
        %3495 = vmatpush1.msra.mxu0 %v3478
        %3496 = vmatprep.subr.mxu0 0.0
        %3497 = vmatpush1.msra.mxu0 %v3479
        %3498 = vmatprep.subr.mxu0 0.0
        %3499 = vmatpush1.msra.mxu0 %v3480
        %3500 = vmatprep.subr.mxu0 0.0
        %3501 = vmatpush1.msra.mxu0 %v3481
        %3502 = vmatprep.subr.mxu0 0.0
        %3503 = vmatpush1.msra.mxu0 %v3482
        %3504 = vmatprep.subr.mxu0 0.0
        %3505 = vmatpush1.msra.mxu0 %v3483
        %3506 = vmatprep.subr.mxu0 0.0
        %3507 = vmatpush1.msra.mxu0 %v3484
        %3508 = vmatprep.subr.mxu0 0.0
        %3509 = vmatpush1.msra.mxu0 %v3485
        %3510 = vmatprep.subr.mxu0 0.0
        %3511 = vmatpush1.msra.mxu0 %v3486
        %3512 = vmatprep.subr.mxu0 0.0
        %3513 = vmatpush1.msra.mxu0 %v3487
        %3514 = vmatprep.subr.mxu0 0.0
        %3515 = vmatpush1.msra.mxu0 %v3488
        %3516 = vmatprep.subr.mxu0 0.0
        %3517 = vmatpush1.msra.mxu0 %v3489
        %3518 = vmatprep.subr.mxu0 0.0
        %3519 = vmatpush1.msra.mxu0 %v3490
        %3520 = vmatprep.subr.mxu0 0.0
        %3521 = vmatpush1.msra.mxu0 %v3491
        %3522 = vmatprep.subr.mxu0 0.0
        %3523 = vmatpush1.msra.mxu0 %v3492
        %3524 = vmatprep.subr.mxu0 0.0
        %3525 = vmatpush1.msra.mxu0 %v3493
        %3526 = vmatprep.subr.mxu0 0.0
        %3527 = vmatpush1.msra.mxu0 0.0
        %3528 = vmatprep.subr.mxu0 0.0
        %3529 = vmatpush1.msra.mxu0 0.0
        %3530 = vmatprep.subr.mxu0 0.0
        %3531 = vmatpush1.msra.mxu0 0.0
        %3532 = vmatprep.subr.mxu0 0.0
        %3533 = vmatpush1.msra.mxu0 0.0
        %3534 = vmatprep.subr.mxu0 0.0
        %3535 = vmatpush1.msra.mxu0 0.0
        %3536 = vmatprep.subr.mxu0 0.0
        %3537 = vmatpush1.msra.mxu0 0.0
        %3538 = vmatprep.subr.mxu0 0.0
        %3539 = vmatpush1.msra.mxu0 0.0
        %3540 = vmatprep.subr.mxu0 0.0
        %3541 = vmatpush1.msra.mxu0 0.0
        %3542 = vmatprep.subr.mxu0 0.0
        %3543 = vmatpush1.msra.mxu0 0.0
        %3544 = vmatprep.subr.mxu0 0.0
        %3545 = vmatpush1.msra.mxu0 0.0
        %3546 = vmatprep.subr.mxu0 0.0
        %3547 = vmatpush1.msra.mxu0 0.0
        %3548 = vmatprep.subr.mxu0 0.0
        %3549 = vmatpush1.msra.mxu0 0.0
        %3550 = vmatprep.subr.mxu0 0.0
        %3551 = vmatpush1.msra.mxu0 0.0
        %3552 = vmatprep.subr.mxu0 0.0
        %3553 = vmatpush1.msra.mxu0 0.0
        %3554 = vmatprep.subr.mxu0 0.0
        %3555 = vmatpush1.msra.mxu0 0.0
        %3556 = vmatprep.subr.mxu0 0.0
        %3557 = vmatpush1.msra.mxu0 0.0
        %3558 = vmatprep.mubr.f32.mxu0 0.0
        %3559 = vmatmul.mubr.f32.gmra.mrb[0].mxu0 %v3476
        %v3560 = vpop.f32.mrb[0].mxu0
        %v3561 = vadd.f32 0.0, %v3560
        %v3562 = vpop.f32.mrb[0].mxu0
        %3563 = vdwg.mxu0
        %v3564 = vadd.f32 %v3475, %v3561
        %v3565 = vld [vmem:[#allocation7 + $0x8] sm:$0x1]
        %s3566 = scalar_lea.vmem %s7, 1024
        %v3567 = vld [vmem:[%s3566] sm:$0xff]
        %v3568 = vld [vmem:[%s3566 + $0x8] sm:$0xff]
        %v3569 = vld [vmem:[%s3566 + $0x10] sm:$0xff]
        %v3570 = vld [vmem:[%s3566 + $0x18] sm:$0xff]
        %v3571 = vld [vmem:[%s3566 + $0x20] sm:$0xff]
        %v3572 = vld [vmem:[%s3566 + $0x28] sm:$0xff]
        %v3573 = vld [vmem:[%s3566 + $0x30] sm:$0xff]
        %v3574 = vld [vmem:[%s3566 + $0x38] sm:$0xff]
        %v3575 = vld [vmem:[%s3566 + $0x40] sm:$0xff]
        %v3576 = vld [vmem:[%s3566 + $0x48] sm:$0xff]
        %v3577 = vld [vmem:[%s3566 + $0x50] sm:$0xff]
        %v3578 = vld [vmem:[%s3566 + $0x58] sm:$0xff]
        %v3579 = vld [vmem:[%s3566 + $0x60] sm:$0xff]
        %v3580 = vld [vmem:[%s3566 + $0x68] sm:$0xff]
        %v3581 = vld [vmem:[%s3566 + $0x70] sm:$0xff]
        %v3582 = vld [vmem:[%s3566 + $0x78] sm:$0xff]
        %3583 = vmatprep.subr.mxu0 0.0
        %3584 = vmatpush1.msra.mxu0 %v3567
        %3585 = vmatprep.subr.mxu0 0.0
        %3586 = vmatpush1.msra.mxu0 %v3568
        %3587 = vmatprep.subr.mxu0 0.0
        %3588 = vmatpush1.msra.mxu0 %v3569
        %3589 = vmatprep.subr.mxu0 0.0
        %3590 = vmatpush1.msra.mxu0 %v3570
        %3591 = vmatprep.subr.mxu0 0.0
        %3592 = vmatpush1.msra.mxu0 %v3571
        %3593 = vmatprep.subr.mxu0 0.0
        %3594 = vmatpush1.msra.mxu0 %v3572
        %3595 = vmatprep.subr.mxu0 0.0
        %3596 = vmatpush1.msra.mxu0 %v3573
        %3597 = vmatprep.subr.mxu0 0.0
        %3598 = vmatpush1.msra.mxu0 %v3574
        %3599 = vmatprep.subr.mxu0 0.0
        %3600 = vmatpush1.msra.mxu0 %v3575
        %3601 = vmatprep.subr.mxu0 0.0
        %3602 = vmatpush1.msra.mxu0 %v3576
        %3603 = vmatprep.subr.mxu0 0.0
        %3604 = vmatpush1.msra.mxu0 %v3577
        %3605 = vmatprep.subr.mxu0 0.0
        %3606 = vmatpush1.msra.mxu0 %v3578
        %3607 = vmatprep.subr.mxu0 0.0
        %3608 = vmatpush1.msra.mxu0 %v3579
        %3609 = vmatprep.subr.mxu0 0.0
        %3610 = vmatpush1.msra.mxu0 %v3580
        %3611 = vmatprep.subr.mxu0 0.0
        %3612 = vmatpush1.msra.mxu0 %v3581
        %3613 = vmatprep.subr.mxu0 0.0
        %3614 = vmatpush1.msra.mxu0 %v3582
        %3615 = vmatprep.subr.mxu0 0.0
        %3616 = vmatpush1.msra.mxu0 0.0
        %3617 = vmatprep.subr.mxu0 0.0
        %3618 = vmatpush1.msra.mxu0 0.0
        %3619 = vmatprep.subr.mxu0 0.0
        %3620 = vmatpush1.msra.mxu0 0.0
        %3621 = vmatprep.subr.mxu0 0.0
        %3622 = vmatpush1.msra.mxu0 0.0
        %3623 = vmatprep.subr.mxu0 0.0
        %3624 = vmatpush1.msra.mxu0 0.0
        %3625 = vmatprep.subr.mxu0 0.0
        %3626 = vmatpush1.msra.mxu0 0.0
        %3627 = vmatprep.subr.mxu0 0.0
        %3628 = vmatpush1.msra.mxu0 0.0
        %3629 = vmatprep.subr.mxu0 0.0
        %3630 = vmatpush1.msra.mxu0 0.0
        %3631 = vmatprep.subr.mxu0 0.0
        %3632 = vmatpush1.msra.mxu0 0.0
        %3633 = vmatprep.subr.mxu0 0.0
        %3634 = vmatpush1.msra.mxu0 0.0
        %3635 = vmatprep.subr.mxu0 0.0
        %3636 = vmatpush1.msra.mxu0 0.0
        %3637 = vmatprep.subr.mxu0 0.0
        %3638 = vmatpush1.msra.mxu0 0.0
        %3639 = vmatprep.subr.mxu0 0.0
        %3640 = vmatpush1.msra.mxu0 0.0
        %3641 = vmatprep.subr.mxu0 0.0
        %3642 = vmatpush1.msra.mxu0 0.0
        %3643 = vmatprep.subr.mxu0 0.0
        %3644 = vmatpush1.msra.mxu0 0.0
        %3645 = vmatprep.subr.mxu0 0.0
        %3646 = vmatpush1.msra.mxu0 0.0
        %3647 = vmatprep.mubr.f32.mxu0 0.0
        %3648 = vmatmul.mubr.f32.gmra.mrb[0].mxu0 %v3565
        %v3649 = vpop.f32.mrb[0].mxu0
        %v3650 = vadd.f32 0.0, %v3649
        %v3651 = vpop.f32.mrb[0].mxu0
        %3652 = vdwg.mxu0
        %v3653 = vadd.f32 %v3564, %v3650
        %v3654 = vld [vmem:[#allocation7 + $0x9] sm:$0x1]
        %s3655 = scalar_lea.vmem %s7, 1152
        %v3656 = vld [vmem:[%s3655] sm:$0xff]
        %v3657 = vld [vmem:[%s3655 + $0x8] sm:$0xff]
        %v3658 = vld [vmem:[%s3655 + $0x10] sm:$0xff]
        %v3659 = vld [vmem:[%s3655 + $0x18] sm:$0xff]
        %v3660 = vld [vmem:[%s3655 + $0x20] sm:$0xff]
        %v3661 = vld [vmem:[%s3655 + $0x28] sm:$0xff]
        %v3662 = vld [vmem:[%s3655 + $0x30] sm:$0xff]
        %v3663 = vld [vmem:[%s3655 + $0x38] sm:$0xff]
        %v3664 = vld [vmem:[%s3655 + $0x40] sm:$0xff]
        %v3665 = vld [vmem:[%s3655 + $0x48] sm:$0xff]
        %v3666 = vld [vmem:[%s3655 + $0x50] sm:$0xff]
        %v3667 = vld [vmem:[%s3655 + $0x58] sm:$0xff]
        %v3668 = vld [vmem:[%s3655 + $0x60] sm:$0xff]
        %v3669 = vld [vmem:[%s3655 + $0x68] sm:$0xff]
        %v3670 = vld [vmem:[%s3655 + $0x70] sm:$0xff]
        %v3671 = vld [vmem:[%s3655 + $0x78] sm:$0xff]
        %3672 = vmatprep.subr.mxu0 0.0
        %3673 = vmatpush1.msra.mxu0 %v3656
        %3674 = vmatprep.subr.mxu0 0.0
        %3675 = vmatpush1.msra.mxu0 %v3657
        %3676 = vmatprep.subr.mxu0 0.0
        %3677 = vmatpush1.msra.mxu0 %v3658
        %3678 = vmatprep.subr.mxu0 0.0
        %3679 = vmatpush1.msra.mxu0 %v3659
        %3680 = vmatprep.subr.mxu0 0.0
        %3681 = vmatpush1.msra.mxu0 %v3660
        %3682 = vmatprep.subr.mxu0 0.0
        %3683 = vmatpush1.msra.mxu0 %v3661
        %3684 = vmatprep.subr.mxu0 0.0
        %3685 = vmatpush1.msra.mxu0 %v3662
        %3686 = vmatprep.subr.mxu0 0.0
        %3687 = vmatpush1.msra.mxu0 %v3663
        %3688 = vmatprep.subr.mxu0 0.0
        %3689 = vmatpush1.msra.mxu0 %v3664
        %3690 = vmatprep.subr.mxu0 0.0
        %3691 = vmatpush1.msra.mxu0 %v3665
        %3692 = vmatprep.subr.mxu0 0.0
        %3693 = vmatpush1.msra.mxu0 %v3666
        %3694 = vmatprep.subr.mxu0 0.0
        %3695 = vmatpush1.msra.mxu0 %v3667
        %3696 = vmatprep.subr.mxu0 0.0
        %3697 = vmatpush1.msra.mxu0 %v3668
        %3698 = vmatprep.subr.mxu0 0.0
        %3699 = vmatpush1.msra.mxu0 %v3669
        %3700 = vmatprep.subr.mxu0 0.0
        %3701 = vmatpush1.msra.mxu0 %v3670
        %3702 = vmatprep.subr.mxu0 0.0
        %3703 = vmatpush1.msra.mxu0 %v3671
        %3704 = vmatprep.subr.mxu0 0.0
        %3705 = vmatpush1.msra.mxu0 0.0
        %3706 = vmatprep.subr.mxu0 0.0
        %3707 = vmatpush1.msra.mxu0 0.0
        %3708 = vmatprep.subr.mxu0 0.0
        %3709 = vmatpush1.msra.mxu0 0.0
        %3710 = vmatprep.subr.mxu0 0.0
        %3711 = vmatpush1.msra.mxu0 0.0
        %3712 = vmatprep.subr.mxu0 0.0
        %3713 = vmatpush1.msra.mxu0 0.0
        %3714 = vmatprep.subr.mxu0 0.0
        %3715 = vmatpush1.msra.mxu0 0.0
        %3716 = vmatprep.subr.mxu0 0.0
        %3717 = vmatpush1.msra.mxu0 0.0
        %3718 = vmatprep.subr.mxu0 0.0
        %3719 = vmatpush1.msra.mxu0 0.0
        %3720 = vmatprep.subr.mxu0 0.0
        %3721 = vmatpush1.msra.mxu0 0.0
        %3722 = vmatprep.subr.mxu0 0.0
        %3723 = vmatpush1.msra.mxu0 0.0
        %3724 = vmatprep.subr.mxu0 0.0
        %3725 = vmatpush1.msra.mxu0 0.0
        %3726 = vmatprep.subr.mxu0 0.0
        %3727 = vmatpush1.msra.mxu0 0.0
        %3728 = vmatprep.subr.mxu0 0.0
        %3729 = vmatpush1.msra.mxu0 0.0
        %3730 = vmatprep.subr.mxu0 0.0
        %3731 = vmatpush1.msra.mxu0 0.0
        %3732 = vmatprep.subr.mxu0 0.0
        %3733 = vmatpush1.msra.mxu0 0.0
        %3734 = vmatprep.subr.mxu0 0.0
        %3735 = vmatpush1.msra.mxu0 0.0
        %3736 = vmatprep.mubr.f32.mxu0 0.0
        %3737 = vmatmul.mubr.f32.gmra.mrb[0].mxu0 %v3654
        %v3738 = vpop.f32.mrb[0].mxu0
        %v3739 = vadd.f32 0.0, %v3738
        %v3740 = vpop.f32.mrb[0].mxu0
        %3741 = vdwg.mxu0
        %v3742 = vadd.f32 %v3653, %v3739
        %v3743 = vld [vmem:[#allocation7 + $0xa] sm:$0x1]
        %s3744 = scalar_lea.vmem %s7, 1280
        %v3745 = vld [vmem:[%s3744] sm:$0xff]
        %v3746 = vld [vmem:[%s3744 + $0x8] sm:$0xff]
        %v3747 = vld [vmem:[%s3744 + $0x10] sm:$0xff]
        %v3748 = vld [vmem:[%s3744 + $0x18] sm:$0xff]
        %v3749 = vld [vmem:[%s3744 + $0x20] sm:$0xff]
        %v3750 = vld [vmem:[%s3744 + $0x28] sm:$0xff]
        %v3751 = vld [vmem:[%s3744 + $0x30] sm:$0xff]
        %v3752 = vld [vmem:[%s3744 + $0x38] sm:$0xff]
        %v3753 = vld [vmem:[%s3744 + $0x40] sm:$0xff]
        %v3754 = vld [vmem:[%s3744 + $0x48] sm:$0xff]
        %v3755 = vld [vmem:[%s3744 + $0x50] sm:$0xff]
        %v3756 = vld [vmem:[%s3744 + $0x58] sm:$0xff]
        %v3757 = vld [vmem:[%s3744 + $0x60] sm:$0xff]
        %v3758 = vld [vmem:[%s3744 + $0x68] sm:$0xff]
        %v3759 = vld [vmem:[%s3744 + $0x70] sm:$0xff]
        %v3760 = vld [vmem:[%s3744 + $0x78] sm:$0xff]
        %3761 = vmatprep.subr.mxu0 0.0
        %3762 = vmatpush1.msra.mxu0 %v3745
        %3763 = vmatprep.subr.mxu0 0.0
        %3764 = vmatpush1.msra.mxu0 %v3746
        %3765 = vmatprep.subr.mxu0 0.0
        %3766 = vmatpush1.msra.mxu0 %v3747
        %3767 = vmatprep.subr.mxu0 0.0
        %3768 = vmatpush1.msra.mxu0 %v3748
        %3769 = vmatprep.subr.mxu0 0.0
        %3770 = vmatpush1.msra.mxu0 %v3749
        %3771 = vmatprep.subr.mxu0 0.0
        %3772 = vmatpush1.msra.mxu0 %v3750
        %3773 = vmatprep.subr.mxu0 0.0
        %3774 = vmatpush1.msra.mxu0 %v3751
        %3775 = vmatprep.subr.mxu0 0.0
        %3776 = vmatpush1.msra.mxu0 %v3752
        %3777 = vmatprep.subr.mxu0 0.0
        %3778 = vmatpush1.msra.mxu0 %v3753
        %3779 = vmatprep.subr.mxu0 0.0
        %3780 = vmatpush1.msra.mxu0 %v3754
        %3781 = vmatprep.subr.mxu0 0.0
        %3782 = vmatpush1.msra.mxu0 %v3755
        %3783 = vmatprep.subr.mxu0 0.0
        %3784 = vmatpush1.msra.mxu0 %v3756
        %3785 = vmatprep.subr.mxu0 0.0
        %3786 = vmatpush1.msra.mxu0 %v3757
        %3787 = vmatprep.subr.mxu0 0.0
        %3788 = vmatpush1.msra.mxu0 %v3758
        %3789 = vmatprep.subr.mxu0 0.0
        %3790 = vmatpush1.msra.mxu0 %v3759
        %3791 = vmatprep.subr.mxu0 0.0
        %3792 = vmatpush1.msra.mxu0 %v3760
        %3793 = vmatprep.subr.mxu0 0.0
        %3794 = vmatpush1.msra.mxu0 0.0
        %3795 = vmatprep.subr.mxu0 0.0
        %3796 = vmatpush1.msra.mxu0 0.0
        %3797 = vmatprep.subr.mxu0 0.0
        %3798 = vmatpush1.msra.mxu0 0.0
        %3799 = vmatprep.subr.mxu0 0.0
        %3800 = vmatpush1.msra.mxu0 0.0
        %3801 = vmatprep.subr.mxu0 0.0
        %3802 = vmatpush1.msra.mxu0 0.0
        %3803 = vmatprep.subr.mxu0 0.0
        %3804 = vmatpush1.msra.mxu0 0.0
        %3805 = vmatprep.subr.mxu0 0.0
        %3806 = vmatpush1.msra.mxu0 0.0
        %3807 = vmatprep.subr.mxu0 0.0
        %3808 = vmatpush1.msra.mxu0 0.0
        %3809 = vmatprep.subr.mxu0 0.0
        %3810 = vmatpush1.msra.mxu0 0.0
        %3811 = vmatprep.subr.mxu0 0.0
        %3812 = vmatpush1.msra.mxu0 0.0
        %3813 = vmatprep.subr.mxu0 0.0
        %3814 = vmatpush1.msra.mxu0 0.0
        %3815 = vmatprep.subr.mxu0 0.0
        %3816 = vmatpush1.msra.mxu0 0.0
        %3817 = vmatprep.subr.mxu0 0.0
        %3818 = vmatpush1.msra.mxu0 0.0
        %3819 = vmatprep.subr.mxu0 0.0
        %3820 = vmatpush1.msra.mxu0 0.0
        %3821 = vmatprep.subr.mxu0 0.0
        %3822 = vmatpush1.msra.mxu0 0.0
        %3823 = vmatprep.subr.mxu0 0.0
        %3824 = vmatpush1.msra.mxu0 0.0
        %3825 = vmatprep.mubr.f32.mxu0 0.0
        %3826 = vmatmul.mubr.f32.gmra.mrb[0].mxu0 %v3743
        %v3827 = vpop.f32.mrb[0].mxu0
        %v3828 = vadd.f32 0.0, %v3827
        %v3829 = vpop.f32.mrb[0].mxu0
        %3830 = vdwg.mxu0
        %v3831 = vadd.f32 %v3742, %v3828
        %v3832 = vld [vmem:[#allocation7 + $0xb] sm:$0x1]
        %s3833 = scalar_lea.vmem %s7, 1408
        %v3834 = vld [vmem:[%s3833] sm:$0xff]
        %v3835 = vld [vmem:[%s3833 + $0x8] sm:$0xff]
        %v3836 = vld [vmem:[%s3833 + $0x10] sm:$0xff]
        %v3837 = vld [vmem:[%s3833 + $0x18] sm:$0xff]
        %v3838 = vld [vmem:[%s3833 + $0x20] sm:$0xff]
        %v3839 = vld [vmem:[%s3833 + $0x28] sm:$0xff]
        %v3840 = vld [vmem:[%s3833 + $0x30] sm:$0xff]
        %v3841 = vld [vmem:[%s3833 + $0x38] sm:$0xff]
        %v3842 = vld [vmem:[%s3833 + $0x40] sm:$0xff]
        %v3843 = vld [vmem:[%s3833 + $0x48] sm:$0xff]
        %v3844 = vld [vmem:[%s3833 + $0x50] sm:$0xff]
        %v3845 = vld [vmem:[%s3833 + $0x58] sm:$0xff]
        %v3846 = vld [vmem:[%s3833 + $0x60] sm:$0xff]
        %v3847 = vld [vmem:[%s3833 + $0x68] sm:$0xff]
        %v3848 = vld [vmem:[%s3833 + $0x70] sm:$0xff]
        %v3849 = vld [vmem:[%s3833 + $0x78] sm:$0xff]
        %3850 = vmatprep.subr.mxu0 0.0
        %3851 = vmatpush1.msra.mxu0 %v3834
        %3852 = vmatprep.subr.mxu0 0.0
        %3853 = vmatpush1.msra.mxu0 %v3835
        %3854 = vmatprep.subr.mxu0 0.0
        %3855 = vmatpush1.msra.mxu0 %v3836
        %3856 = vmatprep.subr.mxu0 0.0
        %3857 = vmatpush1.msra.mxu0 %v3837
        %3858 = vmatprep.subr.mxu0 0.0
        %3859 = vmatpush1.msra.mxu0 %v3838
        %3860 = vmatprep.subr.mxu0 0.0
        %3861 = vmatpush1.msra.mxu0 %v3839
        %3862 = vmatprep.subr.mxu0 0.0
        %3863 = vmatpush1.msra.mxu0 %v3840
        %3864 = vmatprep.subr.mxu0 0.0
        %3865 = vmatpush1.msra.mxu0 %v3841
        %3866 = vmatprep.subr.mxu0 0.0
        %3867 = vmatpush1.msra.mxu0 %v3842
        %3868 = vmatprep.subr.mxu0 0.0
        %3869 = vmatpush1.msra.mxu0 %v3843
        %3870 = vmatprep.subr.mxu0 0.0
        %3871 = vmatpush1.msra.mxu0 %v3844
        %3872 = vmatprep.subr.mxu0 0.0
        %3873 = vmatpush1.msra.mxu0 %v3845
        %3874 = vmatprep.subr.mxu0 0.0
        %3875 = vmatpush1.msra.mxu0 %v3846
        %3876 = vmatprep.subr.mxu0 0.0
        %3877 = vmatpush1.msra.mxu0 %v3847
        %3878 = vmatprep.subr.mxu0 0.0
        %3879 = vmatpush1.msra.mxu0 %v3848
        %3880 = vmatprep.subr.mxu0 0.0
        %3881 = vmatpush1.msra.mxu0 %v3849
        %3882 = vmatprep.subr.mxu0 0.0
        %3883 = vmatpush1.msra.mxu0 0.0
        %3884 = vmatprep.subr.mxu0 0.0
        %3885 = vmatpush1.msra.mxu0 0.0
        %3886 = vmatprep.subr.mxu0 0.0
        %3887 = vmatpush1.msra.mxu0 0.0
        %3888 = vmatprep.subr.mxu0 0.0
        %3889 = vmatpush1.msra.mxu0 0.0
        %3890 = vmatprep.subr.mxu0 0.0
        %3891 = vmatpush1.msra.mxu0 0.0
        %3892 = vmatprep.subr.mxu0 0.0
        %3893 = vmatpush1.msra.mxu0 0.0
        %3894 = vmatprep.subr.mxu0 0.0
        %3895 = vmatpush1.msra.mxu0 0.0
        %3896 = vmatprep.subr.mxu0 0.0
        %3897 = vmatpush1.msra.mxu0 0.0
        %3898 = vmatprep.subr.mxu0 0.0
        %3899 = vmatpush1.msra.mxu0 0.0
        %3900 = vmatprep.subr.mxu0 0.0
        %3901 = vmatpush1.msra.mxu0 0.0
        %3902 = vmatprep.subr.mxu0 0.0
        %3903 = vmatpush1.msra.mxu0 0.0
        %3904 = vmatprep.subr.mxu0 0.0
        %3905 = vmatpush1.msra.mxu0 0.0
        %3906 = vmatprep.subr.mxu0 0.0
        %3907 = vmatpush1.msra.mxu0 0.0
        %3908 = vmatprep.subr.mxu0 0.0
        %3909 = vmatpush1.msra.mxu0 0.0
        %3910 = vmatprep.subr.mxu0 0.0
        %3911 = vmatpush1.msra.mxu0 0.0
        %3912 = vmatprep.subr.mxu0 0.0
        %3913 = vmatpush1.msra.mxu0 0.0
        %3914 = vmatprep.mubr.f32.mxu0 0.0
        %3915 = vmatmul.mubr.f32.gmra.mrb[0].mxu0 %v3832
        %v3916 = vpop.f32.mrb[0].mxu0
        %v3917 = vadd.f32 0.0, %v3916
        %v3918 = vpop.f32.mrb[0].mxu0
        %3919 = vdwg.mxu0
        %v3920 = vadd.f32 %v3831, %v3917
        %v3921 = vld [vmem:[#allocation7 + $0xc] sm:$0x1]
        %s3922 = scalar_lea.vmem %s7, 1536
        %v3923 = vld [vmem:[%s3922] sm:$0xff]
        %v3924 = vld [vmem:[%s3922 + $0x8] sm:$0xff]
        %v3925 = vld [vmem:[%s3922 + $0x10] sm:$0xff]
        %v3926 = vld [vmem:[%s3922 + $0x18] sm:$0xff]
        %v3927 = vld [vmem:[%s3922 + $0x20] sm:$0xff]
        %v3928 = vld [vmem:[%s3922 + $0x28] sm:$0xff]
        %v3929 = vld [vmem:[%s3922 + $0x30] sm:$0xff]
        %v3930 = vld [vmem:[%s3922 + $0x38] sm:$0xff]
        %v3931 = vld [vmem:[%s3922 + $0x40] sm:$0xff]
        %v3932 = vld [vmem:[%s3922 + $0x48] sm:$0xff]
        %v3933 = vld [vmem:[%s3922 + $0x50] sm:$0xff]
        %v3934 = vld [vmem:[%s3922 + $0x58] sm:$0xff]
        %v3935 = vld [vmem:[%s3922 + $0x60] sm:$0xff]
        %v3936 = vld [vmem:[%s3922 + $0x68] sm:$0xff]
        %v3937 = vld [vmem:[%s3922 + $0x70] sm:$0xff]
        %v3938 = vld [vmem:[%s3922 + $0x78] sm:$0xff]
        %3939 = vmatprep.subr.mxu0 0.0
        %3940 = vmatpush1.msra.mxu0 %v3923
        %3941 = vmatprep.subr.mxu0 0.0
        %3942 = vmatpush1.msra.mxu0 %v3924
        %3943 = vmatprep.subr.mxu0 0.0
        %3944 = vmatpush1.msra.mxu0 %v3925
        %3945 = vmatprep.subr.mxu0 0.0
        %3946 = vmatpush1.msra.mxu0 %v3926
        %3947 = vmatprep.subr.mxu0 0.0
        %3948 = vmatpush1.msra.mxu0 %v3927
        %3949 = vmatprep.subr.mxu0 0.0
        %3950 = vmatpush1.msra.mxu0 %v3928
        %3951 = vmatprep.subr.mxu0 0.0
        %3952 = vmatpush1.msra.mxu0 %v3929
        %3953 = vmatprep.subr.mxu0 0.0
        %3954 = vmatpush1.msra.mxu0 %v3930
        %3955 = vmatprep.subr.mxu0 0.0
        %3956 = vmatpush1.msra.mxu0 %v3931
        %3957 = vmatprep.subr.mxu0 0.0
        %3958 = vmatpush1.msra.mxu0 %v3932
        %3959 = vmatprep.subr.mxu0 0.0
        %3960 = vmatpush1.msra.mxu0 %v3933
        %3961 = vmatprep.subr.mxu0 0.0
        %3962 = vmatpush1.msra.mxu0 %v3934
        %3963 = vmatprep.subr.mxu0 0.0
        %3964 = vmatpush1.msra.mxu0 %v3935
        %3965 = vmatprep.subr.mxu0 0.0
        %3966 = vmatpush1.msra.mxu0 %v3936
        %3967 = vmatprep.subr.mxu0 0.0
        %3968 = vmatpush1.msra.mxu0 %v3937
        %3969 = vmatprep.subr.mxu0 0.0
        %3970 = vmatpush1.msra.mxu0 %v3938
        %3971 = vmatprep.subr.mxu0 0.0
        %3972 = vmatpush1.msra.mxu0 0.0
        %3973 = vmatprep.subr.mxu0 0.0
        %3974 = vmatpush1.msra.mxu0 0.0
        %3975 = vmatprep.subr.mxu0 0.0
        %3976 = vmatpush1.msra.mxu0 0.0
        %3977 = vmatprep.subr.mxu0 0.0
        %3978 = vmatpush1.msra.mxu0 0.0
        %3979 = vmatprep.subr.mxu0 0.0
        %3980 = vmatpush1.msra.mxu0 0.0
        %3981 = vmatprep.subr.mxu0 0.0
        %3982 = vmatpush1.msra.mxu0 0.0
        %3983 = vmatprep.subr.mxu0 0.0
        %3984 = vmatpush1.msra.mxu0 0.0
        %3985 = vmatprep.subr.mxu0 0.0
        %3986 = vmatpush1.msra.mxu0 0.0
        %3987 = vmatprep.subr.mxu0 0.0
        %3988 = vmatpush1.msra.mxu0 0.0
        %3989 = vmatprep.subr.mxu0 0.0
        %3990 = vmatpush1.msra.mxu0 0.0
        %3991 = vmatprep.subr.mxu0 0.0
        %3992 = vmatpush1.msra.mxu0 0.0
        %3993 = vmatprep.subr.mxu0 0.0
        %3994 = vmatpush1.msra.mxu0 0.0
        %3995 = vmatprep.subr.mxu0 0.0
        %3996 = vmatpush1.msra.mxu0 0.0
        %3997 = vmatprep.subr.mxu0 0.0
        %3998 = vmatpush1.msra.mxu0 0.0
        %3999 = vmatprep.subr.mxu0 0.0
        %4000 = vmatpush1.msra.mxu0 0.0
        %4001 = vmatprep.subr.mxu0 0.0
        %4002 = vmatpush1.msra.mxu0 0.0
        %4003 = vmatprep.mubr.f32.mxu0 0.0
        %4004 = vmatmul.mubr.f32.gmra.mrb[0].mxu0 %v3921
        %v4005 = vpop.f32.mrb[0].mxu0
        %v4006 = vadd.f32 0.0, %v4005
        %v4007 = vpop.f32.mrb[0].mxu0
        %4008 = vdwg.mxu0
        %v4009 = vadd.f32 %v3920, %v4006
        %v4010 = vld [vmem:[#allocation7 + $0xd] sm:$0x1]
        %s4011 = scalar_lea.vmem %s7, 1664
        %v4012 = vld [vmem:[%s4011] sm:$0xff]
        %v4013 = vld [vmem:[%s4011 + $0x8] sm:$0xff]
        %v4014 = vld [vmem:[%s4011 + $0x10] sm:$0xff]
        %v4015 = vld [vmem:[%s4011 + $0x18] sm:$0xff]
        %v4016 = vld [vmem:[%s4011 + $0x20] sm:$0xff]
        %v4017 = vld [vmem:[%s4011 + $0x28] sm:$0xff]
        %v4018 = vld [vmem:[%s4011 + $0x30] sm:$0xff]
        %v4019 = vld [vmem:[%s4011 + $0x38] sm:$0xff]
        %v4020 = vld [vmem:[%s4011 + $0x40] sm:$0xff]
        %v4021 = vld [vmem:[%s4011 + $0x48] sm:$0xff]
        %v4022 = vld [vmem:[%s4011 + $0x50] sm:$0xff]
        %v4023 = vld [vmem:[%s4011 + $0x58] sm:$0xff]
        %v4024 = vld [vmem:[%s4011 + $0x60] sm:$0xff]
        %v4025 = vld [vmem:[%s4011 + $0x68] sm:$0xff]
        %v4026 = vld [vmem:[%s4011 + $0x70] sm:$0xff]
        %v4027 = vld [vmem:[%s4011 + $0x78] sm:$0xff]
        %4028 = vmatprep.subr.mxu0 0.0
        %4029 = vmatpush1.msra.mxu0 %v4012
        %4030 = vmatprep.subr.mxu0 0.0
        %4031 = vmatpush1.msra.mxu0 %v4013
        %4032 = vmatprep.subr.mxu0 0.0
        %4033 = vmatpush1.msra.mxu0 %v4014
        %4034 = vmatprep.subr.mxu0 0.0
        %4035 = vmatpush1.msra.mxu0 %v4015
        %4036 = vmatprep.subr.mxu0 0.0
        %4037 = vmatpush1.msra.mxu0 %v4016
        %4038 = vmatprep.subr.mxu0 0.0
        %4039 = vmatpush1.msra.mxu0 %v4017
        %4040 = vmatprep.subr.mxu0 0.0
        %4041 = vmatpush1.msra.mxu0 %v4018
        %4042 = vmatprep.subr.mxu0 0.0
        %4043 = vmatpush1.msra.mxu0 %v4019
        %4044 = vmatprep.subr.mxu0 0.0
        %4045 = vmatpush1.msra.mxu0 %v4020
        %4046 = vmatprep.subr.mxu0 0.0
        %4047 = vmatpush1.msra.mxu0 %v4021
        %4048 = vmatprep.subr.mxu0 0.0
        %4049 = vmatpush1.msra.mxu0 %v4022
        %4050 = vmatprep.subr.mxu0 0.0
        %4051 = vmatpush1.msra.mxu0 %v4023
        %4052 = vmatprep.subr.mxu0 0.0
        %4053 = vmatpush1.msra.mxu0 %v4024
        %4054 = vmatprep.subr.mxu0 0.0
        %4055 = vmatpush1.msra.mxu0 %v4025
        %4056 = vmatprep.subr.mxu0 0.0
        %4057 = vmatpush1.msra.mxu0 %v4026
        %4058 = vmatprep.subr.mxu0 0.0
        %4059 = vmatpush1.msra.mxu0 %v4027
        %4060 = vmatprep.subr.mxu0 0.0
        %4061 = vmatpush1.msra.mxu0 0.0
        %4062 = vmatprep.subr.mxu0 0.0
        %4063 = vmatpush1.msra.mxu0 0.0
        %4064 = vmatprep.subr.mxu0 0.0
        %4065 = vmatpush1.msra.mxu0 0.0
        %4066 = vmatprep.subr.mxu0 0.0
        %4067 = vmatpush1.msra.mxu0 0.0
        %4068 = vmatprep.subr.mxu0 0.0
        %4069 = vmatpush1.msra.mxu0 0.0
        %4070 = vmatprep.subr.mxu0 0.0
        %4071 = vmatpush1.msra.mxu0 0.0
        %4072 = vmatprep.subr.mxu0 0.0
        %4073 = vmatpush1.msra.mxu0 0.0
        %4074 = vmatprep.subr.mxu0 0.0
        %4075 = vmatpush1.msra.mxu0 0.0
        %4076 = vmatprep.subr.mxu0 0.0
        %4077 = vmatpush1.msra.mxu0 0.0
        %4078 = vmatprep.subr.mxu0 0.0
        %4079 = vmatpush1.msra.mxu0 0.0
        %4080 = vmatprep.subr.mxu0 0.0
        %4081 = vmatpush1.msra.mxu0 0.0
        %4082 = vmatprep.subr.mxu0 0.0
        %4083 = vmatpush1.msra.mxu0 0.0
        %4084 = vmatprep.subr.mxu0 0.0
        %4085 = vmatpush1.msra.mxu0 0.0
        %4086 = vmatprep.subr.mxu0 0.0
        %4087 = vmatpush1.msra.mxu0 0.0
        %4088 = vmatprep.subr.mxu0 0.0
        %4089 = vmatpush1.msra.mxu0 0.0
        %4090 = vmatprep.subr.mxu0 0.0
        %4091 = vmatpush1.msra.mxu0 0.0
        %4092 = vmatprep.mubr.f32.mxu0 0.0
        %4093 = vmatmul.mubr.f32.gmra.mrb[0].mxu0 %v4010
        %v4094 = vpop.f32.mrb[0].mxu0
        %v4095 = vadd.f32 0.0, %v4094
        %v4096 = vpop.f32.mrb[0].mxu0
        %4097 = vdwg.mxu0
        %v4098 = vadd.f32 %v4009, %v4095
        %v4099 = vld [vmem:[#allocation7 + $0xe] sm:$0x1]
        %s4100 = scalar_lea.vmem %s7, 1792
        %v4101 = vld [vmem:[%s4100] sm:$0xff]
        %v4102 = vld [vmem:[%s4100 + $0x8] sm:$0xff]
        %v4103 = vld [vmem:[%s4100 + $0x10] sm:$0xff]
        %v4104 = vld [vmem:[%s4100 + $0x18] sm:$0xff]
        %v4105 = vld [vmem:[%s4100 + $0x20] sm:$0xff]
        %v4106 = vld [vmem:[%s4100 + $0x28] sm:$0xff]
        %v4107 = vld [vmem:[%s4100 + $0x30] sm:$0xff]
        %v4108 = vld [vmem:[%s4100 + $0x38] sm:$0xff]
        %v4109 = vld [vmem:[%s4100 + $0x40] sm:$0xff]
        %v4110 = vld [vmem:[%s4100 + $0x48] sm:$0xff]
        %v4111 = vld [vmem:[%s4100 + $0x50] sm:$0xff]
        %v4112 = vld [vmem:[%s4100 + $0x58] sm:$0xff]
        %v4113 = vld [vmem:[%s4100 + $0x60] sm:$0xff]
        %v4114 = vld [vmem:[%s4100 + $0x68] sm:$0xff]
        %v4115 = vld [vmem:[%s4100 + $0x70] sm:$0xff]
        %v4116 = vld [vmem:[%s4100 + $0x78] sm:$0xff]
        %4117 = vmatprep.subr.mxu0 0.0
        %4118 = vmatpush1.msra.mxu0 %v4101
        %4119 = vmatprep.subr.mxu0 0.0
        %4120 = vmatpush1.msra.mxu0 %v4102
        %4121 = vmatprep.subr.mxu0 0.0
        %4122 = vmatpush1.msra.mxu0 %v4103
        %4123 = vmatprep.subr.mxu0 0.0
        %4124 = vmatpush1.msra.mxu0 %v4104
        %4125 = vmatprep.subr.mxu0 0.0
        %4126 = vmatpush1.msra.mxu0 %v4105
        %4127 = vmatprep.subr.mxu0 0.0
        %4128 = vmatpush1.msra.mxu0 %v4106
        %4129 = vmatprep.subr.mxu0 0.0
        %4130 = vmatpush1.msra.mxu0 %v4107
        %4131 = vmatprep.subr.mxu0 0.0
        %4132 = vmatpush1.msra.mxu0 %v4108
        %4133 = vmatprep.subr.mxu0 0.0
        %4134 = vmatpush1.msra.mxu0 %v4109
        %4135 = vmatprep.subr.mxu0 0.0
        %4136 = vmatpush1.msra.mxu0 %v4110
        %4137 = vmatprep.subr.mxu0 0.0
        %4138 = vmatpush1.msra.mxu0 %v4111
        %4139 = vmatprep.subr.mxu0 0.0
        %4140 = vmatpush1.msra.mxu0 %v4112
        %4141 = vmatprep.subr.mxu0 0.0
        %4142 = vmatpush1.msra.mxu0 %v4113
        %4143 = vmatprep.subr.mxu0 0.0
        %4144 = vmatpush1.msra.mxu0 %v4114
        %4145 = vmatprep.subr.mxu0 0.0
        %4146 = vmatpush1.msra.mxu0 %v4115
        %4147 = vmatprep.subr.mxu0 0.0
        %4148 = vmatpush1.msra.mxu0 %v4116
        %4149 = vmatprep.subr.mxu0 0.0
        %4150 = vmatpush1.msra.mxu0 0.0
        %4151 = vmatprep.subr.mxu0 0.0
        %4152 = vmatpush1.msra.mxu0 0.0
        %4153 = vmatprep.subr.mxu0 0.0
        %4154 = vmatpush1.msra.mxu0 0.0
        %4155 = vmatprep.subr.mxu0 0.0
        %4156 = vmatpush1.msra.mxu0 0.0
        %4157 = vmatprep.subr.mxu0 0.0
        %4158 = vmatpush1.msra.mxu0 0.0
        %4159 = vmatprep.subr.mxu0 0.0
        %4160 = vmatpush1.msra.mxu0 0.0
        %4161 = vmatprep.subr.mxu0 0.0
        %4162 = vmatpush1.msra.mxu0 0.0
        %4163 = vmatprep.subr.mxu0 0.0
        %4164 = vmatpush1.msra.mxu0 0.0
        %4165 = vmatprep.subr.mxu0 0.0
        %4166 = vmatpush1.msra.mxu0 0.0
        %4167 = vmatprep.subr.mxu0 0.0
        %4168 = vmatpush1.msra.mxu0 0.0
        %4169 = vmatprep.subr.mxu0 0.0
        %4170 = vmatpush1.msra.mxu0 0.0
        %4171 = vmatprep.subr.mxu0 0.0
        %4172 = vmatpush1.msra.mxu0 0.0
        %4173 = vmatprep.subr.mxu0 0.0
        %4174 = vmatpush1.msra.mxu0 0.0
        %4175 = vmatprep.subr.mxu0 0.0
        %4176 = vmatpush1.msra.mxu0 0.0
        %4177 = vmatprep.subr.mxu0 0.0
        %4178 = vmatpush1.msra.mxu0 0.0
        %4179 = vmatprep.subr.mxu0 0.0
        %4180 = vmatpush1.msra.mxu0 0.0
        %4181 = vmatprep.mubr.f32.mxu0 0.0
        %4182 = vmatmul.mubr.f32.gmra.mrb[0].mxu0 %v4099
        %v4183 = vpop.f32.mrb[0].mxu0
        %v4184 = vadd.f32 0.0, %v4183
        %v4185 = vpop.f32.mrb[0].mxu0
        %4186 = vdwg.mxu0
        %v4187 = vadd.f32 %v4098, %v4184
        %v4188 = vld [vmem:[#allocation7 + $0xf] sm:$0x1]
        %s4189 = scalar_lea.vmem %s7, 1920
        %v4190 = vld [vmem:[%s4189] sm:$0xff]
        %v4191 = vld [vmem:[%s4189 + $0x8] sm:$0xff]
        %v4192 = vld [vmem:[%s4189 + $0x10] sm:$0xff]
        %v4193 = vld [vmem:[%s4189 + $0x18] sm:$0xff]
        %v4194 = vld [vmem:[%s4189 + $0x20] sm:$0xff]
        %v4195 = vld [vmem:[%s4189 + $0x28] sm:$0xff]
        %v4196 = vld [vmem:[%s4189 + $0x30] sm:$0xff]
        %v4197 = vld [vmem:[%s4189 + $0x38] sm:$0xff]
        %v4198 = vld [vmem:[%s4189 + $0x40] sm:$0xff]
        %v4199 = vld [vmem:[%s4189 + $0x48] sm:$0xff]
        %v4200 = vld [vmem:[%s4189 + $0x50] sm:$0xff]
        %v4201 = vld [vmem:[%s4189 + $0x58] sm:$0xff]
        %v4202 = vld [vmem:[%s4189 + $0x60] sm:$0xff]
        %v4203 = vld [vmem:[%s4189 + $0x68] sm:$0xff]
        %v4204 = vld [vmem:[%s4189 + $0x70] sm:$0xff]
        %v4205 = vld [vmem:[%s4189 + $0x78] sm:$0xff]
        %4206 = vmatprep.subr.mxu0 0.0
        %4207 = vmatpush1.msra.mxu0 %v4190
        %4208 = vmatprep.subr.mxu0 0.0
        %4209 = vmatpush1.msra.mxu0 %v4191
        %4210 = vmatprep.subr.mxu0 0.0
        %4211 = vmatpush1.msra.mxu0 %v4192
        %4212 = vmatprep.subr.mxu0 0.0
        %4213 = vmatpush1.msra.mxu0 %v4193
        %4214 = vmatprep.subr.mxu0 0.0
        %4215 = vmatpush1.msra.mxu0 %v4194
        %4216 = vmatprep.subr.mxu0 0.0
        %4217 = vmatpush1.msra.mxu0 %v4195
        %4218 = vmatprep.subr.mxu0 0.0
        %4219 = vmatpush1.msra.mxu0 %v4196
        %4220 = vmatprep.subr.mxu0 0.0
        %4221 = vmatpush1.msra.mxu0 %v4197
        %4222 = vmatprep.subr.mxu0 0.0
        %4223 = vmatpush1.msra.mxu0 %v4198
        %4224 = vmatprep.subr.mxu0 0.0
        %4225 = vmatpush1.msra.mxu0 %v4199
        %4226 = vmatprep.subr.mxu0 0.0
        %4227 = vmatpush1.msra.mxu0 %v4200
        %4228 = vmatprep.subr.mxu0 0.0
        %4229 = vmatpush1.msra.mxu0 %v4201
        %4230 = vmatprep.subr.mxu0 0.0
        %4231 = vmatpush1.msra.mxu0 %v4202
        %4232 = vmatprep.subr.mxu0 0.0
        %4233 = vmatpush1.msra.mxu0 %v4203
        %4234 = vmatprep.subr.mxu0 0.0
        %4235 = vmatpush1.msra.mxu0 %v4204
        %4236 = vmatprep.subr.mxu0 0.0
        %4237 = vmatpush1.msra.mxu0 %v4205
        %4238 = vmatprep.subr.mxu0 0.0
        %4239 = vmatpush1.msra.mxu0 0.0
        %4240 = vmatprep.subr.mxu0 0.0
        %4241 = vmatpush1.msra.mxu0 0.0
        %4242 = vmatprep.subr.mxu0 0.0
        %4243 = vmatpush1.msra.mxu0 0.0
        %4244 = vmatprep.subr.mxu0 0.0
        %4245 = vmatpush1.msra.mxu0 0.0
        %4246 = vmatprep.subr.mxu0 0.0
        %4247 = vmatpush1.msra.mxu0 0.0
        %4248 = vmatprep.subr.mxu0 0.0
        %4249 = vmatpush1.msra.mxu0 0.0
        %4250 = vmatprep.subr.mxu0 0.0
        %4251 = vmatpush1.msra.mxu0 0.0
        %4252 = vmatprep.subr.mxu0 0.0
        %4253 = vmatpush1.msra.mxu0 0.0
        %4254 = vmatprep.subr.mxu0 0.0
        %4255 = vmatpush1.msra.mxu0 0.0
        %4256 = vmatprep.subr.mxu0 0.0
        %4257 = vmatpush1.msra.mxu0 0.0
        %4258 = vmatprep.subr.mxu0 0.0
        %4259 = vmatpush1.msra.mxu0 0.0
        %4260 = vmatprep.subr.mxu0 0.0
        %4261 = vmatpush1.msra.mxu0 0.0
        %4262 = vmatprep.subr.mxu0 0.0
        %4263 = vmatpush1.msra.mxu0 0.0
        %4264 = vmatprep.subr.mxu0 0.0
        %4265 = vmatpush1.msra.mxu0 0.0
        %4266 = vmatprep.subr.mxu0 0.0
        %4267 = vmatpush1.msra.mxu0 0.0
        %4268 = vmatprep.subr.mxu0 0.0
        %4269 = vmatpush1.msra.mxu0 0.0
        %4270 = vmatprep.mubr.f32.mxu0 0.0
        %4271 = vmatmul.mubr.f32.gmra.mrb[0].mxu0 %v4188
        %v4272 = vpop.f32.mrb[0].mxu0
        %v4273 = vadd.f32 0.0, %v4272
        %v4274 = vpop.f32.mrb[0].mxu0
        %4275 = vdwg.mxu0
        %v4276 = vadd.f32 %v4187, %v4273
        %v4277 = vld [vmem:[#allocation7 + $0x10] sm:$0x1]
        %s4278 = scalar_lea.vmem %s7, 2048
        %v4279 = vld [vmem:[%s4278] sm:$0xff]
        %v4280 = vld [vmem:[%s4278 + $0x8] sm:$0xff]
        %v4281 = vld [vmem:[%s4278 + $0x10] sm:$0xff]
        %v4282 = vld [vmem:[%s4278 + $0x18] sm:$0xff]
        %v4283 = vld [vmem:[%s4278 + $0x20] sm:$0xff]
        %v4284 = vld [vmem:[%s4278 + $0x28] sm:$0xff]
        %v4285 = vld [vmem:[%s4278 + $0x30] sm:$0xff]
        %v4286 = vld [vmem:[%s4278 + $0x38] sm:$0xff]
        %v4287 = vld [vmem:[%s4278 + $0x40] sm:$0xff]
        %v4288 = vld [vmem:[%s4278 + $0x48] sm:$0xff]
        %v4289 = vld [vmem:[%s4278 + $0x50] sm:$0xff]
        %v4290 = vld [vmem:[%s4278 + $0x58] sm:$0xff]
        %v4291 = vld [vmem:[%s4278 + $0x60] sm:$0xff]
        %v4292 = vld [vmem:[%s4278 + $0x68] sm:$0xff]
        %v4293 = vld [vmem:[%s4278 + $0x70] sm:$0xff]
        %v4294 = vld [vmem:[%s4278 + $0x78] sm:$0xff]
        %4295 = vmatprep.subr.mxu0 0.0
        %4296 = vmatpush1.msra.mxu0 %v4279
        %4297 = vmatprep.subr.mxu0 0.0
        %4298 = vmatpush1.msra.mxu0 %v4280
        %4299 = vmatprep.subr.mxu0 0.0
        %4300 = vmatpush1.msra.mxu0 %v4281
        %4301 = vmatprep.subr.mxu0 0.0
        %4302 = vmatpush1.msra.mxu0 %v4282
        %4303 = vmatprep.subr.mxu0 0.0
        %4304 = vmatpush1.msra.mxu0 %v4283
        %4305 = vmatprep.subr.mxu0 0.0
        %4306 = vmatpush1.msra.mxu0 %v4284
        %4307 = vmatprep.subr.mxu0 0.0
        %4308 = vmatpush1.msra.mxu0 %v4285
        %4309 = vmatprep.subr.mxu0 0.0
        %4310 = vmatpush1.msra.mxu0 %v4286
        %4311 = vmatprep.subr.mxu0 0.0
        %4312 = vmatpush1.msra.mxu0 %v4287
        %4313 = vmatprep.subr.mxu0 0.0
        %4314 = vmatpush1.msra.mxu0 %v4288
        %4315 = vmatprep.subr.mxu0 0.0
        %4316 = vmatpush1.msra.mxu0 %v4289
        %4317 = vmatprep.subr.mxu0 0.0
        %4318 = vmatpush1.msra.mxu0 %v4290
        %4319 = vmatprep.subr.mxu0 0.0
        %4320 = vmatpush1.msra.mxu0 %v4291
        %4321 = vmatprep.subr.mxu0 0.0
        %4322 = vmatpush1.msra.mxu0 %v4292
        %4323 = vmatprep.subr.mxu0 0.0
        %4324 = vmatpush1.msra.mxu0 %v4293
        %4325 = vmatprep.subr.mxu0 0.0
        %4326 = vmatpush1.msra.mxu0 %v4294
        %4327 = vmatprep.subr.mxu0 0.0
        %4328 = vmatpush1.msra.mxu0 0.0
        %4329 = vmatprep.subr.mxu0 0.0
        %4330 = vmatpush1.msra.mxu0 0.0
        %4331 = vmatprep.subr.mxu0 0.0
        %4332 = vmatpush1.msra.mxu0 0.0
        %4333 = vmatprep.subr.mxu0 0.0
        %4334 = vmatpush1.msra.mxu0 0.0
        %4335 = vmatprep.subr.mxu0 0.0
        %4336 = vmatpush1.msra.mxu0 0.0
        %4337 = vmatprep.subr.mxu0 0.0
        %4338 = vmatpush1.msra.mxu0 0.0
        %4339 = vmatprep.subr.mxu0 0.0
        %4340 = vmatpush1.msra.mxu0 0.0
        %4341 = vmatprep.subr.mxu0 0.0
        %4342 = vmatpush1.msra.mxu0 0.0
        %4343 = vmatprep.subr.mxu0 0.0
        %4344 = vmatpush1.msra.mxu0 0.0
        %4345 = vmatprep.subr.mxu0 0.0
        %4346 = vmatpush1.msra.mxu0 0.0
        %4347 = vmatprep.subr.mxu0 0.0
        %4348 = vmatpush1.msra.mxu0 0.0
        %4349 = vmatprep.subr.mxu0 0.0
        %4350 = vmatpush1.msra.mxu0 0.0
        %4351 = vmatprep.subr.mxu0 0.0
        %4352 = vmatpush1.msra.mxu0 0.0
        %4353 = vmatprep.subr.mxu0 0.0
        %4354 = vmatpush1.msra.mxu0 0.0
        %4355 = vmatprep.subr.mxu0 0.0
        %4356 = vmatpush1.msra.mxu0 0.0
        %4357 = vmatprep.subr.mxu0 0.0
        %4358 = vmatpush1.msra.mxu0 0.0
        %4359 = vmatprep.mubr.f32.mxu0 0.0
        %4360 = vmatmul.mubr.f32.gmra.mrb[0].mxu0 %v4277
        %v4361 = vpop.f32.mrb[0].mxu0
        %v4362 = vadd.f32 0.0, %v4361
        %v4363 = vpop.f32.mrb[0].mxu0
        %4364 = vdwg.mxu0
        %v4365 = vadd.f32 %v4276, %v4362
        %v4366 = vld [vmem:[#allocation7 + $0x11] sm:$0x1]
        %s4367 = scalar_lea.vmem %s7, 2176
        %v4368 = vld [vmem:[%s4367] sm:$0xff]
        %v4369 = vld [vmem:[%s4367 + $0x8] sm:$0xff]
        %v4370 = vld [vmem:[%s4367 + $0x10] sm:$0xff]
        %v4371 = vld [vmem:[%s4367 + $0x18] sm:$0xff]
        %v4372 = vld [vmem:[%s4367 + $0x20] sm:$0xff]
        %v4373 = vld [vmem:[%s4367 + $0x28] sm:$0xff]
        %v4374 = vld [vmem:[%s4367 + $0x30] sm:$0xff]
        %v4375 = vld [vmem:[%s4367 + $0x38] sm:$0xff]
        %v4376 = vld [vmem:[%s4367 + $0x40] sm:$0xff]
        %v4377 = vld [vmem:[%s4367 + $0x48] sm:$0xff]
        %v4378 = vld [vmem:[%s4367 + $0x50] sm:$0xff]
        %v4379 = vld [vmem:[%s4367 + $0x58] sm:$0xff]
        %v4380 = vld [vmem:[%s4367 + $0x60] sm:$0xff]
        %v4381 = vld [vmem:[%s4367 + $0x68] sm:$0xff]
        %v4382 = vld [vmem:[%s4367 + $0x70] sm:$0xff]
        %v4383 = vld [vmem:[%s4367 + $0x78] sm:$0xff]
        %4384 = vmatprep.subr.mxu0 0.0
        %4385 = vmatpush1.msra.mxu0 %v4368
        %4386 = vmatprep.subr.mxu0 0.0
        %4387 = vmatpush1.msra.mxu0 %v4369
        %4388 = vmatprep.subr.mxu0 0.0
        %4389 = vmatpush1.msra.mxu0 %v4370
        %4390 = vmatprep.subr.mxu0 0.0
        %4391 = vmatpush1.msra.mxu0 %v4371
        %4392 = vmatprep.subr.mxu0 0.0
        %4393 = vmatpush1.msra.mxu0 %v4372
        %4394 = vmatprep.subr.mxu0 0.0
        %4395 = vmatpush1.msra.mxu0 %v4373
        %4396 = vmatprep.subr.mxu0 0.0
        %4397 = vmatpush1.msra.mxu0 %v4374
        %4398 = vmatprep.subr.mxu0 0.0
        %4399 = vmatpush1.msra.mxu0 %v4375
        %4400 = vmatprep.subr.mxu0 0.0
        %4401 = vmatpush1.msra.mxu0 %v4376
        %4402 = vmatprep.subr.mxu0 0.0
        %4403 = vmatpush1.msra.mxu0 %v4377
        %4404 = vmatprep.subr.mxu0 0.0
        %4405 = vmatpush1.msra.mxu0 %v4378
        %4406 = vmatprep.subr.mxu0 0.0
        %4407 = vmatpush1.msra.mxu0 %v4379
        %4408 = vmatprep.subr.mxu0 0.0
        %4409 = vmatpush1.msra.mxu0 %v4380
        %4410 = vmatprep.subr.mxu0 0.0
        %4411 = vmatpush1.msra.mxu0 %v4381
        %4412 = vmatprep.subr.mxu0 0.0
        %4413 = vmatpush1.msra.mxu0 %v4382
        %4414 = vmatprep.subr.mxu0 0.0
        %4415 = vmatpush1.msra.mxu0 %v4383
        %4416 = vmatprep.subr.mxu0 0.0
        %4417 = vmatpush1.msra.mxu0 0.0
        %4418 = vmatprep.subr.mxu0 0.0
        %4419 = vmatpush1.msra.mxu0 0.0
        %4420 = vmatprep.subr.mxu0 0.0
        %4421 = vmatpush1.msra.mxu0 0.0
        %4422 = vmatprep.subr.mxu0 0.0
        %4423 = vmatpush1.msra.mxu0 0.0
        %4424 = vmatprep.subr.mxu0 0.0
        %4425 = vmatpush1.msra.mxu0 0.0
        %4426 = vmatprep.subr.mxu0 0.0
        %4427 = vmatpush1.msra.mxu0 0.0
        %4428 = vmatprep.subr.mxu0 0.0
        %4429 = vmatpush1.msra.mxu0 0.0
        %4430 = vmatprep.subr.mxu0 0.0
        %4431 = vmatpush1.msra.mxu0 0.0
        %4432 = vmatprep.subr.mxu0 0.0
        %4433 = vmatpush1.msra.mxu0 0.0
        %4434 = vmatprep.subr.mxu0 0.0
        %4435 = vmatpush1.msra.mxu0 0.0
        %4436 = vmatprep.subr.mxu0 0.0
        %4437 = vmatpush1.msra.mxu0 0.0
        %4438 = vmatprep.subr.mxu0 0.0
        %4439 = vmatpush1.msra.mxu0 0.0
        %4440 = vmatprep.subr.mxu0 0.0
        %4441 = vmatpush1.msra.mxu0 0.0
        %4442 = vmatprep.subr.mxu0 0.0
        %4443 = vmatpush1.msra.mxu0 0.0
        %4444 = vmatprep.subr.mxu0 0.0
        %4445 = vmatpush1.msra.mxu0 0.0
        %4446 = vmatprep.subr.mxu0 0.0
        %4447 = vmatpush1.msra.mxu0 0.0
        %4448 = vmatprep.mubr.f32.mxu0 0.0
        %4449 = vmatmul.mubr.f32.gmra.mrb[0].mxu0 %v4366
        %v4450 = vpop.f32.mrb[0].mxu0
        %v4451 = vadd.f32 0.0, %v4450
        %v4452 = vpop.f32.mrb[0].mxu0
        %4453 = vdwg.mxu0
        %v4454 = vadd.f32 %v4365, %v4451
        %v4455 = vld [vmem:[#allocation7 + $0x12] sm:$0x1]
        %s4456 = scalar_lea.vmem %s7, 2304
        %v4457 = vld [vmem:[%s4456] sm:$0xff]
        %v4458 = vld [vmem:[%s4456 + $0x8] sm:$0xff]
        %v4459 = vld [vmem:[%s4456 + $0x10] sm:$0xff]
        %v4460 = vld [vmem:[%s4456 + $0x18] sm:$0xff]
        %v4461 = vld [vmem:[%s4456 + $0x20] sm:$0xff]
        %v4462 = vld [vmem:[%s4456 + $0x28] sm:$0xff]
        %v4463 = vld [vmem:[%s4456 + $0x30] sm:$0xff]
        %v4464 = vld [vmem:[%s4456 + $0x38] sm:$0xff]
        %v4465 = vld [vmem:[%s4456 + $0x40] sm:$0xff]
        %v4466 = vld [vmem:[%s4456 + $0x48] sm:$0xff]
        %v4467 = vld [vmem:[%s4456 + $0x50] sm:$0xff]
        %v4468 = vld [vmem:[%s4456 + $0x58] sm:$0xff]
        %v4469 = vld [vmem:[%s4456 + $0x60] sm:$0xff]
        %v4470 = vld [vmem:[%s4456 + $0x68] sm:$0xff]
        %v4471 = vld [vmem:[%s4456 + $0x70] sm:$0xff]
        %v4472 = vld [vmem:[%s4456 + $0x78] sm:$0xff]
        %4473 = vmatprep.subr.mxu0 0.0
        %4474 = vmatpush1.msra.mxu0 %v4457
        %4475 = vmatprep.subr.mxu0 0.0
        %4476 = vmatpush1.msra.mxu0 %v4458
        %4477 = vmatprep.subr.mxu0 0.0
        %4478 = vmatpush1.msra.mxu0 %v4459
        %4479 = vmatprep.subr.mxu0 0.0
        %4480 = vmatpush1.msra.mxu0 %v4460
        %4481 = vmatprep.subr.mxu0 0.0
        %4482 = vmatpush1.msra.mxu0 %v4461
        %4483 = vmatprep.subr.mxu0 0.0
        %4484 = vmatpush1.msra.mxu0 %v4462
        %4485 = vmatprep.subr.mxu0 0.0
        %4486 = vmatpush1.msra.mxu0 %v4463
        %4487 = vmatprep.subr.mxu0 0.0
        %4488 = vmatpush1.msra.mxu0 %v4464
        %4489 = vmatprep.subr.mxu0 0.0
        %4490 = vmatpush1.msra.mxu0 %v4465
        %4491 = vmatprep.subr.mxu0 0.0
        %4492 = vmatpush1.msra.mxu0 %v4466
        %4493 = vmatprep.subr.mxu0 0.0
        %4494 = vmatpush1.msra.mxu0 %v4467
        %4495 = vmatprep.subr.mxu0 0.0
        %4496 = vmatpush1.msra.mxu0 %v4468
        %4497 = vmatprep.subr.mxu0 0.0
        %4498 = vmatpush1.msra.mxu0 %v4469
        %4499 = vmatprep.subr.mxu0 0.0
        %4500 = vmatpush1.msra.mxu0 %v4470
        %4501 = vmatprep.subr.mxu0 0.0
        %4502 = vmatpush1.msra.mxu0 %v4471
        %4503 = vmatprep.subr.mxu0 0.0
        %4504 = vmatpush1.msra.mxu0 %v4472
        %4505 = vmatprep.subr.mxu0 0.0
        %4506 = vmatpush1.msra.mxu0 0.0
        %4507 = vmatprep.subr.mxu0 0.0
        %4508 = vmatpush1.msra.mxu0 0.0
        %4509 = vmatprep.subr.mxu0 0.0
        %4510 = vmatpush1.msra.mxu0 0.0
        %4511 = vmatprep.subr.mxu0 0.0
        %4512 = vmatpush1.msra.mxu0 0.0
        %4513 = vmatprep.subr.mxu0 0.0
        %4514 = vmatpush1.msra.mxu0 0.0
        %4515 = vmatprep.subr.mxu0 0.0
        %4516 = vmatpush1.msra.mxu0 0.0
        %4517 = vmatprep.subr.mxu0 0.0
        %4518 = vmatpush1.msra.mxu0 0.0
        %4519 = vmatprep.subr.mxu0 0.0
        %4520 = vmatpush1.msra.mxu0 0.0
        %4521 = vmatprep.subr.mxu0 0.0
        %4522 = vmatpush1.msra.mxu0 0.0
        %4523 = vmatprep.subr.mxu0 0.0
        %4524 = vmatpush1.msra.mxu0 0.0
        %4525 = vmatprep.subr.mxu0 0.0
        %4526 = vmatpush1.msra.mxu0 0.0
        %4527 = vmatprep.subr.mxu0 0.0
        %4528 = vmatpush1.msra.mxu0 0.0
        %4529 = vmatprep.subr.mxu0 0.0
        %4530 = vmatpush1.msra.mxu0 0.0
        %4531 = vmatprep.subr.mxu0 0.0
        %4532 = vmatpush1.msra.mxu0 0.0
        %4533 = vmatprep.subr.mxu0 0.0
        %4534 = vmatpush1.msra.mxu0 0.0
        %4535 = vmatprep.subr.mxu0 0.0
        %4536 = vmatpush1.msra.mxu0 0.0
        %4537 = vmatprep.mubr.f32.mxu0 0.0
        %4538 = vmatmul.mubr.f32.gmra.mrb[0].mxu0 %v4455
        %v4539 = vpop.f32.mrb[0].mxu0
        %v4540 = vadd.f32 0.0, %v4539
        %v4541 = vpop.f32.mrb[0].mxu0
        %4542 = vdwg.mxu0
        %v4543 = vadd.f32 %v4454, %v4540
        %v4544 = vld [vmem:[#allocation7 + $0x13] sm:$0x1]
        %s4545 = scalar_lea.vmem %s7, 2432
        %v4546 = vld [vmem:[%s4545] sm:$0xff]
        %v4547 = vld [vmem:[%s4545 + $0x8] sm:$0xff]
        %v4548 = vld [vmem:[%s4545 + $0x10] sm:$0xff]
        %v4549 = vld [vmem:[%s4545 + $0x18] sm:$0xff]
        %v4550 = vld [vmem:[%s4545 + $0x20] sm:$0xff]
        %v4551 = vld [vmem:[%s4545 + $0x28] sm:$0xff]
        %v4552 = vld [vmem:[%s4545 + $0x30] sm:$0xff]
        %v4553 = vld [vmem:[%s4545 + $0x38] sm:$0xff]
        %v4554 = vld [vmem:[%s4545 + $0x40] sm:$0xff]
        %v4555 = vld [vmem:[%s4545 + $0x48] sm:$0xff]
        %v4556 = vld [vmem:[%s4545 + $0x50] sm:$0xff]
        %v4557 = vld [vmem:[%s4545 + $0x58] sm:$0xff]
        %v4558 = vld [vmem:[%s4545 + $0x60] sm:$0xff]
        %v4559 = vld [vmem:[%s4545 + $0x68] sm:$0xff]
        %v4560 = vld [vmem:[%s4545 + $0x70] sm:$0xff]
        %v4561 = vld [vmem:[%s4545 + $0x78] sm:$0xff]
        %4562 = vmatprep.subr.mxu0 0.0
        %4563 = vmatpush1.msra.mxu0 %v4546
        %4564 = vmatprep.subr.mxu0 0.0
        %4565 = vmatpush1.msra.mxu0 %v4547
        %4566 = vmatprep.subr.mxu0 0.0
        %4567 = vmatpush1.msra.mxu0 %v4548
        %4568 = vmatprep.subr.mxu0 0.0
        %4569 = vmatpush1.msra.mxu0 %v4549
        %4570 = vmatprep.subr.mxu0 0.0
        %4571 = vmatpush1.msra.mxu0 %v4550
        %4572 = vmatprep.subr.mxu0 0.0
        %4573 = vmatpush1.msra.mxu0 %v4551
        %4574 = vmatprep.subr.mxu0 0.0
        %4575 = vmatpush1.msra.mxu0 %v4552
        %4576 = vmatprep.subr.mxu0 0.0
        %4577 = vmatpush1.msra.mxu0 %v4553
        %4578 = vmatprep.subr.mxu0 0.0
        %4579 = vmatpush1.msra.mxu0 %v4554
        %4580 = vmatprep.subr.mxu0 0.0
        %4581 = vmatpush1.msra.mxu0 %v4555
        %4582 = vmatprep.subr.mxu0 0.0
        %4583 = vmatpush1.msra.mxu0 %v4556
        %4584 = vmatprep.subr.mxu0 0.0
        %4585 = vmatpush1.msra.mxu0 %v4557
        %4586 = vmatprep.subr.mxu0 0.0
        %4587 = vmatpush1.msra.mxu0 %v4558
        %4588 = vmatprep.subr.mxu0 0.0
        %4589 = vmatpush1.msra.mxu0 %v4559
        %4590 = vmatprep.subr.mxu0 0.0
        %4591 = vmatpush1.msra.mxu0 %v4560
        %4592 = vmatprep.subr.mxu0 0.0
        %4593 = vmatpush1.msra.mxu0 %v4561
        %4594 = vmatprep.subr.mxu0 0.0
        %4595 = vmatpush1.msra.mxu0 0.0
        %4596 = vmatprep.subr.mxu0 0.0
        %4597 = vmatpush1.msra.mxu0 0.0
        %4598 = vmatprep.subr.mxu0 0.0
        %4599 = vmatpush1.msra.mxu0 0.0
        %4600 = vmatprep.subr.mxu0 0.0
        %4601 = vmatpush1.msra.mxu0 0.0
        %4602 = vmatprep.subr.mxu0 0.0
        %4603 = vmatpush1.msra.mxu0 0.0
        %4604 = vmatprep.subr.mxu0 0.0
        %4605 = vmatpush1.msra.mxu0 0.0
        %4606 = vmatprep.subr.mxu0 0.0
        %4607 = vmatpush1.msra.mxu0 0.0
        %4608 = vmatprep.subr.mxu0 0.0
        %4609 = vmatpush1.msra.mxu0 0.0
        %4610 = vmatprep.subr.mxu0 0.0
        %4611 = vmatpush1.msra.mxu0 0.0
        %4612 = vmatprep.subr.mxu0 0.0
        %4613 = vmatpush1.msra.mxu0 0.0
        %4614 = vmatprep.subr.mxu0 0.0
        %4615 = vmatpush1.msra.mxu0 0.0
        %4616 = vmatprep.subr.mxu0 0.0
        %4617 = vmatpush1.msra.mxu0 0.0
        %4618 = vmatprep.subr.mxu0 0.0
        %4619 = vmatpush1.msra.mxu0 0.0
        %4620 = vmatprep.subr.mxu0 0.0
        %4621 = vmatpush1.msra.mxu0 0.0
        %4622 = vmatprep.subr.mxu0 0.0
        %4623 = vmatpush1.msra.mxu0 0.0
        %4624 = vmatprep.subr.mxu0 0.0
        %4625 = vmatpush1.msra.mxu0 0.0
        %4626 = vmatprep.mubr.f32.mxu0 0.0
        %4627 = vmatmul.mubr.f32.gmra.mrb[0].mxu0 %v4544
        %v4628 = vpop.f32.mrb[0].mxu0
        %v4629 = vadd.f32 0.0, %v4628
        %v4630 = vpop.f32.mrb[0].mxu0
        %4631 = vdwg.mxu0
        %v4632 = vadd.f32 %v4543, %v4629
        %v4633 = vld [vmem:[#allocation7 + $0x14] sm:$0x1]
        %s4634 = scalar_lea.vmem %s7, 2560
        %v4635 = vld [vmem:[%s4634] sm:$0xff]
        %v4636 = vld [vmem:[%s4634 + $0x8] sm:$0xff]
        %v4637 = vld [vmem:[%s4634 + $0x10] sm:$0xff]
        %v4638 = vld [vmem:[%s4634 + $0x18] sm:$0xff]
        %v4639 = vld [vmem:[%s4634 + $0x20] sm:$0xff]
        %v4640 = vld [vmem:[%s4634 + $0x28] sm:$0xff]
        %v4641 = vld [vmem:[%s4634 + $0x30] sm:$0xff]
        %v4642 = vld [vmem:[%s4634 + $0x38] sm:$0xff]
        %v4643 = vld [vmem:[%s4634 + $0x40] sm:$0xff]
        %v4644 = vld [vmem:[%s4634 + $0x48] sm:$0xff]
        %v4645 = vld [vmem:[%s4634 + $0x50] sm:$0xff]
        %v4646 = vld [vmem:[%s4634 + $0x58] sm:$0xff]
        %v4647 = vld [vmem:[%s4634 + $0x60] sm:$0xff]
        %v4648 = vld [vmem:[%s4634 + $0x68] sm:$0xff]
        %v4649 = vld [vmem:[%s4634 + $0x70] sm:$0xff]
        %v4650 = vld [vmem:[%s4634 + $0x78] sm:$0xff]
        %4651 = vmatprep.subr.mxu0 0.0
        %4652 = vmatpush1.msra.mxu0 %v4635
        %4653 = vmatprep.subr.mxu0 0.0
        %4654 = vmatpush1.msra.mxu0 %v4636
        %4655 = vmatprep.subr.mxu0 0.0
        %4656 = vmatpush1.msra.mxu0 %v4637
        %4657 = vmatprep.subr.mxu0 0.0
        %4658 = vmatpush1.msra.mxu0 %v4638
        %4659 = vmatprep.subr.mxu0 0.0
        %4660 = vmatpush1.msra.mxu0 %v4639
        %4661 = vmatprep.subr.mxu0 0.0
        %4662 = vmatpush1.msra.mxu0 %v4640
        %4663 = vmatprep.subr.mxu0 0.0
        %4664 = vmatpush1.msra.mxu0 %v4641
        %4665 = vmatprep.subr.mxu0 0.0
        %4666 = vmatpush1.msra.mxu0 %v4642
        %4667 = vmatprep.subr.mxu0 0.0
        %4668 = vmatpush1.msra.mxu0 %v4643
        %4669 = vmatprep.subr.mxu0 0.0
        %4670 = vmatpush1.msra.mxu0 %v4644
        %4671 = vmatprep.subr.mxu0 0.0
        %4672 = vmatpush1.msra.mxu0 %v4645
        %4673 = vmatprep.subr.mxu0 0.0
        %4674 = vmatpush1.msra.mxu0 %v4646
        %4675 = vmatprep.subr.mxu0 0.0
        %4676 = vmatpush1.msra.mxu0 %v4647
        %4677 = vmatprep.subr.mxu0 0.0
        %4678 = vmatpush1.msra.mxu0 %v4648
        %4679 = vmatprep.subr.mxu0 0.0
        %4680 = vmatpush1.msra.mxu0 %v4649
        %4681 = vmatprep.subr.mxu0 0.0
        %4682 = vmatpush1.msra.mxu0 %v4650
        %4683 = vmatprep.subr.mxu0 0.0
        %4684 = vmatpush1.msra.mxu0 0.0
        %4685 = vmatprep.subr.mxu0 0.0
        %4686 = vmatpush1.msra.mxu0 0.0
        %4687 = vmatprep.subr.mxu0 0.0
        %4688 = vmatpush1.msra.mxu0 0.0
        %4689 = vmatprep.subr.mxu0 0.0
        %4690 = vmatpush1.msra.mxu0 0.0
        %4691 = vmatprep.subr.mxu0 0.0
        %4692 = vmatpush1.msra.mxu0 0.0
        %4693 = vmatprep.subr.mxu0 0.0
        %4694 = vmatpush1.msra.mxu0 0.0
        %4695 = vmatprep.subr.mxu0 0.0
        %4696 = vmatpush1.msra.mxu0 0.0
        %4697 = vmatprep.subr.mxu0 0.0
        %4698 = vmatpush1.msra.mxu0 0.0
        %4699 = vmatprep.subr.mxu0 0.0
        %4700 = vmatpush1.msra.mxu0 0.0
        %4701 = vmatprep.subr.mxu0 0.0
        %4702 = vmatpush1.msra.mxu0 0.0
        %4703 = vmatprep.subr.mxu0 0.0
        %4704 = vmatpush1.msra.mxu0 0.0
        %4705 = vmatprep.subr.mxu0 0.0
        %4706 = vmatpush1.msra.mxu0 0.0
        %4707 = vmatprep.subr.mxu0 0.0
        %4708 = vmatpush1.msra.mxu0 0.0
        %4709 = vmatprep.subr.mxu0 0.0
        %4710 = vmatpush1.msra.mxu0 0.0
        %4711 = vmatprep.subr.mxu0 0.0
        %4712 = vmatpush1.msra.mxu0 0.0
        %4713 = vmatprep.subr.mxu0 0.0
        %4714 = vmatpush1.msra.mxu0 0.0
        %4715 = vmatprep.mubr.f32.mxu0 0.0
        %4716 = vmatmul.mubr.f32.gmra.mrb[0].mxu0 %v4633
        %v4717 = vpop.f32.mrb[0].mxu0
        %v4718 = vadd.f32 0.0, %v4717
        %v4719 = vpop.f32.mrb[0].mxu0
        %4720 = vdwg.mxu0
        %v4721 = vadd.f32 %v4632, %v4718
        %v4722 = vld [vmem:[#allocation7 + $0x15] sm:$0x1]
        %s4723 = scalar_lea.vmem %s7, 2688
        %v4724 = vld [vmem:[%s4723] sm:$0xff]
        %v4725 = vld [vmem:[%s4723 + $0x8] sm:$0xff]
        %v4726 = vld [vmem:[%s4723 + $0x10] sm:$0xff]
        %v4727 = vld [vmem:[%s4723 + $0x18] sm:$0xff]
        %v4728 = vld [vmem:[%s4723 + $0x20] sm:$0xff]
        %v4729 = vld [vmem:[%s4723 + $0x28] sm:$0xff]
        %v4730 = vld [vmem:[%s4723 + $0x30] sm:$0xff]
        %v4731 = vld [vmem:[%s4723 + $0x38] sm:$0xff]
        %v4732 = vld [vmem:[%s4723 + $0x40] sm:$0xff]
        %v4733 = vld [vmem:[%s4723 + $0x48] sm:$0xff]
        %v4734 = vld [vmem:[%s4723 + $0x50] sm:$0xff]
        %v4735 = vld [vmem:[%s4723 + $0x58] sm:$0xff]
        %v4736 = vld [vmem:[%s4723 + $0x60] sm:$0xff]
        %v4737 = vld [vmem:[%s4723 + $0x68] sm:$0xff]
        %v4738 = vld [vmem:[%s4723 + $0x70] sm:$0xff]
        %v4739 = vld [vmem:[%s4723 + $0x78] sm:$0xff]
        %4740 = vmatprep.subr.mxu0 0.0
        %4741 = vmatpush1.msra.mxu0 %v4724
        %4742 = vmatprep.subr.mxu0 0.0
        %4743 = vmatpush1.msra.mxu0 %v4725
        %4744 = vmatprep.subr.mxu0 0.0
        %4745 = vmatpush1.msra.mxu0 %v4726
        %4746 = vmatprep.subr.mxu0 0.0
        %4747 = vmatpush1.msra.mxu0 %v4727
        %4748 = vmatprep.subr.mxu0 0.0
        %4749 = vmatpush1.msra.mxu0 %v4728
        %4750 = vmatprep.subr.mxu0 0.0
        %4751 = vmatpush1.msra.mxu0 %v4729
        %4752 = vmatprep.subr.mxu0 0.0
        %4753 = vmatpush1.msra.mxu0 %v4730
        %4754 = vmatprep.subr.mxu0 0.0
        %4755 = vmatpush1.msra.mxu0 %v4731
        %4756 = vmatprep.subr.mxu0 0.0
        %4757 = vmatpush1.msra.mxu0 %v4732
        %4758 = vmatprep.subr.mxu0 0.0
        %4759 = vmatpush1.msra.mxu0 %v4733
        %4760 = vmatprep.subr.mxu0 0.0
        %4761 = vmatpush1.msra.mxu0 %v4734
        %4762 = vmatprep.subr.mxu0 0.0
        %4763 = vmatpush1.msra.mxu0 %v4735
        %4764 = vmatprep.subr.mxu0 0.0
        %4765 = vmatpush1.msra.mxu0 %v4736
        %4766 = vmatprep.subr.mxu0 0.0
        %4767 = vmatpush1.msra.mxu0 %v4737
        %4768 = vmatprep.subr.mxu0 0.0
        %4769 = vmatpush1.msra.mxu0 %v4738
        %4770 = vmatprep.subr.mxu0 0.0
        %4771 = vmatpush1.msra.mxu0 %v4739
        %4772 = vmatprep.subr.mxu0 0.0
        %4773 = vmatpush1.msra.mxu0 0.0
        %4774 = vmatprep.subr.mxu0 0.0
        %4775 = vmatpush1.msra.mxu0 0.0
        %4776 = vmatprep.subr.mxu0 0.0
        %4777 = vmatpush1.msra.mxu0 0.0
        %4778 = vmatprep.subr.mxu0 0.0
        %4779 = vmatpush1.msra.mxu0 0.0
        %4780 = vmatprep.subr.mxu0 0.0
        %4781 = vmatpush1.msra.mxu0 0.0
        %4782 = vmatprep.subr.mxu0 0.0
        %4783 = vmatpush1.msra.mxu0 0.0
        %4784 = vmatprep.subr.mxu0 0.0
        %4785 = vmatpush1.msra.mxu0 0.0
        %4786 = vmatprep.subr.mxu0 0.0
        %4787 = vmatpush1.msra.mxu0 0.0
        %4788 = vmatprep.subr.mxu0 0.0
        %4789 = vmatpush1.msra.mxu0 0.0
        %4790 = vmatprep.subr.mxu0 0.0
        %4791 = vmatpush1.msra.mxu0 0.0
        %4792 = vmatprep.subr.mxu0 0.0
        %4793 = vmatpush1.msra.mxu0 0.0
        %4794 = vmatprep.subr.mxu0 0.0
        %4795 = vmatpush1.msra.mxu0 0.0
        %4796 = vmatprep.subr.mxu0 0.0
        %4797 = vmatpush1.msra.mxu0 0.0
        %4798 = vmatprep.subr.mxu0 0.0
        %4799 = vmatpush1.msra.mxu0 0.0
        %4800 = vmatprep.subr.mxu0 0.0
        %4801 = vmatpush1.msra.mxu0 0.0
        %4802 = vmatprep.subr.mxu0 0.0
        %4803 = vmatpush1.msra.mxu0 0.0
        %4804 = vmatprep.mubr.f32.mxu0 0.0
        %4805 = vmatmul.mubr.f32.gmra.mrb[0].mxu0 %v4722
        %v4806 = vpop.f32.mrb[0].mxu0
        %v4807 = vadd.f32 0.0, %v4806
        %v4808 = vpop.f32.mrb[0].mxu0
        %4809 = vdwg.mxu0
        %v4810 = vadd.f32 %v4721, %v4807
        %v4811 = vld [vmem:[#allocation7 + $0x16] sm:$0x1]
        %s4812 = scalar_lea.vmem %s7, 2816
        %v4813 = vld [vmem:[%s4812] sm:$0xff]
        %v4814 = vld [vmem:[%s4812 + $0x8] sm:$0xff]
        %v4815 = vld [vmem:[%s4812 + $0x10] sm:$0xff]
        %v4816 = vld [vmem:[%s4812 + $0x18] sm:$0xff]
        %v4817 = vld [vmem:[%s4812 + $0x20] sm:$0xff]
        %v4818 = vld [vmem:[%s4812 + $0x28] sm:$0xff]
        %v4819 = vld [vmem:[%s4812 + $0x30] sm:$0xff]
        %v4820 = vld [vmem:[%s4812 + $0x38] sm:$0xff]
        %v4821 = vld [vmem:[%s4812 + $0x40] sm:$0xff]
        %v4822 = vld [vmem:[%s4812 + $0x48] sm:$0xff]
        %v4823 = vld [vmem:[%s4812 + $0x50] sm:$0xff]
        %v4824 = vld [vmem:[%s4812 + $0x58] sm:$0xff]
        %v4825 = vld [vmem:[%s4812 + $0x60] sm:$0xff]
        %v4826 = vld [vmem:[%s4812 + $0x68] sm:$0xff]
        %v4827 = vld [vmem:[%s4812 + $0x70] sm:$0xff]
        %v4828 = vld [vmem:[%s4812 + $0x78] sm:$0xff]
        %4829 = vmatprep.subr.mxu0 0.0
        %4830 = vmatpush1.msra.mxu0 %v4813
        %4831 = vmatprep.subr.mxu0 0.0
        %4832 = vmatpush1.msra.mxu0 %v4814
        %4833 = vmatprep.subr.mxu0 0.0
        %4834 = vmatpush1.msra.mxu0 %v4815
        %4835 = vmatprep.subr.mxu0 0.0
        %4836 = vmatpush1.msra.mxu0 %v4816
        %4837 = vmatprep.subr.mxu0 0.0
        %4838 = vmatpush1.msra.mxu0 %v4817
        %4839 = vmatprep.subr.mxu0 0.0
        %4840 = vmatpush1.msra.mxu0 %v4818
        %4841 = vmatprep.subr.mxu0 0.0
        %4842 = vmatpush1.msra.mxu0 %v4819
        %4843 = vmatprep.subr.mxu0 0.0
        %4844 = vmatpush1.msra.mxu0 %v4820
        %4845 = vmatprep.subr.mxu0 0.0
        %4846 = vmatpush1.msra.mxu0 %v4821
        %4847 = vmatprep.subr.mxu0 0.0
        %4848 = vmatpush1.msra.mxu0 %v4822
        %4849 = vmatprep.subr.mxu0 0.0
        %4850 = vmatpush1.msra.mxu0 %v4823
        %4851 = vmatprep.subr.mxu0 0.0
        %4852 = vmatpush1.msra.mxu0 %v4824
        %4853 = vmatprep.subr.mxu0 0.0
        %4854 = vmatpush1.msra.mxu0 %v4825
        %4855 = vmatprep.subr.mxu0 0.0
        %4856 = vmatpush1.msra.mxu0 %v4826
        %4857 = vmatprep.subr.mxu0 0.0
        %4858 = vmatpush1.msra.mxu0 %v4827
        %4859 = vmatprep.subr.mxu0 0.0
        %4860 = vmatpush1.msra.mxu0 %v4828
        %4861 = vmatprep.subr.mxu0 0.0
        %4862 = vmatpush1.msra.mxu0 0.0
        %4863 = vmatprep.subr.mxu0 0.0
        %4864 = vmatpush1.msra.mxu0 0.0
        %4865 = vmatprep.subr.mxu0 0.0
        %4866 = vmatpush1.msra.mxu0 0.0
        %4867 = vmatprep.subr.mxu0 0.0
        %4868 = vmatpush1.msra.mxu0 0.0
        %4869 = vmatprep.subr.mxu0 0.0
        %4870 = vmatpush1.msra.mxu0 0.0
        %4871 = vmatprep.subr.mxu0 0.0
        %4872 = vmatpush1.msra.mxu0 0.0
        %4873 = vmatprep.subr.mxu0 0.0
        %4874 = vmatpush1.msra.mxu0 0.0
        %4875 = vmatprep.subr.mxu0 0.0
        %4876 = vmatpush1.msra.mxu0 0.0
        %4877 = vmatprep.subr.mxu0 0.0
        %4878 = vmatpush1.msra.mxu0 0.0
        %4879 = vmatprep.subr.mxu0 0.0
        %4880 = vmatpush1.msra.mxu0 0.0
        %4881 = vmatprep.subr.mxu0 0.0
        %4882 = vmatpush1.msra.mxu0 0.0
        %4883 = vmatprep.subr.mxu0 0.0
        %4884 = vmatpush1.msra.mxu0 0.0
        %4885 = vmatprep.subr.mxu0 0.0
        %4886 = vmatpush1.msra.mxu0 0.0
        %4887 = vmatprep.subr.mxu0 0.0
        %4888 = vmatpush1.msra.mxu0 0.0
        %4889 = vmatprep.subr.mxu0 0.0
        %4890 = vmatpush1.msra.mxu0 0.0
        %4891 = vmatprep.subr.mxu0 0.0
        %4892 = vmatpush1.msra.mxu0 0.0
        %4893 = vmatprep.mubr.f32.mxu0 0.0
        %4894 = vmatmul.mubr.f32.gmra.mrb[0].mxu0 %v4811
        %v4895 = vpop.f32.mrb[0].mxu0
        %v4896 = vadd.f32 0.0, %v4895
        %v4897 = vpop.f32.mrb[0].mxu0
        %4898 = vdwg.mxu0
        %v4899 = vadd.f32 %v4810, %v4896
        %v4900 = vld [vmem:[#allocation7 + $0x17] sm:$0x1]
        %s4901 = scalar_lea.vmem %s7, 2944
        %v4902 = vld [vmem:[%s4901] sm:$0xff]
        %v4903 = vld [vmem:[%s4901 + $0x8] sm:$0xff]
        %v4904 = vld [vmem:[%s4901 + $0x10] sm:$0xff]
        %v4905 = vld [vmem:[%s4901 + $0x18] sm:$0xff]
        %v4906 = vld [vmem:[%s4901 + $0x20] sm:$0xff]
        %v4907 = vld [vmem:[%s4901 + $0x28] sm:$0xff]
        %v4908 = vld [vmem:[%s4901 + $0x30] sm:$0xff]
        %v4909 = vld [vmem:[%s4901 + $0x38] sm:$0xff]
        %v4910 = vld [vmem:[%s4901 + $0x40] sm:$0xff]
        %v4911 = vld [vmem:[%s4901 + $0x48] sm:$0xff]
        %v4912 = vld [vmem:[%s4901 + $0x50] sm:$0xff]
        %v4913 = vld [vmem:[%s4901 + $0x58] sm:$0xff]
        %v4914 = vld [vmem:[%s4901 + $0x60] sm:$0xff]
        %v4915 = vld [vmem:[%s4901 + $0x68] sm:$0xff]
        %v4916 = vld [vmem:[%s4901 + $0x70] sm:$0xff]
        %v4917 = vld [vmem:[%s4901 + $0x78] sm:$0xff]
        %4918 = vmatprep.subr.mxu0 0.0
        %4919 = vmatpush1.msra.mxu0 %v4902
        %4920 = vmatprep.subr.mxu0 0.0
        %4921 = vmatpush1.msra.mxu0 %v4903
        %4922 = vmatprep.subr.mxu0 0.0
        %4923 = vmatpush1.msra.mxu0 %v4904
        %4924 = vmatprep.subr.mxu0 0.0
        %4925 = vmatpush1.msra.mxu0 %v4905
        %4926 = vmatprep.subr.mxu0 0.0
        %4927 = vmatpush1.msra.mxu0 %v4906
        %4928 = vmatprep.subr.mxu0 0.0
        %4929 = vmatpush1.msra.mxu0 %v4907
        %4930 = vmatprep.subr.mxu0 0.0
        %4931 = vmatpush1.msra.mxu0 %v4908
        %4932 = vmatprep.subr.mxu0 0.0
        %4933 = vmatpush1.msra.mxu0 %v4909
        %4934 = vmatprep.subr.mxu0 0.0
        %4935 = vmatpush1.msra.mxu0 %v4910
        %4936 = vmatprep.subr.mxu0 0.0
        %4937 = vmatpush1.msra.mxu0 %v4911
        %4938 = vmatprep.subr.mxu0 0.0
        %4939 = vmatpush1.msra.mxu0 %v4912
        %4940 = vmatprep.subr.mxu0 0.0
        %4941 = vmatpush1.msra.mxu0 %v4913
        %4942 = vmatprep.subr.mxu0 0.0
        %4943 = vmatpush1.msra.mxu0 %v4914
        %4944 = vmatprep.subr.mxu0 0.0
        %4945 = vmatpush1.msra.mxu0 %v4915
        %4946 = vmatprep.subr.mxu0 0.0
        %4947 = vmatpush1.msra.mxu0 %v4916
        %4948 = vmatprep.subr.mxu0 0.0
        %4949 = vmatpush1.msra.mxu0 %v4917
        %4950 = vmatprep.subr.mxu0 0.0
        %4951 = vmatpush1.msra.mxu0 0.0
        %4952 = vmatprep.subr.mxu0 0.0
        %4953 = vmatpush1.msra.mxu0 0.0
        %4954 = vmatprep.subr.mxu0 0.0
        %4955 = vmatpush1.msra.mxu0 0.0
        %4956 = vmatprep.subr.mxu0 0.0
        %4957 = vmatpush1.msra.mxu0 0.0
        %4958 = vmatprep.subr.mxu0 0.0
        %4959 = vmatpush1.msra.mxu0 0.0
        %4960 = vmatprep.subr.mxu0 0.0
        %4961 = vmatpush1.msra.mxu0 0.0
        %4962 = vmatprep.subr.mxu0 0.0
        %4963 = vmatpush1.msra.mxu0 0.0
        %4964 = vmatprep.subr.mxu0 0.0
        %4965 = vmatpush1.msra.mxu0 0.0
        %4966 = vmatprep.subr.mxu0 0.0
        %4967 = vmatpush1.msra.mxu0 0.0
        %4968 = vmatprep.subr.mxu0 0.0
        %4969 = vmatpush1.msra.mxu0 0.0
        %4970 = vmatprep.subr.mxu0 0.0
        %4971 = vmatpush1.msra.mxu0 0.0
        %4972 = vmatprep.subr.mxu0 0.0
        %4973 = vmatpush1.msra.mxu0 0.0
        %4974 = vmatprep.subr.mxu0 0.0
        %4975 = vmatpush1.msra.mxu0 0.0
        %4976 = vmatprep.subr.mxu0 0.0
        %4977 = vmatpush1.msra.mxu0 0.0
        %4978 = vmatprep.subr.mxu0 0.0
        %4979 = vmatpush1.msra.mxu0 0.0
        %4980 = vmatprep.subr.mxu0 0.0
        %4981 = vmatpush1.msra.mxu0 0.0
        %4982 = vmatprep.mubr.f32.mxu0 0.0
        %4983 = vmatmul.mubr.f32.gmra.mrb[0].mxu0 %v4900
        %v4984 = vpop.f32.mrb[0].mxu0
        %v4985 = vadd.f32 0.0, %v4984
        %v4986 = vpop.f32.mrb[0].mxu0
        %4987 = vdwg.mxu0
        %v4988 = vadd.f32 %v4899, %v4985
        %v4989 = vld [vmem:[#allocation7 + $0x18] sm:$0x1]
        %s4990 = scalar_lea.vmem %s7, 3072
        %v4991 = vld [vmem:[%s4990] sm:$0xff]
        %v4992 = vld [vmem:[%s4990 + $0x8] sm:$0xff]
        %v4993 = vld [vmem:[%s4990 + $0x10] sm:$0xff]
        %v4994 = vld [vmem:[%s4990 + $0x18] sm:$0xff]
        %v4995 = vld [vmem:[%s4990 + $0x20] sm:$0xff]
        %v4996 = vld [vmem:[%s4990 + $0x28] sm:$0xff]
        %v4997 = vld [vmem:[%s4990 + $0x30] sm:$0xff]
        %v4998 = vld [vmem:[%s4990 + $0x38] sm:$0xff]
        %v4999 = vld [vmem:[%s4990 + $0x40] sm:$0xff]
        %v5000 = vld [vmem:[%s4990 + $0x48] sm:$0xff]
        %v5001 = vld [vmem:[%s4990 + $0x50] sm:$0xff]
        %v5002 = vld [vmem:[%s4990 + $0x58] sm:$0xff]
        %v5003 = vld [vmem:[%s4990 + $0x60] sm:$0xff]
        %v5004 = vld [vmem:[%s4990 + $0x68] sm:$0xff]
        %v5005 = vld [vmem:[%s4990 + $0x70] sm:$0xff]
        %v5006 = vld [vmem:[%s4990 + $0x78] sm:$0xff]
        %5007 = vmatprep.subr.mxu0 0.0
        %5008 = vmatpush1.msra.mxu0 %v4991
        %5009 = vmatprep.subr.mxu0 0.0
        %5010 = vmatpush1.msra.mxu0 %v4992
        %5011 = vmatprep.subr.mxu0 0.0
        %5012 = vmatpush1.msra.mxu0 %v4993
        %5013 = vmatprep.subr.mxu0 0.0
        %5014 = vmatpush1.msra.mxu0 %v4994
        %5015 = vmatprep.subr.mxu0 0.0
        %5016 = vmatpush1.msra.mxu0 %v4995
        %5017 = vmatprep.subr.mxu0 0.0
        %5018 = vmatpush1.msra.mxu0 %v4996
        %5019 = vmatprep.subr.mxu0 0.0
        %5020 = vmatpush1.msra.mxu0 %v4997
        %5021 = vmatprep.subr.mxu0 0.0
        %5022 = vmatpush1.msra.mxu0 %v4998
        %5023 = vmatprep.subr.mxu0 0.0
        %5024 = vmatpush1.msra.mxu0 %v4999
        %5025 = vmatprep.subr.mxu0 0.0
        %5026 = vmatpush1.msra.mxu0 %v5000
        %5027 = vmatprep.subr.mxu0 0.0
        %5028 = vmatpush1.msra.mxu0 %v5001
        %5029 = vmatprep.subr.mxu0 0.0
        %5030 = vmatpush1.msra.mxu0 %v5002
        %5031 = vmatprep.subr.mxu0 0.0
        %5032 = vmatpush1.msra.mxu0 %v5003
        %5033 = vmatprep.subr.mxu0 0.0
        %5034 = vmatpush1.msra.mxu0 %v5004
        %5035 = vmatprep.subr.mxu0 0.0
        %5036 = vmatpush1.msra.mxu0 %v5005
        %5037 = vmatprep.subr.mxu0 0.0
        %5038 = vmatpush1.msra.mxu0 %v5006
        %5039 = vmatprep.subr.mxu0 0.0
        %5040 = vmatpush1.msra.mxu0 0.0
        %5041 = vmatprep.subr.mxu0 0.0
        %5042 = vmatpush1.msra.mxu0 0.0
        %5043 = vmatprep.subr.mxu0 0.0
        %5044 = vmatpush1.msra.mxu0 0.0
        %5045 = vmatprep.subr.mxu0 0.0
        %5046 = vmatpush1.msra.mxu0 0.0
        %5047 = vmatprep.subr.mxu0 0.0
        %5048 = vmatpush1.msra.mxu0 0.0
        %5049 = vmatprep.subr.mxu0 0.0
        %5050 = vmatpush1.msra.mxu0 0.0
        %5051 = vmatprep.subr.mxu0 0.0
        %5052 = vmatpush1.msra.mxu0 0.0
        %5053 = vmatprep.subr.mxu0 0.0
        %5054 = vmatpush1.msra.mxu0 0.0
        %5055 = vmatprep.subr.mxu0 0.0
        %5056 = vmatpush1.msra.mxu0 0.0
        %5057 = vmatprep.subr.mxu0 0.0
        %5058 = vmatpush1.msra.mxu0 0.0
        %5059 = vmatprep.subr.mxu0 0.0
        %5060 = vmatpush1.msra.mxu0 0.0
        %5061 = vmatprep.subr.mxu0 0.0
        %5062 = vmatpush1.msra.mxu0 0.0
        %5063 = vmatprep.subr.mxu0 0.0
        %5064 = vmatpush1.msra.mxu0 0.0
        %5065 = vmatprep.subr.mxu0 0.0
        %5066 = vmatpush1.msra.mxu0 0.0
        %5067 = vmatprep.subr.mxu0 0.0
        %5068 = vmatpush1.msra.mxu0 0.0
        %5069 = vmatprep.subr.mxu0 0.0
        %5070 = vmatpush1.msra.mxu0 0.0
        %5071 = vmatprep.mubr.f32.mxu0 0.0
        %5072 = vmatmul.mubr.f32.gmra.mrb[0].mxu0 %v4989
        %v5073 = vpop.f32.mrb[0].mxu0
        %v5074 = vadd.f32 0.0, %v5073
        %v5075 = vpop.f32.mrb[0].mxu0
        %5076 = vdwg.mxu0
        %v5077 = vadd.f32 %v4988, %v5074
        %v5078 = vld [vmem:[#allocation7 + $0x19] sm:$0x1]
        %s5079 = scalar_lea.vmem %s7, 3200
        %v5080 = vld [vmem:[%s5079] sm:$0xff]
        %v5081 = vld [vmem:[%s5079 + $0x8] sm:$0xff]
        %v5082 = vld [vmem:[%s5079 + $0x10] sm:$0xff]
        %v5083 = vld [vmem:[%s5079 + $0x18] sm:$0xff]
        %v5084 = vld [vmem:[%s5079 + $0x20] sm:$0xff]
        %v5085 = vld [vmem:[%s5079 + $0x28] sm:$0xff]
        %v5086 = vld [vmem:[%s5079 + $0x30] sm:$0xff]
        %v5087 = vld [vmem:[%s5079 + $0x38] sm:$0xff]
        %v5088 = vld [vmem:[%s5079 + $0x40] sm:$0xff]
        %v5089 = vld [vmem:[%s5079 + $0x48] sm:$0xff]
        %v5090 = vld [vmem:[%s5079 + $0x50] sm:$0xff]
        %v5091 = vld [vmem:[%s5079 + $0x58] sm:$0xff]
        %v5092 = vld [vmem:[%s5079 + $0x60] sm:$0xff]
        %v5093 = vld [vmem:[%s5079 + $0x68] sm:$0xff]
        %v5094 = vld [vmem:[%s5079 + $0x70] sm:$0xff]
        %v5095 = vld [vmem:[%s5079 + $0x78] sm:$0xff]
        %5096 = vmatprep.subr.mxu0 0.0
        %5097 = vmatpush1.msra.mxu0 %v5080
        %5098 = vmatprep.subr.mxu0 0.0
        %5099 = vmatpush1.msra.mxu0 %v5081
        %5100 = vmatprep.subr.mxu0 0.0
        %5101 = vmatpush1.msra.mxu0 %v5082
        %5102 = vmatprep.subr.mxu0 0.0
        %5103 = vmatpush1.msra.mxu0 %v5083
        %5104 = vmatprep.subr.mxu0 0.0
        %5105 = vmatpush1.msra.mxu0 %v5084
        %5106 = vmatprep.subr.mxu0 0.0
        %5107 = vmatpush1.msra.mxu0 %v5085
        %5108 = vmatprep.subr.mxu0 0.0
        %5109 = vmatpush1.msra.mxu0 %v5086
        %5110 = vmatprep.subr.mxu0 0.0
        %5111 = vmatpush1.msra.mxu0 %v5087
        %5112 = vmatprep.subr.mxu0 0.0
        %5113 = vmatpush1.msra.mxu0 %v5088
        %5114 = vmatprep.subr.mxu0 0.0
        %5115 = vmatpush1.msra.mxu0 %v5089
        %5116 = vmatprep.subr.mxu0 0.0
        %5117 = vmatpush1.msra.mxu0 %v5090
        %5118 = vmatprep.subr.mxu0 0.0
        %5119 = vmatpush1.msra.mxu0 %v5091
        %5120 = vmatprep.subr.mxu0 0.0
        %5121 = vmatpush1.msra.mxu0 %v5092
        %5122 = vmatprep.subr.mxu0 0.0
        %5123 = vmatpush1.msra.mxu0 %v5093
        %5124 = vmatprep.subr.mxu0 0.0
        %5125 = vmatpush1.msra.mxu0 %v5094
        %5126 = vmatprep.subr.mxu0 0.0
        %5127 = vmatpush1.msra.mxu0 %v5095
        %5128 = vmatprep.subr.mxu0 0.0
        %5129 = vmatpush1.msra.mxu0 0.0
        %5130 = vmatprep.subr.mxu0 0.0
        %5131 = vmatpush1.msra.mxu0 0.0
        %5132 = vmatprep.subr.mxu0 0.0
        %5133 = vmatpush1.msra.mxu0 0.0
        %5134 = vmatprep.subr.mxu0 0.0
        %5135 = vmatpush1.msra.mxu0 0.0
        %5136 = vmatprep.subr.mxu0 0.0
        %5137 = vmatpush1.msra.mxu0 0.0
        %5138 = vmatprep.subr.mxu0 0.0
        %5139 = vmatpush1.msra.mxu0 0.0
        %5140 = vmatprep.subr.mxu0 0.0
        %5141 = vmatpush1.msra.mxu0 0.0
        %5142 = vmatprep.subr.mxu0 0.0
        %5143 = vmatpush1.msra.mxu0 0.0
        %5144 = vmatprep.subr.mxu0 0.0
        %5145 = vmatpush1.msra.mxu0 0.0
        %5146 = vmatprep.subr.mxu0 0.0
        %5147 = vmatpush1.msra.mxu0 0.0
        %5148 = vmatprep.subr.mxu0 0.0
        %5149 = vmatpush1.msra.mxu0 0.0
        %5150 = vmatprep.subr.mxu0 0.0
        %5151 = vmatpush1.msra.mxu0 0.0
        %5152 = vmatprep.subr.mxu0 0.0
        %5153 = vmatpush1.msra.mxu0 0.0
        %5154 = vmatprep.subr.mxu0 0.0
        %5155 = vmatpush1.msra.mxu0 0.0
        %5156 = vmatprep.subr.mxu0 0.0
        %5157 = vmatpush1.msra.mxu0 0.0
        %5158 = vmatprep.subr.mxu0 0.0
        %5159 = vmatpush1.msra.mxu0 0.0
        %5160 = vmatprep.mubr.f32.mxu0 0.0
        %5161 = vmatmul.mubr.f32.gmra.mrb[0].mxu0 %v5078
        %v5162 = vpop.f32.mrb[0].mxu0
        %v5163 = vadd.f32 0.0, %v5162
        %v5164 = vpop.f32.mrb[0].mxu0
        %5165 = vdwg.mxu0
        %v5166 = vadd.f32 %v5077, %v5163
        %v5167 = vld [vmem:[#allocation7 + $0x1a] sm:$0x1]
        %s5168 = scalar_lea.vmem %s7, 3328
        %v5169 = vld [vmem:[%s5168] sm:$0xff]
        %v5170 = vld [vmem:[%s5168 + $0x8] sm:$0xff]
        %v5171 = vld [vmem:[%s5168 + $0x10] sm:$0xff]
        %v5172 = vld [vmem:[%s5168 + $0x18] sm:$0xff]
        %v5173 = vld [vmem:[%s5168 + $0x20] sm:$0xff]
        %v5174 = vld [vmem:[%s5168 + $0x28] sm:$0xff]
        %v5175 = vld [vmem:[%s5168 + $0x30] sm:$0xff]
        %v5176 = vld [vmem:[%s5168 + $0x38] sm:$0xff]
        %v5177 = vld [vmem:[%s5168 + $0x40] sm:$0xff]
        %v5178 = vld [vmem:[%s5168 + $0x48] sm:$0xff]
        %v5179 = vld [vmem:[%s5168 + $0x50] sm:$0xff]
        %v5180 = vld [vmem:[%s5168 + $0x58] sm:$0xff]
        %v5181 = vld [vmem:[%s5168 + $0x60] sm:$0xff]
        %v5182 = vld [vmem:[%s5168 + $0x68] sm:$0xff]
        %v5183 = vld [vmem:[%s5168 + $0x70] sm:$0xff]
        %v5184 = vld [vmem:[%s5168 + $0x78] sm:$0xff]
        %5185 = vmatprep.subr.mxu0 0.0
        %5186 = vmatpush1.msra.mxu0 %v5169
        %5187 = vmatprep.subr.mxu0 0.0
        %5188 = vmatpush1.msra.mxu0 %v5170
        %5189 = vmatprep.subr.mxu0 0.0
        %5190 = vmatpush1.msra.mxu0 %v5171
        %5191 = vmatprep.subr.mxu0 0.0
        %5192 = vmatpush1.msra.mxu0 %v5172
        %5193 = vmatprep.subr.mxu0 0.0
        %5194 = vmatpush1.msra.mxu0 %v5173
        %5195 = vmatprep.subr.mxu0 0.0
        %5196 = vmatpush1.msra.mxu0 %v5174
        %5197 = vmatprep.subr.mxu0 0.0
        %5198 = vmatpush1.msra.mxu0 %v5175
        %5199 = vmatprep.subr.mxu0 0.0
        %5200 = vmatpush1.msra.mxu0 %v5176
        %5201 = vmatprep.subr.mxu0 0.0
        %5202 = vmatpush1.msra.mxu0 %v5177
        %5203 = vmatprep.subr.mxu0 0.0
        %5204 = vmatpush1.msra.mxu0 %v5178
        %5205 = vmatprep.subr.mxu0 0.0
        %5206 = vmatpush1.msra.mxu0 %v5179
        %5207 = vmatprep.subr.mxu0 0.0
        %5208 = vmatpush1.msra.mxu0 %v5180
        %5209 = vmatprep.subr.mxu0 0.0
        %5210 = vmatpush1.msra.mxu0 %v5181
        %5211 = vmatprep.subr.mxu0 0.0
        %5212 = vmatpush1.msra.mxu0 %v5182
        %5213 = vmatprep.subr.mxu0 0.0
        %5214 = vmatpush1.msra.mxu0 %v5183
        %5215 = vmatprep.subr.mxu0 0.0
        %5216 = vmatpush1.msra.mxu0 %v5184
        %5217 = vmatprep.subr.mxu0 0.0
        %5218 = vmatpush1.msra.mxu0 0.0
        %5219 = vmatprep.subr.mxu0 0.0
        %5220 = vmatpush1.msra.mxu0 0.0
        %5221 = vmatprep.subr.mxu0 0.0
        %5222 = vmatpush1.msra.mxu0 0.0
        %5223 = vmatprep.subr.mxu0 0.0
        %5224 = vmatpush1.msra.mxu0 0.0
        %5225 = vmatprep.subr.mxu0 0.0
        %5226 = vmatpush1.msra.mxu0 0.0
        %5227 = vmatprep.subr.mxu0 0.0
        %5228 = vmatpush1.msra.mxu0 0.0
        %5229 = vmatprep.subr.mxu0 0.0
        %5230 = vmatpush1.msra.mxu0 0.0
        %5231 = vmatprep.subr.mxu0 0.0
        %5232 = vmatpush1.msra.mxu0 0.0
        %5233 = vmatprep.subr.mxu0 0.0
        %5234 = vmatpush1.msra.mxu0 0.0
        %5235 = vmatprep.subr.mxu0 0.0
        %5236 = vmatpush1.msra.mxu0 0.0
        %5237 = vmatprep.subr.mxu0 0.0
        %5238 = vmatpush1.msra.mxu0 0.0
        %5239 = vmatprep.subr.mxu0 0.0
        %5240 = vmatpush1.msra.mxu0 0.0
        %5241 = vmatprep.subr.mxu0 0.0
        %5242 = vmatpush1.msra.mxu0 0.0
        %5243 = vmatprep.subr.mxu0 0.0
        %5244 = vmatpush1.msra.mxu0 0.0
        %5245 = vmatprep.subr.mxu0 0.0
        %5246 = vmatpush1.msra.mxu0 0.0
        %5247 = vmatprep.subr.mxu0 0.0
        %5248 = vmatpush1.msra.mxu0 0.0
        %5249 = vmatprep.mubr.f32.mxu0 0.0
        %5250 = vmatmul.mubr.f32.gmra.mrb[0].mxu0 %v5167
        %v5251 = vpop.f32.mrb[0].mxu0
        %v5252 = vadd.f32 0.0, %v5251
        %v5253 = vpop.f32.mrb[0].mxu0
        %5254 = vdwg.mxu0
        %v5255 = vadd.f32 %v5166, %v5252
        %v5256 = vld [vmem:[#allocation7 + $0x1b] sm:$0x1]
        %s5257 = scalar_lea.vmem %s7, 3456
        %v5258 = vld [vmem:[%s5257] sm:$0xff]
        %v5259 = vld [vmem:[%s5257 + $0x8] sm:$0xff]
        %v5260 = vld [vmem:[%s5257 + $0x10] sm:$0xff]
        %v5261 = vld [vmem:[%s5257 + $0x18] sm:$0xff]
        %v5262 = vld [vmem:[%s5257 + $0x20] sm:$0xff]
        %v5263 = vld [vmem:[%s5257 + $0x28] sm:$0xff]
        %v5264 = vld [vmem:[%s5257 + $0x30] sm:$0xff]
        %v5265 = vld [vmem:[%s5257 + $0x38] sm:$0xff]
        %v5266 = vld [vmem:[%s5257 + $0x40] sm:$0xff]
        %v5267 = vld [vmem:[%s5257 + $0x48] sm:$0xff]
        %v5268 = vld [vmem:[%s5257 + $0x50] sm:$0xff]
        %v5269 = vld [vmem:[%s5257 + $0x58] sm:$0xff]
        %v5270 = vld [vmem:[%s5257 + $0x60] sm:$0xff]
        %v5271 = vld [vmem:[%s5257 + $0x68] sm:$0xff]
        %v5272 = vld [vmem:[%s5257 + $0x70] sm:$0xff]
        %v5273 = vld [vmem:[%s5257 + $0x78] sm:$0xff]
        %5274 = vmatprep.subr.mxu0 0.0
        %5275 = vmatpush1.msra.mxu0 %v5258
        %5276 = vmatprep.subr.mxu0 0.0
        %5277 = vmatpush1.msra.mxu0 %v5259
        %5278 = vmatprep.subr.mxu0 0.0
        %5279 = vmatpush1.msra.mxu0 %v5260
        %5280 = vmatprep.subr.mxu0 0.0
        %5281 = vmatpush1.msra.mxu0 %v5261
        %5282 = vmatprep.subr.mxu0 0.0
        %5283 = vmatpush1.msra.mxu0 %v5262
        %5284 = vmatprep.subr.mxu0 0.0
        %5285 = vmatpush1.msra.mxu0 %v5263
        %5286 = vmatprep.subr.mxu0 0.0
        %5287 = vmatpush1.msra.mxu0 %v5264
        %5288 = vmatprep.subr.mxu0 0.0
        %5289 = vmatpush1.msra.mxu0 %v5265
        %5290 = vmatprep.subr.mxu0 0.0
        %5291 = vmatpush1.msra.mxu0 %v5266
        %5292 = vmatprep.subr.mxu0 0.0
        %5293 = vmatpush1.msra.mxu0 %v5267
        %5294 = vmatprep.subr.mxu0 0.0
        %5295 = vmatpush1.msra.mxu0 %v5268
        %5296 = vmatprep.subr.mxu0 0.0
        %5297 = vmatpush1.msra.mxu0 %v5269
        %5298 = vmatprep.subr.mxu0 0.0
        %5299 = vmatpush1.msra.mxu0 %v5270
        %5300 = vmatprep.subr.mxu0 0.0
        %5301 = vmatpush1.msra.mxu0 %v5271
        %5302 = vmatprep.subr.mxu0 0.0
        %5303 = vmatpush1.msra.mxu0 %v5272
        %5304 = vmatprep.subr.mxu0 0.0
        %5305 = vmatpush1.msra.mxu0 %v5273
        %5306 = vmatprep.subr.mxu0 0.0
        %5307 = vmatpush1.msra.mxu0 0.0
        %5308 = vmatprep.subr.mxu0 0.0
        %5309 = vmatpush1.msra.mxu0 0.0
        %5310 = vmatprep.subr.mxu0 0.0
        %5311 = vmatpush1.msra.mxu0 0.0
        %5312 = vmatprep.subr.mxu0 0.0
        %5313 = vmatpush1.msra.mxu0 0.0
        %5314 = vmatprep.subr.mxu0 0.0
        %5315 = vmatpush1.msra.mxu0 0.0
        %5316 = vmatprep.subr.mxu0 0.0
        %5317 = vmatpush1.msra.mxu0 0.0
        %5318 = vmatprep.subr.mxu0 0.0
        %5319 = vmatpush1.msra.mxu0 0.0
        %5320 = vmatprep.subr.mxu0 0.0
        %5321 = vmatpush1.msra.mxu0 0.0
        %5322 = vmatprep.subr.mxu0 0.0
        %5323 = vmatpush1.msra.mxu0 0.0
        %5324 = vmatprep.subr.mxu0 0.0
        %5325 = vmatpush1.msra.mxu0 0.0
        %5326 = vmatprep.subr.mxu0 0.0
        %5327 = vmatpush1.msra.mxu0 0.0
        %5328 = vmatprep.subr.mxu0 0.0
        %5329 = vmatpush1.msra.mxu0 0.0
        %5330 = vmatprep.subr.mxu0 0.0
        %5331 = vmatpush1.msra.mxu0 0.0
        %5332 = vmatprep.subr.mxu0 0.0
        %5333 = vmatpush1.msra.mxu0 0.0
        %5334 = vmatprep.subr.mxu0 0.0
        %5335 = vmatpush1.msra.mxu0 0.0
        %5336 = vmatprep.subr.mxu0 0.0
        %5337 = vmatpush1.msra.mxu0 0.0
        %5338 = vmatprep.mubr.f32.mxu0 0.0
        %5339 = vmatmul.mubr.f32.gmra.mrb[0].mxu0 %v5256
        %v5340 = vpop.f32.mrb[0].mxu0
        %v5341 = vadd.f32 0.0, %v5340
        %v5342 = vpop.f32.mrb[0].mxu0
        %5343 = vdwg.mxu0
        %v5344 = vadd.f32 %v5255, %v5341
        %v5345 = vld [vmem:[#allocation7 + $0x1c] sm:$0x1]
        %s5346 = scalar_lea.vmem %s7, 3584
        %v5347 = vld [vmem:[%s5346] sm:$0xff]
        %v5348 = vld [vmem:[%s5346 + $0x8] sm:$0xff]
        %v5349 = vld [vmem:[%s5346 + $0x10] sm:$0xff]
        %v5350 = vld [vmem:[%s5346 + $0x18] sm:$0xff]
        %v5351 = vld [vmem:[%s5346 + $0x20] sm:$0xff]
        %v5352 = vld [vmem:[%s5346 + $0x28] sm:$0xff]
        %v5353 = vld [vmem:[%s5346 + $0x30] sm:$0xff]
        %v5354 = vld [vmem:[%s5346 + $0x38] sm:$0xff]
        %v5355 = vld [vmem:[%s5346 + $0x40] sm:$0xff]
        %v5356 = vld [vmem:[%s5346 + $0x48] sm:$0xff]
        %v5357 = vld [vmem:[%s5346 + $0x50] sm:$0xff]
        %v5358 = vld [vmem:[%s5346 + $0x58] sm:$0xff]
        %v5359 = vld [vmem:[%s5346 + $0x60] sm:$0xff]
        %v5360 = vld [vmem:[%s5346 + $0x68] sm:$0xff]
        %v5361 = vld [vmem:[%s5346 + $0x70] sm:$0xff]
        %v5362 = vld [vmem:[%s5346 + $0x78] sm:$0xff]
        %5363 = vmatprep.subr.mxu0 0.0
        %5364 = vmatpush1.msra.mxu0 %v5347
        %5365 = vmatprep.subr.mxu0 0.0
        %5366 = vmatpush1.msra.mxu0 %v5348
        %5367 = vmatprep.subr.mxu0 0.0
        %5368 = vmatpush1.msra.mxu0 %v5349
        %5369 = vmatprep.subr.mxu0 0.0
        %5370 = vmatpush1.msra.mxu0 %v5350
        %5371 = vmatprep.subr.mxu0 0.0
        %5372 = vmatpush1.msra.mxu0 %v5351
        %5373 = vmatprep.subr.mxu0 0.0
        %5374 = vmatpush1.msra.mxu0 %v5352
        %5375 = vmatprep.subr.mxu0 0.0
        %5376 = vmatpush1.msra.mxu0 %v5353
        %5377 = vmatprep.subr.mxu0 0.0
        %5378 = vmatpush1.msra.mxu0 %v5354
        %5379 = vmatprep.subr.mxu0 0.0
        %5380 = vmatpush1.msra.mxu0 %v5355
        %5381 = vmatprep.subr.mxu0 0.0
        %5382 = vmatpush1.msra.mxu0 %v5356
        %5383 = vmatprep.subr.mxu0 0.0
        %5384 = vmatpush1.msra.mxu0 %v5357
        %5385 = vmatprep.subr.mxu0 0.0
        %5386 = vmatpush1.msra.mxu0 %v5358
        %5387 = vmatprep.subr.mxu0 0.0
        %5388 = vmatpush1.msra.mxu0 %v5359
        %5389 = vmatprep.subr.mxu0 0.0
        %5390 = vmatpush1.msra.mxu0 %v5360
        %5391 = vmatprep.subr.mxu0 0.0
        %5392 = vmatpush1.msra.mxu0 %v5361
        %5393 = vmatprep.subr.mxu0 0.0
        %5394 = vmatpush1.msra.mxu0 %v5362
        %5395 = vmatprep.subr.mxu0 0.0
        %5396 = vmatpush1.msra.mxu0 0.0
        %5397 = vmatprep.subr.mxu0 0.0
        %5398 = vmatpush1.msra.mxu0 0.0
        %5399 = vmatprep.subr.mxu0 0.0
        %5400 = vmatpush1.msra.mxu0 0.0
        %5401 = vmatprep.subr.mxu0 0.0
        %5402 = vmatpush1.msra.mxu0 0.0
        %5403 = vmatprep.subr.mxu0 0.0
        %5404 = vmatpush1.msra.mxu0 0.0
        %5405 = vmatprep.subr.mxu0 0.0
        %5406 = vmatpush1.msra.mxu0 0.0
        %5407 = vmatprep.subr.mxu0 0.0
        %5408 = vmatpush1.msra.mxu0 0.0
        %5409 = vmatprep.subr.mxu0 0.0
        %5410 = vmatpush1.msra.mxu0 0.0
        %5411 = vmatprep.subr.mxu0 0.0
        %5412 = vmatpush1.msra.mxu0 0.0
        %5413 = vmatprep.subr.mxu0 0.0
        %5414 = vmatpush1.msra.mxu0 0.0
        %5415 = vmatprep.subr.mxu0 0.0
        %5416 = vmatpush1.msra.mxu0 0.0
        %5417 = vmatprep.subr.mxu0 0.0
        %5418 = vmatpush1.msra.mxu0 0.0
        %5419 = vmatprep.subr.mxu0 0.0
        %5420 = vmatpush1.msra.mxu0 0.0
        %5421 = vmatprep.subr.mxu0 0.0
        %5422 = vmatpush1.msra.mxu0 0.0
        %5423 = vmatprep.subr.mxu0 0.0
        %5424 = vmatpush1.msra.mxu0 0.0
        %5425 = vmatprep.subr.mxu0 0.0
        %5426 = vmatpush1.msra.mxu0 0.0
        %5427 = vmatprep.mubr.f32.mxu0 0.0
        %5428 = vmatmul.mubr.f32.gmra.mrb[0].mxu0 %v5345
        %v5429 = vpop.f32.mrb[0].mxu0
        %v5430 = vadd.f32 0.0, %v5429
        %v5431 = vpop.f32.mrb[0].mxu0
        %5432 = vdwg.mxu0
        %v5433 = vadd.f32 %v5344, %v5430
        %v5434 = vld [vmem:[#allocation7 + $0x1d] sm:$0x1]
        %s5435 = scalar_lea.vmem %s7, 3712
        %v5436 = vld [vmem:[%s5435] sm:$0xff]
        %v5437 = vld [vmem:[%s5435 + $0x8] sm:$0xff]
        %v5438 = vld [vmem:[%s5435 + $0x10] sm:$0xff]
        %v5439 = vld [vmem:[%s5435 + $0x18] sm:$0xff]
        %v5440 = vld [vmem:[%s5435 + $0x20] sm:$0xff]
        %v5441 = vld [vmem:[%s5435 + $0x28] sm:$0xff]
        %v5442 = vld [vmem:[%s5435 + $0x30] sm:$0xff]
        %v5443 = vld [vmem:[%s5435 + $0x38] sm:$0xff]
        %v5444 = vld [vmem:[%s5435 + $0x40] sm:$0xff]
        %v5445 = vld [vmem:[%s5435 + $0x48] sm:$0xff]
        %v5446 = vld [vmem:[%s5435 + $0x50] sm:$0xff]
        %v5447 = vld [vmem:[%s5435 + $0x58] sm:$0xff]
        %v5448 = vld [vmem:[%s5435 + $0x60] sm:$0xff]
        %v5449 = vld [vmem:[%s5435 + $0x68] sm:$0xff]
        %v5450 = vld [vmem:[%s5435 + $0x70] sm:$0xff]
        %v5451 = vld [vmem:[%s5435 + $0x78] sm:$0xff]
        %5452 = vmatprep.subr.mxu0 0.0
        %5453 = vmatpush1.msra.mxu0 %v5436
        %5454 = vmatprep.subr.mxu0 0.0
        %5455 = vmatpush1.msra.mxu0 %v5437
        %5456 = vmatprep.subr.mxu0 0.0
        %5457 = vmatpush1.msra.mxu0 %v5438
        %5458 = vmatprep.subr.mxu0 0.0
        %5459 = vmatpush1.msra.mxu0 %v5439
        %5460 = vmatprep.subr.mxu0 0.0
        %5461 = vmatpush1.msra.mxu0 %v5440
        %5462 = vmatprep.subr.mxu0 0.0
        %5463 = vmatpush1.msra.mxu0 %v5441
        %5464 = vmatprep.subr.mxu0 0.0
        %5465 = vmatpush1.msra.mxu0 %v5442
        %5466 = vmatprep.subr.mxu0 0.0
        %5467 = vmatpush1.msra.mxu0 %v5443
        %5468 = vmatprep.subr.mxu0 0.0
        %5469 = vmatpush1.msra.mxu0 %v5444
        %5470 = vmatprep.subr.mxu0 0.0
        %5471 = vmatpush1.msra.mxu0 %v5445
        %5472 = vmatprep.subr.mxu0 0.0
        %5473 = vmatpush1.msra.mxu0 %v5446
        %5474 = vmatprep.subr.mxu0 0.0
        %5475 = vmatpush1.msra.mxu0 %v5447
        %5476 = vmatprep.subr.mxu0 0.0
        %5477 = vmatpush1.msra.mxu0 %v5448
        %5478 = vmatprep.subr.mxu0 0.0
        %5479 = vmatpush1.msra.mxu0 %v5449
        %5480 = vmatprep.subr.mxu0 0.0
        %5481 = vmatpush1.msra.mxu0 %v5450
        %5482 = vmatprep.subr.mxu0 0.0
        %5483 = vmatpush1.msra.mxu0 %v5451
        %5484 = vmatprep.subr.mxu0 0.0
        %5485 = vmatpush1.msra.mxu0 0.0
        %5486 = vmatprep.subr.mxu0 0.0
        %5487 = vmatpush1.msra.mxu0 0.0
        %5488 = vmatprep.subr.mxu0 0.0
        %5489 = vmatpush1.msra.mxu0 0.0
        %5490 = vmatprep.subr.mxu0 0.0
        %5491 = vmatpush1.msra.mxu0 0.0
        %5492 = vmatprep.subr.mxu0 0.0
        %5493 = vmatpush1.msra.mxu0 0.0
        %5494 = vmatprep.subr.mxu0 0.0
        %5495 = vmatpush1.msra.mxu0 0.0
        %5496 = vmatprep.subr.mxu0 0.0
        %5497 = vmatpush1.msra.mxu0 0.0
        %5498 = vmatprep.subr.mxu0 0.0
        %5499 = vmatpush1.msra.mxu0 0.0
        %5500 = vmatprep.subr.mxu0 0.0
        %5501 = vmatpush1.msra.mxu0 0.0
        %5502 = vmatprep.subr.mxu0 0.0
        %5503 = vmatpush1.msra.mxu0 0.0
        %5504 = vmatprep.subr.mxu0 0.0
        %5505 = vmatpush1.msra.mxu0 0.0
        %5506 = vmatprep.subr.mxu0 0.0
        %5507 = vmatpush1.msra.mxu0 0.0
        %5508 = vmatprep.subr.mxu0 0.0
        %5509 = vmatpush1.msra.mxu0 0.0
        %5510 = vmatprep.subr.mxu0 0.0
        %5511 = vmatpush1.msra.mxu0 0.0
        %5512 = vmatprep.subr.mxu0 0.0
        %5513 = vmatpush1.msra.mxu0 0.0
        %5514 = vmatprep.subr.mxu0 0.0
        %5515 = vmatpush1.msra.mxu0 0.0
        %5516 = vmatprep.mubr.f32.mxu0 0.0
        %5517 = vmatmul.mubr.f32.gmra.mrb[0].mxu0 %v5434
        %v5518 = vpop.f32.mrb[0].mxu0
        %v5519 = vadd.f32 0.0, %v5518
        %v5520 = vpop.f32.mrb[0].mxu0
        %5521 = vdwg.mxu0
        %v5522 = vadd.f32 %v5433, %v5519
        %vm5523 = vcmask 516096
        %5524 = vst.msk [vmem:[%s324] sm:$0x1] %vm5523, %v5522
        %s5525 = sand.u32 %s225, 1
        %s5526 = scalar_lea.sflag [#allocation9], %s5525
        %s5527 = sand.u32 %s225, 1
        %s5528 = scalar_lea.vmem [#allocation8], %s5527
        // Predicated region
        $region57: #{frequency_domain_forward.1} parent=55 // pred_check
          %p5529 = pneg %p235
        $region58: #{frequency_domain_forward.1} parent=55 // pred_check_branch
          %5531 = sbr.rel (%p5529) target = $region60
        $region59: #{frequency_domain_forward.1} parent=55 // pred_region
          %s5533 = ssub.s32 16, 16
          %5534 = vsyncadd %s5526, %s5533
          %s5535 = smul.addr %s23, 16
          %s5536 = scalar_lea.hbm %s9, %s5535
          %s5538 = sshll.u32 %s5528, 4
          %s5539 = int_to_ptr.vmem [resolvable:$true] %s5538
          %5541 = dma.vmem_to_hbm [thread:$0]  %s5539, 16, %s5536, %s5526
        $region60: #{frequency_domain_forward.1} parent=55 // pred_fallthru
          _
      $region56: #{frequency_domain_forward.1} parent=5 // pred_fallthru
        _
      %p5542 = scmp.le.s32.totalorder 2, %s18
      // Predicated region
      $region61: #{frequency_domain_forward.1} parent=5 // pred_check
        %p5543 = pneg %p5542
      $region62: #{frequency_domain_forward.1} parent=5 // pred_check_branch
        %5545 = sbr.rel (%p5543) target = $region64
      $region63: #{frequency_domain_forward.1} parent=5 // pred_region
        %s5546 = ssub.s32 %s18, 2
        // Predicated region
        $region65: #{frequency_domain_forward.1} parent=63 // pred_check
          %p5547 = pneg %p241
        $region66: #{frequency_domain_forward.1} parent=63 // pred_check_branch
          %5549 = sbr.rel (%p5547) target = $region68
        $region67: #{frequency_domain_forward.1} parent=63 // pred_region
          %s5550 = sand.u32 %s226, 1
          %s5551 = scalar_lea.sflag [#allocation9], %s5550
          %s5552 = sand.u32 %s226, 1
          %s5553 = scalar_lea.vmem [#allocation8], %s5552
          %5554 = dma.done %s5551, 16
        $region68: #{frequency_domain_forward.1} parent=63 // pred_fallthru
          _
      $region64: #{frequency_domain_forward.1} parent=5 // pred_fallthru
        _
    $region6: #{frequency_domain_forward.1} parent=1 // loop_footer
      %s22 = sadd.s32 1, %s18
    $region7: #{frequency_domain_forward.1} parent=1 // loop_footer_branch
      %17 = sbr.rel target = $region3
    $region8: #{frequency_domain_forward.1} parent=1 // loop_exit
      _
    %5555 = vsyncpa [#allocation9], 1
    %s5556 = scalar_lea.sflag [#allocation9], 1
    %5557 = vsyncpa %s5556, 1

</llo_original>
